<compile_context>
chip_gen: v7x
topology: tpu7x:2x2x1
jax: 0.10.0
libtpu: 0.0.40
codegen_flags: <defaults>
</compile_context>

<pallas_src>
import functools

import jax
import jax.numpy as jnp
from jax.experimental import pallas as pl
from jax.experimental.pallas import tpu as pltpu


# ---------------------------------------------------------------------------
# Fused kernel
# ---------------------------------------------------------------------------
def _respath1_kernel(x_ref, w0_ref, ws_ref, aff_ref, o_ref, *, H, W):
    """Fused 4-stage ResPath for a block of B images.

    x_ref   : (B, H*W, Cin)        flattened NHWC input rows
    w0_ref  : (3, Cin, 4C)         stage-0 packed weights, one RHS per kw:
                                   [w3[kh=0,kw] | w3[kh=1,kw] | w3[kh=2,kw] | w1x1(kw==1 only)]
    ws_ref  : (3, 3, C, 4C)        packed weights for stages 1..3 (stage 2 reuses conv1)
    aff_ref : (4, 6, C)            folded BN per stage:
                                   [sc_conv, b_conv, sc_short, b_short, sc_out, b_out]
    o_ref   : (B, H*W, C)
    """
    B = x_ref.shape[0]
    HW = H * W
    C = o_ref.shape[2]
    f32 = jnp.float32

    # ---- row-index edge masks, hoisted (built once per grid step) --------
    r = jax.lax.broadcasted_iota(jnp.int32, (HW, 1), 0)
    if W & (W - 1) == 0:
        w_id = jnp.bitwise_and(r, W - 1)
    else:
        w_id = jax.lax.rem(r, W)
    one = jnp.float32(1.0)
    zero = jnp.float32(0.0)
    m_w_left = jnp.where(w_id != 0, one, zero)        # kw=0 tap valid (w-1 >= 0)
    m_w_right = jnp.where(w_id != W - 1, one, zero)   # kw=2 tap valid (w+1 <= W-1)
    m_h_top = jnp.where(r >= W, one, zero)            # kh=0 term valid (h-1 >= 0)
    m_h_bot = jnp.where(r < HW - W, one, zero)        # kh=2 term valid (h+1 <= H-1)

    def run_stage(inp, rhs, aff):
        """inp: (HW, ci) f32; rhs(kw) -> (ci, 4C); aff: (6, C) -> (HW, C)."""
        acc = None
        sc = None
        for kw in range(3):
            # Shifted input column for this kw (only one live at a time).
            if kw == 0:
                col = pltpu.roll(inp, shift=1, axis=0) * m_w_left
            elif kw == 2:
                col = pltpu.roll(inp, shift=HW - 1, axis=0) * m_w_right
            else:
                col = inp
            # One wide MXU push: the 3 kh taps (+ shortcut for kw==1) share the LHS.
            y = jnp.dot(col, rhs(kw), preferred_element_type=f32)       # (HW, 4C)
            # Fold the kh outputs into the accumulator with +-W row rolls + masks.
            part = (pltpu.roll(y[:, 0:C], shift=W, axis=0) * m_h_top
                    + y[:, C:2 * C]
                    + pltpu.roll(y[:, 2 * C:3 * C], shift=HW - W, axis=0) * m_h_bot)
            acc = part if acc is None else acc + part
            if kw == 1:
                sc = y[:, 3 * C:4 * C]                                  # 1x1 shortcut
        # epilogue: BN(relu(conv)) + BN(shortcut) -> BN(relu(.))
        conv_path = jnp.maximum(acc, 0.0) * aff[0:1, :] + aff[1:2, :]
        short_path = sc * aff[2:3, :] + aff[3:4, :]
        return jnp.maximum(conv_path + short_path, 0.0) * aff[4:5, :] + aff[5:6, :]

    for b in range(B):
        act = x_ref[b]                                                  # (HW, Cin)
        act = run_stage(act, lambda kw: w0_ref[kw], aff_ref[0])
        for s in (1, 2, 3):                       # stage 2 reuses conv1 (ref bug)
            act = run_stage(act, lambda kw, _s=s: ws_ref[_s - 1, kw], aff_ref[s])
        o_ref[b, :, :] = act.astype(o_ref.dtype)


# ---------------------------------------------------------------------------
# Parameters (eval-mode BN folded to per-channel scale/offset)
# ---------------------------------------------------------------------------
def _fold_bn(gamma, beta, mean, var, eps=1e-5):
    scale = gamma / jnp.sqrt(var + eps)
    return scale, beta - mean * scale


def make_params(key, in_channels, out_channels):
    """Deterministic synthetic parameters mirroring ResPath1.__init__ shapes."""
    ks = iter(jax.random.split(key, 64))
    p = {}

    def conv3x3(cin, cout):      # HWIO
        return jax.random.normal(next(ks), (3, 3, cin, cout), jnp.float32) * 0.1

    def conv1x1(cin, cout):
        return jax.random.normal(next(ks), (cin, cout), jnp.float32) * 0.1

    def bn(cout):
        gamma = 1.0 + 0.1 * jax.random.normal(next(ks), (cout,), jnp.float32)
        beta = 0.1 * jax.random.normal(next(ks), (cout,), jnp.float32)
        mean = 0.1 * jax.random.normal(next(ks), (cout,), jnp.float32)
        var = 1.0 + 0.1 * jax.random.uniform(next(ks), (cout,), jnp.float32)
        return _fold_bn(gamma, beta, mean, var)

    p["conv0"] = conv3x3(in_channels, out_channels)
    p["conv1"] = conv3x3(out_channels, out_channels)
    p["conv2"] = conv3x3(out_channels, out_channels)   # unused by forward (ref bug)
    p["conv3"] = conv3x3(out_channels, out_channels)
    p["shortcut0"] = conv1x1(in_channels, out_channels)
    p["shortcut1"] = conv1x1(out_channels, out_channels)
    p["shortcut2"] = conv1x1(out_channels, out_channels)
    p["shortcut3"] = conv1x1(out_channels, out_channels)
    for name in ("bn_conv0", "bn_conv1", "bn_conv2", "bn_conv3",
                 "bn_shortcut0", "bn_shortcut1", "bn_shortcut2", "bn_shortcut3",
                 "bn_out0", "bn_out1", "bn_out2", "bn_out3"):
        p[name] = bn(out_channels)
    return p


def _pack_kernel_params(p):
    """Pack weights so each kw column is one (cin, 4C) MXU RHS."""
    c = p["conv0"].shape[3]

    def pack_stage(w3, w1):                      # w3: (3,3,ci,c) HWIO, w1: (ci,c)
        ci = w3.shape[2]
        blocks = []
        for kw in range(3):
            cols = [w3[kh, kw] for kh in range(3)]
            cols.append(w1 if kw == 1 else jnp.zeros((ci, c), jnp.float32))
            blocks.append(jnp.concatenate(cols, axis=1))     # (ci, 4c)
        return jnp.stack(blocks, axis=0)                     # (3, ci, 4c)

    w0 = pack_stage(p["conv0"], p["shortcut0"])              # (3, Cin, 4c)
    ws = jnp.stack([
        pack_stage(p["conv1"], p["shortcut1"]),
        pack_stage(p["conv1"], p["shortcut2"]),              # conv1 reuse (ref bug)
        pack_stage(p["conv3"], p["shortcut3"]),
    ], axis=0)                                               # (3, 3, c, 4c)

    def aff(s):
        return jnp.stack([p[f"bn_conv{s}"][0], p[f"bn_conv{s}"][1],
                          p[f"bn_shortcut{s}"][0], p[f"bn_shortcut{s}"][1],
                          p[f"bn_out{s}"][0], p[f"bn_out{s}"][1]], axis=0)

    aff_all = jnp.stack([aff(0), aff(1), aff(2), aff(3)], axis=0)   # (4, 6, c)
    return w0, ws, aff_all


# ---------------------------------------------------------------------------
# Forward wrapper (NCHW in / NCHW out)
# ---------------------------------------------------------------------------
def _single_tensorcore():
    """True for single-TC parts (v5e / v6e): fold the batch into one grid step."""
    try:
        kind = jax.devices()[0].device_kind.lower()
    except Exception:
        return False
    return any(tag in kind for tag in ("v5 lite", "v5e", "v5litepod", "v6 lite", "v6e"))


@functools.partial(jax.jit, static_argnames=("batch_block",))
def _respath1_impl(x_nchw, params, *, batch_block):
    N, Cin, H, W = x_nchw.shape
    x = jnp.transpose(x_nchw, (0, 2, 3, 1)).astype(jnp.float32)
    x = x.reshape(N, H * W, Cin)                                   # contiguous rows
    w0, ws, aff = _pack_kernel_params(params)
    C = w0.shape[2] // 4
    B = batch_block
    assert N % B == 0
    HW = H * W

    kernel = functools.partial(_respath1_kernel, H=H, W=W)

    flops = 2 * N * HW * (3 * Cin * 4 * C + 9 * C * 4 * C)
    bytes_accessed = 4 * (N * HW * Cin + N * HW * C + w0.size + ws.size + aff.size)

    out = pl.pallas_call(
        kernel,
        out_shape=jax.ShapeDtypeStruct((N, HW, C), jnp.float32),
        grid_spec=pltpu.PrefetchScalarGridSpec(
            num_scalar_prefetch=0,
            grid=(N // B,),
            in_specs=[
                pl.BlockSpec((B, HW, Cin), lambda n: (n, 0, 0)),
                pl.BlockSpec((3, Cin, 4 * C), lambda n: (0, 0, 0)),
                pl.BlockSpec((3, 3, C, 4 * C), lambda n: (0, 0, 0, 0)),
                pl.BlockSpec((4, 6, C), lambda n: (0, 0, 0)),
            ],
            out_specs=pl.BlockSpec((B, HW, C), lambda n: (n, 0, 0)),
        ),
        compiler_params=pltpu.CompilerParams(
            dimension_semantics=("parallel",)),
        cost_estimate=pl.CostEstimate(
            flops=flops, transcendentals=0, bytes_accessed=bytes_accessed),
    )(x, w0, ws, aff)

    out = out.reshape(N, H, W, C)
    return jnp.transpose(out, (0, 3, 1, 2))                        # -> NCHW


def respath1_forward(x_nchw, params):
    n = x_nchw.shape[0]
    batch_block = n if _single_tensorcore() else 1   # fold batch on single-TC parts
    return _respath1_impl(x_nchw, params, batch_block=batch_block)


# ---------------------------------------------------------------------------
# Pure-JAX reference (lax.conv) for correctness check
# ---------------------------------------------------------------------------
def _reference_forward(x_nchw, params):
    x = jnp.transpose(x_nchw, (0, 2, 3, 1)).astype(jnp.float32)

    def conv3(x, w):   # w: (3,3,cin,cout) HWIO
        return jax.lax.conv_general_dilated(
            x, w, (1, 1), "SAME",
            dimension_numbers=("NHWC", "HWIO", "NHWC"))

    def conv1(x, w):
        return jnp.einsum("nhwc,cd->nhwd", x, w)

    def stage(x, w3, w1, bn_c, bn_s, bn_o):
        cpath = jnp.maximum(conv3(x, w3), 0.0) * bn_c[0] + bn_c[1]
        spath = conv1(x, w1) * bn_s[0] + bn_s[1]
        return jnp.maximum(cpath + spath, 0.0) * bn_o[0] + bn_o[1]

    out = stage(x, params["conv0"], params["shortcut0"],
                params["bn_conv0"], params["bn_shortcut0"], params["bn_out0"])
    out = stage(out, params["conv1"], params["shortcut1"],
                params["bn_conv1"], params["bn_shortcut1"], params["bn_out1"])
    out = stage(out, params["conv1"], params["shortcut2"],      # conv1 reuse (ref bug)
                params["bn_conv2"], params["bn_shortcut2"], params["bn_out2"])
    out = stage(out, params["conv3"], params["shortcut3"],
                params["bn_conv3"], params["bn_shortcut3"], params["bn_out3"])
    return jnp.transpose(out, (0, 3, 1, 2))


if __name__ == "__main__":
    key = jax.random.PRNGKey(0)
    k_x, k_p = jax.random.split(key)

    N, C_in, H, W = 2, 4, 16, 16
    C_out = 32
    x = jax.random.normal(k_x, (N, C_in, H, W), jnp.float32)
    params = make_params(k_p, C_in, C_out)

    out = jax.block_until_ready(respath1_forward(x, params))
    assert out.shape == (N, C_out, H, W), out.shape

    ref = jax.block_until_ready(_reference_forward(x, params))
    max_err = float(jnp.max(jnp.abs(out - ref)))
    assert jnp.allclose(out, ref, atol=5e-4, rtol=5e-4), max_err

    print("KERNEL_OK")
</pallas_src>

<mosaic_0001>
module attributes {stable_mosaic.version = 11 : i64} {
  func.func @_respath1_kernel(%arg0: i32, %arg1: memref<1x256x4xf32, #tpu.memory_space<vmem>>, %arg2: memref<3x4x128xf32, #tpu.memory_space<vmem>>, %arg3: memref<3x3x32x128xf32, #tpu.memory_space<vmem>>, %arg4: memref<4x6x32xf32, #tpu.memory_space<vmem>>, %arg5: memref<1x256x32xf32, #tpu.memory_space<vmem>>) attributes {dimension_semantics = [#tpu.dimension_semantics<parallel>], iteration_bounds = array<i64: 2>, scalar_prefetch = 0 : i64, scratch_operands = 0 : i64, tpu.core_type = #tpu.core_type<tc>, window_params = [{transform_indices = @transform_0, window_bounds = array<i64: 1, 256, 4>}, {pipeline_mode = #tpu.pipeline_mode<synchronous>, transform_indices = @transform_1, window_bounds = array<i64: 3, 4, 128>}, {pipeline_mode = #tpu.pipeline_mode<synchronous>, transform_indices = @transform_2, window_bounds = array<i64: 3, 3, 32, 128>}, {pipeline_mode = #tpu.pipeline_mode<synchronous>, transform_indices = @transform_3, window_bounds = array<i64: 4, 6, 32>}, {transform_indices = @transform_4, window_bounds = array<i64: 1, 256, 32>}]} {
    %0 = tpu.iota {dimensions = array<i32: 0>} : vector<256x1xi32>
    %c15_i32 = arith.constant 15 : i32
    %1 = vector.broadcast %c15_i32 : i32 to vector<256x1xi32>
    %2 = arith.andi %0, %1 : vector<256x1xi32>
    %c0_i32 = arith.constant 0 : i32
    %3 = vector.broadcast %c0_i32 : i32 to vector<256x1xi32>
    %4 = arith.cmpi ne, %2, %3 : vector<256x1xi32>
    %cst = arith.constant 1.000000e+00 : f32
    %cst_0 = arith.constant 0.000000e+00 : f32
    %5 = vector.broadcast %cst : f32 to vector<256x1xf32>
    %6 = vector.broadcast %cst_0 : f32 to vector<256x1xf32>
    %7 = arith.select %4, %5, %6 : vector<256x1xi1>, vector<256x1xf32>
    %c15_i32_1 = arith.constant 15 : i32
    %8 = vector.broadcast %c15_i32_1 : i32 to vector<256x1xi32>
    %9 = arith.cmpi ne, %2, %8 : vector<256x1xi32>
    %cst_2 = arith.constant 1.000000e+00 : f32
    %cst_3 = arith.constant 0.000000e+00 : f32
    %10 = vector.broadcast %cst_2 : f32 to vector<256x1xf32>
    %11 = vector.broadcast %cst_3 : f32 to vector<256x1xf32>
    %12 = arith.select %9, %10, %11 : vector<256x1xi1>, vector<256x1xf32>
    %c16_i32 = arith.constant 16 : i32
    %13 = vector.broadcast %c16_i32 : i32 to vector<256x1xi32>
    %14 = arith.cmpi sge, %0, %13 : vector<256x1xi32>
    %cst_4 = arith.constant 1.000000e+00 : f32
    %cst_5 = arith.constant 0.000000e+00 : f32
    %15 = vector.broadcast %cst_4 : f32 to vector<256x1xf32>
    %16 = vector.broadcast %cst_5 : f32 to vector<256x1xf32>
    %17 = arith.select %14, %15, %16 : vector<256x1xi1>, vector<256x1xf32>
    %c240_i32 = arith.constant 240 : i32
    %18 = vector.broadcast %c240_i32 : i32 to vector<256x1xi32>
    %19 = arith.cmpi slt, %0, %18 : vector<256x1xi32>
    %cst_6 = arith.constant 1.000000e+00 : f32
    %cst_7 = arith.constant 0.000000e+00 : f32
    %20 = vector.broadcast %cst_6 : f32 to vector<256x1xf32>
    %21 = vector.broadcast %cst_7 : f32 to vector<256x1xf32>
    %22 = arith.select %19, %20, %21 : vector<256x1xi1>, vector<256x1xf32>
    %c0 = arith.constant 0 : index
    %c0_8 = arith.constant 0 : index
    %c0_9 = arith.constant 0 : index
    %23 = vector.load %arg1[%c0, %c0_8, %c0_9] : memref<1x256x4xf32, #tpu.memory_space<vmem>>, vector<1x256x4xf32>
    %24 = vector.shape_cast %23 : vector<1x256x4xf32> to vector<256x4xf32>
    %c0_10 = arith.constant 0 : index
    %c0_11 = arith.constant 0 : index
    %c0_12 = arith.constant 0 : index
    %25 = vector.load %arg4[%c0_10, %c0_11, %c0_12] : memref<4x6x32xf32, #tpu.memory_space<vmem>>, vector<1x6x32xf32>
    %26 = vector.shape_cast %25 : vector<1x6x32xf32> to vector<6x32xf32>
    %c1_i32 = arith.constant 1 : i32
    %27 = tpu.dynamic_rotate %24 by %c1_i32 dim 0 : vector<256x4xf32>, i32 -> vector<256x4xf32>
    %28 = vector.broadcast %7 : vector<256x1xf32> to vector<256x4xf32>
    %29 = arith.mulf %27, %28 : vector<256x4xf32>
    %c0_13 = arith.constant 0 : index
    %c0_14 = arith.constant 0 : index
    %c0_15 = arith.constant 0 : index
    %30 = vector.load %arg2[%c0_13, %c0_14, %c0_15] : memref<3x4x128xf32, #tpu.memory_space<vmem>>, vector<1x4x128xf32>
    %31 = vector.shape_cast %30 : vector<1x4x128xf32> to vector<4x128xf32>
    %cst_16 = arith.constant dense<0.000000e+00> : vector<256x128xf32>
    %32 = tpu.matmul %29, %31, %cst_16 {dimension_numbers = #tpu.dot_dimension_numbers<[1], [0], [0], [1], [0, 0, 1, 1], [], []>} : vector<256x4xf32>, vector<4x128xf32>, vector<256x128xf32> -> vector<256x128xf32>
    %33 = vector.extract_strided_slice %32 {offsets = [0, 0], sizes = [256, 32], strides = [1, 1]} : vector<256x128xf32> to vector<256x32xf32>
    %c16_i32_17 = arith.constant 16 : i32
    %34 = tpu.dynamic_rotate %33 by %c16_i32_17 dim 0 : vector<256x32xf32>, i32 -> vector<256x32xf32>
    %35 = vector.broadcast %17 : vector<256x1xf32> to vector<256x32xf32>
    %36 = arith.mulf %34, %35 : vector<256x32xf32>
    %37 = vector.extract_strided_slice %32 {offsets = [0, 32], sizes = [256, 32], strides = [1, 1]} : vector<256x128xf32> to vector<256x32xf32>
    %38 = arith.addf %36, %37 : vector<256x32xf32>
    %39 = vector.extract_strided_slice %32 {offsets = [0, 64], sizes = [256, 32], strides = [1, 1]} : vector<256x128xf32> to vector<256x32xf32>
    %c240_i32_18 = arith.constant 240 : i32
    %40 = tpu.dynamic_rotate %39 by %c240_i32_18 dim 0 : vector<256x32xf32>, i32 -> vector<256x32xf32>
    %41 = vector.broadcast %22 : vector<256x1xf32> to vector<256x32xf32>
    %42 = arith.mulf %40, %41 : vector<256x32xf32>
    %43 = arith.addf %38, %42 : vector<256x32xf32>
    %c1 = arith.constant 1 : index
    %c0_19 = arith.constant 0 : index
    %c0_20 = arith.constant 0 : index
    %44 = vector.load %arg2[%c1, %c0_19, %c0_20] : memref<3x4x128xf32, #tpu.memory_space<vmem>>, vector<1x4x128xf32>
    %45 = vector.shape_cast %44 : vector<1x4x128xf32> to vector<4x128xf32>
    %cst_21 = arith.constant dense<0.000000e+00> : vector<256x128xf32>
    %46 = tpu.matmul %24, %45, %cst_21 {dimension_numbers = #tpu.dot_dimension_numbers<[1], [0], [0], [1], [0, 0, 1, 1], [], []>} : vector<256x4xf32>, vector<4x128xf32>, vector<256x128xf32> -> vector<256x128xf32>
    %47 = vector.extract_strided_slice %46 {offsets = [0, 0], sizes = [256, 32], strides = [1, 1]} : vector<256x128xf32> to vector<256x32xf32>
    %c16_i32_22 = arith.constant 16 : i32
    %48 = tpu.dynamic_rotate %47 by %c16_i32_22 dim 0 : vector<256x32xf32>, i32 -> vector<256x32xf32>
    %49 = vector.broadcast %17 : vector<256x1xf32> to vector<256x32xf32>
    %50 = arith.mulf %48, %49 : vector<256x32xf32>
    %51 = vector.extract_strided_slice %46 {offsets = [0, 32], sizes = [256, 32], strides = [1, 1]} : vector<256x128xf32> to vector<256x32xf32>
    %52 = arith.addf %50, %51 : vector<256x32xf32>
    %53 = vector.extract_strided_slice %46 {offsets = [0, 64], sizes = [256, 32], strides = [1, 1]} : vector<256x128xf32> to vector<256x32xf32>
    %c240_i32_23 = arith.constant 240 : i32
    %54 = tpu.dynamic_rotate %53 by %c240_i32_23 dim 0 : vector<256x32xf32>, i32 -> vector<256x32xf32>
    %55 = vector.broadcast %22 : vector<256x1xf32> to vector<256x32xf32>
    %56 = arith.mulf %54, %55 : vector<256x32xf32>
    %57 = arith.addf %52, %56 : vector<256x32xf32>
    %58 = arith.addf %43, %57 : vector<256x32xf32>
    %59 = vector.extract_strided_slice %46 {offsets = [0, 96], sizes = [256, 32], strides = [1, 1]} : vector<256x128xf32> to vector<256x32xf32>
    %c255_i32 = arith.constant 255 : i32
    %60 = tpu.dynamic_rotate %24 by %c255_i32 dim 0 : vector<256x4xf32>, i32 -> vector<256x4xf32>
    %61 = vector.broadcast %12 : vector<256x1xf32> to vector<256x4xf32>
    %62 = arith.mulf %60, %61 : vector<256x4xf32>
    %c2 = arith.constant 2 : index
    %c0_24 = arith.constant 0 : index
    %c0_25 = arith.constant 0 : index
    %63 = vector.load %arg2[%c2, %c0_24, %c0_25] : memref<3x4x128xf32, #tpu.memory_space<vmem>>, vector<1x4x128xf32>
    %64 = vector.shape_cast %63 : vector<1x4x128xf32> to vector<4x128xf32>
    %cst_26 = arith.constant dense<0.000000e+00> : vector<256x128xf32>
    %65 = tpu.matmul %62, %64, %cst_26 {dimension_numbers = #tpu.dot_dimension_numbers<[1], [0], [0], [1], [0, 0, 1, 1], [], []>} : vector<256x4xf32>, vector<4x128xf32>, vector<256x128xf32> -> vector<256x128xf32>
    %66 = vector.extract_strided_slice %65 {offsets = [0, 0], sizes = [256, 32], strides = [1, 1]} : vector<256x128xf32> to vector<256x32xf32>
    %c16_i32_27 = arith.constant 16 : i32
    %67 = tpu.dynamic_rotate %66 by %c16_i32_27 dim 0 : vector<256x32xf32>, i32 -> vector<256x32xf32>
    %68 = vector.broadcast %17 : vector<256x1xf32> to vector<256x32xf32>
    %69 = arith.mulf %67, %68 : vector<256x32xf32>
    %70 = vector.extract_strided_slice %65 {offsets = [0, 32], sizes = [256, 32], strides = [1, 1]} : vector<256x128xf32> to vector<256x32xf32>
    %71 = arith.addf %69, %70 : vector<256x32xf32>
    %72 = vector.extract_strided_slice %65 {offsets = [0, 64], sizes = [256, 32], strides = [1, 1]} : vector<256x128xf32> to vector<256x32xf32>
    %c240_i32_28 = arith.constant 240 : i32
    %73 = tpu.dynamic_rotate %72 by %c240_i32_28 dim 0 : vector<256x32xf32>, i32 -> vector<256x32xf32>
    %74 = vector.broadcast %22 : vector<256x1xf32> to vector<256x32xf32>
    %75 = arith.mulf %73, %74 : vector<256x32xf32>
    %76 = arith.addf %71, %75 : vector<256x32xf32>
    %77 = arith.addf %58, %76 : vector<256x32xf32>
    %cst_29 = arith.constant 0.000000e+00 : f32
    %78 = vector.broadcast %cst_29 : f32 to vector<256x32xf32>
    %79 = arith.maximumf %77, %78 : vector<256x32xf32>
    %80 = vector.extract_strided_slice %26 {offsets = [0, 0], sizes = [1, 32], strides = [1, 1]} : vector<6x32xf32> to vector<1x32xf32>
    %81 = vector.broadcast %80 : vector<1x32xf32> to vector<256x32xf32>
    %82 = arith.mulf %79, %81 : vector<256x32xf32>
    %83 = vector.extract_strided_slice %26 {offsets = [1, 0], sizes = [1, 32], strides = [1, 1]} : vector<6x32xf32> to vector<1x32xf32>
    %84 = vector.broadcast %83 : vector<1x32xf32> to vector<256x32xf32>
    %85 = arith.addf %82, %84 : vector<256x32xf32>
    %86 = vector.extract_strided_slice %26 {offsets = [2, 0], sizes = [1, 32], strides = [1, 1]} : vector<6x32xf32> to vector<1x32xf32>
    %87 = vector.broadcast %86 : vector<1x32xf32> to vector<256x32xf32>
    %88 = arith.mulf %59, %87 : vector<256x32xf32>
    %89 = vector.extract_strided_slice %26 {offsets = [3, 0], sizes = [1, 32], strides = [1, 1]} : vector<6x32xf32> to vector<1x32xf32>
    %90 = vector.broadcast %89 : vector<1x32xf32> to vector<256x32xf32>
    %91 = arith.addf %88, %90 : vector<256x32xf32>
    %92 = arith.addf %85, %91 : vector<256x32xf32>
    %cst_30 = arith.constant 0.000000e+00 : f32
    %93 = vector.broadcast %cst_30 : f32 to vector<256x32xf32>
    %94 = arith.maximumf %92, %93 : vector<256x32xf32>
    %95 = vector.extract_strided_slice %26 {offsets = [4, 0], sizes = [1, 32], strides = [1, 1]} : vector<6x32xf32> to vector<1x32xf32>
    %96 = vector.broadcast %95 : vector<1x32xf32> to vector<256x32xf32>
    %97 = arith.mulf %94, %96 : vector<256x32xf32>
    %98 = vector.extract_strided_slice %26 {offsets = [5, 0], sizes = [1, 32], strides = [1, 1]} : vector<6x32xf32> to vector<1x32xf32>
    %99 = vector.broadcast %98 : vector<1x32xf32> to vector<256x32xf32>
    %100 = arith.addf %97, %99 : vector<256x32xf32>
    %c1_31 = arith.constant 1 : index
    %c0_32 = arith.constant 0 : index
    %c0_33 = arith.constant 0 : index
    %101 = vector.load %arg4[%c1_31, %c0_32, %c0_33] : memref<4x6x32xf32, #tpu.memory_space<vmem>>, vector<1x6x32xf32>
    %102 = vector.shape_cast %101 : vector<1x6x32xf32> to vector<6x32xf32>
    %c1_i32_34 = arith.constant 1 : i32
    %103 = tpu.dynamic_rotate %100 by %c1_i32_34 dim 0 : vector<256x32xf32>, i32 -> vector<256x32xf32>
    %104 = vector.broadcast %7 : vector<256x1xf32> to vector<256x32xf32>
    %105 = arith.mulf %103, %104 : vector<256x32xf32>
    %c0_35 = arith.constant 0 : index
    %c0_36 = arith.constant 0 : index
    %c0_37 = arith.constant 0 : index
    %c0_38 = arith.constant 0 : index
    %106 = vector.load %arg3[%c0_35, %c0_36, %c0_37, %c0_38] : memref<3x3x32x128xf32, #tpu.memory_space<vmem>>, vector<1x1x32x128xf32>
    %107 = vector.shape_cast %106 : vector<1x1x32x128xf32> to vector<32x128xf32>
    %cst_39 = arith.constant dense<0.000000e+00> : vector<256x128xf32>
    %108 = tpu.matmul %105, %107, %cst_39 {dimension_numbers = #tpu.dot_dimension_numbers<[1], [0], [0], [1], [0, 0, 1, 1], [], []>} : vector<256x32xf32>, vector<32x128xf32>, vector<256x128xf32> -> vector<256x128xf32>
    %109 = vector.extract_strided_slice %108 {offsets = [0, 0], sizes = [256, 32], strides = [1, 1]} : vector<256x128xf32> to vector<256x32xf32>
    %c16_i32_40 = arith.constant 16 : i32
    %110 = tpu.dynamic_rotate %109 by %c16_i32_40 dim 0 : vector<256x32xf32>, i32 -> vector<256x32xf32>
    %111 = vector.broadcast %17 : vector<256x1xf32> to vector<256x32xf32>
    %112 = arith.mulf %110, %111 : vector<256x32xf32>
    %113 = vector.extract_strided_slice %108 {offsets = [0, 32], sizes = [256, 32], strides = [1, 1]} : vector<256x128xf32> to vector<256x32xf32>
    %114 = arith.addf %112, %113 : vector<256x32xf32>
    %115 = vector.extract_strided_slice %108 {offsets = [0, 64], sizes = [256, 32], strides = [1, 1]} : vector<256x128xf32> to vector<256x32xf32>
    %c240_i32_41 = arith.constant 240 : i32
    %116 = tpu.dynamic_rotate %115 by %c240_i32_41 dim 0 : vector<256x32xf32>, i32 -> vector<256x32xf32>
    %117 = vector.broadcast %22 : vector<256x1xf32> to vector<256x32xf32>
    %118 = arith.mulf %116, %117 : vector<256x32xf32>
    %119 = arith.addf %114, %118 : vector<256x32xf32>
    %c0_42 = arith.constant 0 : index
    %c1_43 = arith.constant 1 : index
    %c0_44 = arith.constant 0 : index
    %c0_45 = arith.constant 0 : index
    %120 = vector.load %arg3[%c0_42, %c1_43, %c0_44, %c0_45] : memref<3x3x32x128xf32, #tpu.memory_space<vmem>>, vector<1x1x32x128xf32>
    %121 = vector.shape_cast %120 : vector<1x1x32x128xf32> to vector<32x128xf32>
    %cst_46 = arith.constant dense<0.000000e+00> : vector<256x128xf32>
    %122 = tpu.matmul %100, %121, %cst_46 {dimension_numbers = #tpu.dot_dimension_numbers<[1], [0], [0], [1], [0, 0, 1, 1], [], []>} : vector<256x32xf32>, vector<32x128xf32>, vector<256x128xf32> -> vector<256x128xf32>
    %123 = vector.extract_strided_slice %122 {offsets = [0, 0], sizes = [256, 32], strides = [1, 1]} : vector<256x128xf32> to vector<256x32xf32>
    %c16_i32_47 = arith.constant 16 : i32
    %124 = tpu.dynamic_rotate %123 by %c16_i32_47 dim 0 : vector<256x32xf32>, i32 -> vector<256x32xf32>
    %125 = vector.broadcast %17 : vector<256x1xf32> to vector<256x32xf32>
    %126 = arith.mulf %124, %125 : vector<256x32xf32>
    %127 = vector.extract_strided_slice %122 {offsets = [0, 32], sizes = [256, 32], strides = [1, 1]} : vector<256x128xf32> to vector<256x32xf32>
    %128 = arith.addf %126, %127 : vector<256x32xf32>
    %129 = vector.extract_strided_slice %122 {offsets = [0, 64], sizes = [256, 32], strides = [1, 1]} : vector<256x128xf32> to vector<256x32xf32>
    %c240_i32_48 = arith.constant 240 : i32
    %130 = tpu.dynamic_rotate %129 by %c240_i32_48 dim 0 : vector<256x32xf32>, i32 -> vector<256x32xf32>
    %131 = vector.broadcast %22 : vector<256x1xf32> to vector<256x32xf32>
    %132 = arith.mulf %130, %131 : vector<256x32xf32>
    %133 = arith.addf %128, %132 : vector<256x32xf32>
    %134 = arith.addf %119, %133 : vector<256x32xf32>
    %135 = vector.extract_strided_slice %122 {offsets = [0, 96], sizes = [256, 32], strides = [1, 1]} : vector<256x128xf32> to vector<256x32xf32>
    %c255_i32_49 = arith.constant 255 : i32
    %136 = tpu.dynamic_rotate %100 by %c255_i32_49 dim 0 : vector<256x32xf32>, i32 -> vector<256x32xf32>
    %137 = vector.broadcast %12 : vector<256x1xf32> to vector<256x32xf32>
    %138 = arith.mulf %136, %137 : vector<256x32xf32>
    %c0_50 = arith.constant 0 : index
    %c2_51 = arith.constant 2 : index
    %c0_52 = arith.constant 0 : index
    %c0_53 = arith.constant 0 : index
    %139 = vector.load %arg3[%c0_50, %c2_51, %c0_52, %c0_53] : memref<3x3x32x128xf32, #tpu.memory_space<vmem>>, vector<1x1x32x128xf32>
    %140 = vector.shape_cast %139 : vector<1x1x32x128xf32> to vector<32x128xf32>
    %cst_54 = arith.constant dense<0.000000e+00> : vector<256x128xf32>
    %141 = tpu.matmul %138, %140, %cst_54 {dimension_numbers = #tpu.dot_dimension_numbers<[1], [0], [0], [1], [0, 0, 1, 1], [], []>} : vector<256x32xf32>, vector<32x128xf32>, vector<256x128xf32> -> vector<256x128xf32>
    %142 = vector.extract_strided_slice %141 {offsets = [0, 0], sizes = [256, 32], strides = [1, 1]} : vector<256x128xf32> to vector<256x32xf32>
    %c16_i32_55 = arith.constant 16 : i32
    %143 = tpu.dynamic_rotate %142 by %c16_i32_55 dim 0 : vector<256x32xf32>, i32 -> vector<256x32xf32>
    %144 = vector.broadcast %17 : vector<256x1xf32> to vector<256x32xf32>
    %145 = arith.mulf %143, %144 : vector<256x32xf32>
    %146 = vector.extract_strided_slice %141 {offsets = [0, 32], sizes = [256, 32], strides = [1, 1]} : vector<256x128xf32> to vector<256x32xf32>
    %147 = arith.addf %145, %146 : vector<256x32xf32>
    %148 = vector.extract_strided_slice %141 {offsets = [0, 64], sizes = [256, 32], strides = [1, 1]} : vector<256x128xf32> to vector<256x32xf32>
    %c240_i32_56 = arith.constant 240 : i32
    %149 = tpu.dynamic_rotate %148 by %c240_i32_56 dim 0 : vector<256x32xf32>, i32 -> vector<256x32xf32>
    %150 = vector.broadcast %22 : vector<256x1xf32> to vector<256x32xf32>
    %151 = arith.mulf %149, %150 : vector<256x32xf32>
    %152 = arith.addf %147, %151 : vector<256x32xf32>
    %153 = arith.addf %134, %152 : vector<256x32xf32>
    %cst_57 = arith.constant 0.000000e+00 : f32
    %154 = vector.broadcast %cst_57 : f32 to vector<256x32xf32>
    %155 = arith.maximumf %153, %154 : vector<256x32xf32>
    %156 = vector.extract_strided_slice %102 {offsets = [0, 0], sizes = [1, 32], strides = [1, 1]} : vector<6x32xf32> to vector<1x32xf32>
    %157 = vector.broadcast %156 : vector<1x32xf32> to vector<256x32xf32>
    %158 = arith.mulf %155, %157 : vector<256x32xf32>
    %159 = vector.extract_strided_slice %102 {offsets = [1, 0], sizes = [1, 32], strides = [1, 1]} : vector<6x32xf32> to vector<1x32xf32>
    %160 = vector.broadcast %159 : vector<1x32xf32> to vector<256x32xf32>
    %161 = arith.addf %158, %160 : vector<256x32xf32>
    %162 = vector.extract_strided_slice %102 {offsets = [2, 0], sizes = [1, 32], strides = [1, 1]} : vector<6x32xf32> to vector<1x32xf32>
    %163 = vector.broadcast %162 : vector<1x32xf32> to vector<256x32xf32>
    %164 = arith.mulf %135, %163 : vector<256x32xf32>
    %165 = vector.extract_strided_slice %102 {offsets = [3, 0], sizes = [1, 32], strides = [1, 1]} : vector<6x32xf32> to vector<1x32xf32>
    %166 = vector.broadcast %165 : vector<1x32xf32> to vector<256x32xf32>
    %167 = arith.addf %164, %166 : vector<256x32xf32>
    %168 = arith.addf %161, %167 : vector<256x32xf32>
    %cst_58 = arith.constant 0.000000e+00 : f32
    %169 = vector.broadcast %cst_58 : f32 to vector<256x32xf32>
    %170 = arith.maximumf %168, %169 : vector<256x32xf32>
    %171 = vector.extract_strided_slice %102 {offsets = [4, 0], sizes = [1, 32], strides = [1, 1]} : vector<6x32xf32> to vector<1x32xf32>
    %172 = vector.broadcast %171 : vector<1x32xf32> to vector<256x32xf32>
    %173 = arith.mulf %170, %172 : vector<256x32xf32>
    %174 = vector.extract_strided_slice %102 {offsets = [5, 0], sizes = [1, 32], strides = [1, 1]} : vector<6x32xf32> to vector<1x32xf32>
    %175 = vector.broadcast %174 : vector<1x32xf32> to vector<256x32xf32>
    %176 = arith.addf %173, %175 : vector<256x32xf32>
    %c2_59 = arith.constant 2 : index
    %c0_60 = arith.constant 0 : index
    %c0_61 = arith.constant 0 : index
    %177 = vector.load %arg4[%c2_59, %c0_60, %c0_61] : memref<4x6x32xf32, #tpu.memory_space<vmem>>, vector<1x6x32xf32>
    %178 = vector.shape_cast %177 : vector<1x6x32xf32> to vector<6x32xf32>
    %c1_i32_62 = arith.constant 1 : i32
    %179 = tpu.dynamic_rotate %176 by %c1_i32_62 dim 0 : vector<256x32xf32>, i32 -> vector<256x32xf32>
    %180 = vector.broadcast %7 : vector<256x1xf32> to vector<256x32xf32>
    %181 = arith.mulf %179, %180 : vector<256x32xf32>
    %c1_63 = arith.constant 1 : index
    %c0_64 = arith.constant 0 : index
    %c0_65 = arith.constant 0 : index
    %c0_66 = arith.constant 0 : index
    %182 = vector.load %arg3[%c1_63, %c0_64, %c0_65, %c0_66] : memref<3x3x32x128xf32, #tpu.memory_space<vmem>>, vector<1x1x32x128xf32>
    %183 = vector.shape_cast %182 : vector<1x1x32x128xf32> to vector<32x128xf32>
    %cst_67 = arith.constant dense<0.000000e+00> : vector<256x128xf32>
    %184 = tpu.matmul %181, %183, %cst_67 {dimension_numbers = #tpu.dot_dimension_numbers<[1], [0], [0], [1], [0, 0, 1, 1], [], []>} : vector<256x32xf32>, vector<32x128xf32>, vector<256x128xf32> -> vector<256x128xf32>
    %185 = vector.extract_strided_slice %184 {offsets = [0, 0], sizes = [256, 32], strides = [1, 1]} : vector<256x128xf32> to vector<256x32xf32>
    %c16_i32_68 = arith.constant 16 : i32
    %186 = tpu.dynamic_rotate %185 by %c16_i32_68 dim 0 : vector<256x32xf32>, i32 -> vector<256x32xf32>
    %187 = vector.broadcast %17 : vector<256x1xf32> to vector<256x32xf32>
    %188 = arith.mulf %186, %187 : vector<256x32xf32>
    %189 = vector.extract_strided_slice %184 {offsets = [0, 32], sizes = [256, 32], strides = [1, 1]} : vector<256x128xf32> to vector<256x32xf32>
    %190 = arith.addf %188, %189 : vector<256x32xf32>
    %191 = vector.extract_strided_slice %184 {offsets = [0, 64], sizes = [256, 32], strides = [1, 1]} : vector<256x128xf32> to vector<256x32xf32>
    %c240_i32_69 = arith.constant 240 : i32
    %192 = tpu.dynamic_rotate %191 by %c240_i32_69 dim 0 : vector<256x32xf32>, i32 -> vector<256x32xf32>
    %193 = vector.broadcast %22 : vector<256x1xf32> to vector<256x32xf32>
    %194 = arith.mulf %192, %193 : vector<256x32xf32>
    %195 = arith.addf %190, %194 : vector<256x32xf32>
    %c1_70 = arith.constant 1 : index
    %c1_71 = arith.constant 1 : index
    %c0_72 = arith.constant 0 : index
    %c0_73 = arith.constant 0 : index
    %196 = vector.load %arg3[%c1_70, %c1_71, %c0_72, %c0_73] : memref<3x3x32x128xf32, #tpu.memory_space<vmem>>, vector<1x1x32x128xf32>
    %197 = vector.shape_cast %196 : vector<1x1x32x128xf32> to vector<32x128xf32>
    %cst_74 = arith.constant dense<0.000000e+00> : vector<256x128xf32>
    %198 = tpu.matmul %176, %197, %cst_74 {dimension_numbers = #tpu.dot_dimension_numbers<[1], [0], [0], [1], [0, 0, 1, 1], [], []>} : vector<256x32xf32>, vector<32x128xf32>, vector<256x128xf32> -> vector<256x128xf32>
    %199 = vector.extract_strided_slice %198 {offsets = [0, 0], sizes = [256, 32], strides = [1, 1]} : vector<256x128xf32> to vector<256x32xf32>
    %c16_i32_75 = arith.constant 16 : i32
    %200 = tpu.dynamic_rotate %199 by %c16_i32_75 dim 0 : vector<256x32xf32>, i32 -> vector<256x32xf32>
    %201 = vector.broadcast %17 : vector<256x1xf32> to vector<256x32xf32>
    %202 = arith.mulf %200, %201 : vector<256x32xf32>
    %203 = vector.extract_strided_slice %198 {offsets = [0, 32], sizes = [256, 32], strides = [1, 1]} : vector<256x128xf32> to vector<256x32xf32>
    %204 = arith.addf %202, %203 : vector<256x32xf32>
    %205 = vector.extract_strided_slice %198 {offsets = [0, 64], sizes = [256, 32], strides = [1, 1]} : vector<256x128xf32> to vector<256x32xf32>
    %c240_i32_76 = arith.constant 240 : i32
    %206 = tpu.dynamic_rotate %205 by %c240_i32_76 dim 0 : vector<256x32xf32>, i32 -> vector<256x32xf32>
    %207 = vector.broadcast %22 : vector<256x1xf32> to vector<256x32xf32>
    %208 = arith.mulf %206, %207 : vector<256x32xf32>
    %209 = arith.addf %204, %208 : vector<256x32xf32>
    %210 = arith.addf %195, %209 : vector<256x32xf32>
    %211 = vector.extract_strided_slice %198 {offsets = [0, 96], sizes = [256, 32], strides = [1, 1]} : vector<256x128xf32> to vector<256x32xf32>
    %c255_i32_77 = arith.constant 255 : i32
    %212 = tpu.dynamic_rotate %176 by %c255_i32_77 dim 0 : vector<256x32xf32>, i32 -> vector<256x32xf32>
    %213 = vector.broadcast %12 : vector<256x1xf32> to vector<256x32xf32>
    %214 = arith.mulf %212, %213 : vector<256x32xf32>
    %c1_78 = arith.constant 1 : index
    %c2_79 = arith.constant 2 : index
    %c0_80 = arith.constant 0 : index
    %c0_81 = arith.constant 0 : index
    %215 = vector.load %arg3[%c1_78, %c2_79, %c0_80, %c0_81] : memref<3x3x32x128xf32, #tpu.memory_space<vmem>>, vector<1x1x32x128xf32>
    %216 = vector.shape_cast %215 : vector<1x1x32x128xf32> to vector<32x128xf32>
    %cst_82 = arith.constant dense<0.000000e+00> : vector<256x128xf32>
    %217 = tpu.matmul %214, %216, %cst_82 {dimension_numbers = #tpu.dot_dimension_numbers<[1], [0], [0], [1], [0, 0, 1, 1], [], []>} : vector<256x32xf32>, vector<32x128xf32>, vector<256x128xf32> -> vector<256x128xf32>
    %218 = vector.extract_strided_slice %217 {offsets = [0, 0], sizes = [256, 32], strides = [1, 1]} : vector<256x128xf32> to vector<256x32xf32>
    %c16_i32_83 = arith.constant 16 : i32
    %219 = tpu.dynamic_rotate %218 by %c16_i32_83 dim 0 : vector<256x32xf32>, i32 -> vector<256x32xf32>
    %220 = vector.broadcast %17 : vector<256x1xf32> to vector<256x32xf32>
    %221 = arith.mulf %219, %220 : vector<256x32xf32>
    %222 = vector.extract_strided_slice %217 {offsets = [0, 32], sizes = [256, 32], strides = [1, 1]} : vector<256x128xf32> to vector<256x32xf32>
    %223 = arith.addf %221, %222 : vector<256x32xf32>
    %224 = vector.extract_strided_slice %217 {offsets = [0, 64], sizes = [256, 32], strides = [1, 1]} : vector<256x128xf32> to vector<256x32xf32>
    %c240_i32_84 = arith.constant 240 : i32
    %225 = tpu.dynamic_rotate %224 by %c240_i32_84 dim 0 : vector<256x32xf32>, i32 -> vector<256x32xf32>
    %226 = vector.broadcast %22 : vector<256x1xf32> to vector<256x32xf32>
    %227 = arith.mulf %225, %226 : vector<256x32xf32>
    %228 = arith.addf %223, %227 : vector<256x32xf32>
    %229 = arith.addf %210, %228 : vector<256x32xf32>
    %cst_85 = arith.constant 0.000000e+00 : f32
    %230 = vector.broadcast %cst_85 : f32 to vector<256x32xf32>
    %231 = arith.maximumf %229, %230 : vector<256x32xf32>
    %232 = vector.extract_strided_slice %178 {offsets = [0, 0], sizes = [1, 32], strides = [1, 1]} : vector<6x32xf32> to vector<1x32xf32>
    %233 = vector.broadcast %232 : vector<1x32xf32> to vector<256x32xf32>
    %234 = arith.mulf %231, %233 : vector<256x32xf32>
    %235 = vector.extract_strided_slice %178 {offsets = [1, 0], sizes = [1, 32], strides = [1, 1]} : vector<6x32xf32> to vector<1x32xf32>
    %236 = vector.broadcast %235 : vector<1x32xf32> to vector<256x32xf32>
    %237 = arith.addf %234, %236 : vector<256x32xf32>
    %238 = vector.extract_strided_slice %178 {offsets = [2, 0], sizes = [1, 32], strides = [1, 1]} : vector<6x32xf32> to vector<1x32xf32>
    %239 = vector.broadcast %238 : vector<1x32xf32> to vector<256x32xf32>
    %240 = arith.mulf %211, %239 : vector<256x32xf32>
    %241 = vector.extract_strided_slice %178 {offsets = [3, 0], sizes = [1, 32], strides = [1, 1]} : vector<6x32xf32> to vector<1x32xf32>
    %242 = vector.broadcast %241 : vector<1x32xf32> to vector<256x32xf32>
    %243 = arith.addf %240, %242 : vector<256x32xf32>
    %244 = arith.addf %237, %243 : vector<256x32xf32>
    %cst_86 = arith.constant 0.000000e+00 : f32
    %245 = vector.broadcast %cst_86 : f32 to vector<256x32xf32>
    %246 = arith.maximumf %244, %245 : vector<256x32xf32>
    %247 = vector.extract_strided_slice %178 {offsets = [4, 0], sizes = [1, 32], strides = [1, 1]} : vector<6x32xf32> to vector<1x32xf32>
    %248 = vector.broadcast %247 : vector<1x32xf32> to vector<256x32xf32>
    %249 = arith.mulf %246, %248 : vector<256x32xf32>
    %250 = vector.extract_strided_slice %178 {offsets = [5, 0], sizes = [1, 32], strides = [1, 1]} : vector<6x32xf32> to vector<1x32xf32>
    %251 = vector.broadcast %250 : vector<1x32xf32> to vector<256x32xf32>
    %252 = arith.addf %249, %251 : vector<256x32xf32>
    %c3 = arith.constant 3 : index
    %c0_87 = arith.constant 0 : index
    %c0_88 = arith.constant 0 : index
    %253 = vector.load %arg4[%c3, %c0_87, %c0_88] : memref<4x6x32xf32, #tpu.memory_space<vmem>>, vector<1x6x32xf32>
    %254 = vector.shape_cast %253 : vector<1x6x32xf32> to vector<6x32xf32>
    %c1_i32_89 = arith.constant 1 : i32
    %255 = tpu.dynamic_rotate %252 by %c1_i32_89 dim 0 : vector<256x32xf32>, i32 -> vector<256x32xf32>
    %256 = vector.broadcast %7 : vector<256x1xf32> to vector<256x32xf32>
    %257 = arith.mulf %255, %256 : vector<256x32xf32>
    %c2_90 = arith.constant 2 : index
    %c0_91 = arith.constant 0 : index
    %c0_92 = arith.constant 0 : index
    %c0_93 = arith.constant 0 : index
    %258 = vector.load %arg3[%c2_90, %c0_91, %c0_92, %c0_93] : memref<3x3x32x128xf32, #tpu.memory_space<vmem>>, vector<1x1x32x128xf32>
    %259 = vector.shape_cast %258 : vector<1x1x32x128xf32> to vector<32x128xf32>
    %cst_94 = arith.constant dense<0.000000e+00> : vector<256x128xf32>
    %260 = tpu.matmul %257, %259, %cst_94 {dimension_numbers = #tpu.dot_dimension_numbers<[1], [0], [0], [1], [0, 0, 1, 1], [], []>} : vector<256x32xf32>, vector<32x128xf32>, vector<256x128xf32> -> vector<256x128xf32>
    %261 = vector.extract_strided_slice %260 {offsets = [0, 0], sizes = [256, 32], strides = [1, 1]} : vector<256x128xf32> to vector<256x32xf32>
    %c16_i32_95 = arith.constant 16 : i32
    %262 = tpu.dynamic_rotate %261 by %c16_i32_95 dim 0 : vector<256x32xf32>, i32 -> vector<256x32xf32>
    %263 = vector.broadcast %17 : vector<256x1xf32> to vector<256x32xf32>
    %264 = arith.mulf %262, %263 : vector<256x32xf32>
    %265 = vector.extract_strided_slice %260 {offsets = [0, 32], sizes = [256, 32], strides = [1, 1]} : vector<256x128xf32> to vector<256x32xf32>
    %266 = arith.addf %264, %265 : vector<256x32xf32>
    %267 = vector.extract_strided_slice %260 {offsets = [0, 64], sizes = [256, 32], strides = [1, 1]} : vector<256x128xf32> to vector<256x32xf32>
    %c240_i32_96 = arith.constant 240 : i32
    %268 = tpu.dynamic_rotate %267 by %c240_i32_96 dim 0 : vector<256x32xf32>, i32 -> vector<256x32xf32>
    %269 = vector.broadcast %22 : vector<256x1xf32> to vector<256x32xf32>
    %270 = arith.mulf %268, %269 : vector<256x32xf32>
    %271 = arith.addf %266, %270 : vector<256x32xf32>
    %c2_97 = arith.constant 2 : index
    %c1_98 = arith.constant 1 : index
    %c0_99 = arith.constant 0 : index
    %c0_100 = arith.constant 0 : index
    %272 = vector.load %arg3[%c2_97, %c1_98, %c0_99, %c0_100] : memref<3x3x32x128xf32, #tpu.memory_space<vmem>>, vector<1x1x32x128xf32>
    %273 = vector.shape_cast %272 : vector<1x1x32x128xf32> to vector<32x128xf32>
    %cst_101 = arith.constant dense<0.000000e+00> : vector<256x128xf32>
    %274 = tpu.matmul %252, %273, %cst_101 {dimension_numbers = #tpu.dot_dimension_numbers<[1], [0], [0], [1], [0, 0, 1, 1], [], []>} : vector<256x32xf32>, vector<32x128xf32>, vector<256x128xf32> -> vector<256x128xf32>
    %275 = vector.extract_strided_slice %274 {offsets = [0, 0], sizes = [256, 32], strides = [1, 1]} : vector<256x128xf32> to vector<256x32xf32>
    %c16_i32_102 = arith.constant 16 : i32
    %276 = tpu.dynamic_rotate %275 by %c16_i32_102 dim 0 : vector<256x32xf32>, i32 -> vector<256x32xf32>
    %277 = vector.broadcast %17 : vector<256x1xf32> to vector<256x32xf32>
    %278 = arith.mulf %276, %277 : vector<256x32xf32>
    %279 = vector.extract_strided_slice %274 {offsets = [0, 32], sizes = [256, 32], strides = [1, 1]} : vector<256x128xf32> to vector<256x32xf32>
    %280 = arith.addf %278, %279 : vector<256x32xf32>
    %281 = vector.extract_strided_slice %274 {offsets = [0, 64], sizes = [256, 32], strides = [1, 1]} : vector<256x128xf32> to vector<256x32xf32>
    %c240_i32_103 = arith.constant 240 : i32
    %282 = tpu.dynamic_rotate %281 by %c240_i32_103 dim 0 : vector<256x32xf32>, i32 -> vector<256x32xf32>
    %283 = vector.broadcast %22 : vector<256x1xf32> to vector<256x32xf32>
    %284 = arith.mulf %282, %283 : vector<256x32xf32>
    %285 = arith.addf %280, %284 : vector<256x32xf32>
    %286 = arith.addf %271, %285 : vector<256x32xf32>
    %287 = vector.extract_strided_slice %274 {offsets = [0, 96], sizes = [256, 32], strides = [1, 1]} : vector<256x128xf32> to vector<256x32xf32>
    %c255_i32_104 = arith.constant 255 : i32
    %288 = tpu.dynamic_rotate %252 by %c255_i32_104 dim 0 : vector<256x32xf32>, i32 -> vector<256x32xf32>
    %289 = vector.broadcast %12 : vector<256x1xf32> to vector<256x32xf32>
    %290 = arith.mulf %288, %289 : vector<256x32xf32>
    %c2_105 = arith.constant 2 : index
    %c2_106 = arith.constant 2 : index
    %c0_107 = arith.constant 0 : index
    %c0_108 = arith.constant 0 : index
    %291 = vector.load %arg3[%c2_105, %c2_106, %c0_107, %c0_108] : memref<3x3x32x128xf32, #tpu.memory_space<vmem>>, vector<1x1x32x128xf32>
    %292 = vector.shape_cast %291 : vector<1x1x32x128xf32> to vector<32x128xf32>
    %cst_109 = arith.constant dense<0.000000e+00> : vector<256x128xf32>
    %293 = tpu.matmul %290, %292, %cst_109 {dimension_numbers = #tpu.dot_dimension_numbers<[1], [0], [0], [1], [0, 0, 1, 1], [], []>} : vector<256x32xf32>, vector<32x128xf32>, vector<256x128xf32> -> vector<256x128xf32>
    %294 = vector.extract_strided_slice %293 {offsets = [0, 0], sizes = [256, 32], strides = [1, 1]} : vector<256x128xf32> to vector<256x32xf32>
    %c16_i32_110 = arith.constant 16 : i32
    %295 = tpu.dynamic_rotate %294 by %c16_i32_110 dim 0 : vector<256x32xf32>, i32 -> vector<256x32xf32>
    %296 = vector.broadcast %17 : vector<256x1xf32> to vector<256x32xf32>
    %297 = arith.mulf %295, %296 : vector<256x32xf32>
    %298 = vector.extract_strided_slice %293 {offsets = [0, 32], sizes = [256, 32], strides = [1, 1]} : vector<256x128xf32> to vector<256x32xf32>
    %299 = arith.addf %297, %298 : vector<256x32xf32>
    %300 = vector.extract_strided_slice %293 {offsets = [0, 64], sizes = [256, 32], strides = [1, 1]} : vector<256x128xf32> to vector<256x32xf32>
    %c240_i32_111 = arith.constant 240 : i32
    %301 = tpu.dynamic_rotate %300 by %c240_i32_111 dim 0 : vector<256x32xf32>, i32 -> vector<256x32xf32>
    %302 = vector.broadcast %22 : vector<256x1xf32> to vector<256x32xf32>
    %303 = arith.mulf %301, %302 : vector<256x32xf32>
    %304 = arith.addf %299, %303 : vector<256x32xf32>
    %305 = arith.addf %286, %304 : vector<256x32xf32>
    %cst_112 = arith.constant 0.000000e+00 : f32
    %306 = vector.broadcast %cst_112 : f32 to vector<256x32xf32>
    %307 = arith.maximumf %305, %306 : vector<256x32xf32>
    %308 = vector.extract_strided_slice %254 {offsets = [0, 0], sizes = [1, 32], strides = [1, 1]} : vector<6x32xf32> to vector<1x32xf32>
    %309 = vector.broadcast %308 : vector<1x32xf32> to vector<256x32xf32>
    %310 = arith.mulf %307, %309 : vector<256x32xf32>
    %311 = vector.extract_strided_slice %254 {offsets = [1, 0], sizes = [1, 32], strides = [1, 1]} : vector<6x32xf32> to vector<1x32xf32>
    %312 = vector.broadcast %311 : vector<1x32xf32> to vector<256x32xf32>
    %313 = arith.addf %310, %312 : vector<256x32xf32>
    %314 = vector.extract_strided_slice %254 {offsets = [2, 0], sizes = [1, 32], strides = [1, 1]} : vector<6x32xf32> to vector<1x32xf32>
    %315 = vector.broadcast %314 : vector<1x32xf32> to vector<256x32xf32>
    %316 = arith.mulf %287, %315 : vector<256x32xf32>
    %317 = vector.extract_strided_slice %254 {offsets = [3, 0], sizes = [1, 32], strides = [1, 1]} : vector<6x32xf32> to vector<1x32xf32>
    %318 = vector.broadcast %317 : vector<1x32xf32> to vector<256x32xf32>
    %319 = arith.addf %316, %318 : vector<256x32xf32>
    %320 = arith.addf %313, %319 : vector<256x32xf32>
    %cst_113 = arith.constant 0.000000e+00 : f32
    %321 = vector.broadcast %cst_113 : f32 to vector<256x32xf32>
    %322 = arith.maximumf %320, %321 : vector<256x32xf32>
    %323 = vector.extract_strided_slice %254 {offsets = [4, 0], sizes = [1, 32], strides = [1, 1]} : vector<6x32xf32> to vector<1x32xf32>
    %324 = vector.broadcast %323 : vector<1x32xf32> to vector<256x32xf32>
    %325 = arith.mulf %322, %324 : vector<256x32xf32>
    %326 = vector.extract_strided_slice %254 {offsets = [5, 0], sizes = [1, 32], strides = [1, 1]} : vector<6x32xf32> to vector<1x32xf32>
    %327 = vector.broadcast %326 : vector<1x32xf32> to vector<256x32xf32>
    %328 = arith.addf %325, %327 : vector<256x32xf32>
    %c0_114 = arith.constant 0 : index
    %c0_115 = arith.constant 0 : index
    %c0_116 = arith.constant 0 : index
    %329 = vector.load %arg5[%c0_114, %c0_115, %c0_116] : memref<1x256x32xf32, #tpu.memory_space<vmem>>, vector<1x256x32xf32>
    %330 = vector.shape_cast %329 : vector<1x256x32xf32> to vector<256x32xf32>
    %331 = vector.shape_cast %328 : vector<256x32xf32> to vector<1x256x32xf32>
    tpu.vector_store %arg5[%c0_114, %c0_115, %c0_116], %331 {strides = array<i32>} : memref<1x256x32xf32, #tpu.memory_space<vmem>>, vector<1x256x32xf32>,
    return
  }
  func.func @transform_0(%arg0: i32) -> (i32, i32, i32) {
    %c0_i32 = arith.constant 0 : i32
    %c0_i32_0 = arith.constant 0 : i32
    %c0_i32_1 = arith.constant 0 : i32
    return %arg0, %c0_i32, %c0_i32_0 : i32, i32, i32
  }
  func.func @transform_1(%arg0: i32) -> (i32, i32, i32) {
    %c0_i32 = arith.constant 0 : i32
    %c0_i32_0 = arith.constant 0 : i32
    %c0_i32_1 = arith.constant 0 : i32
    %c0_i32_2 = arith.constant 0 : i32
    return %c0_i32, %c0_i32_0, %c0_i32_1 : i32, i32, i32
  }
  func.func @transform_2(%arg0: i32) -> (i32, i32, i32, i32) {
    %c0_i32 = arith.constant 0 : i32
    %c0_i32_0 = arith.constant 0 : i32
    %c0_i32_1 = arith.constant 0 : i32
    %c0_i32_2 = arith.constant 0 : i32
    %c0_i32_3 = arith.constant 0 : i32
    return %c0_i32, %c0_i32_0, %c0_i32_1, %c0_i32_2 : i32, i32, i32, i32
  }
  func.func @transform_3(%arg0: i32) -> (i32, i32, i32) {
    %c0_i32 = arith.constant 0 : i32
    %c0_i32_0 = arith.constant 0 : i32
    %c0_i32_1 = arith.constant 0 : i32
    %c0_i32_2 = arith.constant 0 : i32
    return %c0_i32, %c0_i32_0, %c0_i32_1 : i32, i32, i32
  }
  func.func @transform_4(%arg0: i32) -> (i32, i32, i32) {
    %c0_i32 = arith.constant 0 : i32
    %c0_i32_0 = arith.constant 0 : i32
    %c0_i32_1 = arith.constant 0 : i32
    return %arg0, %c0_i32, %c0_i32_0 : i32, i32, i32
  }
}

</mosaic_0001>

<llo_original>
// kernel: _respath1_impl.1
$region0: #{_respath1_impl.1}
  #allocation0 [shape = 'u32[]', space=smem, size = 0x4, offset = 0x4, fixed_abs, tag = 'smem constant byte address 0x4 - core index']
  #allocation1 [shape = 'u32[144,128]{1,0:T(1,128)}', space=vmem, size = 0x12000, scoped, tag = 'internal scratch']
  %s0 = inlined_call_operand.vmem [shape: f32[2,256,4], index: 0, kind: input, shape index: {}]
  %s1 = inlined_call_operand.vmem [shape: f32[3,4,128], index: 1, kind: input, shape index: {}]
  %s2 = inlined_call_operand.vmem [shape: f32[3,3,32,128], index: 2, kind: input, shape index: {}]
  %s3 = inlined_call_operand.vmem [shape: f32[4,6,32], index: 3, kind: input, shape index: {}]
  %s4 = inlined_call_operand.hbm [shape: f32[2,256,32], index: 4, kind: output, shape index: {}]
  %s5 = sld [smem:[#allocation0]]
  $region49: #{_respath1_impl.1} parent=0
    _
  %s7 = ssub.s32 1, %s5
  %s8 = scalar_select 0, %s7, %s5
  $region1: #{_respath1_impl.1} parent=0
    #allocation2 [shape = 'u8[262144]{0}', space=vmem, size = 0x40000, scoped, tag = 'output window, operand 0']
    #allocation3 [shape = 's32[2]{0}', space=sflag, size = 0x8, scoped, tag = 'scoped memory for _respath1_impl.1']
    %9 = vsyncpa [#allocation3], 0
    %s10 = scalar_lea.sflag [#allocation3], 1
    %11 = vsyncpa %s10, 0
    loop: start=0, step=1, limit=4
    $region2: #{_respath1_impl.1} parent=1 // loop_pre_header
      _
    $region3: #{_respath1_impl.1} parent=1 // loop_header
      %s13 = sphi 0, %s17
      %p14 = scmp.ge.s32.totalorder %s13, 4
      %s23 = sphi 0, %s25
      %s26 = sphi 0, %s23
      %s27 = sphi 0, %s26
      %s43 = sphi 0, %s27
      %s47 = sphi 0, %s47
      %s49 = sphi 0, %s47
      %s50 = sphi 0, %s49
      %s64 = sphi 0, %s50
      %s68 = sphi 0, %s68
      %s70 = sphi 0, %s68
      %s71 = sphi 0, %s70
      %s85 = sphi 0, %s71
      %s89 = sphi 0, %s89
      %s91 = sphi 0, %s89
      %s92 = sphi 0, %s91
      %s106 = sphi 0, %s92
      %s112 = sphi 0, %s114
      %s115 = sphi 0, %s112
      %s116 = sphi 0, %s115
      %s132 = sphi 0, %s116
    $region4: #{_respath1_impl.1} parent=1 // loop_header_branch
      %16 = sbr.rel (%p14) target = $region8
    $region5: #{_respath1_impl.1} parent=1 // loop_body
      %s18 = ssub.s32 %s13, 1
      %s19 = ssub.s32 %s13, 2
      %s20 = sadd.s32 %s13, 1
      %s21 = ssub.s32 %s13, %s20
      %p22 = scmp.eq.s32.totalorder %s21, 0
      %s24 = sadd.s32 %s23, 1
      %s25 = scalar_select %p22, %s23, %s24
      %p28 = pneg %p22
      %p29 = scmp.eq.s32.totalorder %s13, 1
      %p30 = por %p28, %p29
      %p31 = scmp.ne.s32.totalorder %s23, %s26
      %p32 = scmp.eq.s32.totalorder %s13, 0
      %p33 = por %p31, %p32
      %p34 = scmp.ne.s32.totalorder %s23, %s26
      %p35 = scmp.eq.s32.totalorder %s18, 1
      %p36 = por %p34, %p35
      %p37 = scmp.ne.s32.totalorder %s26, %s27
      %p38 = scmp.eq.s32.totalorder %s18, 0
      %p39 = por %p37, %p38
      %p40 = scmp.ne.s32.totalorder %s26, %s27
      %p41 = scmp.eq.s32.totalorder %s19, 1
      %p42 = por %p40, %p41
      %p44 = scmp.ne.s32.totalorder %s27, %s43
      %p45 = scmp.eq.s32.totalorder %s19, 0
      %p46 = por %p44, %p45
      %s48 = sadd.s32 %s47, 1
      %p51 = scmp.eq.s32.totalorder %s13, 1
      %p52 = scmp.ne.s32.totalorder %s47, %s49
      %p53 = scmp.eq.s32.totalorder %s13, 0
      %p54 = por %p52, %p53
      %p55 = scmp.ne.s32.totalorder %s47, %s49
      %p56 = scmp.eq.s32.totalorder %s18, 1
      %p57 = por %p55, %p56
      %p58 = scmp.ne.s32.totalorder %s49, %s50
      %p59 = scmp.eq.s32.totalorder %s18, 0
      %p60 = por %p58, %p59
      %p61 = scmp.ne.s32.totalorder %s49, %s50
      %p62 = scmp.eq.s32.totalorder %s19, 1
      %p63 = por %p61, %p62
      %p65 = scmp.ne.s32.totalorder %s50, %s64
      %p66 = scmp.eq.s32.totalorder %s19, 0
      %p67 = por %p65, %p66
      %s69 = sadd.s32 %s68, 1
      %p72 = scmp.eq.s32.totalorder %s13, 1
      %p73 = scmp.ne.s32.totalorder %s68, %s70
      %p74 = scmp.eq.s32.totalorder %s13, 0
      %p75 = por %p73, %p74
      %p76 = scmp.ne.s32.totalorder %s68, %s70
      %p77 = scmp.eq.s32.totalorder %s18, 1
      %p78 = por %p76, %p77
      %p79 = scmp.ne.s32.totalorder %s70, %s71
      %p80 = scmp.eq.s32.totalorder %s18, 0
      %p81 = por %p79, %p80
      %p82 = scmp.ne.s32.totalorder %s70, %s71
      %p83 = scmp.eq.s32.totalorder %s19, 1
      %p84 = por %p82, %p83
      %p86 = scmp.ne.s32.totalorder %s71, %s85
      %p87 = scmp.eq.s32.totalorder %s19, 0
      %p88 = por %p86, %p87
      %s90 = sadd.s32 %s89, 1
      %p93 = scmp.eq.s32.totalorder %s13, 1
      %p94 = scmp.ne.s32.totalorder %s89, %s91
      %p95 = scmp.eq.s32.totalorder %s13, 0
      %p96 = por %p94, %p95
      %p97 = scmp.ne.s32.totalorder %s89, %s91
      %p98 = scmp.eq.s32.totalorder %s18, 1
      %p99 = por %p97, %p98
      %p100 = scmp.ne.s32.totalorder %s91, %s92
      %p101 = scmp.eq.s32.totalorder %s18, 0
      %p102 = por %p100, %p101
      %p103 = scmp.ne.s32.totalorder %s91, %s92
      %p104 = scmp.eq.s32.totalorder %s19, 1
      %p105 = por %p103, %p104
      %p107 = scmp.ne.s32.totalorder %s92, %s106
      %p108 = scmp.eq.s32.totalorder %s19, 0
      %p109 = por %p107, %p108
      %s110 = ssub.s32 %s13, %s20
      %p111 = scmp.eq.s32.totalorder %s110, 0
      %s113 = sadd.s32 %s112, 1
      %s114 = scalar_select %p111, %s112, %s113
      %p117 = pneg %p111
      %p118 = scmp.eq.s32.totalorder %s13, 1
      %p119 = por %p117, %p118
      %p120 = scmp.ne.s32.totalorder %s112, %s115
      %p121 = scmp.eq.s32.totalorder %s13, 0
      %p122 = por %p120, %p121
      %p123 = scmp.ne.s32.totalorder %s112, %s115
      %p124 = scmp.eq.s32.totalorder %s18, 1
      %p125 = por %p123, %p124
      %p126 = scmp.ne.s32.totalorder %s115, %s116
      %p127 = scmp.eq.s32.totalorder %s18, 0
      %p128 = por %p126, %p127
      %p129 = scmp.ne.s32.totalorder %s115, %s116
      %p130 = scmp.eq.s32.totalorder %s19, 1
      %p131 = por %p129, %p130
      %p133 = scmp.ne.s32.totalorder %s116, %s132
      %p134 = scmp.eq.s32.totalorder %s19, 0
      %p135 = por %p133, %p134
      %p136 = scmp.le.s32.totalorder 1, %s13
      %p137 = scmp.lt.s32.totalorder %s13, 3
      %p138 = pnand %p136, %p137
      %p139 = pneg %p138
      // Predicated region
      $region9: #{_respath1_impl.1} parent=5 // pred_check
        _
      $region10: #{_respath1_impl.1} parent=5 // pred_check_branch
        %141 = sbr.rel (%p138) target = $region12
      $region11: #{_respath1_impl.1} parent=5 // pred_region
        %s142 = ssub.s32 %s13, 1
        // Predicated region
        $region13: #{_respath1_impl.1} parent=11 // pred_check
          %p143 = pneg %p60
        $region14: #{_respath1_impl.1} parent=11 // pred_check_branch
          %145 = sbr.rel (%p143) target = $region16
        $region15: #{_respath1_impl.1} parent=11 // pred_region
          _
        $region16: #{_respath1_impl.1} parent=11 // pred_fallthru
          _
        // Predicated region
        $region17: #{_respath1_impl.1} parent=11 // pred_check
          %p146 = pneg %p81
        $region18: #{_respath1_impl.1} parent=11 // pred_check_branch
          %148 = sbr.rel (%p146) target = $region20
        $region19: #{_respath1_impl.1} parent=11 // pred_region
          _
        $region20: #{_respath1_impl.1} parent=11 // pred_fallthru
          _
        // Predicated region
        $region21: #{_respath1_impl.1} parent=11 // pred_check
          %p149 = pneg %p102
        $region22: #{_respath1_impl.1} parent=11 // pred_check_branch
          %151 = sbr.rel (%p149) target = $region24
        $region23: #{_respath1_impl.1} parent=11 // pred_region
          _
        $region24: #{_respath1_impl.1} parent=11 // pred_fallthru
          _
      $region12: #{_respath1_impl.1} parent=5 // pred_fallthru
        _
      %p152 = scmp.lt.s32.totalorder %s13, 2
      // Predicated region
      $region25: #{_respath1_impl.1} parent=5 // pred_check
        %p153 = pneg %p152
      $region26: #{_respath1_impl.1} parent=5 // pred_check_branch
        %155 = sbr.rel (%p153) target = $region28
      $region27: #{_respath1_impl.1} parent=5 // pred_region
        // Predicated region
        $region29: #{_respath1_impl.1} parent=27 // pred_check
          %p156 = pneg %p33
        $region30: #{_respath1_impl.1} parent=27 // pred_check_branch
          %158 = sbr.rel (%p156) target = $region32
        $region31: #{_respath1_impl.1} parent=27 // pred_region
          %p159 = scmp.lt.s32.totalorder %s13, 1
          %s160 = scalar_select %p159, %s13, 1
          %s161 = smul.addr %s160, 32
          %s162 = smul.addr %s161, 8
          %s163 = scalar_lea.vmem %s0, %s162
        $region32: #{_respath1_impl.1} parent=27 // pred_fallthru
          _
      $region28: #{_respath1_impl.1} parent=5 // pred_fallthru
        _
      %p164 = scmp.le.s32.totalorder 1, %s13
      %p165 = scmp.lt.s32.totalorder %s13, 3
      %p166 = pnand %p164, %p165
      %p167 = pneg %p166
      // Predicated region
      $region33: #{_respath1_impl.1} parent=5 // pred_check
        _
      $region34: #{_respath1_impl.1} parent=5 // pred_check_branch
        %169 = sbr.rel (%p166) target = $region36
      $region35: #{_respath1_impl.1} parent=5 // pred_region
        %s170 = ssub.s32 %s13, 1
        %p171 = scmp.lt.s32.totalorder %s18, 1
        %s172 = scalar_select %p171, %s18, 1
        %s173 = smul.addr %s172, 32
        %s174 = smul.addr %s173, 8
        %s175 = scalar_lea.vmem %s0, %s174
        %p176 = pneg %p39
        %p177 = pneg %p36
        %p178 = pneg %p60
        %p179 = pneg %p57
        %p180 = pneg %p81
        %p181 = pneg %p78
        %p182 = pneg %p102
        %p183 = pneg %p99
        %p184 = pneg %p128
        %p185 = pneg %p125
        %s186 = sand.u32 %s115, 1
        %s187 = scalar_lea.sflag [#allocation3], %s186
        %s188 = sand.u32 %s115, 1
        %s189 = smul.addr %s188, 256
        %s190 = scalar_lea.vmem [#allocation2], %s189
        %p191 = scmp.lt.s32.totalorder %s18, 1
        %s192 = scalar_select %p191, %s18, 1
        %s193 = smul.addr %s192, 32
        %s194 = smul.addr %s193, 8
        %s195 = scalar_lea.vmem %s0, %s194
        %v196 = vlaneseq
        %v197 = vshrl.u32 %v196, 7
        %v198 = vadd.s32 %v197, 8
        %v199 = vadd.s32 %v197, 16
        %v200 = vadd.s32 %v197, 24
        %v201 = vadd.s32 %v197, 32
        %v202 = vadd.s32 %v197, 40
        %v203 = vadd.s32 %v197, 48
        %v204 = vadd.s32 %v197, 56
        %v205 = vadd.s32 %v197, 64
        %v206 = vadd.s32 %v197, 72
        %v207 = vadd.s32 %v197, 80
        %v208 = vadd.s32 %v197, 88
        %v209 = vadd.s32 %v197, 96
        %v210 = vadd.s32 %v197, 104
        %v211 = vadd.s32 %v197, 112
        %v212 = vadd.s32 %v197, 120
        %v213 = vadd.s32 %v197, 128
        %v214 = vadd.s32 %v197, 136
        %v215 = vadd.s32 %v197, 144
        %v216 = vadd.s32 %v197, 152
        %v217 = vadd.s32 %v197, 160
        %v218 = vadd.s32 %v197, 168
        %v219 = vadd.s32 %v197, 176
        %v220 = vadd.s32 %v197, 184
        %v221 = vadd.s32 %v197, 192
        %v222 = vadd.s32 %v197, 200
        %v223 = vadd.s32 %v197, 208
        %v224 = vadd.s32 %v197, 216
        %v225 = vadd.s32 %v197, 224
        %v226 = vadd.s32 %v197, 232
        %v227 = vadd.s32 %v197, 240
        %v228 = vadd.s32 %v197, 248
        %v229 = vand.u32 %v197, 15
        %v230 = vand.u32 %v198, 15
        %v231 = vand.u32 %v199, 15
        %v232 = vand.u32 %v200, 15
        %v233 = vand.u32 %v201, 15
        %v234 = vand.u32 %v202, 15
        %v235 = vand.u32 %v203, 15
        %v236 = vand.u32 %v204, 15
        %v237 = vand.u32 %v205, 15
        %v238 = vand.u32 %v206, 15
        %v239 = vand.u32 %v207, 15
        %v240 = vand.u32 %v208, 15
        %v241 = vand.u32 %v209, 15
        %v242 = vand.u32 %v210, 15
        %v243 = vand.u32 %v211, 15
        %v244 = vand.u32 %v212, 15
        %v245 = vand.u32 %v213, 15
        %v246 = vand.u32 %v214, 15
        %v247 = vand.u32 %v215, 15
        %v248 = vand.u32 %v216, 15
        %v249 = vand.u32 %v217, 15
        %v250 = vand.u32 %v218, 15
        %v251 = vand.u32 %v219, 15
        %v252 = vand.u32 %v220, 15
        %v253 = vand.u32 %v221, 15
        %v254 = vand.u32 %v222, 15
        %v255 = vand.u32 %v223, 15
        %v256 = vand.u32 %v224, 15
        %v257 = vand.u32 %v225, 15
        %v258 = vand.u32 %v226, 15
        %v259 = vand.u32 %v227, 15
        %v260 = vand.u32 %v228, 15
        %vm261 = vcmp.ne.s32.totalorder %v229, 0
        %vm262 = vcmp.ne.s32.totalorder %v230, 0
        %vm263 = vcmp.ne.s32.totalorder %v231, 0
        %vm264 = vcmp.ne.s32.totalorder %v232, 0
        %vm265 = vcmp.ne.s32.totalorder %v233, 0
        %vm266 = vcmp.ne.s32.totalorder %v234, 0
        %vm267 = vcmp.ne.s32.totalorder %v235, 0
        %vm268 = vcmp.ne.s32.totalorder %v236, 0
        %vm269 = vcmp.ne.s32.totalorder %v237, 0
        %vm270 = vcmp.ne.s32.totalorder %v238, 0
        %vm271 = vcmp.ne.s32.totalorder %v239, 0
        %vm272 = vcmp.ne.s32.totalorder %v240, 0
        %vm273 = vcmp.ne.s32.totalorder %v241, 0
        %vm274 = vcmp.ne.s32.totalorder %v242, 0
        %vm275 = vcmp.ne.s32.totalorder %v243, 0
        %vm276 = vcmp.ne.s32.totalorder %v244, 0
        %vm277 = vcmp.ne.s32.totalorder %v245, 0
        %vm278 = vcmp.ne.s32.totalorder %v246, 0
        %vm279 = vcmp.ne.s32.totalorder %v247, 0
        %vm280 = vcmp.ne.s32.totalorder %v248, 0
        %vm281 = vcmp.ne.s32.totalorder %v249, 0
        %vm282 = vcmp.ne.s32.totalorder %v250, 0
        %vm283 = vcmp.ne.s32.totalorder %v251, 0
        %vm284 = vcmp.ne.s32.totalorder %v252, 0
        %vm285 = vcmp.ne.s32.totalorder %v253, 0
        %vm286 = vcmp.ne.s32.totalorder %v254, 0
        %vm287 = vcmp.ne.s32.totalorder %v255, 0
        %vm288 = vcmp.ne.s32.totalorder %v256, 0
        %vm289 = vcmp.ne.s32.totalorder %v257, 0
        %vm290 = vcmp.ne.s32.totalorder %v258, 0
        %vm291 = vcmp.ne.s32.totalorder %v259, 0
        %vm292 = vcmp.ne.s32.totalorder %v260, 0
        %v293 = vsel %vm261, 1.0, 0.0
        %v294 = vsel %vm262, 1.0, 0.0
        %v295 = vsel %vm263, 1.0, 0.0
        %v296 = vsel %vm264, 1.0, 0.0
        %v297 = vsel %vm265, 1.0, 0.0
        %v298 = vsel %vm266, 1.0, 0.0
        %v299 = vsel %vm267, 1.0, 0.0
        %v300 = vsel %vm268, 1.0, 0.0
        %v301 = vsel %vm269, 1.0, 0.0
        %v302 = vsel %vm270, 1.0, 0.0
        %v303 = vsel %vm271, 1.0, 0.0
        %v304 = vsel %vm272, 1.0, 0.0
        %v305 = vsel %vm273, 1.0, 0.0
        %v306 = vsel %vm274, 1.0, 0.0
        %v307 = vsel %vm275, 1.0, 0.0
        %v308 = vsel %vm276, 1.0, 0.0
        %v309 = vsel %vm277, 1.0, 0.0
        %v310 = vsel %vm278, 1.0, 0.0
        %v311 = vsel %vm279, 1.0, 0.0
        %v312 = vsel %vm280, 1.0, 0.0
        %v313 = vsel %vm281, 1.0, 0.0
        %v314 = vsel %vm282, 1.0, 0.0
        %v315 = vsel %vm283, 1.0, 0.0
        %v316 = vsel %vm284, 1.0, 0.0
        %v317 = vsel %vm285, 1.0, 0.0
        %v318 = vsel %vm286, 1.0, 0.0
        %v319 = vsel %vm287, 1.0, 0.0
        %v320 = vsel %vm288, 1.0, 0.0
        %v321 = vsel %vm289, 1.0, 0.0
        %v322 = vsel %vm290, 1.0, 0.0
        %v323 = vsel %vm291, 1.0, 0.0
        %v324 = vsel %vm292, 1.0, 0.0
        %vm325 = vcmp.ne.s32.totalorder %v229, 15
        %vm326 = vcmp.ne.s32.totalorder %v230, 15
        %vm327 = vcmp.ne.s32.totalorder %v231, 15
        %vm328 = vcmp.ne.s32.totalorder %v232, 15
        %vm329 = vcmp.ne.s32.totalorder %v233, 15
        %vm330 = vcmp.ne.s32.totalorder %v234, 15
        %vm331 = vcmp.ne.s32.totalorder %v235, 15
        %vm332 = vcmp.ne.s32.totalorder %v236, 15
        %vm333 = vcmp.ne.s32.totalorder %v237, 15
        %vm334 = vcmp.ne.s32.totalorder %v238, 15
        %vm335 = vcmp.ne.s32.totalorder %v239, 15
        %vm336 = vcmp.ne.s32.totalorder %v240, 15
        %vm337 = vcmp.ne.s32.totalorder %v241, 15
        %vm338 = vcmp.ne.s32.totalorder %v242, 15
        %vm339 = vcmp.ne.s32.totalorder %v243, 15
        %vm340 = vcmp.ne.s32.totalorder %v244, 15
        %vm341 = vcmp.ne.s32.totalorder %v245, 15
        %vm342 = vcmp.ne.s32.totalorder %v246, 15
        %vm343 = vcmp.ne.s32.totalorder %v247, 15
        %vm344 = vcmp.ne.s32.totalorder %v248, 15
        %vm345 = vcmp.ne.s32.totalorder %v249, 15
        %vm346 = vcmp.ne.s32.totalorder %v250, 15
        %vm347 = vcmp.ne.s32.totalorder %v251, 15
        %vm348 = vcmp.ne.s32.totalorder %v252, 15
        %vm349 = vcmp.ne.s32.totalorder %v253, 15
        %vm350 = vcmp.ne.s32.totalorder %v254, 15
        %vm351 = vcmp.ne.s32.totalorder %v255, 15
        %vm352 = vcmp.ne.s32.totalorder %v256, 15
        %vm353 = vcmp.ne.s32.totalorder %v257, 15
        %vm354 = vcmp.ne.s32.totalorder %v258, 15
        %vm355 = vcmp.ne.s32.totalorder %v259, 15
        %vm356 = vcmp.ne.s32.totalorder %v260, 15
        %v357 = vsel %vm325, 1.0, 0.0
        %v358 = vsel %vm326, 1.0, 0.0
        %v359 = vsel %vm327, 1.0, 0.0
        %v360 = vsel %vm328, 1.0, 0.0
        %v361 = vsel %vm329, 1.0, 0.0
        %v362 = vsel %vm330, 1.0, 0.0
        %v363 = vsel %vm331, 1.0, 0.0
        %v364 = vsel %vm332, 1.0, 0.0
        %v365 = vsel %vm333, 1.0, 0.0
        %v366 = vsel %vm334, 1.0, 0.0
        %v367 = vsel %vm335, 1.0, 0.0
        %v368 = vsel %vm336, 1.0, 0.0
        %v369 = vsel %vm337, 1.0, 0.0
        %v370 = vsel %vm338, 1.0, 0.0
        %v371 = vsel %vm339, 1.0, 0.0
        %v372 = vsel %vm340, 1.0, 0.0
        %v373 = vsel %vm341, 1.0, 0.0
        %v374 = vsel %vm342, 1.0, 0.0
        %v375 = vsel %vm343, 1.0, 0.0
        %v376 = vsel %vm344, 1.0, 0.0
        %v377 = vsel %vm345, 1.0, 0.0
        %v378 = vsel %vm346, 1.0, 0.0
        %v379 = vsel %vm347, 1.0, 0.0
        %v380 = vsel %vm348, 1.0, 0.0
        %v381 = vsel %vm349, 1.0, 0.0
        %v382 = vsel %vm350, 1.0, 0.0
        %v383 = vsel %vm351, 1.0, 0.0
        %v384 = vsel %vm352, 1.0, 0.0
        %v385 = vsel %vm353, 1.0, 0.0
        %v386 = vsel %vm354, 1.0, 0.0
        %v387 = vsel %vm355, 1.0, 0.0
        %v388 = vsel %vm356, 1.0, 0.0
        %vm389 = vcmp.ge.s32.totalorder %v197, 16
        %vm390 = vcmp.ge.s32.totalorder %v198, 16
        %vm391 = vcmp.ge.s32.totalorder %v199, 16
        %vm392 = vcmp.ge.s32.totalorder %v200, 16
        %vm393 = vcmp.ge.s32.totalorder %v201, 16
        %vm394 = vcmp.ge.s32.totalorder %v202, 16
        %vm395 = vcmp.ge.s32.totalorder %v203, 16
        %vm396 = vcmp.ge.s32.totalorder %v204, 16
        %vm397 = vcmp.ge.s32.totalorder %v205, 16
        %vm398 = vcmp.ge.s32.totalorder %v206, 16
        %vm399 = vcmp.ge.s32.totalorder %v207, 16
        %vm400 = vcmp.ge.s32.totalorder %v208, 16
        %vm401 = vcmp.ge.s32.totalorder %v209, 16
        %vm402 = vcmp.ge.s32.totalorder %v210, 16
        %vm403 = vcmp.ge.s32.totalorder %v211, 16
        %vm404 = vcmp.ge.s32.totalorder %v212, 16
        %vm405 = vcmp.ge.s32.totalorder %v213, 16
        %vm406 = vcmp.ge.s32.totalorder %v214, 16
        %vm407 = vcmp.ge.s32.totalorder %v215, 16
        %vm408 = vcmp.ge.s32.totalorder %v216, 16
        %vm409 = vcmp.ge.s32.totalorder %v217, 16
        %vm410 = vcmp.ge.s32.totalorder %v218, 16
        %vm411 = vcmp.ge.s32.totalorder %v219, 16
        %vm412 = vcmp.ge.s32.totalorder %v220, 16
        %vm413 = vcmp.ge.s32.totalorder %v221, 16
        %vm414 = vcmp.ge.s32.totalorder %v222, 16
        %vm415 = vcmp.ge.s32.totalorder %v223, 16
        %vm416 = vcmp.ge.s32.totalorder %v224, 16
        %vm417 = vcmp.ge.s32.totalorder %v225, 16
        %vm418 = vcmp.ge.s32.totalorder %v226, 16
        %vm419 = vcmp.ge.s32.totalorder %v227, 16
        %vm420 = vcmp.ge.s32.totalorder %v228, 16
        %v421 = vsel %vm389, 1.0, 0.0
        %v422 = vsel %vm390, 1.0, 0.0
        %v423 = vsel %vm391, 1.0, 0.0
        %v424 = vsel %vm392, 1.0, 0.0
        %v425 = vsel %vm393, 1.0, 0.0
        %v426 = vsel %vm394, 1.0, 0.0
        %v427 = vsel %vm395, 1.0, 0.0
        %v428 = vsel %vm396, 1.0, 0.0
        %v429 = vsel %vm397, 1.0, 0.0
        %v430 = vsel %vm398, 1.0, 0.0
        %v431 = vsel %vm399, 1.0, 0.0
        %v432 = vsel %vm400, 1.0, 0.0
        %v433 = vsel %vm401, 1.0, 0.0
        %v434 = vsel %vm402, 1.0, 0.0
        %v435 = vsel %vm403, 1.0, 0.0
        %v436 = vsel %vm404, 1.0, 0.0
        %v437 = vsel %vm405, 1.0, 0.0
        %v438 = vsel %vm406, 1.0, 0.0
        %v439 = vsel %vm407, 1.0, 0.0
        %v440 = vsel %vm408, 1.0, 0.0
        %v441 = vsel %vm409, 1.0, 0.0
        %v442 = vsel %vm410, 1.0, 0.0
        %v443 = vsel %vm411, 1.0, 0.0
        %v444 = vsel %vm412, 1.0, 0.0
        %v445 = vsel %vm413, 1.0, 0.0
        %v446 = vsel %vm414, 1.0, 0.0
        %v447 = vsel %vm415, 1.0, 0.0
        %v448 = vsel %vm416, 1.0, 0.0
        %v449 = vsel %vm417, 1.0, 0.0
        %v450 = vsel %vm418, 1.0, 0.0
        %v451 = vsel %vm419, 1.0, 0.0
        %v452 = vsel %vm420, 1.0, 0.0
        %vm453 = vcmp.lt.s32.totalorder %v197, 240
        %vm454 = vcmp.lt.s32.totalorder %v198, 240
        %vm455 = vcmp.lt.s32.totalorder %v199, 240
        %vm456 = vcmp.lt.s32.totalorder %v200, 240
        %vm457 = vcmp.lt.s32.totalorder %v201, 240
        %vm458 = vcmp.lt.s32.totalorder %v202, 240
        %vm459 = vcmp.lt.s32.totalorder %v203, 240
        %vm460 = vcmp.lt.s32.totalorder %v204, 240
        %vm461 = vcmp.lt.s32.totalorder %v205, 240
        %vm462 = vcmp.lt.s32.totalorder %v206, 240
        %vm463 = vcmp.lt.s32.totalorder %v207, 240
        %vm464 = vcmp.lt.s32.totalorder %v208, 240
        %vm465 = vcmp.lt.s32.totalorder %v209, 240
        %vm466 = vcmp.lt.s32.totalorder %v210, 240
        %vm467 = vcmp.lt.s32.totalorder %v211, 240
        %vm468 = vcmp.lt.s32.totalorder %v212, 240
        %vm469 = vcmp.lt.s32.totalorder %v213, 240
        %vm470 = vcmp.lt.s32.totalorder %v214, 240
        %vm471 = vcmp.lt.s32.totalorder %v215, 240
        %vm472 = vcmp.lt.s32.totalorder %v216, 240
        %vm473 = vcmp.lt.s32.totalorder %v217, 240
        %vm474 = vcmp.lt.s32.totalorder %v218, 240
        %vm475 = vcmp.lt.s32.totalorder %v219, 240
        %vm476 = vcmp.lt.s32.totalorder %v220, 240
        %vm477 = vcmp.lt.s32.totalorder %v221, 240
        %vm478 = vcmp.lt.s32.totalorder %v222, 240
        %vm479 = vcmp.lt.s32.totalorder %v223, 240
        %vm480 = vcmp.lt.s32.totalorder %v224, 240
        %vm481 = vcmp.lt.s32.totalorder %v225, 240
        %vm482 = vcmp.lt.s32.totalorder %v226, 240
        %vm483 = vcmp.lt.s32.totalorder %v227, 240
        %vm484 = vcmp.lt.s32.totalorder %v228, 240
        %v485 = vsel %vm453, 1.0, 0.0
        %v486 = vsel %vm454, 1.0, 0.0
        %v487 = vsel %vm455, 1.0, 0.0
        %v488 = vsel %vm456, 1.0, 0.0
        %v489 = vsel %vm457, 1.0, 0.0
        %v490 = vsel %vm458, 1.0, 0.0
        %v491 = vsel %vm459, 1.0, 0.0
        %v492 = vsel %vm460, 1.0, 0.0
        %v493 = vsel %vm461, 1.0, 0.0
        %v494 = vsel %vm462, 1.0, 0.0
        %v495 = vsel %vm463, 1.0, 0.0
        %v496 = vsel %vm464, 1.0, 0.0
        %v497 = vsel %vm465, 1.0, 0.0
        %v498 = vsel %vm466, 1.0, 0.0
        %v499 = vsel %vm467, 1.0, 0.0
        %v500 = vsel %vm468, 1.0, 0.0
        %v501 = vsel %vm469, 1.0, 0.0
        %v502 = vsel %vm470, 1.0, 0.0
        %v503 = vsel %vm471, 1.0, 0.0
        %v504 = vsel %vm472, 1.0, 0.0
        %v505 = vsel %vm473, 1.0, 0.0
        %v506 = vsel %vm474, 1.0, 0.0
        %v507 = vsel %vm475, 1.0, 0.0
        %v508 = vsel %vm476, 1.0, 0.0
        %v509 = vsel %vm477, 1.0, 0.0
        %v510 = vsel %vm478, 1.0, 0.0
        %v511 = vsel %vm479, 1.0, 0.0
        %v512 = vsel %vm480, 1.0, 0.0
        %v513 = vsel %vm481, 1.0, 0.0
        %v514 = vsel %vm482, 1.0, 0.0
        %v515 = vsel %vm483, 1.0, 0.0
        %v516 = vsel %vm484, 1.0, 0.0
        %v517 = vld [vmem:[%s195] sm:$0xff]
        %v518 = vld [vmem:[%s195 + $0x8] sm:$0xff]
        %v519 = vld [vmem:[%s195 + $0x10] sm:$0xff]
        %v520 = vld [vmem:[%s195 + $0x18] sm:$0xff]
        %v521 = vld [vmem:[%s195 + $0x20] sm:$0xff]
        %v522 = vld [vmem:[%s195 + $0x28] sm:$0xff]
        %v523 = vld [vmem:[%s195 + $0x30] sm:$0xff]
        %v524 = vld [vmem:[%s195 + $0x38] sm:$0xff]
        %v525 = vld [vmem:[%s195 + $0x40] sm:$0xff]
        %v526 = vld [vmem:[%s195 + $0x48] sm:$0xff]
        %v527 = vld [vmem:[%s195 + $0x50] sm:$0xff]
        %v528 = vld [vmem:[%s195 + $0x58] sm:$0xff]
        %v529 = vld [vmem:[%s195 + $0x60] sm:$0xff]
        %v530 = vld [vmem:[%s195 + $0x68] sm:$0xff]
        %v531 = vld [vmem:[%s195 + $0x70] sm:$0xff]
        %v532 = vld [vmem:[%s195 + $0x78] sm:$0xff]
        %v533 = vld [vmem:[%s195 + $0x80] sm:$0xff]
        %v534 = vld [vmem:[%s195 + $0x88] sm:$0xff]
        %v535 = vld [vmem:[%s195 + $0x90] sm:$0xff]
        %v536 = vld [vmem:[%s195 + $0x98] sm:$0xff]
        %v537 = vld [vmem:[%s195 + $0xa0] sm:$0xff]
        %v538 = vld [vmem:[%s195 + $0xa8] sm:$0xff]
        %v539 = vld [vmem:[%s195 + $0xb0] sm:$0xff]
        %v540 = vld [vmem:[%s195 + $0xb8] sm:$0xff]
        %v541 = vld [vmem:[%s195 + $0xc0] sm:$0xff]
        %v542 = vld [vmem:[%s195 + $0xc8] sm:$0xff]
        %v543 = vld [vmem:[%s195 + $0xd0] sm:$0xff]
        %v544 = vld [vmem:[%s195 + $0xd8] sm:$0xff]
        %v545 = vld [vmem:[%s195 + $0xe0] sm:$0xff]
        %v546 = vld [vmem:[%s195 + $0xe8] sm:$0xff]
        %v547 = vld [vmem:[%s195 + $0xf0] sm:$0xff]
        %v548 = vld [vmem:[%s195 + $0xf8] sm:$0xff]
        %v549 = vld [vmem:[%s3] sm:$0x3f]
        %v550 = vrot.slane %v517, 7
        %v551 = vrot.slane %v518, 7
        %v552 = vrot.slane %v519, 7
        %v553 = vrot.slane %v520, 7
        %v554 = vrot.slane %v521, 7
        %v555 = vrot.slane %v522, 7
        %v556 = vrot.slane %v523, 7
        %v557 = vrot.slane %v524, 7
        %v558 = vrot.slane %v525, 7
        %v559 = vrot.slane %v526, 7
        %v560 = vrot.slane %v527, 7
        %v561 = vrot.slane %v528, 7
        %v562 = vrot.slane %v529, 7
        %v563 = vrot.slane %v530, 7
        %v564 = vrot.slane %v531, 7
        %v565 = vrot.slane %v532, 7
        %v566 = vrot.slane %v533, 7
        %v567 = vrot.slane %v534, 7
        %v568 = vrot.slane %v535, 7
        %v569 = vrot.slane %v536, 7
        %v570 = vrot.slane %v537, 7
        %v571 = vrot.slane %v538, 7
        %v572 = vrot.slane %v539, 7
        %v573 = vrot.slane %v540, 7
        %v574 = vrot.slane %v541, 7
        %v575 = vrot.slane %v542, 7
        %v576 = vrot.slane %v543, 7
        %v577 = vrot.slane %v544, 7
        %v578 = vrot.slane %v545, 7
        %v579 = vrot.slane %v546, 7
        %v580 = vrot.slane %v547, 7
        %v581 = vrot.slane %v548, 7
        %vm582 = vcmp.lt.s32.totalorder %v197, 1
        %v583 = vsel %vm582, %v580, %v581
        %v584 = vsel %vm582, %v579, %v580
        %v585 = vsel %vm582, %v578, %v579
        %v586 = vsel %vm582, %v577, %v578
        %v587 = vsel %vm582, %v576, %v577
        %v588 = vsel %vm582, %v575, %v576
        %v589 = vsel %vm582, %v574, %v575
        %v590 = vsel %vm582, %v573, %v574
        %v591 = vsel %vm582, %v572, %v573
        %v592 = vsel %vm582, %v571, %v572
        %v593 = vsel %vm582, %v570, %v571
        %v594 = vsel %vm582, %v569, %v570
        %v595 = vsel %vm582, %v568, %v569
        %v596 = vsel %vm582, %v567, %v568
        %v597 = vsel %vm582, %v566, %v567
        %v598 = vsel %vm582, %v565, %v566
        %v599 = vsel %vm582, %v564, %v565
        %v600 = vsel %vm582, %v563, %v564
        %v601 = vsel %vm582, %v562, %v563
        %v602 = vsel %vm582, %v561, %v562
        %v603 = vsel %vm582, %v560, %v561
        %v604 = vsel %vm582, %v559, %v560
        %v605 = vsel %vm582, %v558, %v559
        %v606 = vsel %vm582, %v557, %v558
        %v607 = vsel %vm582, %v556, %v557
        %v608 = vsel %vm582, %v555, %v556
        %v609 = vsel %vm582, %v554, %v555
        %v610 = vsel %vm582, %v553, %v554
        %v611 = vsel %vm582, %v552, %v553
        %v612 = vsel %vm582, %v551, %v552
        %v613 = vsel %vm582, %v550, %v551
        %v614 = vsel %vm582, %v581, %v550
        %v615 = vmul.f32 %v614, %v293
        %v616 = vmul.f32 %v613, %v294
        %v617 = vmul.f32 %v612, %v295
        %v618 = vmul.f32 %v611, %v296
        %v619 = vmul.f32 %v610, %v297
        %v620 = vmul.f32 %v609, %v298
        %v621 = vmul.f32 %v608, %v299
        %v622 = vmul.f32 %v607, %v300
        %v623 = vmul.f32 %v606, %v301
        %v624 = vmul.f32 %v605, %v302
        %v625 = vmul.f32 %v604, %v303
        %v626 = vmul.f32 %v603, %v304
        %v627 = vmul.f32 %v602, %v305
        %v628 = vmul.f32 %v601, %v306
        %v629 = vmul.f32 %v600, %v307
        %v630 = vmul.f32 %v599, %v308
        %v631 = vmul.f32 %v598, %v309
        %v632 = vmul.f32 %v597, %v310
        %v633 = vmul.f32 %v596, %v311
        %v634 = vmul.f32 %v595, %v312
        %v635 = vmul.f32 %v594, %v313
        %v636 = vmul.f32 %v593, %v314
        %v637 = vmul.f32 %v592, %v315
        %v638 = vmul.f32 %v591, %v316
        %v639 = vmul.f32 %v590, %v317
        %v640 = vmul.f32 %v589, %v318
        %v641 = vmul.f32 %v588, %v319
        %v642 = vmul.f32 %v587, %v320
        %v643 = vmul.f32 %v586, %v321
        %v644 = vmul.f32 %v585, %v322
        %v645 = vmul.f32 %v584, %v323
        %v646 = vmul.f32 %v583, %v324
        %v647 = vld [vmem:[%s1] sm:$0xf]
        %vm648 = vcmask 31744
        %v650 = vsel %vm648, %v615, 0
        %v653 = vsel %vm648, %v616, 0
        %v656 = vsel %vm648, %v617, 0
        %v659 = vsel %vm648, %v618, 0
        %v662 = vsel %vm648, %v619, 0
        %v665 = vsel %vm648, %v620, 0
        %v668 = vsel %vm648, %v621, 0
        %v671 = vsel %vm648, %v622, 0
        %v674 = vsel %vm648, %v623, 0
        %v677 = vsel %vm648, %v624, 0
        %v680 = vsel %vm648, %v625, 0
        %v683 = vsel %vm648, %v626, 0
        %v686 = vsel %vm648, %v627, 0
        %v689 = vsel %vm648, %v628, 0
        %v692 = vsel %vm648, %v629, 0
        %v695 = vsel %vm648, %v630, 0
        %v698 = vsel %vm648, %v631, 0
        %v701 = vsel %vm648, %v632, 0
        %v704 = vsel %vm648, %v633, 0
        %v707 = vsel %vm648, %v634, 0
        %v710 = vsel %vm648, %v635, 0
        %v713 = vsel %vm648, %v636, 0
        %v716 = vsel %vm648, %v637, 0
        %v719 = vsel %vm648, %v638, 0
        %v722 = vsel %vm648, %v639, 0
        %v725 = vsel %vm648, %v640, 0
        %v728 = vsel %vm648, %v641, 0
        %v731 = vsel %vm648, %v642, 0
        %v734 = vsel %vm648, %v643, 0
        %v737 = vsel %vm648, %v644, 0
        %v740 = vsel %vm648, %v645, 0
        %v743 = vsel %vm648, %v646, 0
        %vm745 = vcmask 1043456
        %v747 = vsel %vm745, %v647, 0
        %749 = vmatprep.subr.mxu0 0.0
        %750 = vmatpush1.msra.mxu0 %v747
        %751 = vmatprep.subr.mxu0 0.0
        %752 = vmatpush1.msra.mxu0 0.0
        %753 = vmatprep.subr.mxu0 0.0
        %754 = vmatpush1.msra.mxu0 0.0
        %755 = vmatprep.subr.mxu0 0.0
        %756 = vmatpush1.msra.mxu0 0.0
        %757 = vmatprep.subr.mxu0 0.0
        %758 = vmatpush1.msra.mxu0 0.0
        %759 = vmatprep.subr.mxu0 0.0
        %760 = vmatpush1.msra.mxu0 0.0
        %761 = vmatprep.subr.mxu0 0.0
        %762 = vmatpush1.msra.mxu0 0.0
        %763 = vmatprep.subr.mxu0 0.0
        %764 = vmatpush1.msra.mxu0 0.0
        %765 = vmatprep.subr.mxu0 0.0
        %766 = vmatpush1.msra.mxu0 0.0
        %767 = vmatprep.subr.mxu0 0.0
        %768 = vmatpush1.msra.mxu0 0.0
        %769 = vmatprep.subr.mxu0 0.0
        %770 = vmatpush1.msra.mxu0 0.0
        %771 = vmatprep.subr.mxu0 0.0
        %772 = vmatpush1.msra.mxu0 0.0
        %773 = vmatprep.subr.mxu0 0.0
        %774 = vmatpush1.msra.mxu0 0.0
        %775 = vmatprep.subr.mxu0 0.0
        %776 = vmatpush1.msra.mxu0 0.0
        %777 = vmatprep.subr.mxu0 0.0
        %778 = vmatpush1.msra.mxu0 0.0
        %779 = vmatprep.subr.mxu0 0.0
        %780 = vmatpush1.msra.mxu0 0.0
        %781 = vmatprep.subr.mxu0 0.0
        %782 = vmatpush1.msra.mxu0 0.0
        %783 = vmatprep.subr.mxu0 0.0
        %784 = vmatpush1.msra.mxu0 0.0
        %785 = vmatprep.subr.mxu0 0.0
        %786 = vmatpush1.msra.mxu0 0.0
        %787 = vmatprep.subr.mxu0 0.0
        %788 = vmatpush1.msra.mxu0 0.0
        %789 = vmatprep.subr.mxu0 0.0
        %790 = vmatpush1.msra.mxu0 0.0
        %791 = vmatprep.subr.mxu0 0.0
        %792 = vmatpush1.msra.mxu0 0.0
        %793 = vmatprep.subr.mxu0 0.0
        %794 = vmatpush1.msra.mxu0 0.0
        %795 = vmatprep.subr.mxu0 0.0
        %796 = vmatpush1.msra.mxu0 0.0
        %797 = vmatprep.subr.mxu0 0.0
        %798 = vmatpush1.msra.mxu0 0.0
        %799 = vmatprep.subr.mxu0 0.0
        %800 = vmatpush1.msra.mxu0 0.0
        %801 = vmatprep.subr.mxu0 0.0
        %802 = vmatpush1.msra.mxu0 0.0
        %803 = vmatprep.subr.mxu0 0.0
        %804 = vmatpush1.msra.mxu0 0.0
        %805 = vmatprep.subr.mxu0 0.0
        %806 = vmatpush1.msra.mxu0 0.0
        %807 = vmatprep.subr.mxu0 0.0
        %808 = vmatpush1.msra.mxu0 0.0
        %809 = vmatprep.subr.mxu0 0.0
        %810 = vmatpush1.msra.mxu0 0.0
        %811 = vmatprep.subr.mxu0 0.0
        %812 = vmatpush1.msra.mxu0 0.0
        %813 = vmatprep.mubr.f32.mxu0 0.0
        %814 = vmatmul.mubr.f32.gmra.mrb[0].mxu0 %v650
        %v815 = vpop.f32.mrb[0].mxu0
        %v816 = vadd.f32 0.0, %v815
        %v817 = vpop.f32.mrb[0].mxu0
        %818 = vmatprep.mubr.f32.mxu0 0.0
        %819 = vmatmul.mubr.f32.gmra.mrb[0].mxu0 %v653
        %v820 = vpop.f32.mrb[0].mxu0
        %v821 = vadd.f32 0.0, %v820
        %v822 = vpop.f32.mrb[0].mxu0
        %823 = vmatprep.mubr.f32.mxu0 0.0
        %824 = vmatmul.mubr.f32.gmra.mrb[0].mxu0 %v656
        %v825 = vpop.f32.mrb[0].mxu0
        %v826 = vadd.f32 0.0, %v825
        %v827 = vpop.f32.mrb[0].mxu0
        %828 = vmatprep.mubr.f32.mxu0 0.0
        %829 = vmatmul.mubr.f32.gmra.mrb[0].mxu0 %v659
        %v830 = vpop.f32.mrb[0].mxu0
        %v831 = vadd.f32 0.0, %v830
        %v832 = vpop.f32.mrb[0].mxu0
        %833 = vmatprep.mubr.f32.mxu0 0.0
        %834 = vmatmul.mubr.f32.gmra.mrb[0].mxu0 %v662
        %v835 = vpop.f32.mrb[0].mxu0
        %v836 = vadd.f32 0.0, %v835
        %v837 = vpop.f32.mrb[0].mxu0
        %838 = vmatprep.mubr.f32.mxu0 0.0
        %839 = vmatmul.mubr.f32.gmra.mrb[0].mxu0 %v665
        %v840 = vpop.f32.mrb[0].mxu0
        %v841 = vadd.f32 0.0, %v840
        %v842 = vpop.f32.mrb[0].mxu0
        %843 = vmatprep.mubr.f32.mxu0 0.0
        %844 = vmatmul.mubr.f32.gmra.mrb[0].mxu0 %v668
        %v845 = vpop.f32.mrb[0].mxu0
        %v846 = vadd.f32 0.0, %v845
        %v847 = vpop.f32.mrb[0].mxu0
        %848 = vmatprep.mubr.f32.mxu0 0.0
        %849 = vmatmul.mubr.f32.gmra.mrb[0].mxu0 %v671
        %v850 = vpop.f32.mrb[0].mxu0
        %v851 = vadd.f32 0.0, %v850
        %v852 = vpop.f32.mrb[0].mxu0
        %853 = vmatprep.mubr.f32.mxu0 0.0
        %854 = vmatmul.mubr.f32.gmra.mrb[0].mxu0 %v674
        %v855 = vpop.f32.mrb[0].mxu0
        %v856 = vadd.f32 0.0, %v855
        %v857 = vpop.f32.mrb[0].mxu0
        %858 = vmatprep.mubr.f32.mxu0 0.0
        %859 = vmatmul.mubr.f32.gmra.mrb[0].mxu0 %v677
        %v860 = vpop.f32.mrb[0].mxu0
        %v861 = vadd.f32 0.0, %v860
        %v862 = vpop.f32.mrb[0].mxu0
        %863 = vmatprep.mubr.f32.mxu0 0.0
        %864 = vmatmul.mubr.f32.gmra.mrb[0].mxu0 %v680
        %v865 = vpop.f32.mrb[0].mxu0
        %v866 = vadd.f32 0.0, %v865
        %v867 = vpop.f32.mrb[0].mxu0
        %868 = vmatprep.mubr.f32.mxu0 0.0
        %869 = vmatmul.mubr.f32.gmra.mrb[0].mxu0 %v683
        %v870 = vpop.f32.mrb[0].mxu0
        %v871 = vadd.f32 0.0, %v870
        %v872 = vpop.f32.mrb[0].mxu0
        %873 = vmatprep.mubr.f32.mxu0 0.0
        %874 = vmatmul.mubr.f32.gmra.mrb[0].mxu0 %v686
        %v875 = vpop.f32.mrb[0].mxu0
        %v876 = vadd.f32 0.0, %v875
        %v877 = vpop.f32.mrb[0].mxu0
        %878 = vmatprep.mubr.f32.mxu0 0.0
        %879 = vmatmul.mubr.f32.gmra.mrb[0].mxu0 %v689
        %v880 = vpop.f32.mrb[0].mxu0
        %v881 = vadd.f32 0.0, %v880
        %v882 = vpop.f32.mrb[0].mxu0
        %883 = vmatprep.mubr.f32.mxu0 0.0
        %884 = vmatmul.mubr.f32.gmra.mrb[0].mxu0 %v692
        %v885 = vpop.f32.mrb[0].mxu0
        %v886 = vadd.f32 0.0, %v885
        %v887 = vpop.f32.mrb[0].mxu0
        %888 = vmatprep.mubr.f32.mxu0 0.0
        %889 = vmatmul.mubr.f32.gmra.mrb[0].mxu0 %v695
        %v890 = vpop.f32.mrb[0].mxu0
        %v891 = vadd.f32 0.0, %v890
        %v892 = vpop.f32.mrb[0].mxu0
        %893 = vmatprep.mubr.f32.mxu0 0.0
        %894 = vmatmul.mubr.f32.gmra.mrb[0].mxu0 %v698
        %v895 = vpop.f32.mrb[0].mxu0
        %v896 = vadd.f32 0.0, %v895
        %v897 = vpop.f32.mrb[0].mxu0
        %898 = vmatprep.mubr.f32.mxu0 0.0
        %899 = vmatmul.mubr.f32.gmra.mrb[0].mxu0 %v701
        %v900 = vpop.f32.mrb[0].mxu0
        %v901 = vadd.f32 0.0, %v900
        %v902 = vpop.f32.mrb[0].mxu0
        %903 = vmatprep.mubr.f32.mxu0 0.0
        %904 = vmatmul.mubr.f32.gmra.mrb[0].mxu0 %v704
        %v905 = vpop.f32.mrb[0].mxu0
        %v906 = vadd.f32 0.0, %v905
        %v907 = vpop.f32.mrb[0].mxu0
        %908 = vmatprep.mubr.f32.mxu0 0.0
        %909 = vmatmul.mubr.f32.gmra.mrb[0].mxu0 %v707
        %v910 = vpop.f32.mrb[0].mxu0
        %v911 = vadd.f32 0.0, %v910
        %v912 = vpop.f32.mrb[0].mxu0
        %913 = vmatprep.mubr.f32.mxu0 0.0
        %914 = vmatmul.mubr.f32.gmra.mrb[0].mxu0 %v710
        %v915 = vpop.f32.mrb[0].mxu0
        %v916 = vadd.f32 0.0, %v915
        %v917 = vpop.f32.mrb[0].mxu0
        %918 = vmatprep.mubr.f32.mxu0 0.0
        %919 = vmatmul.mubr.f32.gmra.mrb[0].mxu0 %v713
        %v920 = vpop.f32.mrb[0].mxu0
        %v921 = vadd.f32 0.0, %v920
        %v922 = vpop.f32.mrb[0].mxu0
        %923 = vmatprep.mubr.f32.mxu0 0.0
        %924 = vmatmul.mubr.f32.gmra.mrb[0].mxu0 %v716
        %v925 = vpop.f32.mrb[0].mxu0
        %v926 = vadd.f32 0.0, %v925
        %v927 = vpop.f32.mrb[0].mxu0
        %928 = vmatprep.mubr.f32.mxu0 0.0
        %929 = vmatmul.mubr.f32.gmra.mrb[0].mxu0 %v719
        %v930 = vpop.f32.mrb[0].mxu0
        %v931 = vadd.f32 0.0, %v930
        %v932 = vpop.f32.mrb[0].mxu0
        %933 = vmatprep.mubr.f32.mxu0 0.0
        %934 = vmatmul.mubr.f32.gmra.mrb[0].mxu0 %v722
        %v935 = vpop.f32.mrb[0].mxu0
        %v936 = vadd.f32 0.0, %v935
        %v937 = vpop.f32.mrb[0].mxu0
        %938 = vmatprep.mubr.f32.mxu0 0.0
        %939 = vmatmul.mubr.f32.gmra.mrb[0].mxu0 %v725
        %v940 = vpop.f32.mrb[0].mxu0
        %v941 = vadd.f32 0.0, %v940
        %v942 = vpop.f32.mrb[0].mxu0
        %943 = vmatprep.mubr.f32.mxu0 0.0
        %944 = vmatmul.mubr.f32.gmra.mrb[0].mxu0 %v728
        %v945 = vpop.f32.mrb[0].mxu0
        %v946 = vadd.f32 0.0, %v945
        %v947 = vpop.f32.mrb[0].mxu0
        %948 = vmatprep.mubr.f32.mxu0 0.0
        %949 = vmatmul.mubr.f32.gmra.mrb[0].mxu0 %v731
        %v950 = vpop.f32.mrb[0].mxu0
        %v951 = vadd.f32 0.0, %v950
        %v952 = vpop.f32.mrb[0].mxu0
        %953 = vmatprep.mubr.f32.mxu0 0.0
        %954 = vmatmul.mubr.f32.gmra.mrb[0].mxu0 %v734
        %v955 = vpop.f32.mrb[0].mxu0
        %v956 = vadd.f32 0.0, %v955
        %v957 = vpop.f32.mrb[0].mxu0
        %958 = vmatprep.mubr.f32.mxu0 0.0
        %959 = vmatmul.mubr.f32.gmra.mrb[0].mxu0 %v737
        %v960 = vpop.f32.mrb[0].mxu0
        %v961 = vadd.f32 0.0, %v960
        %v962 = vpop.f32.mrb[0].mxu0
        %963 = vmatprep.mubr.f32.mxu0 0.0
        %964 = vmatmul.mubr.f32.gmra.mrb[0].mxu0 %v740
        %v965 = vpop.f32.mrb[0].mxu0
        %v966 = vadd.f32 0.0, %v965
        %v967 = vpop.f32.mrb[0].mxu0
        %968 = vmatprep.mubr.f32.mxu0 0.0
        %969 = vmatmul.mubr.f32.gmra.mrb[0].mxu0 %v743
        %v970 = vpop.f32.mrb[0].mxu0
        %v971 = vadd.f32 0.0, %v970
        %v972 = vpop.f32.mrb[0].mxu0
        %973 = vdwg.mxu0
        %v974 = vmul.f32 %v966, %v421
        %v975 = vmul.f32 %v971, %v422
        %v976 = vmul.f32 %v816, %v423
        %v977 = vmul.f32 %v821, %v424
        %v978 = vmul.f32 %v826, %v425
        %v979 = vmul.f32 %v831, %v426
        %v980 = vmul.f32 %v836, %v427
        %v981 = vmul.f32 %v841, %v428
        %v982 = vmul.f32 %v846, %v429
        %v983 = vmul.f32 %v851, %v430
        %v984 = vmul.f32 %v856, %v431
        %v985 = vmul.f32 %v861, %v432
        %v986 = vmul.f32 %v866, %v433
        %v987 = vmul.f32 %v871, %v434
        %v988 = vmul.f32 %v876, %v435
        %v989 = vmul.f32 %v881, %v436
        %v990 = vmul.f32 %v886, %v437
        %v991 = vmul.f32 %v891, %v438
        %v992 = vmul.f32 %v896, %v439
        %v993 = vmul.f32 %v901, %v440
        %v994 = vmul.f32 %v906, %v441
        %v995 = vmul.f32 %v911, %v442
        %v996 = vmul.f32 %v916, %v443
        %v997 = vmul.f32 %v921, %v444
        %v998 = vmul.f32 %v926, %v445
        %v999 = vmul.f32 %v931, %v446
        %v1000 = vmul.f32 %v936, %v447
        %v1001 = vmul.f32 %v941, %v448
        %v1002 = vmul.f32 %v946, %v449
        %v1003 = vmul.f32 %v951, %v450
        %v1004 = vmul.f32 %v956, %v451
        %v1005 = vmul.f32 %v961, %v452
        %1038 = vrot.lane.b32.xlu0 %v816, 96
        %v1039 = vpop.permute.xlu0 %1038
        %1040 = vrot.lane.b32.xlu0 %v821, 96
        %v1041 = vpop.permute.xlu0 %1040
        %1042 = vrot.lane.b32.xlu0 %v826, 96
        %v1043 = vpop.permute.xlu0 %1042
        %1044 = vrot.lane.b32.xlu0 %v831, 96
        %v1045 = vpop.permute.xlu0 %1044
        %1046 = vrot.lane.b32.xlu0 %v836, 96
        %v1047 = vpop.permute.xlu0 %1046
        %1048 = vrot.lane.b32.xlu0 %v841, 96
        %v1049 = vpop.permute.xlu0 %1048
        %1050 = vrot.lane.b32.xlu0 %v846, 96
        %v1051 = vpop.permute.xlu0 %1050
        %1052 = vrot.lane.b32.xlu0 %v851, 96
        %v1053 = vpop.permute.xlu0 %1052
        %1054 = vrot.lane.b32.xlu0 %v856, 96
        %v1055 = vpop.permute.xlu0 %1054
        %1056 = vrot.lane.b32.xlu0 %v861, 96
        %v1057 = vpop.permute.xlu0 %1056
        %1058 = vrot.lane.b32.xlu0 %v866, 96
        %v1059 = vpop.permute.xlu0 %1058
        %1060 = vrot.lane.b32.xlu0 %v871, 96
        %v1061 = vpop.permute.xlu0 %1060
        %1062 = vrot.lane.b32.xlu0 %v876, 96
        %v1063 = vpop.permute.xlu0 %1062
        %1064 = vrot.lane.b32.xlu0 %v881, 96
        %v1065 = vpop.permute.xlu0 %1064
        %1066 = vrot.lane.b32.xlu0 %v886, 96
        %v1067 = vpop.permute.xlu0 %1066
        %1068 = vrot.lane.b32.xlu0 %v891, 96
        %v1069 = vpop.permute.xlu0 %1068
        %1070 = vrot.lane.b32.xlu0 %v896, 96
        %v1071 = vpop.permute.xlu0 %1070
        %1072 = vrot.lane.b32.xlu0 %v901, 96
        %v1073 = vpop.permute.xlu0 %1072
        %1074 = vrot.lane.b32.xlu0 %v906, 96
        %v1075 = vpop.permute.xlu0 %1074
        %1076 = vrot.lane.b32.xlu0 %v911, 96
        %v1077 = vpop.permute.xlu0 %1076
        %1078 = vrot.lane.b32.xlu0 %v916, 96
        %v1079 = vpop.permute.xlu0 %1078
        %1080 = vrot.lane.b32.xlu0 %v921, 96
        %v1081 = vpop.permute.xlu0 %1080
        %1082 = vrot.lane.b32.xlu0 %v926, 96
        %v1083 = vpop.permute.xlu0 %1082
        %1084 = vrot.lane.b32.xlu0 %v931, 96
        %v1085 = vpop.permute.xlu0 %1084
        %1086 = vrot.lane.b32.xlu0 %v936, 96
        %v1087 = vpop.permute.xlu0 %1086
        %1088 = vrot.lane.b32.xlu0 %v941, 96
        %v1089 = vpop.permute.xlu0 %1088
        %1090 = vrot.lane.b32.xlu0 %v946, 96
        %v1091 = vpop.permute.xlu0 %1090
        %1092 = vrot.lane.b32.xlu0 %v951, 96
        %v1093 = vpop.permute.xlu0 %1092
        %1094 = vrot.lane.b32.xlu0 %v956, 96
        %v1095 = vpop.permute.xlu0 %1094
        %1096 = vrot.lane.b32.xlu0 %v961, 96
        %v1097 = vpop.permute.xlu0 %1096
        %1098 = vrot.lane.b32.xlu0 %v966, 96
        %v1099 = vpop.permute.xlu0 %1098
        %1100 = vrot.lane.b32.xlu0 %v971, 96
        %v1101 = vpop.permute.xlu0 %1100
        %v1134 = vadd.f32 %v974, %v1039
        %v1135 = vadd.f32 %v975, %v1041
        %v1136 = vadd.f32 %v976, %v1043
        %v1137 = vadd.f32 %v977, %v1045
        %v1138 = vadd.f32 %v978, %v1047
        %v1139 = vadd.f32 %v979, %v1049
        %v1140 = vadd.f32 %v980, %v1051
        %v1141 = vadd.f32 %v981, %v1053
        %v1142 = vadd.f32 %v982, %v1055
        %v1143 = vadd.f32 %v983, %v1057
        %v1144 = vadd.f32 %v984, %v1059
        %v1145 = vadd.f32 %v985, %v1061
        %v1146 = vadd.f32 %v986, %v1063
        %v1147 = vadd.f32 %v987, %v1065
        %v1148 = vadd.f32 %v988, %v1067
        %v1149 = vadd.f32 %v989, %v1069
        %v1150 = vadd.f32 %v990, %v1071
        %v1151 = vadd.f32 %v991, %v1073
        %v1152 = vadd.f32 %v992, %v1075
        %v1153 = vadd.f32 %v993, %v1077
        %v1154 = vadd.f32 %v994, %v1079
        %v1155 = vadd.f32 %v995, %v1081
        %v1156 = vadd.f32 %v996, %v1083
        %v1157 = vadd.f32 %v997, %v1085
        %v1158 = vadd.f32 %v998, %v1087
        %v1159 = vadd.f32 %v999, %v1089
        %v1160 = vadd.f32 %v1000, %v1091
        %v1161 = vadd.f32 %v1001, %v1093
        %v1162 = vadd.f32 %v1002, %v1095
        %v1163 = vadd.f32 %v1003, %v1097
        %v1164 = vadd.f32 %v1004, %v1099
        %v1165 = vadd.f32 %v1005, %v1101
        %1166 = vrot.lane.b32.xlu0 %v816, 64
        %v1167 = vpop.permute.xlu0 %1166
        %1168 = vrot.lane.b32.xlu0 %v821, 64
        %v1169 = vpop.permute.xlu0 %1168
        %1170 = vrot.lane.b32.xlu0 %v826, 64
        %v1171 = vpop.permute.xlu0 %1170
        %1172 = vrot.lane.b32.xlu0 %v831, 64
        %v1173 = vpop.permute.xlu0 %1172
        %1174 = vrot.lane.b32.xlu0 %v836, 64
        %v1175 = vpop.permute.xlu0 %1174
        %1176 = vrot.lane.b32.xlu0 %v841, 64
        %v1177 = vpop.permute.xlu0 %1176
        %1178 = vrot.lane.b32.xlu0 %v846, 64
        %v1179 = vpop.permute.xlu0 %1178
        %1180 = vrot.lane.b32.xlu0 %v851, 64
        %v1181 = vpop.permute.xlu0 %1180
        %1182 = vrot.lane.b32.xlu0 %v856, 64
        %v1183 = vpop.permute.xlu0 %1182
        %1184 = vrot.lane.b32.xlu0 %v861, 64
        %v1185 = vpop.permute.xlu0 %1184
        %1186 = vrot.lane.b32.xlu0 %v866, 64
        %v1187 = vpop.permute.xlu0 %1186
        %1188 = vrot.lane.b32.xlu0 %v871, 64
        %v1189 = vpop.permute.xlu0 %1188
        %1190 = vrot.lane.b32.xlu0 %v876, 64
        %v1191 = vpop.permute.xlu0 %1190
        %1192 = vrot.lane.b32.xlu0 %v881, 64
        %v1193 = vpop.permute.xlu0 %1192
        %1194 = vrot.lane.b32.xlu0 %v886, 64
        %v1195 = vpop.permute.xlu0 %1194
        %1196 = vrot.lane.b32.xlu0 %v891, 64
        %v1197 = vpop.permute.xlu0 %1196
        %1198 = vrot.lane.b32.xlu0 %v896, 64
        %v1199 = vpop.permute.xlu0 %1198
        %1200 = vrot.lane.b32.xlu0 %v901, 64
        %v1201 = vpop.permute.xlu0 %1200
        %1202 = vrot.lane.b32.xlu0 %v906, 64
        %v1203 = vpop.permute.xlu0 %1202
        %1204 = vrot.lane.b32.xlu0 %v911, 64
        %v1205 = vpop.permute.xlu0 %1204
        %1206 = vrot.lane.b32.xlu0 %v916, 64
        %v1207 = vpop.permute.xlu0 %1206
        %1208 = vrot.lane.b32.xlu0 %v921, 64
        %v1209 = vpop.permute.xlu0 %1208
        %1210 = vrot.lane.b32.xlu0 %v926, 64
        %v1211 = vpop.permute.xlu0 %1210
        %1212 = vrot.lane.b32.xlu0 %v931, 64
        %v1213 = vpop.permute.xlu0 %1212
        %1214 = vrot.lane.b32.xlu0 %v936, 64
        %v1215 = vpop.permute.xlu0 %1214
        %1216 = vrot.lane.b32.xlu0 %v941, 64
        %v1217 = vpop.permute.xlu0 %1216
        %1218 = vrot.lane.b32.xlu0 %v946, 64
        %v1219 = vpop.permute.xlu0 %1218
        %1220 = vrot.lane.b32.xlu0 %v951, 64
        %v1221 = vpop.permute.xlu0 %1220
        %1222 = vrot.lane.b32.xlu0 %v956, 64
        %v1223 = vpop.permute.xlu0 %1222
        %1224 = vrot.lane.b32.xlu0 %v961, 64
        %v1225 = vpop.permute.xlu0 %1224
        %1226 = vrot.lane.b32.xlu0 %v966, 64
        %v1227 = vpop.permute.xlu0 %1226
        %1228 = vrot.lane.b32.xlu0 %v971, 64
        %v1229 = vpop.permute.xlu0 %1228
        %v1262 = vmul.f32 %v1171, %v485
        %v1263 = vmul.f32 %v1173, %v486
        %v1264 = vmul.f32 %v1175, %v487
        %v1265 = vmul.f32 %v1177, %v488
        %v1266 = vmul.f32 %v1179, %v489
        %v1267 = vmul.f32 %v1181, %v490
        %v1268 = vmul.f32 %v1183, %v491
        %v1269 = vmul.f32 %v1185, %v492
        %v1270 = vmul.f32 %v1187, %v493
        %v1271 = vmul.f32 %v1189, %v494
        %v1272 = vmul.f32 %v1191, %v495
        %v1273 = vmul.f32 %v1193, %v496
        %v1274 = vmul.f32 %v1195, %v497
        %v1275 = vmul.f32 %v1197, %v498
        %v1276 = vmul.f32 %v1199, %v499
        %v1277 = vmul.f32 %v1201, %v500
        %v1278 = vmul.f32 %v1203, %v501
        %v1279 = vmul.f32 %v1205, %v502
        %v1280 = vmul.f32 %v1207, %v503
        %v1281 = vmul.f32 %v1209, %v504
        %v1282 = vmul.f32 %v1211, %v505
        %v1283 = vmul.f32 %v1213, %v506
        %v1284 = vmul.f32 %v1215, %v507
        %v1285 = vmul.f32 %v1217, %v508
        %v1286 = vmul.f32 %v1219, %v509
        %v1287 = vmul.f32 %v1221, %v510
        %v1288 = vmul.f32 %v1223, %v511
        %v1289 = vmul.f32 %v1225, %v512
        %v1290 = vmul.f32 %v1227, %v513
        %v1291 = vmul.f32 %v1229, %v514
        %v1292 = vmul.f32 %v1167, %v515
        %v1293 = vmul.f32 %v1169, %v516
        %v1294 = vadd.f32 %v1134, %v1262
        %v1295 = vadd.f32 %v1135, %v1263
        %v1296 = vadd.f32 %v1136, %v1264
        %v1297 = vadd.f32 %v1137, %v1265
        %v1298 = vadd.f32 %v1138, %v1266
        %v1299 = vadd.f32 %v1139, %v1267
        %v1300 = vadd.f32 %v1140, %v1268
        %v1301 = vadd.f32 %v1141, %v1269
        %v1302 = vadd.f32 %v1142, %v1270
        %v1303 = vadd.f32 %v1143, %v1271
        %v1304 = vadd.f32 %v1144, %v1272
        %v1305 = vadd.f32 %v1145, %v1273
        %v1306 = vadd.f32 %v1146, %v1274
        %v1307 = vadd.f32 %v1147, %v1275
        %v1308 = vadd.f32 %v1148, %v1276
        %v1309 = vadd.f32 %v1149, %v1277
        %v1310 = vadd.f32 %v1150, %v1278
        %v1311 = vadd.f32 %v1151, %v1279
        %v1312 = vadd.f32 %v1152, %v1280
        %v1313 = vadd.f32 %v1153, %v1281
        %v1314 = vadd.f32 %v1154, %v1282
        %v1315 = vadd.f32 %v1155, %v1283
        %v1316 = vadd.f32 %v1156, %v1284
        %v1317 = vadd.f32 %v1157, %v1285
        %v1318 = vadd.f32 %v1158, %v1286
        %v1319 = vadd.f32 %v1159, %v1287
        %v1320 = vadd.f32 %v1160, %v1288
        %v1321 = vadd.f32 %v1161, %v1289
        %v1322 = vadd.f32 %v1162, %v1290
        %v1323 = vadd.f32 %v1163, %v1291
        %v1324 = vadd.f32 %v1164, %v1292
        %v1325 = vadd.f32 %v1165, %v1293
        %s1326 = scalar_lea.vmem %s1, 4
        %v1327 = vld [vmem:[%s1326] sm:$0xf]
        %v1329 = vsel %vm648, %v517, 0
        %v1332 = vsel %vm648, %v518, 0
        %v1335 = vsel %vm648, %v519, 0
        %v1338 = vsel %vm648, %v520, 0
        %v1341 = vsel %vm648, %v521, 0
        %v1344 = vsel %vm648, %v522, 0
        %v1347 = vsel %vm648, %v523, 0
        %v1350 = vsel %vm648, %v524, 0
        %v1353 = vsel %vm648, %v525, 0
        %v1356 = vsel %vm648, %v526, 0
        %v1359 = vsel %vm648, %v527, 0
        %v1362 = vsel %vm648, %v528, 0
        %v1365 = vsel %vm648, %v529, 0
        %v1368 = vsel %vm648, %v530, 0
        %v1371 = vsel %vm648, %v531, 0
        %v1374 = vsel %vm648, %v532, 0
        %v1377 = vsel %vm648, %v533, 0
        %v1380 = vsel %vm648, %v534, 0
        %v1383 = vsel %vm648, %v535, 0
        %v1386 = vsel %vm648, %v536, 0
        %v1389 = vsel %vm648, %v537, 0
        %v1392 = vsel %vm648, %v538, 0
        %v1395 = vsel %vm648, %v539, 0
        %v1398 = vsel %vm648, %v540, 0
        %v1401 = vsel %vm648, %v541, 0
        %v1404 = vsel %vm648, %v542, 0
        %v1407 = vsel %vm648, %v543, 0
        %v1410 = vsel %vm648, %v544, 0
        %v1413 = vsel %vm648, %v545, 0
        %v1416 = vsel %vm648, %v546, 0
        %v1419 = vsel %vm648, %v547, 0
        %v1422 = vsel %vm648, %v548, 0
        %v1425 = vsel %vm745, %v1327, 0
        %1427 = vmatprep.subr.mxu0 0.0
        %1428 = vmatpush1.msra.mxu0 %v1425
        %1429 = vmatprep.subr.mxu0 0.0
        %1430 = vmatpush1.msra.mxu0 0.0
        %1431 = vmatprep.subr.mxu0 0.0
        %1432 = vmatpush1.msra.mxu0 0.0
        %1433 = vmatprep.subr.mxu0 0.0
        %1434 = vmatpush1.msra.mxu0 0.0
        %1435 = vmatprep.subr.mxu0 0.0
        %1436 = vmatpush1.msra.mxu0 0.0
        %1437 = vmatprep.subr.mxu0 0.0
        %1438 = vmatpush1.msra.mxu0 0.0
        %1439 = vmatprep.subr.mxu0 0.0
        %1440 = vmatpush1.msra.mxu0 0.0
        %1441 = vmatprep.subr.mxu0 0.0
        %1442 = vmatpush1.msra.mxu0 0.0
        %1443 = vmatprep.subr.mxu0 0.0
        %1444 = vmatpush1.msra.mxu0 0.0
        %1445 = vmatprep.subr.mxu0 0.0
        %1446 = vmatpush1.msra.mxu0 0.0
        %1447 = vmatprep.subr.mxu0 0.0
        %1448 = vmatpush1.msra.mxu0 0.0
        %1449 = vmatprep.subr.mxu0 0.0
        %1450 = vmatpush1.msra.mxu0 0.0
        %1451 = vmatprep.subr.mxu0 0.0
        %1452 = vmatpush1.msra.mxu0 0.0
        %1453 = vmatprep.subr.mxu0 0.0
        %1454 = vmatpush1.msra.mxu0 0.0
        %1455 = vmatprep.subr.mxu0 0.0
        %1456 = vmatpush1.msra.mxu0 0.0
        %1457 = vmatprep.subr.mxu0 0.0
        %1458 = vmatpush1.msra.mxu0 0.0
        %1459 = vmatprep.subr.mxu0 0.0
        %1460 = vmatpush1.msra.mxu0 0.0
        %1461 = vmatprep.subr.mxu0 0.0
        %1462 = vmatpush1.msra.mxu0 0.0
        %1463 = vmatprep.subr.mxu0 0.0
        %1464 = vmatpush1.msra.mxu0 0.0
        %1465 = vmatprep.subr.mxu0 0.0
        %1466 = vmatpush1.msra.mxu0 0.0
        %1467 = vmatprep.subr.mxu0 0.0
        %1468 = vmatpush1.msra.mxu0 0.0
        %1469 = vmatprep.subr.mxu0 0.0
        %1470 = vmatpush1.msra.mxu0 0.0
        %1471 = vmatprep.subr.mxu0 0.0
        %1472 = vmatpush1.msra.mxu0 0.0
        %1473 = vmatprep.subr.mxu0 0.0
        %1474 = vmatpush1.msra.mxu0 0.0
        %1475 = vmatprep.subr.mxu0 0.0
        %1476 = vmatpush1.msra.mxu0 0.0
        %1477 = vmatprep.subr.mxu0 0.0
        %1478 = vmatpush1.msra.mxu0 0.0
        %1479 = vmatprep.subr.mxu0 0.0
        %1480 = vmatpush1.msra.mxu0 0.0
        %1481 = vmatprep.subr.mxu0 0.0
        %1482 = vmatpush1.msra.mxu0 0.0
        %1483 = vmatprep.subr.mxu0 0.0
        %1484 = vmatpush1.msra.mxu0 0.0
        %1485 = vmatprep.subr.mxu0 0.0
        %1486 = vmatpush1.msra.mxu0 0.0
        %1487 = vmatprep.subr.mxu0 0.0
        %1488 = vmatpush1.msra.mxu0 0.0
        %1489 = vmatprep.subr.mxu0 0.0
        %1490 = vmatpush1.msra.mxu0 0.0
        %1491 = vmatprep.mubr.f32.mxu0 0.0
        %1492 = vmatmul.mubr.f32.gmra.mrb[0].mxu0 %v1329
        %v1493 = vpop.f32.mrb[0].mxu0
        %v1494 = vadd.f32 0.0, %v1493
        %v1495 = vpop.f32.mrb[0].mxu0
        %1496 = vmatprep.mubr.f32.mxu0 0.0
        %1497 = vmatmul.mubr.f32.gmra.mrb[0].mxu0 %v1332
        %v1498 = vpop.f32.mrb[0].mxu0
        %v1499 = vadd.f32 0.0, %v1498
        %v1500 = vpop.f32.mrb[0].mxu0
        %1501 = vmatprep.mubr.f32.mxu0 0.0
        %1502 = vmatmul.mubr.f32.gmra.mrb[0].mxu0 %v1335
        %v1503 = vpop.f32.mrb[0].mxu0
        %v1504 = vadd.f32 0.0, %v1503
        %v1505 = vpop.f32.mrb[0].mxu0
        %1506 = vmatprep.mubr.f32.mxu0 0.0
        %1507 = vmatmul.mubr.f32.gmra.mrb[0].mxu0 %v1338
        %v1508 = vpop.f32.mrb[0].mxu0
        %v1509 = vadd.f32 0.0, %v1508
        %v1510 = vpop.f32.mrb[0].mxu0
        %1511 = vmatprep.mubr.f32.mxu0 0.0
        %1512 = vmatmul.mubr.f32.gmra.mrb[0].mxu0 %v1341
        %v1513 = vpop.f32.mrb[0].mxu0
        %v1514 = vadd.f32 0.0, %v1513
        %v1515 = vpop.f32.mrb[0].mxu0
        %1516 = vmatprep.mubr.f32.mxu0 0.0
        %1517 = vmatmul.mubr.f32.gmra.mrb[0].mxu0 %v1344
        %v1518 = vpop.f32.mrb[0].mxu0
        %v1519 = vadd.f32 0.0, %v1518
        %v1520 = vpop.f32.mrb[0].mxu0
        %1521 = vmatprep.mubr.f32.mxu0 0.0
        %1522 = vmatmul.mubr.f32.gmra.mrb[0].mxu0 %v1347
        %v1523 = vpop.f32.mrb[0].mxu0
        %v1524 = vadd.f32 0.0, %v1523
        %v1525 = vpop.f32.mrb[0].mxu0
        %1526 = vmatprep.mubr.f32.mxu0 0.0
        %1527 = vmatmul.mubr.f32.gmra.mrb[0].mxu0 %v1350
        %v1528 = vpop.f32.mrb[0].mxu0
        %v1529 = vadd.f32 0.0, %v1528
        %v1530 = vpop.f32.mrb[0].mxu0
        %1531 = vmatprep.mubr.f32.mxu0 0.0
        %1532 = vmatmul.mubr.f32.gmra.mrb[0].mxu0 %v1353
        %v1533 = vpop.f32.mrb[0].mxu0
        %v1534 = vadd.f32 0.0, %v1533
        %v1535 = vpop.f32.mrb[0].mxu0
        %1536 = vmatprep.mubr.f32.mxu0 0.0
        %1537 = vmatmul.mubr.f32.gmra.mrb[0].mxu0 %v1356
        %v1538 = vpop.f32.mrb[0].mxu0
        %v1539 = vadd.f32 0.0, %v1538
        %v1540 = vpop.f32.mrb[0].mxu0
        %1541 = vmatprep.mubr.f32.mxu0 0.0
        %1542 = vmatmul.mubr.f32.gmra.mrb[0].mxu0 %v1359
        %v1543 = vpop.f32.mrb[0].mxu0
        %v1544 = vadd.f32 0.0, %v1543
        %v1545 = vpop.f32.mrb[0].mxu0
        %1546 = vmatprep.mubr.f32.mxu0 0.0
        %1547 = vmatmul.mubr.f32.gmra.mrb[0].mxu0 %v1362
        %v1548 = vpop.f32.mrb[0].mxu0
        %v1549 = vadd.f32 0.0, %v1548
        %v1550 = vpop.f32.mrb[0].mxu0
        %1551 = vmatprep.mubr.f32.mxu0 0.0
        %1552 = vmatmul.mubr.f32.gmra.mrb[0].mxu0 %v1365
        %v1553 = vpop.f32.mrb[0].mxu0
        %v1554 = vadd.f32 0.0, %v1553
        %v1555 = vpop.f32.mrb[0].mxu0
        %1556 = vmatprep.mubr.f32.mxu0 0.0
        %1557 = vmatmul.mubr.f32.gmra.mrb[0].mxu0 %v1368
        %v1558 = vpop.f32.mrb[0].mxu0
        %v1559 = vadd.f32 0.0, %v1558
        %v1560 = vpop.f32.mrb[0].mxu0
        %1561 = vmatprep.mubr.f32.mxu0 0.0
        %1562 = vmatmul.mubr.f32.gmra.mrb[0].mxu0 %v1371
        %v1563 = vpop.f32.mrb[0].mxu0
        %v1564 = vadd.f32 0.0, %v1563
        %v1565 = vpop.f32.mrb[0].mxu0
        %1566 = vmatprep.mubr.f32.mxu0 0.0
        %1567 = vmatmul.mubr.f32.gmra.mrb[0].mxu0 %v1374
        %v1568 = vpop.f32.mrb[0].mxu0
        %v1569 = vadd.f32 0.0, %v1568
        %v1570 = vpop.f32.mrb[0].mxu0
        %1571 = vmatprep.mubr.f32.mxu0 0.0
        %1572 = vmatmul.mubr.f32.gmra.mrb[0].mxu0 %v1377
        %v1573 = vpop.f32.mrb[0].mxu0
        %v1574 = vadd.f32 0.0, %v1573
        %v1575 = vpop.f32.mrb[0].mxu0
        %1576 = vmatprep.mubr.f32.mxu0 0.0
        %1577 = vmatmul.mubr.f32.gmra.mrb[0].mxu0 %v1380
        %v1578 = vpop.f32.mrb[0].mxu0
        %v1579 = vadd.f32 0.0, %v1578
        %v1580 = vpop.f32.mrb[0].mxu0
        %1581 = vmatprep.mubr.f32.mxu0 0.0
        %1582 = vmatmul.mubr.f32.gmra.mrb[0].mxu0 %v1383
        %v1583 = vpop.f32.mrb[0].mxu0
        %v1584 = vadd.f32 0.0, %v1583
        %v1585 = vpop.f32.mrb[0].mxu0
        %1586 = vmatprep.mubr.f32.mxu0 0.0
        %1587 = vmatmul.mubr.f32.gmra.mrb[0].mxu0 %v1386
        %v1588 = vpop.f32.mrb[0].mxu0
        %v1589 = vadd.f32 0.0, %v1588
        %v1590 = vpop.f32.mrb[0].mxu0
        %1591 = vmatprep.mubr.f32.mxu0 0.0
        %1592 = vmatmul.mubr.f32.gmra.mrb[0].mxu0 %v1389
        %v1593 = vpop.f32.mrb[0].mxu0
        %v1594 = vadd.f32 0.0, %v1593
        %v1595 = vpop.f32.mrb[0].mxu0
        %1596 = vmatprep.mubr.f32.mxu0 0.0
        %1597 = vmatmul.mubr.f32.gmra.mrb[0].mxu0 %v1392
        %v1598 = vpop.f32.mrb[0].mxu0
        %v1599 = vadd.f32 0.0, %v1598
        %v1600 = vpop.f32.mrb[0].mxu0
        %1601 = vmatprep.mubr.f32.mxu0 0.0
        %1602 = vmatmul.mubr.f32.gmra.mrb[0].mxu0 %v1395
        %v1603 = vpop.f32.mrb[0].mxu0
        %v1604 = vadd.f32 0.0, %v1603
        %v1605 = vpop.f32.mrb[0].mxu0
        %1606 = vmatprep.mubr.f32.mxu0 0.0
        %1607 = vmatmul.mubr.f32.gmra.mrb[0].mxu0 %v1398
        %v1608 = vpop.f32.mrb[0].mxu0
        %v1609 = vadd.f32 0.0, %v1608
        %v1610 = vpop.f32.mrb[0].mxu0
        %1611 = vmatprep.mubr.f32.mxu0 0.0
        %1612 = vmatmul.mubr.f32.gmra.mrb[0].mxu0 %v1401
        %v1613 = vpop.f32.mrb[0].mxu0
        %v1614 = vadd.f32 0.0, %v1613
        %v1615 = vpop.f32.mrb[0].mxu0
        %1616 = vmatprep.mubr.f32.mxu0 0.0
        %1617 = vmatmul.mubr.f32.gmra.mrb[0].mxu0 %v1404
        %v1618 = vpop.f32.mrb[0].mxu0
        %v1619 = vadd.f32 0.0, %v1618
        %v1620 = vpop.f32.mrb[0].mxu0
        %1621 = vmatprep.mubr.f32.mxu0 0.0
        %1622 = vmatmul.mubr.f32.gmra.mrb[0].mxu0 %v1407
        %v1623 = vpop.f32.mrb[0].mxu0
        %v1624 = vadd.f32 0.0, %v1623
        %v1625 = vpop.f32.mrb[0].mxu0
        %1626 = vmatprep.mubr.f32.mxu0 0.0
        %1627 = vmatmul.mubr.f32.gmra.mrb[0].mxu0 %v1410
        %v1628 = vpop.f32.mrb[0].mxu0
        %v1629 = vadd.f32 0.0, %v1628
        %v1630 = vpop.f32.mrb[0].mxu0
        %1631 = vmatprep.mubr.f32.mxu0 0.0
        %1632 = vmatmul.mubr.f32.gmra.mrb[0].mxu0 %v1413
        %v1633 = vpop.f32.mrb[0].mxu0
        %v1634 = vadd.f32 0.0, %v1633
        %v1635 = vpop.f32.mrb[0].mxu0
        %1636 = vmatprep.mubr.f32.mxu0 0.0
        %1637 = vmatmul.mubr.f32.gmra.mrb[0].mxu0 %v1416
        %v1638 = vpop.f32.mrb[0].mxu0
        %v1639 = vadd.f32 0.0, %v1638
        %v1640 = vpop.f32.mrb[0].mxu0
        %1641 = vmatprep.mubr.f32.mxu0 0.0
        %1642 = vmatmul.mubr.f32.gmra.mrb[0].mxu0 %v1419
        %v1643 = vpop.f32.mrb[0].mxu0
        %v1644 = vadd.f32 0.0, %v1643
        %v1645 = vpop.f32.mrb[0].mxu0
        %1646 = vmatprep.mubr.f32.mxu0 0.0
        %1647 = vmatmul.mubr.f32.gmra.mrb[0].mxu0 %v1422
        %v1648 = vpop.f32.mrb[0].mxu0
        %v1649 = vadd.f32 0.0, %v1648
        %v1650 = vpop.f32.mrb[0].mxu0
        %1651 = vdwg.mxu0
        %v1652 = vmul.f32 %v1644, %v421
        %v1653 = vmul.f32 %v1649, %v422
        %v1654 = vmul.f32 %v1494, %v423
        %v1655 = vmul.f32 %v1499, %v424
        %v1656 = vmul.f32 %v1504, %v425
        %v1657 = vmul.f32 %v1509, %v426
        %v1658 = vmul.f32 %v1514, %v427
        %v1659 = vmul.f32 %v1519, %v428
        %v1660 = vmul.f32 %v1524, %v429
        %v1661 = vmul.f32 %v1529, %v430
        %v1662 = vmul.f32 %v1534, %v431
        %v1663 = vmul.f32 %v1539, %v432
        %v1664 = vmul.f32 %v1544, %v433
        %v1665 = vmul.f32 %v1549, %v434
        %v1666 = vmul.f32 %v1554, %v435
        %v1667 = vmul.f32 %v1559, %v436
        %v1668 = vmul.f32 %v1564, %v437
        %v1669 = vmul.f32 %v1569, %v438
        %v1670 = vmul.f32 %v1574, %v439
        %v1671 = vmul.f32 %v1579, %v440
        %v1672 = vmul.f32 %v1584, %v441
        %v1673 = vmul.f32 %v1589, %v442
        %v1674 = vmul.f32 %v1594, %v443
        %v1675 = vmul.f32 %v1599, %v444
        %v1676 = vmul.f32 %v1604, %v445
        %v1677 = vmul.f32 %v1609, %v446
        %v1678 = vmul.f32 %v1614, %v447
        %v1679 = vmul.f32 %v1619, %v448
        %v1680 = vmul.f32 %v1624, %v449
        %v1681 = vmul.f32 %v1629, %v450
        %v1682 = vmul.f32 %v1634, %v451
        %v1683 = vmul.f32 %v1639, %v452
        %1716 = vrot.lane.b32.xlu0 %v1494, 96
        %v1717 = vpop.permute.xlu0 %1716
        %1718 = vrot.lane.b32.xlu0 %v1499, 96
        %v1719 = vpop.permute.xlu0 %1718
        %1720 = vrot.lane.b32.xlu0 %v1504, 96
        %v1721 = vpop.permute.xlu0 %1720
        %1722 = vrot.lane.b32.xlu0 %v1509, 96
        %v1723 = vpop.permute.xlu0 %1722
        %1724 = vrot.lane.b32.xlu0 %v1514, 96
        %v1725 = vpop.permute.xlu0 %1724
        %1726 = vrot.lane.b32.xlu0 %v1519, 96
        %v1727 = vpop.permute.xlu0 %1726
        %1728 = vrot.lane.b32.xlu0 %v1524, 96
        %v1729 = vpop.permute.xlu0 %1728
        %1730 = vrot.lane.b32.xlu0 %v1529, 96
        %v1731 = vpop.permute.xlu0 %1730
        %1732 = vrot.lane.b32.xlu0 %v1534, 96
        %v1733 = vpop.permute.xlu0 %1732
        %1734 = vrot.lane.b32.xlu0 %v1539, 96
        %v1735 = vpop.permute.xlu0 %1734
        %1736 = vrot.lane.b32.xlu0 %v1544, 96
        %v1737 = vpop.permute.xlu0 %1736
        %1738 = vrot.lane.b32.xlu0 %v1549, 96
        %v1739 = vpop.permute.xlu0 %1738
        %1740 = vrot.lane.b32.xlu0 %v1554, 96
        %v1741 = vpop.permute.xlu0 %1740
        %1742 = vrot.lane.b32.xlu0 %v1559, 96
        %v1743 = vpop.permute.xlu0 %1742
        %1744 = vrot.lane.b32.xlu0 %v1564, 96
        %v1745 = vpop.permute.xlu0 %1744
        %1746 = vrot.lane.b32.xlu0 %v1569, 96
        %v1747 = vpop.permute.xlu0 %1746
        %1748 = vrot.lane.b32.xlu0 %v1574, 96
        %v1749 = vpop.permute.xlu0 %1748
        %1750 = vrot.lane.b32.xlu0 %v1579, 96
        %v1751 = vpop.permute.xlu0 %1750
        %1752 = vrot.lane.b32.xlu0 %v1584, 96
        %v1753 = vpop.permute.xlu0 %1752
        %1754 = vrot.lane.b32.xlu0 %v1589, 96
        %v1755 = vpop.permute.xlu0 %1754
        %1756 = vrot.lane.b32.xlu0 %v1594, 96
        %v1757 = vpop.permute.xlu0 %1756
        %1758 = vrot.lane.b32.xlu0 %v1599, 96
        %v1759 = vpop.permute.xlu0 %1758
        %1760 = vrot.lane.b32.xlu0 %v1604, 96
        %v1761 = vpop.permute.xlu0 %1760
        %1762 = vrot.lane.b32.xlu0 %v1609, 96
        %v1763 = vpop.permute.xlu0 %1762
        %1764 = vrot.lane.b32.xlu0 %v1614, 96
        %v1765 = vpop.permute.xlu0 %1764
        %1766 = vrot.lane.b32.xlu0 %v1619, 96
        %v1767 = vpop.permute.xlu0 %1766
        %1768 = vrot.lane.b32.xlu0 %v1624, 96
        %v1769 = vpop.permute.xlu0 %1768
        %1770 = vrot.lane.b32.xlu0 %v1629, 96
        %v1771 = vpop.permute.xlu0 %1770
        %1772 = vrot.lane.b32.xlu0 %v1634, 96
        %v1773 = vpop.permute.xlu0 %1772
        %1774 = vrot.lane.b32.xlu0 %v1639, 96
        %v1775 = vpop.permute.xlu0 %1774
        %1776 = vrot.lane.b32.xlu0 %v1644, 96
        %v1777 = vpop.permute.xlu0 %1776
        %1778 = vrot.lane.b32.xlu0 %v1649, 96
        %v1779 = vpop.permute.xlu0 %1778
        %v1812 = vadd.f32 %v1652, %v1717
        %v1813 = vadd.f32 %v1653, %v1719
        %v1814 = vadd.f32 %v1654, %v1721
        %v1815 = vadd.f32 %v1655, %v1723
        %v1816 = vadd.f32 %v1656, %v1725
        %v1817 = vadd.f32 %v1657, %v1727
        %v1818 = vadd.f32 %v1658, %v1729
        %v1819 = vadd.f32 %v1659, %v1731
        %v1820 = vadd.f32 %v1660, %v1733
        %v1821 = vadd.f32 %v1661, %v1735
        %v1822 = vadd.f32 %v1662, %v1737
        %v1823 = vadd.f32 %v1663, %v1739
        %v1824 = vadd.f32 %v1664, %v1741
        %v1825 = vadd.f32 %v1665, %v1743
        %v1826 = vadd.f32 %v1666, %v1745
        %v1827 = vadd.f32 %v1667, %v1747
        %v1828 = vadd.f32 %v1668, %v1749
        %v1829 = vadd.f32 %v1669, %v1751
        %v1830 = vadd.f32 %v1670, %v1753
        %v1831 = vadd.f32 %v1671, %v1755
        %v1832 = vadd.f32 %v1672, %v1757
        %v1833 = vadd.f32 %v1673, %v1759
        %v1834 = vadd.f32 %v1674, %v1761
        %v1835 = vadd.f32 %v1675, %v1763
        %v1836 = vadd.f32 %v1676, %v1765
        %v1837 = vadd.f32 %v1677, %v1767
        %v1838 = vadd.f32 %v1678, %v1769
        %v1839 = vadd.f32 %v1679, %v1771
        %v1840 = vadd.f32 %v1680, %v1773
        %v1841 = vadd.f32 %v1681, %v1775
        %v1842 = vadd.f32 %v1682, %v1777
        %v1843 = vadd.f32 %v1683, %v1779
        %1844 = vrot.lane.b32.xlu0 %v1494, 64
        %v1845 = vpop.permute.xlu0 %1844
        %1846 = vrot.lane.b32.xlu0 %v1499, 64
        %v1847 = vpop.permute.xlu0 %1846
        %1848 = vrot.lane.b32.xlu0 %v1504, 64
        %v1849 = vpop.permute.xlu0 %1848
        %1850 = vrot.lane.b32.xlu0 %v1509, 64
        %v1851 = vpop.permute.xlu0 %1850
        %1852 = vrot.lane.b32.xlu0 %v1514, 64
        %v1853 = vpop.permute.xlu0 %1852
        %1854 = vrot.lane.b32.xlu0 %v1519, 64
        %v1855 = vpop.permute.xlu0 %1854
        %1856 = vrot.lane.b32.xlu0 %v1524, 64
        %v1857 = vpop.permute.xlu0 %1856
        %1858 = vrot.lane.b32.xlu0 %v1529, 64
        %v1859 = vpop.permute.xlu0 %1858
        %1860 = vrot.lane.b32.xlu0 %v1534, 64
        %v1861 = vpop.permute.xlu0 %1860
        %1862 = vrot.lane.b32.xlu0 %v1539, 64
        %v1863 = vpop.permute.xlu0 %1862
        %1864 = vrot.lane.b32.xlu0 %v1544, 64
        %v1865 = vpop.permute.xlu0 %1864
        %1866 = vrot.lane.b32.xlu0 %v1549, 64
        %v1867 = vpop.permute.xlu0 %1866
        %1868 = vrot.lane.b32.xlu0 %v1554, 64
        %v1869 = vpop.permute.xlu0 %1868
        %1870 = vrot.lane.b32.xlu0 %v1559, 64
        %v1871 = vpop.permute.xlu0 %1870
        %1872 = vrot.lane.b32.xlu0 %v1564, 64
        %v1873 = vpop.permute.xlu0 %1872
        %1874 = vrot.lane.b32.xlu0 %v1569, 64
        %v1875 = vpop.permute.xlu0 %1874
        %1876 = vrot.lane.b32.xlu0 %v1574, 64
        %v1877 = vpop.permute.xlu0 %1876
        %1878 = vrot.lane.b32.xlu0 %v1579, 64
        %v1879 = vpop.permute.xlu0 %1878
        %1880 = vrot.lane.b32.xlu0 %v1584, 64
        %v1881 = vpop.permute.xlu0 %1880
        %1882 = vrot.lane.b32.xlu0 %v1589, 64
        %v1883 = vpop.permute.xlu0 %1882
        %1884 = vrot.lane.b32.xlu0 %v1594, 64
        %v1885 = vpop.permute.xlu0 %1884
        %1886 = vrot.lane.b32.xlu0 %v1599, 64
        %v1887 = vpop.permute.xlu0 %1886
        %1888 = vrot.lane.b32.xlu0 %v1604, 64
        %v1889 = vpop.permute.xlu0 %1888
        %1890 = vrot.lane.b32.xlu0 %v1609, 64
        %v1891 = vpop.permute.xlu0 %1890
        %1892 = vrot.lane.b32.xlu0 %v1614, 64
        %v1893 = vpop.permute.xlu0 %1892
        %1894 = vrot.lane.b32.xlu0 %v1619, 64
        %v1895 = vpop.permute.xlu0 %1894
        %1896 = vrot.lane.b32.xlu0 %v1624, 64
        %v1897 = vpop.permute.xlu0 %1896
        %1898 = vrot.lane.b32.xlu0 %v1629, 64
        %v1899 = vpop.permute.xlu0 %1898
        %1900 = vrot.lane.b32.xlu0 %v1634, 64
        %v1901 = vpop.permute.xlu0 %1900
        %1902 = vrot.lane.b32.xlu0 %v1639, 64
        %v1903 = vpop.permute.xlu0 %1902
        %1904 = vrot.lane.b32.xlu0 %v1644, 64
        %v1905 = vpop.permute.xlu0 %1904
        %1906 = vrot.lane.b32.xlu0 %v1649, 64
        %v1907 = vpop.permute.xlu0 %1906
        %v1940 = vmul.f32 %v1849, %v485
        %v1941 = vmul.f32 %v1851, %v486
        %v1942 = vmul.f32 %v1853, %v487
        %v1943 = vmul.f32 %v1855, %v488
        %v1944 = vmul.f32 %v1857, %v489
        %v1945 = vmul.f32 %v1859, %v490
        %v1946 = vmul.f32 %v1861, %v491
        %v1947 = vmul.f32 %v1863, %v492
        %v1948 = vmul.f32 %v1865, %v493
        %v1949 = vmul.f32 %v1867, %v494
        %v1950 = vmul.f32 %v1869, %v495
        %v1951 = vmul.f32 %v1871, %v496
        %v1952 = vmul.f32 %v1873, %v497
        %v1953 = vmul.f32 %v1875, %v498
        %v1954 = vmul.f32 %v1877, %v499
        %v1955 = vmul.f32 %v1879, %v500
        %v1956 = vmul.f32 %v1881, %v501
        %v1957 = vmul.f32 %v1883, %v502
        %v1958 = vmul.f32 %v1885, %v503
        %v1959 = vmul.f32 %v1887, %v504
        %v1960 = vmul.f32 %v1889, %v505
        %v1961 = vmul.f32 %v1891, %v506
        %v1962 = vmul.f32 %v1893, %v507
        %v1963 = vmul.f32 %v1895, %v508
        %v1964 = vmul.f32 %v1897, %v509
        %v1965 = vmul.f32 %v1899, %v510
        %v1966 = vmul.f32 %v1901, %v511
        %v1967 = vmul.f32 %v1903, %v512
        %v1968 = vmul.f32 %v1905, %v513
        %v1969 = vmul.f32 %v1907, %v514
        %v1970 = vmul.f32 %v1845, %v515
        %v1971 = vmul.f32 %v1847, %v516
        %v1972 = vadd.f32 %v1812, %v1940
        %v1973 = vadd.f32 %v1813, %v1941
        %v1974 = vadd.f32 %v1814, %v1942
        %v1975 = vadd.f32 %v1815, %v1943
        %v1976 = vadd.f32 %v1816, %v1944
        %v1977 = vadd.f32 %v1817, %v1945
        %v1978 = vadd.f32 %v1818, %v1946
        %v1979 = vadd.f32 %v1819, %v1947
        %v1980 = vadd.f32 %v1820, %v1948
        %v1981 = vadd.f32 %v1821, %v1949
        %v1982 = vadd.f32 %v1822, %v1950
        %v1983 = vadd.f32 %v1823, %v1951
        %v1984 = vadd.f32 %v1824, %v1952
        %v1985 = vadd.f32 %v1825, %v1953
        %v1986 = vadd.f32 %v1826, %v1954
        %v1987 = vadd.f32 %v1827, %v1955
        %v1988 = vadd.f32 %v1828, %v1956
        %v1989 = vadd.f32 %v1829, %v1957
        %v1990 = vadd.f32 %v1830, %v1958
        %v1991 = vadd.f32 %v1831, %v1959
        %v1992 = vadd.f32 %v1832, %v1960
        %v1993 = vadd.f32 %v1833, %v1961
        %v1994 = vadd.f32 %v1834, %v1962
        %v1995 = vadd.f32 %v1835, %v1963
        %v1996 = vadd.f32 %v1836, %v1964
        %v1997 = vadd.f32 %v1837, %v1965
        %v1998 = vadd.f32 %v1838, %v1966
        %v1999 = vadd.f32 %v1839, %v1967
        %v2000 = vadd.f32 %v1840, %v1968
        %v2001 = vadd.f32 %v1841, %v1969
        %v2002 = vadd.f32 %v1842, %v1970
        %v2003 = vadd.f32 %v1843, %v1971
        %v2004 = vadd.f32 %v1294, %v1972
        %v2005 = vadd.f32 %v1295, %v1973
        %v2006 = vadd.f32 %v1296, %v1974
        %v2007 = vadd.f32 %v1297, %v1975
        %v2008 = vadd.f32 %v1298, %v1976
        %v2009 = vadd.f32 %v1299, %v1977
        %v2010 = vadd.f32 %v1300, %v1978
        %v2011 = vadd.f32 %v1301, %v1979
        %v2012 = vadd.f32 %v1302, %v1980
        %v2013 = vadd.f32 %v1303, %v1981
        %v2014 = vadd.f32 %v1304, %v1982
        %v2015 = vadd.f32 %v1305, %v1983
        %v2016 = vadd.f32 %v1306, %v1984
        %v2017 = vadd.f32 %v1307, %v1985
        %v2018 = vadd.f32 %v1308, %v1986
        %v2019 = vadd.f32 %v1309, %v1987
        %v2020 = vadd.f32 %v1310, %v1988
        %v2021 = vadd.f32 %v1311, %v1989
        %v2022 = vadd.f32 %v1312, %v1990
        %v2023 = vadd.f32 %v1313, %v1991
        %v2024 = vadd.f32 %v1314, %v1992
        %v2025 = vadd.f32 %v1315, %v1993
        %v2026 = vadd.f32 %v1316, %v1994
        %v2027 = vadd.f32 %v1317, %v1995
        %v2028 = vadd.f32 %v1318, %v1996
        %v2029 = vadd.f32 %v1319, %v1997
        %v2030 = vadd.f32 %v1320, %v1998
        %v2031 = vadd.f32 %v1321, %v1999
        %v2032 = vadd.f32 %v1322, %v2000
        %v2033 = vadd.f32 %v1323, %v2001
        %v2034 = vadd.f32 %v1324, %v2002
        %v2035 = vadd.f32 %v1325, %v2003
        %v2036 = vrot.slane %v517, 1
        %v2037 = vrot.slane %v518, 1
        %v2038 = vrot.slane %v519, 1
        %v2039 = vrot.slane %v520, 1
        %v2040 = vrot.slane %v521, 1
        %v2041 = vrot.slane %v522, 1
        %v2042 = vrot.slane %v523, 1
        %v2043 = vrot.slane %v524, 1
        %v2044 = vrot.slane %v525, 1
        %v2045 = vrot.slane %v526, 1
        %v2046 = vrot.slane %v527, 1
        %v2047 = vrot.slane %v528, 1
        %v2048 = vrot.slane %v529, 1
        %v2049 = vrot.slane %v530, 1
        %v2050 = vrot.slane %v531, 1
        %v2051 = vrot.slane %v532, 1
        %v2052 = vrot.slane %v533, 1
        %v2053 = vrot.slane %v534, 1
        %v2054 = vrot.slane %v535, 1
        %v2055 = vrot.slane %v536, 1
        %v2056 = vrot.slane %v537, 1
        %v2057 = vrot.slane %v538, 1
        %v2058 = vrot.slane %v539, 1
        %v2059 = vrot.slane %v540, 1
        %v2060 = vrot.slane %v541, 1
        %v2061 = vrot.slane %v542, 1
        %v2062 = vrot.slane %v543, 1
        %v2063 = vrot.slane %v544, 1
        %v2064 = vrot.slane %v545, 1
        %v2065 = vrot.slane %v546, 1
        %v2066 = vrot.slane %v547, 1
        %v2067 = vrot.slane %v548, 1
        %vm2068 = vcmp.lt.s32.totalorder %v197, 7
        %v2069 = vsel %vm2068, %v2066, %v2067
        %v2070 = vsel %vm2068, %v2065, %v2066
        %v2071 = vsel %vm2068, %v2064, %v2065
        %v2072 = vsel %vm2068, %v2063, %v2064
        %v2073 = vsel %vm2068, %v2062, %v2063
        %v2074 = vsel %vm2068, %v2061, %v2062
        %v2075 = vsel %vm2068, %v2060, %v2061
        %v2076 = vsel %vm2068, %v2059, %v2060
        %v2077 = vsel %vm2068, %v2058, %v2059
        %v2078 = vsel %vm2068, %v2057, %v2058
        %v2079 = vsel %vm2068, %v2056, %v2057
        %v2080 = vsel %vm2068, %v2055, %v2056
        %v2081 = vsel %vm2068, %v2054, %v2055
        %v2082 = vsel %vm2068, %v2053, %v2054
        %v2083 = vsel %vm2068, %v2052, %v2053
        %v2084 = vsel %vm2068, %v2051, %v2052
        %v2085 = vsel %vm2068, %v2050, %v2051
        %v2086 = vsel %vm2068, %v2049, %v2050
        %v2087 = vsel %vm2068, %v2048, %v2049
        %v2088 = vsel %vm2068, %v2047, %v2048
        %v2089 = vsel %vm2068, %v2046, %v2047
        %v2090 = vsel %vm2068, %v2045, %v2046
        %v2091 = vsel %vm2068, %v2044, %v2045
        %v2092 = vsel %vm2068, %v2043, %v2044
        %v2093 = vsel %vm2068, %v2042, %v2043
        %v2094 = vsel %vm2068, %v2041, %v2042
        %v2095 = vsel %vm2068, %v2040, %v2041
        %v2096 = vsel %vm2068, %v2039, %v2040
        %v2097 = vsel %vm2068, %v2038, %v2039
        %v2098 = vsel %vm2068, %v2037, %v2038
        %v2099 = vsel %vm2068, %v2036, %v2037
        %v2100 = vsel %vm2068, %v2067, %v2036
        %v2101 = vmul.f32 %v2099, %v357
        %v2102 = vmul.f32 %v2098, %v358
        %v2103 = vmul.f32 %v2097, %v359
        %v2104 = vmul.f32 %v2096, %v360
        %v2105 = vmul.f32 %v2095, %v361
        %v2106 = vmul.f32 %v2094, %v362
        %v2107 = vmul.f32 %v2093, %v363
        %v2108 = vmul.f32 %v2092, %v364
        %v2109 = vmul.f32 %v2091, %v365
        %v2110 = vmul.f32 %v2090, %v366
        %v2111 = vmul.f32 %v2089, %v367
        %v2112 = vmul.f32 %v2088, %v368
        %v2113 = vmul.f32 %v2087, %v369
        %v2114 = vmul.f32 %v2086, %v370
        %v2115 = vmul.f32 %v2085, %v371
        %v2116 = vmul.f32 %v2084, %v372
        %v2117 = vmul.f32 %v2083, %v373
        %v2118 = vmul.f32 %v2082, %v374
        %v2119 = vmul.f32 %v2081, %v375
        %v2120 = vmul.f32 %v2080, %v376
        %v2121 = vmul.f32 %v2079, %v377
        %v2122 = vmul.f32 %v2078, %v378
        %v2123 = vmul.f32 %v2077, %v379
        %v2124 = vmul.f32 %v2076, %v380
        %v2125 = vmul.f32 %v2075, %v381
        %v2126 = vmul.f32 %v2074, %v382
        %v2127 = vmul.f32 %v2073, %v383
        %v2128 = vmul.f32 %v2072, %v384
        %v2129 = vmul.f32 %v2071, %v385
        %v2130 = vmul.f32 %v2070, %v386
        %v2131 = vmul.f32 %v2069, %v387
        %v2132 = vmul.f32 %v2100, %v388
        %s2133 = scalar_lea.vmem %s1, 8
        %v2134 = vld [vmem:[%s2133] sm:$0xf]
        %v2136 = vsel %vm648, %v2101, 0
        %v2139 = vsel %vm648, %v2102, 0
        %v2142 = vsel %vm648, %v2103, 0
        %v2145 = vsel %vm648, %v2104, 0
        %v2148 = vsel %vm648, %v2105, 0
        %v2151 = vsel %vm648, %v2106, 0
        %v2154 = vsel %vm648, %v2107, 0
        %v2157 = vsel %vm648, %v2108, 0
        %v2160 = vsel %vm648, %v2109, 0
        %v2163 = vsel %vm648, %v2110, 0
        %v2166 = vsel %vm648, %v2111, 0
        %v2169 = vsel %vm648, %v2112, 0
        %v2172 = vsel %vm648, %v2113, 0
        %v2175 = vsel %vm648, %v2114, 0
        %v2178 = vsel %vm648, %v2115, 0
        %v2181 = vsel %vm648, %v2116, 0
        %v2184 = vsel %vm648, %v2117, 0
        %v2187 = vsel %vm648, %v2118, 0
        %v2190 = vsel %vm648, %v2119, 0
        %v2193 = vsel %vm648, %v2120, 0
        %v2196 = vsel %vm648, %v2121, 0
        %v2199 = vsel %vm648, %v2122, 0
        %v2202 = vsel %vm648, %v2123, 0
        %v2205 = vsel %vm648, %v2124, 0
        %v2208 = vsel %vm648, %v2125, 0
        %v2211 = vsel %vm648, %v2126, 0
        %v2214 = vsel %vm648, %v2127, 0
        %v2217 = vsel %vm648, %v2128, 0
        %v2220 = vsel %vm648, %v2129, 0
        %v2223 = vsel %vm648, %v2130, 0
        %v2226 = vsel %vm648, %v2131, 0
        %v2229 = vsel %vm648, %v2132, 0
        %v2232 = vsel %vm745, %v2134, 0
        %2234 = vmatprep.subr.mxu0 0.0
        %2235 = vmatpush1.msra.mxu0 %v2232
        %2236 = vmatprep.subr.mxu0 0.0
        %2237 = vmatpush1.msra.mxu0 0.0
        %2238 = vmatprep.subr.mxu0 0.0
        %2239 = vmatpush1.msra.mxu0 0.0
        %2240 = vmatprep.subr.mxu0 0.0
        %2241 = vmatpush1.msra.mxu0 0.0
        %2242 = vmatprep.subr.mxu0 0.0
        %2243 = vmatpush1.msra.mxu0 0.0
        %2244 = vmatprep.subr.mxu0 0.0
        %2245 = vmatpush1.msra.mxu0 0.0
        %2246 = vmatprep.subr.mxu0 0.0
        %2247 = vmatpush1.msra.mxu0 0.0
        %2248 = vmatprep.subr.mxu0 0.0
        %2249 = vmatpush1.msra.mxu0 0.0
        %2250 = vmatprep.subr.mxu0 0.0
        %2251 = vmatpush1.msra.mxu0 0.0
        %2252 = vmatprep.subr.mxu0 0.0
        %2253 = vmatpush1.msra.mxu0 0.0
        %2254 = vmatprep.subr.mxu0 0.0
        %2255 = vmatpush1.msra.mxu0 0.0
        %2256 = vmatprep.subr.mxu0 0.0
        %2257 = vmatpush1.msra.mxu0 0.0
        %2258 = vmatprep.subr.mxu0 0.0
        %2259 = vmatpush1.msra.mxu0 0.0
        %2260 = vmatprep.subr.mxu0 0.0
        %2261 = vmatpush1.msra.mxu0 0.0
        %2262 = vmatprep.subr.mxu0 0.0
        %2263 = vmatpush1.msra.mxu0 0.0
        %2264 = vmatprep.subr.mxu0 0.0
        %2265 = vmatpush1.msra.mxu0 0.0
        %2266 = vmatprep.subr.mxu0 0.0
        %2267 = vmatpush1.msra.mxu0 0.0
        %2268 = vmatprep.subr.mxu0 0.0
        %2269 = vmatpush1.msra.mxu0 0.0
        %2270 = vmatprep.subr.mxu0 0.0
        %2271 = vmatpush1.msra.mxu0 0.0
        %2272 = vmatprep.subr.mxu0 0.0
        %2273 = vmatpush1.msra.mxu0 0.0
        %2274 = vmatprep.subr.mxu0 0.0
        %2275 = vmatpush1.msra.mxu0 0.0
        %2276 = vmatprep.subr.mxu0 0.0
        %2277 = vmatpush1.msra.mxu0 0.0
        %2278 = vmatprep.subr.mxu0 0.0
        %2279 = vmatpush1.msra.mxu0 0.0
        %2280 = vmatprep.subr.mxu0 0.0
        %2281 = vmatpush1.msra.mxu0 0.0
        %2282 = vmatprep.subr.mxu0 0.0
        %2283 = vmatpush1.msra.mxu0 0.0
        %2284 = vmatprep.subr.mxu0 0.0
        %2285 = vmatpush1.msra.mxu0 0.0
        %2286 = vmatprep.subr.mxu0 0.0
        %2287 = vmatpush1.msra.mxu0 0.0
        %2288 = vmatprep.subr.mxu0 0.0
        %2289 = vmatpush1.msra.mxu0 0.0
        %2290 = vmatprep.subr.mxu0 0.0
        %2291 = vmatpush1.msra.mxu0 0.0
        %2292 = vmatprep.subr.mxu0 0.0
        %2293 = vmatpush1.msra.mxu0 0.0
        %2294 = vmatprep.subr.mxu0 0.0
        %2295 = vmatpush1.msra.mxu0 0.0
        %2296 = vmatprep.subr.mxu0 0.0
        %2297 = vmatpush1.msra.mxu0 0.0
        %2298 = vmatprep.mubr.f32.mxu0 0.0
        %2299 = vmatmul.mubr.f32.gmra.mrb[0].mxu0 %v2136
        %v2300 = vpop.f32.mrb[0].mxu0
        %v2301 = vadd.f32 0.0, %v2300
        %v2302 = vpop.f32.mrb[0].mxu0
        %2303 = vmatprep.mubr.f32.mxu0 0.0
        %2304 = vmatmul.mubr.f32.gmra.mrb[0].mxu0 %v2139
        %v2305 = vpop.f32.mrb[0].mxu0
        %v2306 = vadd.f32 0.0, %v2305
        %v2307 = vpop.f32.mrb[0].mxu0
        %2308 = vmatprep.mubr.f32.mxu0 0.0
        %2309 = vmatmul.mubr.f32.gmra.mrb[0].mxu0 %v2142
        %v2310 = vpop.f32.mrb[0].mxu0
        %v2311 = vadd.f32 0.0, %v2310
        %v2312 = vpop.f32.mrb[0].mxu0
        %2313 = vmatprep.mubr.f32.mxu0 0.0
        %2314 = vmatmul.mubr.f32.gmra.mrb[0].mxu0 %v2145
        %v2315 = vpop.f32.mrb[0].mxu0
        %v2316 = vadd.f32 0.0, %v2315
        %v2317 = vpop.f32.mrb[0].mxu0
        %2318 = vmatprep.mubr.f32.mxu0 0.0
        %2319 = vmatmul.mubr.f32.gmra.mrb[0].mxu0 %v2148
        %v2320 = vpop.f32.mrb[0].mxu0
        %v2321 = vadd.f32 0.0, %v2320
        %v2322 = vpop.f32.mrb[0].mxu0
        %2323 = vmatprep.mubr.f32.mxu0 0.0
        %2324 = vmatmul.mubr.f32.gmra.mrb[0].mxu0 %v2151
        %v2325 = vpop.f32.mrb[0].mxu0
        %v2326 = vadd.f32 0.0, %v2325
        %v2327 = vpop.f32.mrb[0].mxu0
        %2328 = vmatprep.mubr.f32.mxu0 0.0
        %2329 = vmatmul.mubr.f32.gmra.mrb[0].mxu0 %v2154
        %v2330 = vpop.f32.mrb[0].mxu0
        %v2331 = vadd.f32 0.0, %v2330
        %v2332 = vpop.f32.mrb[0].mxu0
        %2333 = vmatprep.mubr.f32.mxu0 0.0
        %2334 = vmatmul.mubr.f32.gmra.mrb[0].mxu0 %v2157
        %v2335 = vpop.f32.mrb[0].mxu0
        %v2336 = vadd.f32 0.0, %v2335
        %v2337 = vpop.f32.mrb[0].mxu0
        %2338 = vmatprep.mubr.f32.mxu0 0.0
        %2339 = vmatmul.mubr.f32.gmra.mrb[0].mxu0 %v2160
        %v2340 = vpop.f32.mrb[0].mxu0
        %v2341 = vadd.f32 0.0, %v2340
        %v2342 = vpop.f32.mrb[0].mxu0
        %2343 = vmatprep.mubr.f32.mxu0 0.0
        %2344 = vmatmul.mubr.f32.gmra.mrb[0].mxu0 %v2163
        %v2345 = vpop.f32.mrb[0].mxu0
        %v2346 = vadd.f32 0.0, %v2345
        %v2347 = vpop.f32.mrb[0].mxu0
        %2348 = vmatprep.mubr.f32.mxu0 0.0
        %2349 = vmatmul.mubr.f32.gmra.mrb[0].mxu0 %v2166
        %v2350 = vpop.f32.mrb[0].mxu0
        %v2351 = vadd.f32 0.0, %v2350
        %v2352 = vpop.f32.mrb[0].mxu0
        %2353 = vmatprep.mubr.f32.mxu0 0.0
        %2354 = vmatmul.mubr.f32.gmra.mrb[0].mxu0 %v2169
        %v2355 = vpop.f32.mrb[0].mxu0
        %v2356 = vadd.f32 0.0, %v2355
        %v2357 = vpop.f32.mrb[0].mxu0
        %2358 = vmatprep.mubr.f32.mxu0 0.0
        %2359 = vmatmul.mubr.f32.gmra.mrb[0].mxu0 %v2172
        %v2360 = vpop.f32.mrb[0].mxu0
        %v2361 = vadd.f32 0.0, %v2360
        %v2362 = vpop.f32.mrb[0].mxu0
        %2363 = vmatprep.mubr.f32.mxu0 0.0
        %2364 = vmatmul.mubr.f32.gmra.mrb[0].mxu0 %v2175
        %v2365 = vpop.f32.mrb[0].mxu0
        %v2366 = vadd.f32 0.0, %v2365
        %v2367 = vpop.f32.mrb[0].mxu0
        %2368 = vmatprep.mubr.f32.mxu0 0.0
        %2369 = vmatmul.mubr.f32.gmra.mrb[0].mxu0 %v2178
        %v2370 = vpop.f32.mrb[0].mxu0
        %v2371 = vadd.f32 0.0, %v2370
        %v2372 = vpop.f32.mrb[0].mxu0
        %2373 = vmatprep.mubr.f32.mxu0 0.0
        %2374 = vmatmul.mubr.f32.gmra.mrb[0].mxu0 %v2181
        %v2375 = vpop.f32.mrb[0].mxu0
        %v2376 = vadd.f32 0.0, %v2375
        %v2377 = vpop.f32.mrb[0].mxu0
        %2378 = vmatprep.mubr.f32.mxu0 0.0
        %2379 = vmatmul.mubr.f32.gmra.mrb[0].mxu0 %v2184
        %v2380 = vpop.f32.mrb[0].mxu0
        %v2381 = vadd.f32 0.0, %v2380
        %v2382 = vpop.f32.mrb[0].mxu0
        %2383 = vmatprep.mubr.f32.mxu0 0.0
        %2384 = vmatmul.mubr.f32.gmra.mrb[0].mxu0 %v2187
        %v2385 = vpop.f32.mrb[0].mxu0
        %v2386 = vadd.f32 0.0, %v2385
        %v2387 = vpop.f32.mrb[0].mxu0
        %2388 = vmatprep.mubr.f32.mxu0 0.0
        %2389 = vmatmul.mubr.f32.gmra.mrb[0].mxu0 %v2190
        %v2390 = vpop.f32.mrb[0].mxu0
        %v2391 = vadd.f32 0.0, %v2390
        %v2392 = vpop.f32.mrb[0].mxu0
        %2393 = vmatprep.mubr.f32.mxu0 0.0
        %2394 = vmatmul.mubr.f32.gmra.mrb[0].mxu0 %v2193
        %v2395 = vpop.f32.mrb[0].mxu0
        %v2396 = vadd.f32 0.0, %v2395
        %v2397 = vpop.f32.mrb[0].mxu0
        %2398 = vmatprep.mubr.f32.mxu0 0.0
        %2399 = vmatmul.mubr.f32.gmra.mrb[0].mxu0 %v2196
        %v2400 = vpop.f32.mrb[0].mxu0
        %v2401 = vadd.f32 0.0, %v2400
        %v2402 = vpop.f32.mrb[0].mxu0
        %2403 = vmatprep.mubr.f32.mxu0 0.0
        %2404 = vmatmul.mubr.f32.gmra.mrb[0].mxu0 %v2199
        %v2405 = vpop.f32.mrb[0].mxu0
        %v2406 = vadd.f32 0.0, %v2405
        %v2407 = vpop.f32.mrb[0].mxu0
        %2408 = vmatprep.mubr.f32.mxu0 0.0
        %2409 = vmatmul.mubr.f32.gmra.mrb[0].mxu0 %v2202
        %v2410 = vpop.f32.mrb[0].mxu0
        %v2411 = vadd.f32 0.0, %v2410
        %v2412 = vpop.f32.mrb[0].mxu0
        %2413 = vmatprep.mubr.f32.mxu0 0.0
        %2414 = vmatmul.mubr.f32.gmra.mrb[0].mxu0 %v2205
        %v2415 = vpop.f32.mrb[0].mxu0
        %v2416 = vadd.f32 0.0, %v2415
        %v2417 = vpop.f32.mrb[0].mxu0
        %2418 = vmatprep.mubr.f32.mxu0 0.0
        %2419 = vmatmul.mubr.f32.gmra.mrb[0].mxu0 %v2208
        %v2420 = vpop.f32.mrb[0].mxu0
        %v2421 = vadd.f32 0.0, %v2420
        %v2422 = vpop.f32.mrb[0].mxu0
        %2423 = vmatprep.mubr.f32.mxu0 0.0
        %2424 = vmatmul.mubr.f32.gmra.mrb[0].mxu0 %v2211
        %v2425 = vpop.f32.mrb[0].mxu0
        %v2426 = vadd.f32 0.0, %v2425
        %v2427 = vpop.f32.mrb[0].mxu0
        %2428 = vmatprep.mubr.f32.mxu0 0.0
        %2429 = vmatmul.mubr.f32.gmra.mrb[0].mxu0 %v2214
        %v2430 = vpop.f32.mrb[0].mxu0
        %v2431 = vadd.f32 0.0, %v2430
        %v2432 = vpop.f32.mrb[0].mxu0
        %2433 = vmatprep.mubr.f32.mxu0 0.0
        %2434 = vmatmul.mubr.f32.gmra.mrb[0].mxu0 %v2217
        %v2435 = vpop.f32.mrb[0].mxu0
        %v2436 = vadd.f32 0.0, %v2435
        %v2437 = vpop.f32.mrb[0].mxu0
        %2438 = vmatprep.mubr.f32.mxu0 0.0
        %2439 = vmatmul.mubr.f32.gmra.mrb[0].mxu0 %v2220
        %v2440 = vpop.f32.mrb[0].mxu0
        %v2441 = vadd.f32 0.0, %v2440
        %v2442 = vpop.f32.mrb[0].mxu0
        %2443 = vmatprep.mubr.f32.mxu0 0.0
        %2444 = vmatmul.mubr.f32.gmra.mrb[0].mxu0 %v2223
        %v2445 = vpop.f32.mrb[0].mxu0
        %v2446 = vadd.f32 0.0, %v2445
        %v2447 = vpop.f32.mrb[0].mxu0
        %2448 = vmatprep.mubr.f32.mxu0 0.0
        %2449 = vmatmul.mubr.f32.gmra.mrb[0].mxu0 %v2226
        %v2450 = vpop.f32.mrb[0].mxu0
        %v2451 = vadd.f32 0.0, %v2450
        %v2452 = vpop.f32.mrb[0].mxu0
        %2453 = vmatprep.mubr.f32.mxu0 0.0
        %2454 = vmatmul.mubr.f32.gmra.mrb[0].mxu0 %v2229
        %v2455 = vpop.f32.mrb[0].mxu0
        %v2456 = vadd.f32 0.0, %v2455
        %v2457 = vpop.f32.mrb[0].mxu0
        %2458 = vdwg.mxu0
        %v2459 = vmul.f32 %v2451, %v421
        %v2460 = vmul.f32 %v2456, %v422
        %v2461 = vmul.f32 %v2301, %v423
        %v2462 = vmul.f32 %v2306, %v424
        %v2463 = vmul.f32 %v2311, %v425
        %v2464 = vmul.f32 %v2316, %v426
        %v2465 = vmul.f32 %v2321, %v427
        %v2466 = vmul.f32 %v2326, %v428
        %v2467 = vmul.f32 %v2331, %v429
        %v2468 = vmul.f32 %v2336, %v430
        %v2469 = vmul.f32 %v2341, %v431
        %v2470 = vmul.f32 %v2346, %v432
        %v2471 = vmul.f32 %v2351, %v433
        %v2472 = vmul.f32 %v2356, %v434
        %v2473 = vmul.f32 %v2361, %v435
        %v2474 = vmul.f32 %v2366, %v436
        %v2475 = vmul.f32 %v2371, %v437
        %v2476 = vmul.f32 %v2376, %v438
        %v2477 = vmul.f32 %v2381, %v439
        %v2478 = vmul.f32 %v2386, %v440
        %v2479 = vmul.f32 %v2391, %v441
        %v2480 = vmul.f32 %v2396, %v442
        %v2481 = vmul.f32 %v2401, %v443
        %v2482 = vmul.f32 %v2406, %v444
        %v2483 = vmul.f32 %v2411, %v445
        %v2484 = vmul.f32 %v2416, %v446
        %v2485 = vmul.f32 %v2421, %v447
        %v2486 = vmul.f32 %v2426, %v448
        %v2487 = vmul.f32 %v2431, %v449
        %v2488 = vmul.f32 %v2436, %v450
        %v2489 = vmul.f32 %v2441, %v451
        %v2490 = vmul.f32 %v2446, %v452
        %2523 = vrot.lane.b32.xlu0 %v2301, 96
        %v2524 = vpop.permute.xlu0 %2523
        %2525 = vrot.lane.b32.xlu0 %v2306, 96
        %v2526 = vpop.permute.xlu0 %2525
        %2527 = vrot.lane.b32.xlu0 %v2311, 96
        %v2528 = vpop.permute.xlu0 %2527
        %2529 = vrot.lane.b32.xlu0 %v2316, 96
        %v2530 = vpop.permute.xlu0 %2529
        %2531 = vrot.lane.b32.xlu0 %v2321, 96
        %v2532 = vpop.permute.xlu0 %2531
        %2533 = vrot.lane.b32.xlu0 %v2326, 96
        %v2534 = vpop.permute.xlu0 %2533
        %2535 = vrot.lane.b32.xlu0 %v2331, 96
        %v2536 = vpop.permute.xlu0 %2535
        %2537 = vrot.lane.b32.xlu0 %v2336, 96
        %v2538 = vpop.permute.xlu0 %2537
        %2539 = vrot.lane.b32.xlu0 %v2341, 96
        %v2540 = vpop.permute.xlu0 %2539
        %2541 = vrot.lane.b32.xlu0 %v2346, 96
        %v2542 = vpop.permute.xlu0 %2541
        %2543 = vrot.lane.b32.xlu0 %v2351, 96
        %v2544 = vpop.permute.xlu0 %2543
        %2545 = vrot.lane.b32.xlu0 %v2356, 96
        %v2546 = vpop.permute.xlu0 %2545
        %2547 = vrot.lane.b32.xlu0 %v2361, 96
        %v2548 = vpop.permute.xlu0 %2547
        %2549 = vrot.lane.b32.xlu0 %v2366, 96
        %v2550 = vpop.permute.xlu0 %2549
        %2551 = vrot.lane.b32.xlu0 %v2371, 96
        %v2552 = vpop.permute.xlu0 %2551
        %2553 = vrot.lane.b32.xlu0 %v2376, 96
        %v2554 = vpop.permute.xlu0 %2553
        %2555 = vrot.lane.b32.xlu0 %v2381, 96
        %v2556 = vpop.permute.xlu0 %2555
        %2557 = vrot.lane.b32.xlu0 %v2386, 96
        %v2558 = vpop.permute.xlu0 %2557
        %2559 = vrot.lane.b32.xlu0 %v2391, 96
        %v2560 = vpop.permute.xlu0 %2559
        %2561 = vrot.lane.b32.xlu0 %v2396, 96
        %v2562 = vpop.permute.xlu0 %2561
        %2563 = vrot.lane.b32.xlu0 %v2401, 96
        %v2564 = vpop.permute.xlu0 %2563
        %2565 = vrot.lane.b32.xlu0 %v2406, 96
        %v2566 = vpop.permute.xlu0 %2565
        %2567 = vrot.lane.b32.xlu0 %v2411, 96
        %v2568 = vpop.permute.xlu0 %2567
        %2569 = vrot.lane.b32.xlu0 %v2416, 96
        %v2570 = vpop.permute.xlu0 %2569
        %2571 = vrot.lane.b32.xlu0 %v2421, 96
        %v2572 = vpop.permute.xlu0 %2571
        %2573 = vrot.lane.b32.xlu0 %v2426, 96
        %v2574 = vpop.permute.xlu0 %2573
        %2575 = vrot.lane.b32.xlu0 %v2431, 96
        %v2576 = vpop.permute.xlu0 %2575
        %2577 = vrot.lane.b32.xlu0 %v2436, 96
        %v2578 = vpop.permute.xlu0 %2577
        %2579 = vrot.lane.b32.xlu0 %v2441, 96
        %v2580 = vpop.permute.xlu0 %2579
        %2581 = vrot.lane.b32.xlu0 %v2446, 96
        %v2582 = vpop.permute.xlu0 %2581
        %2583 = vrot.lane.b32.xlu0 %v2451, 96
        %v2584 = vpop.permute.xlu0 %2583
        %2585 = vrot.lane.b32.xlu0 %v2456, 96
        %v2586 = vpop.permute.xlu0 %2585
        %v2619 = vadd.f32 %v2459, %v2524
        %v2620 = vadd.f32 %v2460, %v2526
        %v2621 = vadd.f32 %v2461, %v2528
        %v2622 = vadd.f32 %v2462, %v2530
        %v2623 = vadd.f32 %v2463, %v2532
        %v2624 = vadd.f32 %v2464, %v2534
        %v2625 = vadd.f32 %v2465, %v2536
        %v2626 = vadd.f32 %v2466, %v2538
        %v2627 = vadd.f32 %v2467, %v2540
        %v2628 = vadd.f32 %v2468, %v2542
        %v2629 = vadd.f32 %v2469, %v2544
        %v2630 = vadd.f32 %v2470, %v2546
        %v2631 = vadd.f32 %v2471, %v2548
        %v2632 = vadd.f32 %v2472, %v2550
        %v2633 = vadd.f32 %v2473, %v2552
        %v2634 = vadd.f32 %v2474, %v2554
        %v2635 = vadd.f32 %v2475, %v2556
        %v2636 = vadd.f32 %v2476, %v2558
        %v2637 = vadd.f32 %v2477, %v2560
        %v2638 = vadd.f32 %v2478, %v2562
        %v2639 = vadd.f32 %v2479, %v2564
        %v2640 = vadd.f32 %v2480, %v2566
        %v2641 = vadd.f32 %v2481, %v2568
        %v2642 = vadd.f32 %v2482, %v2570
        %v2643 = vadd.f32 %v2483, %v2572
        %v2644 = vadd.f32 %v2484, %v2574
        %v2645 = vadd.f32 %v2485, %v2576
        %v2646 = vadd.f32 %v2486, %v2578
        %v2647 = vadd.f32 %v2487, %v2580
        %v2648 = vadd.f32 %v2488, %v2582
        %v2649 = vadd.f32 %v2489, %v2584
        %v2650 = vadd.f32 %v2490, %v2586
        %2651 = vrot.lane.b32.xlu0 %v2301, 64
        %v2652 = vpop.permute.xlu0 %2651
        %2653 = vrot.lane.b32.xlu0 %v2306, 64
        %v2654 = vpop.permute.xlu0 %2653
        %2655 = vrot.lane.b32.xlu0 %v2311, 64
        %v2656 = vpop.permute.xlu0 %2655
        %2657 = vrot.lane.b32.xlu0 %v2316, 64
        %v2658 = vpop.permute.xlu0 %2657
        %2659 = vrot.lane.b32.xlu0 %v2321, 64
        %v2660 = vpop.permute.xlu0 %2659
        %2661 = vrot.lane.b32.xlu0 %v2326, 64
        %v2662 = vpop.permute.xlu0 %2661
        %2663 = vrot.lane.b32.xlu0 %v2331, 64
        %v2664 = vpop.permute.xlu0 %2663
        %2665 = vrot.lane.b32.xlu0 %v2336, 64
        %v2666 = vpop.permute.xlu0 %2665
        %2667 = vrot.lane.b32.xlu0 %v2341, 64
        %v2668 = vpop.permute.xlu0 %2667
        %2669 = vrot.lane.b32.xlu0 %v2346, 64
        %v2670 = vpop.permute.xlu0 %2669
        %2671 = vrot.lane.b32.xlu0 %v2351, 64
        %v2672 = vpop.permute.xlu0 %2671
        %2673 = vrot.lane.b32.xlu0 %v2356, 64
        %v2674 = vpop.permute.xlu0 %2673
        %2675 = vrot.lane.b32.xlu0 %v2361, 64
        %v2676 = vpop.permute.xlu0 %2675
        %2677 = vrot.lane.b32.xlu0 %v2366, 64
        %v2678 = vpop.permute.xlu0 %2677
        %2679 = vrot.lane.b32.xlu0 %v2371, 64
        %v2680 = vpop.permute.xlu0 %2679
        %2681 = vrot.lane.b32.xlu0 %v2376, 64
        %v2682 = vpop.permute.xlu0 %2681
        %2683 = vrot.lane.b32.xlu0 %v2381, 64
        %v2684 = vpop.permute.xlu0 %2683
        %2685 = vrot.lane.b32.xlu0 %v2386, 64
        %v2686 = vpop.permute.xlu0 %2685
        %2687 = vrot.lane.b32.xlu0 %v2391, 64
        %v2688 = vpop.permute.xlu0 %2687
        %2689 = vrot.lane.b32.xlu0 %v2396, 64
        %v2690 = vpop.permute.xlu0 %2689
        %2691 = vrot.lane.b32.xlu0 %v2401, 64
        %v2692 = vpop.permute.xlu0 %2691
        %2693 = vrot.lane.b32.xlu0 %v2406, 64
        %v2694 = vpop.permute.xlu0 %2693
        %2695 = vrot.lane.b32.xlu0 %v2411, 64
        %v2696 = vpop.permute.xlu0 %2695
        %2697 = vrot.lane.b32.xlu0 %v2416, 64
        %v2698 = vpop.permute.xlu0 %2697
        %2699 = vrot.lane.b32.xlu0 %v2421, 64
        %v2700 = vpop.permute.xlu0 %2699
        %2701 = vrot.lane.b32.xlu0 %v2426, 64
        %v2702 = vpop.permute.xlu0 %2701
        %2703 = vrot.lane.b32.xlu0 %v2431, 64
        %v2704 = vpop.permute.xlu0 %2703
        %2705 = vrot.lane.b32.xlu0 %v2436, 64
        %v2706 = vpop.permute.xlu0 %2705
        %2707 = vrot.lane.b32.xlu0 %v2441, 64
        %v2708 = vpop.permute.xlu0 %2707
        %2709 = vrot.lane.b32.xlu0 %v2446, 64
        %v2710 = vpop.permute.xlu0 %2709
        %2711 = vrot.lane.b32.xlu0 %v2451, 64
        %v2712 = vpop.permute.xlu0 %2711
        %2713 = vrot.lane.b32.xlu0 %v2456, 64
        %v2714 = vpop.permute.xlu0 %2713
        %v2747 = vmul.f32 %v2656, %v485
        %v2748 = vmul.f32 %v2658, %v486
        %v2749 = vmul.f32 %v2660, %v487
        %v2750 = vmul.f32 %v2662, %v488
        %v2751 = vmul.f32 %v2664, %v489
        %v2752 = vmul.f32 %v2666, %v490
        %v2753 = vmul.f32 %v2668, %v491
        %v2754 = vmul.f32 %v2670, %v492
        %v2755 = vmul.f32 %v2672, %v493
        %v2756 = vmul.f32 %v2674, %v494
        %v2757 = vmul.f32 %v2676, %v495
        %v2758 = vmul.f32 %v2678, %v496
        %v2759 = vmul.f32 %v2680, %v497
        %v2760 = vmul.f32 %v2682, %v498
        %v2761 = vmul.f32 %v2684, %v499
        %v2762 = vmul.f32 %v2686, %v500
        %v2763 = vmul.f32 %v2688, %v501
        %v2764 = vmul.f32 %v2690, %v502
        %v2765 = vmul.f32 %v2692, %v503
        %v2766 = vmul.f32 %v2694, %v504
        %v2767 = vmul.f32 %v2696, %v505
        %v2768 = vmul.f32 %v2698, %v506
        %v2769 = vmul.f32 %v2700, %v507
        %v2770 = vmul.f32 %v2702, %v508
        %v2771 = vmul.f32 %v2704, %v509
        %v2772 = vmul.f32 %v2706, %v510
        %v2773 = vmul.f32 %v2708, %v511
        %v2774 = vmul.f32 %v2710, %v512
        %v2775 = vmul.f32 %v2712, %v513
        %v2776 = vmul.f32 %v2714, %v514
        %v2777 = vmul.f32 %v2652, %v515
        %v2778 = vmul.f32 %v2654, %v516
        %v2779 = vadd.f32 %v2619, %v2747
        %v2780 = vadd.f32 %v2620, %v2748
        %v2781 = vadd.f32 %v2621, %v2749
        %v2782 = vadd.f32 %v2622, %v2750
        %v2783 = vadd.f32 %v2623, %v2751
        %v2784 = vadd.f32 %v2624, %v2752
        %v2785 = vadd.f32 %v2625, %v2753
        %v2786 = vadd.f32 %v2626, %v2754
        %v2787 = vadd.f32 %v2627, %v2755
        %v2788 = vadd.f32 %v2628, %v2756
        %v2789 = vadd.f32 %v2629, %v2757
        %v2790 = vadd.f32 %v2630, %v2758
        %v2791 = vadd.f32 %v2631, %v2759
        %v2792 = vadd.f32 %v2632, %v2760
        %v2793 = vadd.f32 %v2633, %v2761
        %v2794 = vadd.f32 %v2634, %v2762
        %v2795 = vadd.f32 %v2635, %v2763
        %v2796 = vadd.f32 %v2636, %v2764
        %v2797 = vadd.f32 %v2637, %v2765
        %v2798 = vadd.f32 %v2638, %v2766
        %v2799 = vadd.f32 %v2639, %v2767
        %v2800 = vadd.f32 %v2640, %v2768
        %v2801 = vadd.f32 %v2641, %v2769
        %v2802 = vadd.f32 %v2642, %v2770
        %v2803 = vadd.f32 %v2643, %v2771
        %v2804 = vadd.f32 %v2644, %v2772
        %v2805 = vadd.f32 %v2645, %v2773
        %v2806 = vadd.f32 %v2646, %v2774
        %v2807 = vadd.f32 %v2647, %v2775
        %v2808 = vadd.f32 %v2648, %v2776
        %v2809 = vadd.f32 %v2649, %v2777
        %v2810 = vadd.f32 %v2650, %v2778
        %v2811 = vadd.f32 %v2004, %v2779
        %v2812 = vadd.f32 %v2005, %v2780
        %v2813 = vadd.f32 %v2006, %v2781
        %v2814 = vadd.f32 %v2007, %v2782
        %v2815 = vadd.f32 %v2008, %v2783
        %v2816 = vadd.f32 %v2009, %v2784
        %v2817 = vadd.f32 %v2010, %v2785
        %v2818 = vadd.f32 %v2011, %v2786
        %v2819 = vadd.f32 %v2012, %v2787
        %v2820 = vadd.f32 %v2013, %v2788
        %v2821 = vadd.f32 %v2014, %v2789
        %v2822 = vadd.f32 %v2015, %v2790
        %v2823 = vadd.f32 %v2016, %v2791
        %v2824 = vadd.f32 %v2017, %v2792
        %v2825 = vadd.f32 %v2018, %v2793
        %v2826 = vadd.f32 %v2019, %v2794
        %v2827 = vadd.f32 %v2020, %v2795
        %v2828 = vadd.f32 %v2021, %v2796
        %v2829 = vadd.f32 %v2022, %v2797
        %v2830 = vadd.f32 %v2023, %v2798
        %v2831 = vadd.f32 %v2024, %v2799
        %v2832 = vadd.f32 %v2025, %v2800
        %v2833 = vadd.f32 %v2026, %v2801
        %v2834 = vadd.f32 %v2027, %v2802
        %v2835 = vadd.f32 %v2028, %v2803
        %v2836 = vadd.f32 %v2029, %v2804
        %v2837 = vadd.f32 %v2030, %v2805
        %v2838 = vadd.f32 %v2031, %v2806
        %v2839 = vadd.f32 %v2032, %v2807
        %v2840 = vadd.f32 %v2033, %v2808
        %v2841 = vadd.f32 %v2034, %v2809
        %v2842 = vadd.f32 %v2035, %v2810
        %v2843 = vmax.f32 %v2811, 0.0
        %v2844 = vmax.f32 %v2812, 0.0
        %v2845 = vmax.f32 %v2813, 0.0
        %v2846 = vmax.f32 %v2814, 0.0
        %v2847 = vmax.f32 %v2815, 0.0
        %v2848 = vmax.f32 %v2816, 0.0
        %v2849 = vmax.f32 %v2817, 0.0
        %v2850 = vmax.f32 %v2818, 0.0
        %v2851 = vmax.f32 %v2819, 0.0
        %v2852 = vmax.f32 %v2820, 0.0
        %v2853 = vmax.f32 %v2821, 0.0
        %v2854 = vmax.f32 %v2822, 0.0
        %v2855 = vmax.f32 %v2823, 0.0
        %v2856 = vmax.f32 %v2824, 0.0
        %v2857 = vmax.f32 %v2825, 0.0
        %v2858 = vmax.f32 %v2826, 0.0
        %v2859 = vmax.f32 %v2827, 0.0
        %v2860 = vmax.f32 %v2828, 0.0
        %v2861 = vmax.f32 %v2829, 0.0
        %v2862 = vmax.f32 %v2830, 0.0
        %v2863 = vmax.f32 %v2831, 0.0
        %v2864 = vmax.f32 %v2832, 0.0
        %v2865 = vmax.f32 %v2833, 0.0
        %v2866 = vmax.f32 %v2834, 0.0
        %v2867 = vmax.f32 %v2835, 0.0
        %v2868 = vmax.f32 %v2836, 0.0
        %v2869 = vmax.f32 %v2837, 0.0
        %v2870 = vmax.f32 %v2838, 0.0
        %v2871 = vmax.f32 %v2839, 0.0
        %v2872 = vmax.f32 %v2840, 0.0
        %v2873 = vmax.f32 %v2841, 0.0
        %v2874 = vmax.f32 %v2842, 0.0
        %v2875 = vlaneseq
        %v2876 = vshrl.u32 %v2875, 7
        %v2877 = vsub.s32 0, %v2876
        %v2878 = vrot.slane %v549, %v2877
        %v2879 = vmul.f32 %v2843, %v2878
        %v2880 = vmul.f32 %v2844, %v2878
        %v2881 = vmul.f32 %v2845, %v2878
        %v2882 = vmul.f32 %v2846, %v2878
        %v2883 = vmul.f32 %v2847, %v2878
        %v2884 = vmul.f32 %v2848, %v2878
        %v2885 = vmul.f32 %v2849, %v2878
        %v2886 = vmul.f32 %v2850, %v2878
        %v2887 = vmul.f32 %v2851, %v2878
        %v2888 = vmul.f32 %v2852, %v2878
        %v2889 = vmul.f32 %v2853, %v2878
        %v2890 = vmul.f32 %v2854, %v2878
        %v2891 = vmul.f32 %v2855, %v2878
        %v2892 = vmul.f32 %v2856, %v2878
        %v2893 = vmul.f32 %v2857, %v2878
        %v2894 = vmul.f32 %v2858, %v2878
        %v2895 = vmul.f32 %v2859, %v2878
        %v2896 = vmul.f32 %v2860, %v2878
        %v2897 = vmul.f32 %v2861, %v2878
        %v2898 = vmul.f32 %v2862, %v2878
        %v2899 = vmul.f32 %v2863, %v2878
        %v2900 = vmul.f32 %v2864, %v2878
        %v2901 = vmul.f32 %v2865, %v2878
        %v2902 = vmul.f32 %v2866, %v2878
        %v2903 = vmul.f32 %v2867, %v2878
        %v2904 = vmul.f32 %v2868, %v2878
        %v2905 = vmul.f32 %v2869, %v2878
        %v2906 = vmul.f32 %v2870, %v2878
        %v2907 = vmul.f32 %v2871, %v2878
        %v2908 = vmul.f32 %v2872, %v2878
        %v2909 = vmul.f32 %v2873, %v2878
        %v2910 = vmul.f32 %v2874, %v2878
        %v2911 = vlaneseq
        %v2912 = vshrl.u32 %v2911, 7
        %v2913 = vsub.s32 1, %v2912
        %v2914 = vrot.slane %v549, %v2913
        %v2915 = vadd.f32 %v2879, %v2914
        %v2916 = vadd.f32 %v2880, %v2914
        %v2917 = vadd.f32 %v2881, %v2914
        %v2918 = vadd.f32 %v2882, %v2914
        %v2919 = vadd.f32 %v2883, %v2914
        %v2920 = vadd.f32 %v2884, %v2914
        %v2921 = vadd.f32 %v2885, %v2914
        %v2922 = vadd.f32 %v2886, %v2914
        %v2923 = vadd.f32 %v2887, %v2914
        %v2924 = vadd.f32 %v2888, %v2914
        %v2925 = vadd.f32 %v2889, %v2914
        %v2926 = vadd.f32 %v2890, %v2914
        %v2927 = vadd.f32 %v2891, %v2914
        %v2928 = vadd.f32 %v2892, %v2914
        %v2929 = vadd.f32 %v2893, %v2914
        %v2930 = vadd.f32 %v2894, %v2914
        %v2931 = vadd.f32 %v2895, %v2914
        %v2932 = vadd.f32 %v2896, %v2914
        %v2933 = vadd.f32 %v2897, %v2914
        %v2934 = vadd.f32 %v2898, %v2914
        %v2935 = vadd.f32 %v2899, %v2914
        %v2936 = vadd.f32 %v2900, %v2914
        %v2937 = vadd.f32 %v2901, %v2914
        %v2938 = vadd.f32 %v2902, %v2914
        %v2939 = vadd.f32 %v2903, %v2914
        %v2940 = vadd.f32 %v2904, %v2914
        %v2941 = vadd.f32 %v2905, %v2914
        %v2942 = vadd.f32 %v2906, %v2914
        %v2943 = vadd.f32 %v2907, %v2914
        %v2944 = vadd.f32 %v2908, %v2914
        %v2945 = vadd.f32 %v2909, %v2914
        %v2946 = vadd.f32 %v2910, %v2914
        %v2947 = vlaneseq
        %v2948 = vshrl.u32 %v2947, 7
        %v2949 = vsub.s32 2, %v2948
        %v2950 = vrot.slane %v549, %v2949
        %2952 = vrot.lane.b32.xlu0 %v2950, 96
        %v2953 = vpop.permute.xlu0 %2952
        %v2955 = vmul.f32 %v1494, %v2953
        %v2956 = vmul.f32 %v1499, %v2953
        %v2957 = vmul.f32 %v1504, %v2953
        %v2958 = vmul.f32 %v1509, %v2953
        %v2959 = vmul.f32 %v1514, %v2953
        %v2960 = vmul.f32 %v1519, %v2953
        %v2961 = vmul.f32 %v1524, %v2953
        %v2962 = vmul.f32 %v1529, %v2953
        %v2963 = vmul.f32 %v1534, %v2953
        %v2964 = vmul.f32 %v1539, %v2953
        %v2965 = vmul.f32 %v1544, %v2953
        %v2966 = vmul.f32 %v1549, %v2953
        %v2967 = vmul.f32 %v1554, %v2953
        %v2968 = vmul.f32 %v1559, %v2953
        %v2969 = vmul.f32 %v1564, %v2953
        %v2970 = vmul.f32 %v1569, %v2953
        %v2971 = vmul.f32 %v1574, %v2953
        %v2972 = vmul.f32 %v1579, %v2953
        %v2973 = vmul.f32 %v1584, %v2953
        %v2974 = vmul.f32 %v1589, %v2953
        %v2975 = vmul.f32 %v1594, %v2953
        %v2976 = vmul.f32 %v1599, %v2953
        %v2977 = vmul.f32 %v1604, %v2953
        %v2978 = vmul.f32 %v1609, %v2953
        %v2979 = vmul.f32 %v1614, %v2953
        %v2980 = vmul.f32 %v1619, %v2953
        %v2981 = vmul.f32 %v1624, %v2953
        %v2982 = vmul.f32 %v1629, %v2953
        %v2983 = vmul.f32 %v1634, %v2953
        %v2984 = vmul.f32 %v1639, %v2953
        %v2985 = vmul.f32 %v1644, %v2953
        %v2986 = vmul.f32 %v1649, %v2953
        %v2987 = vlaneseq
        %v2988 = vshrl.u32 %v2987, 7
        %v2989 = vsub.s32 3, %v2988
        %v2990 = vrot.slane %v549, %v2989
        %2992 = vrot.lane.b32.xlu0 %v2990, 96
        %v2993 = vpop.permute.xlu0 %2992
        %v2995 = vadd.f32 %v2955, %v2993
        %v2996 = vadd.f32 %v2956, %v2993
        %v2997 = vadd.f32 %v2957, %v2993
        %v2998 = vadd.f32 %v2958, %v2993
        %v2999 = vadd.f32 %v2959, %v2993
        %v3000 = vadd.f32 %v2960, %v2993
        %v3001 = vadd.f32 %v2961, %v2993
        %v3002 = vadd.f32 %v2962, %v2993
        %v3003 = vadd.f32 %v2963, %v2993
        %v3004 = vadd.f32 %v2964, %v2993
        %v3005 = vadd.f32 %v2965, %v2993
        %v3006 = vadd.f32 %v2966, %v2993
        %v3007 = vadd.f32 %v2967, %v2993
        %v3008 = vadd.f32 %v2968, %v2993
        %v3009 = vadd.f32 %v2969, %v2993
        %v3010 = vadd.f32 %v2970, %v2993
        %v3011 = vadd.f32 %v2971, %v2993
        %v3012 = vadd.f32 %v2972, %v2993
        %v3013 = vadd.f32 %v2973, %v2993
        %v3014 = vadd.f32 %v2974, %v2993
        %v3015 = vadd.f32 %v2975, %v2993
        %v3016 = vadd.f32 %v2976, %v2993
        %v3017 = vadd.f32 %v2977, %v2993
        %v3018 = vadd.f32 %v2978, %v2993
        %v3019 = vadd.f32 %v2979, %v2993
        %v3020 = vadd.f32 %v2980, %v2993
        %v3021 = vadd.f32 %v2981, %v2993
        %v3022 = vadd.f32 %v2982, %v2993
        %v3023 = vadd.f32 %v2983, %v2993
        %v3024 = vadd.f32 %v2984, %v2993
        %v3025 = vadd.f32 %v2985, %v2993
        %v3026 = vadd.f32 %v2986, %v2993
        %3059 = vrot.lane.b32.xlu0 %v2995, 32
        %v3060 = vpop.permute.xlu0 %3059
        %3061 = vrot.lane.b32.xlu0 %v2996, 32
        %v3062 = vpop.permute.xlu0 %3061
        %3063 = vrot.lane.b32.xlu0 %v2997, 32
        %v3064 = vpop.permute.xlu0 %3063
        %3065 = vrot.lane.b32.xlu0 %v2998, 32
        %v3066 = vpop.permute.xlu0 %3065
        %3067 = vrot.lane.b32.xlu0 %v2999, 32
        %v3068 = vpop.permute.xlu0 %3067
        %3069 = vrot.lane.b32.xlu0 %v3000, 32
        %v3070 = vpop.permute.xlu0 %3069
        %3071 = vrot.lane.b32.xlu0 %v3001, 32
        %v3072 = vpop.permute.xlu0 %3071
        %3073 = vrot.lane.b32.xlu0 %v3002, 32
        %v3074 = vpop.permute.xlu0 %3073
        %3075 = vrot.lane.b32.xlu0 %v3003, 32
        %v3076 = vpop.permute.xlu0 %3075
        %3077 = vrot.lane.b32.xlu0 %v3004, 32
        %v3078 = vpop.permute.xlu0 %3077
        %3079 = vrot.lane.b32.xlu0 %v3005, 32
        %v3080 = vpop.permute.xlu0 %3079
        %3081 = vrot.lane.b32.xlu0 %v3006, 32
        %v3082 = vpop.permute.xlu0 %3081
        %3083 = vrot.lane.b32.xlu0 %v3007, 32
        %v3084 = vpop.permute.xlu0 %3083
        %3085 = vrot.lane.b32.xlu0 %v3008, 32
        %v3086 = vpop.permute.xlu0 %3085
        %3087 = vrot.lane.b32.xlu0 %v3009, 32
        %v3088 = vpop.permute.xlu0 %3087
        %3089 = vrot.lane.b32.xlu0 %v3010, 32
        %v3090 = vpop.permute.xlu0 %3089
        %3091 = vrot.lane.b32.xlu0 %v3011, 32
        %v3092 = vpop.permute.xlu0 %3091
        %3093 = vrot.lane.b32.xlu0 %v3012, 32
        %v3094 = vpop.permute.xlu0 %3093
        %3095 = vrot.lane.b32.xlu0 %v3013, 32
        %v3096 = vpop.permute.xlu0 %3095
        %3097 = vrot.lane.b32.xlu0 %v3014, 32
        %v3098 = vpop.permute.xlu0 %3097
        %3099 = vrot.lane.b32.xlu0 %v3015, 32
        %v3100 = vpop.permute.xlu0 %3099
        %3101 = vrot.lane.b32.xlu0 %v3016, 32
        %v3102 = vpop.permute.xlu0 %3101
        %3103 = vrot.lane.b32.xlu0 %v3017, 32
        %v3104 = vpop.permute.xlu0 %3103
        %3105 = vrot.lane.b32.xlu0 %v3018, 32
        %v3106 = vpop.permute.xlu0 %3105
        %3107 = vrot.lane.b32.xlu0 %v3019, 32
        %v3108 = vpop.permute.xlu0 %3107
        %3109 = vrot.lane.b32.xlu0 %v3020, 32
        %v3110 = vpop.permute.xlu0 %3109
        %3111 = vrot.lane.b32.xlu0 %v3021, 32
        %v3112 = vpop.permute.xlu0 %3111
        %3113 = vrot.lane.b32.xlu0 %v3022, 32
        %v3114 = vpop.permute.xlu0 %3113
        %3115 = vrot.lane.b32.xlu0 %v3023, 32
        %v3116 = vpop.permute.xlu0 %3115
        %3117 = vrot.lane.b32.xlu0 %v3024, 32
        %v3118 = vpop.permute.xlu0 %3117
        %3119 = vrot.lane.b32.xlu0 %v3025, 32
        %v3120 = vpop.permute.xlu0 %3119
        %3121 = vrot.lane.b32.xlu0 %v3026, 32
        %v3122 = vpop.permute.xlu0 %3121
        %v3155 = vadd.f32 %v2915, %v3060
        %v3156 = vadd.f32 %v2916, %v3062
        %v3157 = vadd.f32 %v2917, %v3064
        %v3158 = vadd.f32 %v2918, %v3066
        %v3159 = vadd.f32 %v2919, %v3068
        %v3160 = vadd.f32 %v2920, %v3070
        %v3161 = vadd.f32 %v2921, %v3072
        %v3162 = vadd.f32 %v2922, %v3074
        %v3163 = vadd.f32 %v2923, %v3076
        %v3164 = vadd.f32 %v2924, %v3078
        %v3165 = vadd.f32 %v2925, %v3080
        %v3166 = vadd.f32 %v2926, %v3082
        %v3167 = vadd.f32 %v2927, %v3084
        %v3168 = vadd.f32 %v2928, %v3086
        %v3169 = vadd.f32 %v2929, %v3088
        %v3170 = vadd.f32 %v2930, %v3090
        %v3171 = vadd.f32 %v2931, %v3092
        %v3172 = vadd.f32 %v2932, %v3094
        %v3173 = vadd.f32 %v2933, %v3096
        %v3174 = vadd.f32 %v2934, %v3098
        %v3175 = vadd.f32 %v2935, %v3100
        %v3176 = vadd.f32 %v2936, %v3102
        %v3177 = vadd.f32 %v2937, %v3104
        %v3178 = vadd.f32 %v2938, %v3106
        %v3179 = vadd.f32 %v2939, %v3108
        %v3180 = vadd.f32 %v2940, %v3110
        %v3181 = vadd.f32 %v2941, %v3112
        %v3182 = vadd.f32 %v2942, %v3114
        %v3183 = vadd.f32 %v2943, %v3116
        %v3184 = vadd.f32 %v2944, %v3118
        %v3185 = vadd.f32 %v2945, %v3120
        %v3186 = vadd.f32 %v2946, %v3122
        %v3187 = vmax.f32 %v3155, 0.0
        %v3188 = vmax.f32 %v3156, 0.0
        %v3189 = vmax.f32 %v3157, 0.0
        %v3190 = vmax.f32 %v3158, 0.0
        %v3191 = vmax.f32 %v3159, 0.0
        %v3192 = vmax.f32 %v3160, 0.0
        %v3193 = vmax.f32 %v3161, 0.0
        %v3194 = vmax.f32 %v3162, 0.0
        %v3195 = vmax.f32 %v3163, 0.0
        %v3196 = vmax.f32 %v3164, 0.0
        %v3197 = vmax.f32 %v3165, 0.0
        %v3198 = vmax.f32 %v3166, 0.0
        %v3199 = vmax.f32 %v3167, 0.0
        %v3200 = vmax.f32 %v3168, 0.0
        %v3201 = vmax.f32 %v3169, 0.0
        %v3202 = vmax.f32 %v3170, 0.0
        %v3203 = vmax.f32 %v3171, 0.0
        %v3204 = vmax.f32 %v3172, 0.0
        %v3205 = vmax.f32 %v3173, 0.0
        %v3206 = vmax.f32 %v3174, 0.0
        %v3207 = vmax.f32 %v3175, 0.0
        %v3208 = vmax.f32 %v3176, 0.0
        %v3209 = vmax.f32 %v3177, 0.0
        %v3210 = vmax.f32 %v3178, 0.0
        %v3211 = vmax.f32 %v3179, 0.0
        %v3212 = vmax.f32 %v3180, 0.0
        %v3213 = vmax.f32 %v3181, 0.0
        %v3214 = vmax.f32 %v3182, 0.0
        %v3215 = vmax.f32 %v3183, 0.0
        %v3216 = vmax.f32 %v3184, 0.0
        %v3217 = vmax.f32 %v3185, 0.0
        %v3218 = vmax.f32 %v3186, 0.0
        %v3219 = vlaneseq
        %v3220 = vshrl.u32 %v3219, 7
        %v3221 = vsub.s32 4, %v3220
        %v3222 = vrot.slane %v549, %v3221
        %v3223 = vmul.f32 %v3187, %v3222
        %v3224 = vmul.f32 %v3188, %v3222
        %v3225 = vmul.f32 %v3189, %v3222
        %v3226 = vmul.f32 %v3190, %v3222
        %v3227 = vmul.f32 %v3191, %v3222
        %v3228 = vmul.f32 %v3192, %v3222
        %v3229 = vmul.f32 %v3193, %v3222
        %v3230 = vmul.f32 %v3194, %v3222
        %v3231 = vmul.f32 %v3195, %v3222
        %v3232 = vmul.f32 %v3196, %v3222
        %v3233 = vmul.f32 %v3197, %v3222
        %v3234 = vmul.f32 %v3198, %v3222
        %v3235 = vmul.f32 %v3199, %v3222
        %v3236 = vmul.f32 %v3200, %v3222
        %v3237 = vmul.f32 %v3201, %v3222
        %v3238 = vmul.f32 %v3202, %v3222
        %v3239 = vmul.f32 %v3203, %v3222
        %v3240 = vmul.f32 %v3204, %v3222
        %v3241 = vmul.f32 %v3205, %v3222
        %v3242 = vmul.f32 %v3206, %v3222
        %v3243 = vmul.f32 %v3207, %v3222
        %v3244 = vmul.f32 %v3208, %v3222
        %v3245 = vmul.f32 %v3209, %v3222
        %v3246 = vmul.f32 %v3210, %v3222
        %v3247 = vmul.f32 %v3211, %v3222
        %v3248 = vmul.f32 %v3212, %v3222
        %v3249 = vmul.f32 %v3213, %v3222
        %v3250 = vmul.f32 %v3214, %v3222
        %v3251 = vmul.f32 %v3215, %v3222
        %v3252 = vmul.f32 %v3216, %v3222
        %v3253 = vmul.f32 %v3217, %v3222
        %v3254 = vmul.f32 %v3218, %v3222
        %v3255 = vlaneseq
        %v3256 = vshrl.u32 %v3255, 7
        %v3257 = vsub.s32 5, %v3256
        %v3258 = vrot.slane %v549, %v3257
        %v3259 = vadd.f32 %v3223, %v3258
        %v3260 = vadd.f32 %v3224, %v3258
        %v3261 = vadd.f32 %v3225, %v3258
        %v3262 = vadd.f32 %v3226, %v3258
        %v3263 = vadd.f32 %v3227, %v3258
        %v3264 = vadd.f32 %v3228, %v3258
        %v3265 = vadd.f32 %v3229, %v3258
        %v3266 = vadd.f32 %v3230, %v3258
        %v3267 = vadd.f32 %v3231, %v3258
        %v3268 = vadd.f32 %v3232, %v3258
        %v3269 = vadd.f32 %v3233, %v3258
        %v3270 = vadd.f32 %v3234, %v3258
        %v3271 = vadd.f32 %v3235, %v3258
        %v3272 = vadd.f32 %v3236, %v3258
        %v3273 = vadd.f32 %v3237, %v3258
        %v3274 = vadd.f32 %v3238, %v3258
        %v3275 = vadd.f32 %v3239, %v3258
        %v3276 = vadd.f32 %v3240, %v3258
        %v3277 = vadd.f32 %v3241, %v3258
        %v3278 = vadd.f32 %v3242, %v3258
        %v3279 = vadd.f32 %v3243, %v3258
        %v3280 = vadd.f32 %v3244, %v3258
        %v3281 = vadd.f32 %v3245, %v3258
        %v3282 = vadd.f32 %v3246, %v3258
        %v3283 = vadd.f32 %v3247, %v3258
        %v3284 = vadd.f32 %v3248, %v3258
        %v3285 = vadd.f32 %v3249, %v3258
        %v3286 = vadd.f32 %v3250, %v3258
        %v3287 = vadd.f32 %v3251, %v3258
        %v3288 = vadd.f32 %v3252, %v3258
        %v3289 = vadd.f32 %v3253, %v3258
        %v3290 = vadd.f32 %v3254, %v3258
        %s3291 = scalar_lea.vmem %s3, 8
        %v3292 = vld [vmem:[%s3291] sm:$0x3f]
        %v3293 = vrot.slane %v3259, 7
        %v3294 = vrot.slane %v3260, 7
        %v3295 = vrot.slane %v3261, 7
        %v3296 = vrot.slane %v3262, 7
        %v3297 = vrot.slane %v3263, 7
        %v3298 = vrot.slane %v3264, 7
        %v3299 = vrot.slane %v3265, 7
        %v3300 = vrot.slane %v3266, 7
        %v3301 = vrot.slane %v3267, 7
        %v3302 = vrot.slane %v3268, 7
        %v3303 = vrot.slane %v3269, 7
        %v3304 = vrot.slane %v3270, 7
        %v3305 = vrot.slane %v3271, 7
        %v3306 = vrot.slane %v3272, 7
        %v3307 = vrot.slane %v3273, 7
        %v3308 = vrot.slane %v3274, 7
        %v3309 = vrot.slane %v3275, 7
        %v3310 = vrot.slane %v3276, 7
        %v3311 = vrot.slane %v3277, 7
        %v3312 = vrot.slane %v3278, 7
        %v3313 = vrot.slane %v3279, 7
        %v3314 = vrot.slane %v3280, 7
        %v3315 = vrot.slane %v3281, 7
        %v3316 = vrot.slane %v3282, 7
        %v3317 = vrot.slane %v3283, 7
        %v3318 = vrot.slane %v3284, 7
        %v3319 = vrot.slane %v3285, 7
        %v3320 = vrot.slane %v3286, 7
        %v3321 = vrot.slane %v3287, 7
        %v3322 = vrot.slane %v3288, 7
        %v3323 = vrot.slane %v3289, 7
        %v3324 = vrot.slane %v3290, 7
        %v3325 = vsel %vm582, %v3323, %v3324
        %v3326 = vsel %vm582, %v3322, %v3323
        %v3327 = vsel %vm582, %v3321, %v3322
        %v3328 = vsel %vm582, %v3320, %v3321
        %v3329 = vsel %vm582, %v3319, %v3320
        %v3330 = vsel %vm582, %v3318, %v3319
        %v3331 = vsel %vm582, %v3317, %v3318
        %v3332 = vsel %vm582, %v3316, %v3317
        %v3333 = vsel %vm582, %v3315, %v3316
        %v3334 = vsel %vm582, %v3314, %v3315
        %v3335 = vsel %vm582, %v3313, %v3314
        %v3336 = vsel %vm582, %v3312, %v3313
        %v3337 = vsel %vm582, %v3311, %v3312
        %v3338 = vsel %vm582, %v3310, %v3311
        %v3339 = vsel %vm582, %v3309, %v3310
        %v3340 = vsel %vm582, %v3308, %v3309
        %v3341 = vsel %vm582, %v3307, %v3308
        %v3342 = vsel %vm582, %v3306, %v3307
        %v3343 = vsel %vm582, %v3305, %v3306
        %v3344 = vsel %vm582, %v3304, %v3305
        %v3345 = vsel %vm582, %v3303, %v3304
        %v3346 = vsel %vm582, %v3302, %v3303
        %v3347 = vsel %vm582, %v3301, %v3302
        %v3348 = vsel %vm582, %v3300, %v3301
        %v3349 = vsel %vm582, %v3299, %v3300
        %v3350 = vsel %vm582, %v3298, %v3299
        %v3351 = vsel %vm582, %v3297, %v3298
        %v3352 = vsel %vm582, %v3296, %v3297
        %v3353 = vsel %vm582, %v3295, %v3296
        %v3354 = vsel %vm582, %v3294, %v3295
        %v3355 = vsel %vm582, %v3293, %v3294
        %v3356 = vsel %vm582, %v3324, %v3293
        %v3357 = vmul.f32 %v3356, %v293
        %v3358 = vmul.f32 %v3355, %v294
        %v3359 = vmul.f32 %v3354, %v295
        %v3360 = vmul.f32 %v3353, %v296
        %v3361 = vmul.f32 %v3352, %v297
        %v3362 = vmul.f32 %v3351, %v298
        %v3363 = vmul.f32 %v3350, %v299
        %v3364 = vmul.f32 %v3349, %v300
        %v3365 = vmul.f32 %v3348, %v301
        %v3366 = vmul.f32 %v3347, %v302
        %v3367 = vmul.f32 %v3346, %v303
        %v3368 = vmul.f32 %v3345, %v304
        %v3369 = vmul.f32 %v3344, %v305
        %v3370 = vmul.f32 %v3343, %v306
        %v3371 = vmul.f32 %v3342, %v307
        %v3372 = vmul.f32 %v3341, %v308
        %v3373 = vmul.f32 %v3340, %v309
        %v3374 = vmul.f32 %v3339, %v310
        %v3375 = vmul.f32 %v3338, %v311
        %v3376 = vmul.f32 %v3337, %v312
        %v3377 = vmul.f32 %v3336, %v313
        %v3378 = vmul.f32 %v3335, %v314
        %v3379 = vmul.f32 %v3334, %v315
        %v3380 = vmul.f32 %v3333, %v316
        %v3381 = vmul.f32 %v3332, %v317
        %v3382 = vmul.f32 %v3331, %v318
        %v3383 = vmul.f32 %v3330, %v319
        %v3384 = vmul.f32 %v3329, %v320
        %v3385 = vmul.f32 %v3328, %v321
        %v3386 = vmul.f32 %v3327, %v322
        %v3387 = vmul.f32 %v3326, %v323
        %v3388 = vmul.f32 %v3325, %v324
        %v3389 = vld [vmem:[%s2] sm:$0xff]
        %v3390 = vld [vmem:[%s2 + $0x8] sm:$0xff]
        %v3391 = vld [vmem:[%s2 + $0x10] sm:$0xff]
        %v3392 = vld [vmem:[%s2 + $0x18] sm:$0xff]
        %vm3393 = vcmask 261120
        %v3395 = vsel %vm3393, %v3357, 0
        %v3398 = vsel %vm3393, %v3358, 0
        %v3401 = vsel %vm3393, %v3359, 0
        %v3404 = vsel %vm3393, %v3360, 0
        %v3407 = vsel %vm3393, %v3361, 0
        %v3410 = vsel %vm3393, %v3362, 0
        %v3413 = vsel %vm3393, %v3363, 0
        %v3416 = vsel %vm3393, %v3364, 0
        %v3419 = vsel %vm3393, %v3365, 0
        %v3422 = vsel %vm3393, %v3366, 0
        %v3425 = vsel %vm3393, %v3367, 0
        %v3428 = vsel %vm3393, %v3368, 0
        %v3431 = vsel %vm3393, %v3369, 0
        %v3434 = vsel %vm3393, %v3370, 0
        %v3437 = vsel %vm3393, %v3371, 0
        %v3440 = vsel %vm3393, %v3372, 0
        %v3443 = vsel %vm3393, %v3373, 0
        %v3446 = vsel %vm3393, %v3374, 0
        %v3449 = vsel %vm3393, %v3375, 0
        %v3452 = vsel %vm3393, %v3376, 0
        %v3455 = vsel %vm3393, %v3377, 0
        %v3458 = vsel %vm3393, %v3378, 0
        %v3461 = vsel %vm3393, %v3379, 0
        %v3464 = vsel %vm3393, %v3380, 0
        %v3467 = vsel %vm3393, %v3381, 0
        %v3470 = vsel %vm3393, %v3382, 0
        %v3473 = vsel %vm3393, %v3383, 0
        %v3476 = vsel %vm3393, %v3384, 0
        %v3479 = vsel %vm3393, %v3385, 0
        %v3482 = vsel %vm3393, %v3386, 0
        %v3485 = vsel %vm3393, %v3387, 0
        %v3488 = vsel %vm3393, %v3388, 0
        %3490 = vmatprep.subr.mxu0 0.0
        %3491 = vmatpush1.msra.mxu0 %v3389
        %3492 = vmatprep.subr.mxu0 0.0
        %3493 = vmatpush1.msra.mxu0 %v3390
        %3494 = vmatprep.subr.mxu0 0.0
        %3495 = vmatpush1.msra.mxu0 %v3391
        %3496 = vmatprep.subr.mxu0 0.0
        %3497 = vmatpush1.msra.mxu0 %v3392
        %3498 = vmatprep.subr.mxu0 0.0
        %3499 = vmatpush1.msra.mxu0 0.0
        %3500 = vmatprep.subr.mxu0 0.0
        %3501 = vmatpush1.msra.mxu0 0.0
        %3502 = vmatprep.subr.mxu0 0.0
        %3503 = vmatpush1.msra.mxu0 0.0
        %3504 = vmatprep.subr.mxu0 0.0
        %3505 = vmatpush1.msra.mxu0 0.0
        %3506 = vmatprep.subr.mxu0 0.0
        %3507 = vmatpush1.msra.mxu0 0.0
        %3508 = vmatprep.subr.mxu0 0.0
        %3509 = vmatpush1.msra.mxu0 0.0
        %3510 = vmatprep.subr.mxu0 0.0
        %3511 = vmatpush1.msra.mxu0 0.0
        %3512 = vmatprep.subr.mxu0 0.0
        %3513 = vmatpush1.msra.mxu0 0.0
        %3514 = vmatprep.subr.mxu0 0.0
        %3515 = vmatpush1.msra.mxu0 0.0
        %3516 = vmatprep.subr.mxu0 0.0
        %3517 = vmatpush1.msra.mxu0 0.0
        %3518 = vmatprep.subr.mxu0 0.0
        %3519 = vmatpush1.msra.mxu0 0.0
        %3520 = vmatprep.subr.mxu0 0.0
        %3521 = vmatpush1.msra.mxu0 0.0
        %3522 = vmatprep.subr.mxu0 0.0
        %3523 = vmatpush1.msra.mxu0 0.0
        %3524 = vmatprep.subr.mxu0 0.0
        %3525 = vmatpush1.msra.mxu0 0.0
        %3526 = vmatprep.subr.mxu0 0.0
        %3527 = vmatpush1.msra.mxu0 0.0
        %3528 = vmatprep.subr.mxu0 0.0
        %3529 = vmatpush1.msra.mxu0 0.0
        %3530 = vmatprep.subr.mxu0 0.0
        %3531 = vmatpush1.msra.mxu0 0.0
        %3532 = vmatprep.subr.mxu0 0.0
        %3533 = vmatpush1.msra.mxu0 0.0
        %3534 = vmatprep.subr.mxu0 0.0
        %3535 = vmatpush1.msra.mxu0 0.0
        %3536 = vmatprep.subr.mxu0 0.0
        %3537 = vmatpush1.msra.mxu0 0.0
        %3538 = vmatprep.subr.mxu0 0.0
        %3539 = vmatpush1.msra.mxu0 0.0
        %3540 = vmatprep.subr.mxu0 0.0
        %3541 = vmatpush1.msra.mxu0 0.0
        %3542 = vmatprep.subr.mxu0 0.0
        %3543 = vmatpush1.msra.mxu0 0.0
        %3544 = vmatprep.subr.mxu0 0.0
        %3545 = vmatpush1.msra.mxu0 0.0
        %3546 = vmatprep.subr.mxu0 0.0
        %3547 = vmatpush1.msra.mxu0 0.0
        %3548 = vmatprep.subr.mxu0 0.0
        %3549 = vmatpush1.msra.mxu0 0.0
        %3550 = vmatprep.subr.mxu0 0.0
        %3551 = vmatpush1.msra.mxu0 0.0
        %3552 = vmatprep.subr.mxu0 0.0
        %3553 = vmatpush1.msra.mxu0 0.0
        %3554 = vmatprep.mubr.f32.mxu0 0.0
        %3555 = vmatmul.mubr.f32.gmra.mrb[0].mxu0 %v3395
        %v3556 = vpop.f32.mrb[0].mxu0
        %v3557 = vadd.f32 0.0, %v3556
        %v3558 = vpop.f32.mrb[0].mxu0
        %3559 = vmatprep.mubr.f32.mxu0 0.0
        %3560 = vmatmul.mubr.f32.gmra.mrb[0].mxu0 %v3398
        %v3561 = vpop.f32.mrb[0].mxu0
        %v3562 = vadd.f32 0.0, %v3561
        %v3563 = vpop.f32.mrb[0].mxu0
        %3564 = vmatprep.mubr.f32.mxu0 0.0
        %3565 = vmatmul.mubr.f32.gmra.mrb[0].mxu0 %v3401
        %v3566 = vpop.f32.mrb[0].mxu0
        %v3567 = vadd.f32 0.0, %v3566
        %v3568 = vpop.f32.mrb[0].mxu0
        %3569 = vmatprep.mubr.f32.mxu0 0.0
        %3570 = vmatmul.mubr.f32.gmra.mrb[0].mxu0 %v3404
        %v3571 = vpop.f32.mrb[0].mxu0
        %v3572 = vadd.f32 0.0, %v3571
        %v3573 = vpop.f32.mrb[0].mxu0
        %3574 = vmatprep.mubr.f32.mxu0 0.0
        %3575 = vmatmul.mubr.f32.gmra.mrb[0].mxu0 %v3407
        %v3576 = vpop.f32.mrb[0].mxu0
        %v3577 = vadd.f32 0.0, %v3576
        %v3578 = vpop.f32.mrb[0].mxu0
        %3579 = vmatprep.mubr.f32.mxu0 0.0
        %3580 = vmatmul.mubr.f32.gmra.mrb[0].mxu0 %v3410
        %v3581 = vpop.f32.mrb[0].mxu0
        %v3582 = vadd.f32 0.0, %v3581
        %v3583 = vpop.f32.mrb[0].mxu0
        %3584 = vmatprep.mubr.f32.mxu0 0.0
        %3585 = vmatmul.mubr.f32.gmra.mrb[0].mxu0 %v3413
        %v3586 = vpop.f32.mrb[0].mxu0
        %v3587 = vadd.f32 0.0, %v3586
        %v3588 = vpop.f32.mrb[0].mxu0
        %3589 = vmatprep.mubr.f32.mxu0 0.0
        %3590 = vmatmul.mubr.f32.gmra.mrb[0].mxu0 %v3416
        %v3591 = vpop.f32.mrb[0].mxu0
        %v3592 = vadd.f32 0.0, %v3591
        %v3593 = vpop.f32.mrb[0].mxu0
        %3594 = vmatprep.mubr.f32.mxu0 0.0
        %3595 = vmatmul.mubr.f32.gmra.mrb[0].mxu0 %v3419
        %v3596 = vpop.f32.mrb[0].mxu0
        %v3597 = vadd.f32 0.0, %v3596
        %v3598 = vpop.f32.mrb[0].mxu0
        %3599 = vmatprep.mubr.f32.mxu0 0.0
        %3600 = vmatmul.mubr.f32.gmra.mrb[0].mxu0 %v3422
        %v3601 = vpop.f32.mrb[0].mxu0
        %v3602 = vadd.f32 0.0, %v3601
        %v3603 = vpop.f32.mrb[0].mxu0
        %3604 = vmatprep.mubr.f32.mxu0 0.0
        %3605 = vmatmul.mubr.f32.gmra.mrb[0].mxu0 %v3425
        %v3606 = vpop.f32.mrb[0].mxu0
        %v3607 = vadd.f32 0.0, %v3606
        %v3608 = vpop.f32.mrb[0].mxu0
        %3609 = vmatprep.mubr.f32.mxu0 0.0
        %3610 = vmatmul.mubr.f32.gmra.mrb[0].mxu0 %v3428
        %v3611 = vpop.f32.mrb[0].mxu0
        %v3612 = vadd.f32 0.0, %v3611
        %v3613 = vpop.f32.mrb[0].mxu0
        %3614 = vmatprep.mubr.f32.mxu0 0.0
        %3615 = vmatmul.mubr.f32.gmra.mrb[0].mxu0 %v3431
        %v3616 = vpop.f32.mrb[0].mxu0
        %v3617 = vadd.f32 0.0, %v3616
        %v3618 = vpop.f32.mrb[0].mxu0
        %3619 = vmatprep.mubr.f32.mxu0 0.0
        %3620 = vmatmul.mubr.f32.gmra.mrb[0].mxu0 %v3434
        %v3621 = vpop.f32.mrb[0].mxu0
        %v3622 = vadd.f32 0.0, %v3621
        %v3623 = vpop.f32.mrb[0].mxu0
        %3624 = vmatprep.mubr.f32.mxu0 0.0
        %3625 = vmatmul.mubr.f32.gmra.mrb[0].mxu0 %v3437
        %v3626 = vpop.f32.mrb[0].mxu0
        %v3627 = vadd.f32 0.0, %v3626
        %v3628 = vpop.f32.mrb[0].mxu0
        %3629 = vmatprep.mubr.f32.mxu0 0.0
        %3630 = vmatmul.mubr.f32.gmra.mrb[0].mxu0 %v3440
        %v3631 = vpop.f32.mrb[0].mxu0
        %v3632 = vadd.f32 0.0, %v3631
        %v3633 = vpop.f32.mrb[0].mxu0
        %3634 = vmatprep.mubr.f32.mxu0 0.0
        %3635 = vmatmul.mubr.f32.gmra.mrb[0].mxu0 %v3443
        %v3636 = vpop.f32.mrb[0].mxu0
        %v3637 = vadd.f32 0.0, %v3636
        %v3638 = vpop.f32.mrb[0].mxu0
        %3639 = vmatprep.mubr.f32.mxu0 0.0
        %3640 = vmatmul.mubr.f32.gmra.mrb[0].mxu0 %v3446
        %v3641 = vpop.f32.mrb[0].mxu0
        %v3642 = vadd.f32 0.0, %v3641
        %v3643 = vpop.f32.mrb[0].mxu0
        %3644 = vmatprep.mubr.f32.mxu0 0.0
        %3645 = vmatmul.mubr.f32.gmra.mrb[0].mxu0 %v3449
        %v3646 = vpop.f32.mrb[0].mxu0
        %v3647 = vadd.f32 0.0, %v3646
        %v3648 = vpop.f32.mrb[0].mxu0
        %3649 = vmatprep.mubr.f32.mxu0 0.0
        %3650 = vmatmul.mubr.f32.gmra.mrb[0].mxu0 %v3452
        %v3651 = vpop.f32.mrb[0].mxu0
        %v3652 = vadd.f32 0.0, %v3651
        %v3653 = vpop.f32.mrb[0].mxu0
        %3654 = vmatprep.mubr.f32.mxu0 0.0
        %3655 = vmatmul.mubr.f32.gmra.mrb[0].mxu0 %v3455
        %v3656 = vpop.f32.mrb[0].mxu0
        %v3657 = vadd.f32 0.0, %v3656
        %v3658 = vpop.f32.mrb[0].mxu0
        %3659 = vmatprep.mubr.f32.mxu0 0.0
        %3660 = vmatmul.mubr.f32.gmra.mrb[0].mxu0 %v3458
        %v3661 = vpop.f32.mrb[0].mxu0
        %v3662 = vadd.f32 0.0, %v3661
        %v3663 = vpop.f32.mrb[0].mxu0
        %3664 = vmatprep.mubr.f32.mxu0 0.0
        %3665 = vmatmul.mubr.f32.gmra.mrb[0].mxu0 %v3461
        %v3666 = vpop.f32.mrb[0].mxu0
        %v3667 = vadd.f32 0.0, %v3666
        %v3668 = vpop.f32.mrb[0].mxu0
        %3669 = vmatprep.mubr.f32.mxu0 0.0
        %3670 = vmatmul.mubr.f32.gmra.mrb[0].mxu0 %v3464
        %v3671 = vpop.f32.mrb[0].mxu0
        %v3672 = vadd.f32 0.0, %v3671
        %v3673 = vpop.f32.mrb[0].mxu0
        %3674 = vmatprep.mubr.f32.mxu0 0.0
        %3675 = vmatmul.mubr.f32.gmra.mrb[0].mxu0 %v3467
        %v3676 = vpop.f32.mrb[0].mxu0
        %v3677 = vadd.f32 0.0, %v3676
        %v3678 = vpop.f32.mrb[0].mxu0
        %3679 = vmatprep.mubr.f32.mxu0 0.0
        %3680 = vmatmul.mubr.f32.gmra.mrb[0].mxu0 %v3470
        %v3681 = vpop.f32.mrb[0].mxu0
        %v3682 = vadd.f32 0.0, %v3681
        %v3683 = vpop.f32.mrb[0].mxu0
        %3684 = vmatprep.mubr.f32.mxu0 0.0
        %3685 = vmatmul.mubr.f32.gmra.mrb[0].mxu0 %v3473
        %v3686 = vpop.f32.mrb[0].mxu0
        %v3687 = vadd.f32 0.0, %v3686
        %v3688 = vpop.f32.mrb[0].mxu0
        %3689 = vmatprep.mubr.f32.mxu0 0.0
        %3690 = vmatmul.mubr.f32.gmra.mrb[0].mxu0 %v3476
        %v3691 = vpop.f32.mrb[0].mxu0
        %v3692 = vadd.f32 0.0, %v3691
        %v3693 = vpop.f32.mrb[0].mxu0
        %3694 = vmatprep.mubr.f32.mxu0 0.0
        %3695 = vmatmul.mubr.f32.gmra.mrb[0].mxu0 %v3479
        %v3696 = vpop.f32.mrb[0].mxu0
        %v3697 = vadd.f32 0.0, %v3696
        %v3698 = vpop.f32.mrb[0].mxu0
        %3699 = vmatprep.mubr.f32.mxu0 0.0
        %3700 = vmatmul.mubr.f32.gmra.mrb[0].mxu0 %v3482
        %v3701 = vpop.f32.mrb[0].mxu0
        %v3702 = vadd.f32 0.0, %v3701
        %v3703 = vpop.f32.mrb[0].mxu0
        %3704 = vmatprep.mubr.f32.mxu0 0.0
        %3705 = vmatmul.mubr.f32.gmra.mrb[0].mxu0 %v3485
        %v3706 = vpop.f32.mrb[0].mxu0
        %v3707 = vadd.f32 0.0, %v3706
        %v3708 = vpop.f32.mrb[0].mxu0
        %3709 = vmatprep.mubr.f32.mxu0 0.0
        %3710 = vmatmul.mubr.f32.gmra.mrb[0].mxu0 %v3488
        %v3711 = vpop.f32.mrb[0].mxu0
        %v3712 = vadd.f32 0.0, %v3711
        %v3713 = vpop.f32.mrb[0].mxu0
        %3714 = vdwg.mxu0
        %v3715 = vmul.f32 %v3707, %v421
        %v3716 = vmul.f32 %v3712, %v422
        %v3717 = vmul.f32 %v3557, %v423
        %v3718 = vmul.f32 %v3562, %v424
        %v3719 = vmul.f32 %v3567, %v425
        %v3720 = vmul.f32 %v3572, %v426
        %v3721 = vmul.f32 %v3577, %v427
        %v3722 = vmul.f32 %v3582, %v428
        %v3723 = vmul.f32 %v3587, %v429
        %v3724 = vmul.f32 %v3592, %v430
        %v3725 = vmul.f32 %v3597, %v431
        %v3726 = vmul.f32 %v3602, %v432
        %v3727 = vmul.f32 %v3607, %v433
        %v3728 = vmul.f32 %v3612, %v434
        %v3729 = vmul.f32 %v3617, %v435
        %v3730 = vmul.f32 %v3622, %v436
        %v3731 = vmul.f32 %v3627, %v437
        %v3732 = vmul.f32 %v3632, %v438
        %v3733 = vmul.f32 %v3637, %v439
        %v3734 = vmul.f32 %v3642, %v440
        %v3735 = vmul.f32 %v3647, %v441
        %v3736 = vmul.f32 %v3652, %v442
        %v3737 = vmul.f32 %v3657, %v443
        %v3738 = vmul.f32 %v3662, %v444
        %v3739 = vmul.f32 %v3667, %v445
        %v3740 = vmul.f32 %v3672, %v446
        %v3741 = vmul.f32 %v3677, %v447
        %v3742 = vmul.f32 %v3682, %v448
        %v3743 = vmul.f32 %v3687, %v449
        %v3744 = vmul.f32 %v3692, %v450
        %v3745 = vmul.f32 %v3697, %v451
        %v3746 = vmul.f32 %v3702, %v452
        %3779 = vrot.lane.b32.xlu0 %v3557, 96
        %v3780 = vpop.permute.xlu0 %3779
        %3781 = vrot.lane.b32.xlu0 %v3562, 96
        %v3782 = vpop.permute.xlu0 %3781
        %3783 = vrot.lane.b32.xlu0 %v3567, 96
        %v3784 = vpop.permute.xlu0 %3783
        %3785 = vrot.lane.b32.xlu0 %v3572, 96
        %v3786 = vpop.permute.xlu0 %3785
        %3787 = vrot.lane.b32.xlu0 %v3577, 96
        %v3788 = vpop.permute.xlu0 %3787
        %3789 = vrot.lane.b32.xlu0 %v3582, 96
        %v3790 = vpop.permute.xlu0 %3789
        %3791 = vrot.lane.b32.xlu0 %v3587, 96
        %v3792 = vpop.permute.xlu0 %3791
        %3793 = vrot.lane.b32.xlu0 %v3592, 96
        %v3794 = vpop.permute.xlu0 %3793
        %3795 = vrot.lane.b32.xlu0 %v3597, 96
        %v3796 = vpop.permute.xlu0 %3795
        %3797 = vrot.lane.b32.xlu0 %v3602, 96
        %v3798 = vpop.permute.xlu0 %3797
        %3799 = vrot.lane.b32.xlu0 %v3607, 96
        %v3800 = vpop.permute.xlu0 %3799
        %3801 = vrot.lane.b32.xlu0 %v3612, 96
        %v3802 = vpop.permute.xlu0 %3801
        %3803 = vrot.lane.b32.xlu0 %v3617, 96
        %v3804 = vpop.permute.xlu0 %3803
        %3805 = vrot.lane.b32.xlu0 %v3622, 96
        %v3806 = vpop.permute.xlu0 %3805
        %3807 = vrot.lane.b32.xlu0 %v3627, 96
        %v3808 = vpop.permute.xlu0 %3807
        %3809 = vrot.lane.b32.xlu0 %v3632, 96
        %v3810 = vpop.permute.xlu0 %3809
        %3811 = vrot.lane.b32.xlu0 %v3637, 96
        %v3812 = vpop.permute.xlu0 %3811
        %3813 = vrot.lane.b32.xlu0 %v3642, 96
        %v3814 = vpop.permute.xlu0 %3813
        %3815 = vrot.lane.b32.xlu0 %v3647, 96
        %v3816 = vpop.permute.xlu0 %3815
        %3817 = vrot.lane.b32.xlu0 %v3652, 96
        %v3818 = vpop.permute.xlu0 %3817
        %3819 = vrot.lane.b32.xlu0 %v3657, 96
        %v3820 = vpop.permute.xlu0 %3819
        %3821 = vrot.lane.b32.xlu0 %v3662, 96
        %v3822 = vpop.permute.xlu0 %3821
        %3823 = vrot.lane.b32.xlu0 %v3667, 96
        %v3824 = vpop.permute.xlu0 %3823
        %3825 = vrot.lane.b32.xlu0 %v3672, 96
        %v3826 = vpop.permute.xlu0 %3825
        %3827 = vrot.lane.b32.xlu0 %v3677, 96
        %v3828 = vpop.permute.xlu0 %3827
        %3829 = vrot.lane.b32.xlu0 %v3682, 96
        %v3830 = vpop.permute.xlu0 %3829
        %3831 = vrot.lane.b32.xlu0 %v3687, 96
        %v3832 = vpop.permute.xlu0 %3831
        %3833 = vrot.lane.b32.xlu0 %v3692, 96
        %v3834 = vpop.permute.xlu0 %3833
        %3835 = vrot.lane.b32.xlu0 %v3697, 96
        %v3836 = vpop.permute.xlu0 %3835
        %3837 = vrot.lane.b32.xlu0 %v3702, 96
        %v3838 = vpop.permute.xlu0 %3837
        %3839 = vrot.lane.b32.xlu0 %v3707, 96
        %v3840 = vpop.permute.xlu0 %3839
        %3841 = vrot.lane.b32.xlu0 %v3712, 96
        %v3842 = vpop.permute.xlu0 %3841
        %v3875 = vadd.f32 %v3715, %v3780
        %v3876 = vadd.f32 %v3716, %v3782
        %v3877 = vadd.f32 %v3717, %v3784
        %v3878 = vadd.f32 %v3718, %v3786
        %v3879 = vadd.f32 %v3719, %v3788
        %v3880 = vadd.f32 %v3720, %v3790
        %v3881 = vadd.f32 %v3721, %v3792
        %v3882 = vadd.f32 %v3722, %v3794
        %v3883 = vadd.f32 %v3723, %v3796
        %v3884 = vadd.f32 %v3724, %v3798
        %v3885 = vadd.f32 %v3725, %v3800
        %v3886 = vadd.f32 %v3726, %v3802
        %v3887 = vadd.f32 %v3727, %v3804
        %v3888 = vadd.f32 %v3728, %v3806
        %v3889 = vadd.f32 %v3729, %v3808
        %v3890 = vadd.f32 %v3730, %v3810
        %v3891 = vadd.f32 %v3731, %v3812
        %v3892 = vadd.f32 %v3732, %v3814
        %v3893 = vadd.f32 %v3733, %v3816
        %v3894 = vadd.f32 %v3734, %v3818
        %v3895 = vadd.f32 %v3735, %v3820
        %v3896 = vadd.f32 %v3736, %v3822
        %v3897 = vadd.f32 %v3737, %v3824
        %v3898 = vadd.f32 %v3738, %v3826
        %v3899 = vadd.f32 %v3739, %v3828
        %v3900 = vadd.f32 %v3740, %v3830
        %v3901 = vadd.f32 %v3741, %v3832
        %v3902 = vadd.f32 %v3742, %v3834
        %v3903 = vadd.f32 %v3743, %v3836
        %v3904 = vadd.f32 %v3744, %v3838
        %v3905 = vadd.f32 %v3745, %v3840
        %v3906 = vadd.f32 %v3746, %v3842
        %3907 = vrot.lane.b32.xlu0 %v3557, 64
        %v3908 = vpop.permute.xlu0 %3907
        %3909 = vrot.lane.b32.xlu0 %v3562, 64
        %v3910 = vpop.permute.xlu0 %3909
        %3911 = vrot.lane.b32.xlu0 %v3567, 64
        %v3912 = vpop.permute.xlu0 %3911
        %3913 = vrot.lane.b32.xlu0 %v3572, 64
        %v3914 = vpop.permute.xlu0 %3913
        %3915 = vrot.lane.b32.xlu0 %v3577, 64
        %v3916 = vpop.permute.xlu0 %3915
        %3917 = vrot.lane.b32.xlu0 %v3582, 64
        %v3918 = vpop.permute.xlu0 %3917
        %3919 = vrot.lane.b32.xlu0 %v3587, 64
        %v3920 = vpop.permute.xlu0 %3919
        %3921 = vrot.lane.b32.xlu0 %v3592, 64
        %v3922 = vpop.permute.xlu0 %3921
        %3923 = vrot.lane.b32.xlu0 %v3597, 64
        %v3924 = vpop.permute.xlu0 %3923
        %3925 = vrot.lane.b32.xlu0 %v3602, 64
        %v3926 = vpop.permute.xlu0 %3925
        %3927 = vrot.lane.b32.xlu0 %v3607, 64
        %v3928 = vpop.permute.xlu0 %3927
        %3929 = vrot.lane.b32.xlu0 %v3612, 64
        %v3930 = vpop.permute.xlu0 %3929
        %3931 = vrot.lane.b32.xlu0 %v3617, 64
        %v3932 = vpop.permute.xlu0 %3931
        %3933 = vrot.lane.b32.xlu0 %v3622, 64
        %v3934 = vpop.permute.xlu0 %3933
        %3935 = vrot.lane.b32.xlu0 %v3627, 64
        %v3936 = vpop.permute.xlu0 %3935
        %3937 = vrot.lane.b32.xlu0 %v3632, 64
        %v3938 = vpop.permute.xlu0 %3937
        %3939 = vrot.lane.b32.xlu0 %v3637, 64
        %v3940 = vpop.permute.xlu0 %3939
        %3941 = vrot.lane.b32.xlu0 %v3642, 64
        %v3942 = vpop.permute.xlu0 %3941
        %3943 = vrot.lane.b32.xlu0 %v3647, 64
        %v3944 = vpop.permute.xlu0 %3943
        %3945 = vrot.lane.b32.xlu0 %v3652, 64
        %v3946 = vpop.permute.xlu0 %3945
        %3947 = vrot.lane.b32.xlu0 %v3657, 64
        %v3948 = vpop.permute.xlu0 %3947
        %3949 = vrot.lane.b32.xlu0 %v3662, 64
        %v3950 = vpop.permute.xlu0 %3949
        %3951 = vrot.lane.b32.xlu0 %v3667, 64
        %v3952 = vpop.permute.xlu0 %3951
        %3953 = vrot.lane.b32.xlu0 %v3672, 64
        %v3954 = vpop.permute.xlu0 %3953
        %3955 = vrot.lane.b32.xlu0 %v3677, 64
        %v3956 = vpop.permute.xlu0 %3955
        %3957 = vrot.lane.b32.xlu0 %v3682, 64
        %v3958 = vpop.permute.xlu0 %3957
        %3959 = vrot.lane.b32.xlu0 %v3687, 64
        %v3960 = vpop.permute.xlu0 %3959
        %3961 = vrot.lane.b32.xlu0 %v3692, 64
        %v3962 = vpop.permute.xlu0 %3961
        %3963 = vrot.lane.b32.xlu0 %v3697, 64
        %v3964 = vpop.permute.xlu0 %3963
        %3965 = vrot.lane.b32.xlu0 %v3702, 64
        %v3966 = vpop.permute.xlu0 %3965
        %3967 = vrot.lane.b32.xlu0 %v3707, 64
        %v3968 = vpop.permute.xlu0 %3967
        %3969 = vrot.lane.b32.xlu0 %v3712, 64
        %v3970 = vpop.permute.xlu0 %3969
        %v4003 = vmul.f32 %v3912, %v485
        %v4004 = vmul.f32 %v3914, %v486
        %v4005 = vmul.f32 %v3916, %v487
        %v4006 = vmul.f32 %v3918, %v488
        %v4007 = vmul.f32 %v3920, %v489
        %v4008 = vmul.f32 %v3922, %v490
        %v4009 = vmul.f32 %v3924, %v491
        %v4010 = vmul.f32 %v3926, %v492
        %v4011 = vmul.f32 %v3928, %v493
        %v4012 = vmul.f32 %v3930, %v494
        %v4013 = vmul.f32 %v3932, %v495
        %v4014 = vmul.f32 %v3934, %v496
        %v4015 = vmul.f32 %v3936, %v497
        %v4016 = vmul.f32 %v3938, %v498
        %v4017 = vmul.f32 %v3940, %v499
        %v4018 = vmul.f32 %v3942, %v500
        %v4019 = vmul.f32 %v3944, %v501
        %v4020 = vmul.f32 %v3946, %v502
        %v4021 = vmul.f32 %v3948, %v503
        %v4022 = vmul.f32 %v3950, %v504
        %v4023 = vmul.f32 %v3952, %v505
        %v4024 = vmul.f32 %v3954, %v506
        %v4025 = vmul.f32 %v3956, %v507
        %v4026 = vmul.f32 %v3958, %v508
        %v4027 = vmul.f32 %v3960, %v509
        %v4028 = vmul.f32 %v3962, %v510
        %v4029 = vmul.f32 %v3964, %v511
        %v4030 = vmul.f32 %v3966, %v512
        %v4031 = vmul.f32 %v3968, %v513
        %v4032 = vmul.f32 %v3970, %v514
        %v4033 = vmul.f32 %v3908, %v515
        %v4034 = vmul.f32 %v3910, %v516
        %v4035 = vadd.f32 %v3875, %v4003
        %v4036 = vadd.f32 %v3876, %v4004
        %v4037 = vadd.f32 %v3877, %v4005
        %v4038 = vadd.f32 %v3878, %v4006
        %v4039 = vadd.f32 %v3879, %v4007
        %v4040 = vadd.f32 %v3880, %v4008
        %v4041 = vadd.f32 %v3881, %v4009
        %v4042 = vadd.f32 %v3882, %v4010
        %v4043 = vadd.f32 %v3883, %v4011
        %v4044 = vadd.f32 %v3884, %v4012
        %v4045 = vadd.f32 %v3885, %v4013
        %v4046 = vadd.f32 %v3886, %v4014
        %v4047 = vadd.f32 %v3887, %v4015
        %v4048 = vadd.f32 %v3888, %v4016
        %v4049 = vadd.f32 %v3889, %v4017
        %v4050 = vadd.f32 %v3890, %v4018
        %v4051 = vadd.f32 %v3891, %v4019
        %v4052 = vadd.f32 %v3892, %v4020
        %v4053 = vadd.f32 %v3893, %v4021
        %v4054 = vadd.f32 %v3894, %v4022
        %v4055 = vadd.f32 %v3895, %v4023
        %v4056 = vadd.f32 %v3896, %v4024
        %v4057 = vadd.f32 %v3897, %v4025
        %v4058 = vadd.f32 %v3898, %v4026
        %v4059 = vadd.f32 %v3899, %v4027
        %v4060 = vadd.f32 %v3900, %v4028
        %v4061 = vadd.f32 %v3901, %v4029
        %v4062 = vadd.f32 %v3902, %v4030
        %v4063 = vadd.f32 %v3903, %v4031
        %v4064 = vadd.f32 %v3904, %v4032
        %v4065 = vadd.f32 %v3905, %v4033
        %v4066 = vadd.f32 %v3906, %v4034
        %s4067 = scalar_lea.vmem %s2, 32
        %v4068 = vld [vmem:[%s4067] sm:$0xff]
        %v4069 = vld [vmem:[%s4067 + $0x8] sm:$0xff]
        %v4070 = vld [vmem:[%s4067 + $0x10] sm:$0xff]
        %v4071 = vld [vmem:[%s4067 + $0x18] sm:$0xff]
        %v4073 = vsel %vm3393, %v3259, 0
        %v4076 = vsel %vm3393, %v3260, 0
        %v4079 = vsel %vm3393, %v3261, 0
        %v4082 = vsel %vm3393, %v3262, 0
        %v4085 = vsel %vm3393, %v3263, 0
        %v4088 = vsel %vm3393, %v3264, 0
        %v4091 = vsel %vm3393, %v3265, 0
        %v4094 = vsel %vm3393, %v3266, 0
        %v4097 = vsel %vm3393, %v3267, 0
        %v4100 = vsel %vm3393, %v3268, 0
        %v4103 = vsel %vm3393, %v3269, 0
        %v4106 = vsel %vm3393, %v3270, 0
        %v4109 = vsel %vm3393, %v3271, 0
        %v4112 = vsel %vm3393, %v3272, 0
        %v4115 = vsel %vm3393, %v3273, 0
        %v4118 = vsel %vm3393, %v3274, 0
        %v4121 = vsel %vm3393, %v3275, 0
        %v4124 = vsel %vm3393, %v3276, 0
        %v4127 = vsel %vm3393, %v3277, 0
        %v4130 = vsel %vm3393, %v3278, 0
        %v4133 = vsel %vm3393, %v3279, 0
        %v4136 = vsel %vm3393, %v3280, 0
        %v4139 = vsel %vm3393, %v3281, 0
        %v4142 = vsel %vm3393, %v3282, 0
        %v4145 = vsel %vm3393, %v3283, 0
        %v4148 = vsel %vm3393, %v3284, 0
        %v4151 = vsel %vm3393, %v3285, 0
        %v4154 = vsel %vm3393, %v3286, 0
        %v4157 = vsel %vm3393, %v3287, 0
        %v4160 = vsel %vm3393, %v3288, 0
        %v4163 = vsel %vm3393, %v3289, 0
        %v4166 = vsel %vm3393, %v3290, 0
        %4168 = vmatprep.subr.mxu0 0.0
        %4169 = vmatpush1.msra.mxu0 %v4068
        %4170 = vmatprep.subr.mxu0 0.0
        %4171 = vmatpush1.msra.mxu0 %v4069
        %4172 = vmatprep.subr.mxu0 0.0
        %4173 = vmatpush1.msra.mxu0 %v4070
        %4174 = vmatprep.subr.mxu0 0.0
        %4175 = vmatpush1.msra.mxu0 %v4071
        %4176 = vmatprep.subr.mxu0 0.0
        %4177 = vmatpush1.msra.mxu0 0.0
        %4178 = vmatprep.subr.mxu0 0.0
        %4179 = vmatpush1.msra.mxu0 0.0
        %4180 = vmatprep.subr.mxu0 0.0
        %4181 = vmatpush1.msra.mxu0 0.0
        %4182 = vmatprep.subr.mxu0 0.0
        %4183 = vmatpush1.msra.mxu0 0.0
        %4184 = vmatprep.subr.mxu0 0.0
        %4185 = vmatpush1.msra.mxu0 0.0
        %4186 = vmatprep.subr.mxu0 0.0
        %4187 = vmatpush1.msra.mxu0 0.0
        %4188 = vmatprep.subr.mxu0 0.0
        %4189 = vmatpush1.msra.mxu0 0.0
        %4190 = vmatprep.subr.mxu0 0.0
        %4191 = vmatpush1.msra.mxu0 0.0
        %4192 = vmatprep.subr.mxu0 0.0
        %4193 = vmatpush1.msra.mxu0 0.0
        %4194 = vmatprep.subr.mxu0 0.0
        %4195 = vmatpush1.msra.mxu0 0.0
        %4196 = vmatprep.subr.mxu0 0.0
        %4197 = vmatpush1.msra.mxu0 0.0
        %4198 = vmatprep.subr.mxu0 0.0
        %4199 = vmatpush1.msra.mxu0 0.0
        %4200 = vmatprep.subr.mxu0 0.0
        %4201 = vmatpush1.msra.mxu0 0.0
        %4202 = vmatprep.subr.mxu0 0.0
        %4203 = vmatpush1.msra.mxu0 0.0
        %4204 = vmatprep.subr.mxu0 0.0
        %4205 = vmatpush1.msra.mxu0 0.0
        %4206 = vmatprep.subr.mxu0 0.0
        %4207 = vmatpush1.msra.mxu0 0.0
        %4208 = vmatprep.subr.mxu0 0.0
        %4209 = vmatpush1.msra.mxu0 0.0
        %4210 = vmatprep.subr.mxu0 0.0
        %4211 = vmatpush1.msra.mxu0 0.0
        %4212 = vmatprep.subr.mxu0 0.0
        %4213 = vmatpush1.msra.mxu0 0.0
        %4214 = vmatprep.subr.mxu0 0.0
        %4215 = vmatpush1.msra.mxu0 0.0
        %4216 = vmatprep.subr.mxu0 0.0
        %4217 = vmatpush1.msra.mxu0 0.0
        %4218 = vmatprep.subr.mxu0 0.0
        %4219 = vmatpush1.msra.mxu0 0.0
        %4220 = vmatprep.subr.mxu0 0.0
        %4221 = vmatpush1.msra.mxu0 0.0
        %4222 = vmatprep.subr.mxu0 0.0
        %4223 = vmatpush1.msra.mxu0 0.0
        %4224 = vmatprep.subr.mxu0 0.0
        %4225 = vmatpush1.msra.mxu0 0.0
        %4226 = vmatprep.subr.mxu0 0.0
        %4227 = vmatpush1.msra.mxu0 0.0
        %4228 = vmatprep.subr.mxu0 0.0
        %4229 = vmatpush1.msra.mxu0 0.0
        %4230 = vmatprep.subr.mxu0 0.0
        %4231 = vmatpush1.msra.mxu0 0.0
        %4232 = vmatprep.mubr.f32.mxu0 0.0
        %4233 = vmatmul.mubr.f32.gmra.mrb[0].mxu0 %v4073
        %v4234 = vpop.f32.mrb[0].mxu0
        %v4235 = vadd.f32 0.0, %v4234
        %v4236 = vpop.f32.mrb[0].mxu0
        %4237 = vmatprep.mubr.f32.mxu0 0.0
        %4238 = vmatmul.mubr.f32.gmra.mrb[0].mxu0 %v4076
        %v4239 = vpop.f32.mrb[0].mxu0
        %v4240 = vadd.f32 0.0, %v4239
        %v4241 = vpop.f32.mrb[0].mxu0
        %4242 = vmatprep.mubr.f32.mxu0 0.0
        %4243 = vmatmul.mubr.f32.gmra.mrb[0].mxu0 %v4079
        %v4244 = vpop.f32.mrb[0].mxu0
        %v4245 = vadd.f32 0.0, %v4244
        %v4246 = vpop.f32.mrb[0].mxu0
        %4247 = vmatprep.mubr.f32.mxu0 0.0
        %4248 = vmatmul.mubr.f32.gmra.mrb[0].mxu0 %v4082
        %v4249 = vpop.f32.mrb[0].mxu0
        %v4250 = vadd.f32 0.0, %v4249
        %v4251 = vpop.f32.mrb[0].mxu0
        %4252 = vmatprep.mubr.f32.mxu0 0.0
        %4253 = vmatmul.mubr.f32.gmra.mrb[0].mxu0 %v4085
        %v4254 = vpop.f32.mrb[0].mxu0
        %v4255 = vadd.f32 0.0, %v4254
        %v4256 = vpop.f32.mrb[0].mxu0
        %4257 = vmatprep.mubr.f32.mxu0 0.0
        %4258 = vmatmul.mubr.f32.gmra.mrb[0].mxu0 %v4088
        %v4259 = vpop.f32.mrb[0].mxu0
        %v4260 = vadd.f32 0.0, %v4259
        %v4261 = vpop.f32.mrb[0].mxu0
        %4262 = vmatprep.mubr.f32.mxu0 0.0
        %4263 = vmatmul.mubr.f32.gmra.mrb[0].mxu0 %v4091
        %v4264 = vpop.f32.mrb[0].mxu0
        %v4265 = vadd.f32 0.0, %v4264
        %v4266 = vpop.f32.mrb[0].mxu0
        %4267 = vmatprep.mubr.f32.mxu0 0.0
        %4268 = vmatmul.mubr.f32.gmra.mrb[0].mxu0 %v4094
        %v4269 = vpop.f32.mrb[0].mxu0
        %v4270 = vadd.f32 0.0, %v4269
        %v4271 = vpop.f32.mrb[0].mxu0
        %4272 = vmatprep.mubr.f32.mxu0 0.0
        %4273 = vmatmul.mubr.f32.gmra.mrb[0].mxu0 %v4097
        %v4274 = vpop.f32.mrb[0].mxu0
        %v4275 = vadd.f32 0.0, %v4274
        %v4276 = vpop.f32.mrb[0].mxu0
        %4277 = vmatprep.mubr.f32.mxu0 0.0
        %4278 = vmatmul.mubr.f32.gmra.mrb[0].mxu0 %v4100
        %v4279 = vpop.f32.mrb[0].mxu0
        %v4280 = vadd.f32 0.0, %v4279
        %v4281 = vpop.f32.mrb[0].mxu0
        %4282 = vmatprep.mubr.f32.mxu0 0.0
        %4283 = vmatmul.mubr.f32.gmra.mrb[0].mxu0 %v4103
        %v4284 = vpop.f32.mrb[0].mxu0
        %v4285 = vadd.f32 0.0, %v4284
        %v4286 = vpop.f32.mrb[0].mxu0
        %4287 = vmatprep.mubr.f32.mxu0 0.0
        %4288 = vmatmul.mubr.f32.gmra.mrb[0].mxu0 %v4106
        %v4289 = vpop.f32.mrb[0].mxu0
        %v4290 = vadd.f32 0.0, %v4289
        %v4291 = vpop.f32.mrb[0].mxu0
        %4292 = vmatprep.mubr.f32.mxu0 0.0
        %4293 = vmatmul.mubr.f32.gmra.mrb[0].mxu0 %v4109
        %v4294 = vpop.f32.mrb[0].mxu0
        %v4295 = vadd.f32 0.0, %v4294
        %v4296 = vpop.f32.mrb[0].mxu0
        %4297 = vmatprep.mubr.f32.mxu0 0.0
        %4298 = vmatmul.mubr.f32.gmra.mrb[0].mxu0 %v4112
        %v4299 = vpop.f32.mrb[0].mxu0
        %v4300 = vadd.f32 0.0, %v4299
        %v4301 = vpop.f32.mrb[0].mxu0
        %4302 = vmatprep.mubr.f32.mxu0 0.0
        %4303 = vmatmul.mubr.f32.gmra.mrb[0].mxu0 %v4115
        %v4304 = vpop.f32.mrb[0].mxu0
        %v4305 = vadd.f32 0.0, %v4304
        %v4306 = vpop.f32.mrb[0].mxu0
        %4307 = vmatprep.mubr.f32.mxu0 0.0
        %4308 = vmatmul.mubr.f32.gmra.mrb[0].mxu0 %v4118
        %v4309 = vpop.f32.mrb[0].mxu0
        %v4310 = vadd.f32 0.0, %v4309
        %v4311 = vpop.f32.mrb[0].mxu0
        %4312 = vmatprep.mubr.f32.mxu0 0.0
        %4313 = vmatmul.mubr.f32.gmra.mrb[0].mxu0 %v4121
        %v4314 = vpop.f32.mrb[0].mxu0
        %v4315 = vadd.f32 0.0, %v4314
        %v4316 = vpop.f32.mrb[0].mxu0
        %4317 = vmatprep.mubr.f32.mxu0 0.0
        %4318 = vmatmul.mubr.f32.gmra.mrb[0].mxu0 %v4124
        %v4319 = vpop.f32.mrb[0].mxu0
        %v4320 = vadd.f32 0.0, %v4319
        %v4321 = vpop.f32.mrb[0].mxu0
        %4322 = vmatprep.mubr.f32.mxu0 0.0
        %4323 = vmatmul.mubr.f32.gmra.mrb[0].mxu0 %v4127
        %v4324 = vpop.f32.mrb[0].mxu0
        %v4325 = vadd.f32 0.0, %v4324
        %v4326 = vpop.f32.mrb[0].mxu0
        %4327 = vmatprep.mubr.f32.mxu0 0.0
        %4328 = vmatmul.mubr.f32.gmra.mrb[0].mxu0 %v4130
        %v4329 = vpop.f32.mrb[0].mxu0
        %v4330 = vadd.f32 0.0, %v4329
        %v4331 = vpop.f32.mrb[0].mxu0
        %4332 = vmatprep.mubr.f32.mxu0 0.0
        %4333 = vmatmul.mubr.f32.gmra.mrb[0].mxu0 %v4133
        %v4334 = vpop.f32.mrb[0].mxu0
        %v4335 = vadd.f32 0.0, %v4334
        %v4336 = vpop.f32.mrb[0].mxu0
        %4337 = vmatprep.mubr.f32.mxu0 0.0
        %4338 = vmatmul.mubr.f32.gmra.mrb[0].mxu0 %v4136
        %v4339 = vpop.f32.mrb[0].mxu0
        %v4340 = vadd.f32 0.0, %v4339
        %v4341 = vpop.f32.mrb[0].mxu0
        %4342 = vmatprep.mubr.f32.mxu0 0.0
        %4343 = vmatmul.mubr.f32.gmra.mrb[0].mxu0 %v4139
        %v4344 = vpop.f32.mrb[0].mxu0
        %v4345 = vadd.f32 0.0, %v4344
        %v4346 = vpop.f32.mrb[0].mxu0
        %4347 = vmatprep.mubr.f32.mxu0 0.0
        %4348 = vmatmul.mubr.f32.gmra.mrb[0].mxu0 %v4142
        %v4349 = vpop.f32.mrb[0].mxu0
        %v4350 = vadd.f32 0.0, %v4349
        %v4351 = vpop.f32.mrb[0].mxu0
        %4352 = vmatprep.mubr.f32.mxu0 0.0
        %4353 = vmatmul.mubr.f32.gmra.mrb[0].mxu0 %v4145
        %v4354 = vpop.f32.mrb[0].mxu0
        %v4355 = vadd.f32 0.0, %v4354
        %v4356 = vpop.f32.mrb[0].mxu0
        %4357 = vmatprep.mubr.f32.mxu0 0.0
        %4358 = vmatmul.mubr.f32.gmra.mrb[0].mxu0 %v4148
        %v4359 = vpop.f32.mrb[0].mxu0
        %v4360 = vadd.f32 0.0, %v4359
        %v4361 = vpop.f32.mrb[0].mxu0
        %4362 = vmatprep.mubr.f32.mxu0 0.0
        %4363 = vmatmul.mubr.f32.gmra.mrb[0].mxu0 %v4151
        %v4364 = vpop.f32.mrb[0].mxu0
        %v4365 = vadd.f32 0.0, %v4364
        %v4366 = vpop.f32.mrb[0].mxu0
        %4367 = vmatprep.mubr.f32.mxu0 0.0
        %4368 = vmatmul.mubr.f32.gmra.mrb[0].mxu0 %v4154
        %v4369 = vpop.f32.mrb[0].mxu0
        %v4370 = vadd.f32 0.0, %v4369
        %v4371 = vpop.f32.mrb[0].mxu0
        %4372 = vmatprep.mubr.f32.mxu0 0.0
        %4373 = vmatmul.mubr.f32.gmra.mrb[0].mxu0 %v4157
        %v4374 = vpop.f32.mrb[0].mxu0
        %v4375 = vadd.f32 0.0, %v4374
        %v4376 = vpop.f32.mrb[0].mxu0
        %4377 = vmatprep.mubr.f32.mxu0 0.0
        %4378 = vmatmul.mubr.f32.gmra.mrb[0].mxu0 %v4160
        %v4379 = vpop.f32.mrb[0].mxu0
        %v4380 = vadd.f32 0.0, %v4379
        %v4381 = vpop.f32.mrb[0].mxu0
        %4382 = vmatprep.mubr.f32.mxu0 0.0
        %4383 = vmatmul.mubr.f32.gmra.mrb[0].mxu0 %v4163
        %v4384 = vpop.f32.mrb[0].mxu0
        %v4385 = vadd.f32 0.0, %v4384
        %v4386 = vpop.f32.mrb[0].mxu0
        %4387 = vmatprep.mubr.f32.mxu0 0.0
        %4388 = vmatmul.mubr.f32.gmra.mrb[0].mxu0 %v4166
        %v4389 = vpop.f32.mrb[0].mxu0
        %v4390 = vadd.f32 0.0, %v4389
        %v4391 = vpop.f32.mrb[0].mxu0
        %4392 = vdwg.mxu0
        %v4393 = vmul.f32 %v4385, %v421
        %v4394 = vmul.f32 %v4390, %v422
        %v4395 = vmul.f32 %v4235, %v423
        %v4396 = vmul.f32 %v4240, %v424
        %v4397 = vmul.f32 %v4245, %v425
        %v4398 = vmul.f32 %v4250, %v426
        %v4399 = vmul.f32 %v4255, %v427
        %v4400 = vmul.f32 %v4260, %v428
        %v4401 = vmul.f32 %v4265, %v429
        %v4402 = vmul.f32 %v4270, %v430
        %v4403 = vmul.f32 %v4275, %v431
        %v4404 = vmul.f32 %v4280, %v432
        %v4405 = vmul.f32 %v4285, %v433
        %v4406 = vmul.f32 %v4290, %v434
        %v4407 = vmul.f32 %v4295, %v435
        %v4408 = vmul.f32 %v4300, %v436
        %v4409 = vmul.f32 %v4305, %v437
        %v4410 = vmul.f32 %v4310, %v438
        %v4411 = vmul.f32 %v4315, %v439
        %v4412 = vmul.f32 %v4320, %v440
        %v4413 = vmul.f32 %v4325, %v441
        %v4414 = vmul.f32 %v4330, %v442
        %v4415 = vmul.f32 %v4335, %v443
        %v4416 = vmul.f32 %v4340, %v444
        %v4417 = vmul.f32 %v4345, %v445
        %v4418 = vmul.f32 %v4350, %v446
        %v4419 = vmul.f32 %v4355, %v447
        %v4420 = vmul.f32 %v4360, %v448
        %v4421 = vmul.f32 %v4365, %v449
        %v4422 = vmul.f32 %v4370, %v450
        %v4423 = vmul.f32 %v4375, %v451
        %v4424 = vmul.f32 %v4380, %v452
        %4457 = vrot.lane.b32.xlu0 %v4235, 96
        %v4458 = vpop.permute.xlu0 %4457
        %4459 = vrot.lane.b32.xlu0 %v4240, 96
        %v4460 = vpop.permute.xlu0 %4459
        %4461 = vrot.lane.b32.xlu0 %v4245, 96
        %v4462 = vpop.permute.xlu0 %4461
        %4463 = vrot.lane.b32.xlu0 %v4250, 96
        %v4464 = vpop.permute.xlu0 %4463
        %4465 = vrot.lane.b32.xlu0 %v4255, 96
        %v4466 = vpop.permute.xlu0 %4465
        %4467 = vrot.lane.b32.xlu0 %v4260, 96
        %v4468 = vpop.permute.xlu0 %4467
        %4469 = vrot.lane.b32.xlu0 %v4265, 96
        %v4470 = vpop.permute.xlu0 %4469
        %4471 = vrot.lane.b32.xlu0 %v4270, 96
        %v4472 = vpop.permute.xlu0 %4471
        %4473 = vrot.lane.b32.xlu0 %v4275, 96
        %v4474 = vpop.permute.xlu0 %4473
        %4475 = vrot.lane.b32.xlu0 %v4280, 96
        %v4476 = vpop.permute.xlu0 %4475
        %4477 = vrot.lane.b32.xlu0 %v4285, 96
        %v4478 = vpop.permute.xlu0 %4477
        %4479 = vrot.lane.b32.xlu0 %v4290, 96
        %v4480 = vpop.permute.xlu0 %4479
        %4481 = vrot.lane.b32.xlu0 %v4295, 96
        %v4482 = vpop.permute.xlu0 %4481
        %4483 = vrot.lane.b32.xlu0 %v4300, 96
        %v4484 = vpop.permute.xlu0 %4483
        %4485 = vrot.lane.b32.xlu0 %v4305, 96
        %v4486 = vpop.permute.xlu0 %4485
        %4487 = vrot.lane.b32.xlu0 %v4310, 96
        %v4488 = vpop.permute.xlu0 %4487
        %4489 = vrot.lane.b32.xlu0 %v4315, 96
        %v4490 = vpop.permute.xlu0 %4489
        %4491 = vrot.lane.b32.xlu0 %v4320, 96
        %v4492 = vpop.permute.xlu0 %4491
        %4493 = vrot.lane.b32.xlu0 %v4325, 96
        %v4494 = vpop.permute.xlu0 %4493
        %4495 = vrot.lane.b32.xlu0 %v4330, 96
        %v4496 = vpop.permute.xlu0 %4495
        %4497 = vrot.lane.b32.xlu0 %v4335, 96
        %v4498 = vpop.permute.xlu0 %4497
        %4499 = vrot.lane.b32.xlu0 %v4340, 96
        %v4500 = vpop.permute.xlu0 %4499
        %4501 = vrot.lane.b32.xlu0 %v4345, 96
        %v4502 = vpop.permute.xlu0 %4501
        %4503 = vrot.lane.b32.xlu0 %v4350, 96
        %v4504 = vpop.permute.xlu0 %4503
        %4505 = vrot.lane.b32.xlu0 %v4355, 96
        %v4506 = vpop.permute.xlu0 %4505
        %4507 = vrot.lane.b32.xlu0 %v4360, 96
        %v4508 = vpop.permute.xlu0 %4507
        %4509 = vrot.lane.b32.xlu0 %v4365, 96
        %v4510 = vpop.permute.xlu0 %4509
        %4511 = vrot.lane.b32.xlu0 %v4370, 96
        %v4512 = vpop.permute.xlu0 %4511
        %4513 = vrot.lane.b32.xlu0 %v4375, 96
        %v4514 = vpop.permute.xlu0 %4513
        %4515 = vrot.lane.b32.xlu0 %v4380, 96
        %v4516 = vpop.permute.xlu0 %4515
        %4517 = vrot.lane.b32.xlu0 %v4385, 96
        %v4518 = vpop.permute.xlu0 %4517
        %4519 = vrot.lane.b32.xlu0 %v4390, 96
        %v4520 = vpop.permute.xlu0 %4519
        %v4553 = vadd.f32 %v4393, %v4458
        %v4554 = vadd.f32 %v4394, %v4460
        %v4555 = vadd.f32 %v4395, %v4462
        %v4556 = vadd.f32 %v4396, %v4464
        %v4557 = vadd.f32 %v4397, %v4466
        %v4558 = vadd.f32 %v4398, %v4468
        %v4559 = vadd.f32 %v4399, %v4470
        %v4560 = vadd.f32 %v4400, %v4472
        %v4561 = vadd.f32 %v4401, %v4474
        %v4562 = vadd.f32 %v4402, %v4476
        %v4563 = vadd.f32 %v4403, %v4478
        %v4564 = vadd.f32 %v4404, %v4480
        %v4565 = vadd.f32 %v4405, %v4482
        %v4566 = vadd.f32 %v4406, %v4484
        %v4567 = vadd.f32 %v4407, %v4486
        %v4568 = vadd.f32 %v4408, %v4488
        %v4569 = vadd.f32 %v4409, %v4490
        %v4570 = vadd.f32 %v4410, %v4492
        %v4571 = vadd.f32 %v4411, %v4494
        %v4572 = vadd.f32 %v4412, %v4496
        %v4573 = vadd.f32 %v4413, %v4498
        %v4574 = vadd.f32 %v4414, %v4500
        %v4575 = vadd.f32 %v4415, %v4502
        %v4576 = vadd.f32 %v4416, %v4504
        %v4577 = vadd.f32 %v4417, %v4506
        %v4578 = vadd.f32 %v4418, %v4508
        %v4579 = vadd.f32 %v4419, %v4510
        %v4580 = vadd.f32 %v4420, %v4512
        %v4581 = vadd.f32 %v4421, %v4514
        %v4582 = vadd.f32 %v4422, %v4516
        %v4583 = vadd.f32 %v4423, %v4518
        %v4584 = vadd.f32 %v4424, %v4520
        %4585 = vrot.lane.b32.xlu0 %v4235, 64
        %v4586 = vpop.permute.xlu0 %4585
        %4587 = vrot.lane.b32.xlu0 %v4240, 64
        %v4588 = vpop.permute.xlu0 %4587
        %4589 = vrot.lane.b32.xlu0 %v4245, 64
        %v4590 = vpop.permute.xlu0 %4589
        %4591 = vrot.lane.b32.xlu0 %v4250, 64
        %v4592 = vpop.permute.xlu0 %4591
        %4593 = vrot.lane.b32.xlu0 %v4255, 64
        %v4594 = vpop.permute.xlu0 %4593
        %4595 = vrot.lane.b32.xlu0 %v4260, 64
        %v4596 = vpop.permute.xlu0 %4595
        %4597 = vrot.lane.b32.xlu0 %v4265, 64
        %v4598 = vpop.permute.xlu0 %4597
        %4599 = vrot.lane.b32.xlu0 %v4270, 64
        %v4600 = vpop.permute.xlu0 %4599
        %4601 = vrot.lane.b32.xlu0 %v4275, 64
        %v4602 = vpop.permute.xlu0 %4601
        %4603 = vrot.lane.b32.xlu0 %v4280, 64
        %v4604 = vpop.permute.xlu0 %4603
        %4605 = vrot.lane.b32.xlu0 %v4285, 64
        %v4606 = vpop.permute.xlu0 %4605
        %4607 = vrot.lane.b32.xlu0 %v4290, 64
        %v4608 = vpop.permute.xlu0 %4607
        %4609 = vrot.lane.b32.xlu0 %v4295, 64
        %v4610 = vpop.permute.xlu0 %4609
        %4611 = vrot.lane.b32.xlu0 %v4300, 64
        %v4612 = vpop.permute.xlu0 %4611
        %4613 = vrot.lane.b32.xlu0 %v4305, 64
        %v4614 = vpop.permute.xlu0 %4613
        %4615 = vrot.lane.b32.xlu0 %v4310, 64
        %v4616 = vpop.permute.xlu0 %4615
        %4617 = vrot.lane.b32.xlu0 %v4315, 64
        %v4618 = vpop.permute.xlu0 %4617
        %4619 = vrot.lane.b32.xlu0 %v4320, 64
        %v4620 = vpop.permute.xlu0 %4619
        %4621 = vrot.lane.b32.xlu0 %v4325, 64
        %v4622 = vpop.permute.xlu0 %4621
        %4623 = vrot.lane.b32.xlu0 %v4330, 64
        %v4624 = vpop.permute.xlu0 %4623
        %4625 = vrot.lane.b32.xlu0 %v4335, 64
        %v4626 = vpop.permute.xlu0 %4625
        %4627 = vrot.lane.b32.xlu0 %v4340, 64
        %v4628 = vpop.permute.xlu0 %4627
        %4629 = vrot.lane.b32.xlu0 %v4345, 64
        %v4630 = vpop.permute.xlu0 %4629
        %4631 = vrot.lane.b32.xlu0 %v4350, 64
        %v4632 = vpop.permute.xlu0 %4631
        %4633 = vrot.lane.b32.xlu0 %v4355, 64
        %v4634 = vpop.permute.xlu0 %4633
        %4635 = vrot.lane.b32.xlu0 %v4360, 64
        %v4636 = vpop.permute.xlu0 %4635
        %4637 = vrot.lane.b32.xlu0 %v4365, 64
        %v4638 = vpop.permute.xlu0 %4637
        %4639 = vrot.lane.b32.xlu0 %v4370, 64
        %v4640 = vpop.permute.xlu0 %4639
        %4641 = vrot.lane.b32.xlu0 %v4375, 64
        %v4642 = vpop.permute.xlu0 %4641
        %4643 = vrot.lane.b32.xlu0 %v4380, 64
        %v4644 = vpop.permute.xlu0 %4643
        %4645 = vrot.lane.b32.xlu0 %v4385, 64
        %v4646 = vpop.permute.xlu0 %4645
        %4647 = vrot.lane.b32.xlu0 %v4390, 64
        %v4648 = vpop.permute.xlu0 %4647
        %v4681 = vmul.f32 %v4590, %v485
        %v4682 = vmul.f32 %v4592, %v486
        %v4683 = vmul.f32 %v4594, %v487
        %v4684 = vmul.f32 %v4596, %v488
        %v4685 = vmul.f32 %v4598, %v489
        %v4686 = vmul.f32 %v4600, %v490
        %v4687 = vmul.f32 %v4602, %v491
        %v4688 = vmul.f32 %v4604, %v492
        %v4689 = vmul.f32 %v4606, %v493
        %v4690 = vmul.f32 %v4608, %v494
        %v4691 = vmul.f32 %v4610, %v495
        %v4692 = vmul.f32 %v4612, %v496
        %v4693 = vmul.f32 %v4614, %v497
        %v4694 = vmul.f32 %v4616, %v498
        %v4695 = vmul.f32 %v4618, %v499
        %v4696 = vmul.f32 %v4620, %v500
        %v4697 = vmul.f32 %v4622, %v501
        %v4698 = vmul.f32 %v4624, %v502
        %v4699 = vmul.f32 %v4626, %v503
        %v4700 = vmul.f32 %v4628, %v504
        %v4701 = vmul.f32 %v4630, %v505
        %v4702 = vmul.f32 %v4632, %v506
        %v4703 = vmul.f32 %v4634, %v507
        %v4704 = vmul.f32 %v4636, %v508
        %v4705 = vmul.f32 %v4638, %v509
        %v4706 = vmul.f32 %v4640, %v510
        %v4707 = vmul.f32 %v4642, %v511
        %v4708 = vmul.f32 %v4644, %v512
        %v4709 = vmul.f32 %v4646, %v513
        %v4710 = vmul.f32 %v4648, %v514
        %v4711 = vmul.f32 %v4586, %v515
        %v4712 = vmul.f32 %v4588, %v516
        %v4713 = vadd.f32 %v4553, %v4681
        %v4714 = vadd.f32 %v4554, %v4682
        %v4715 = vadd.f32 %v4555, %v4683
        %v4716 = vadd.f32 %v4556, %v4684
        %v4717 = vadd.f32 %v4557, %v4685
        %v4718 = vadd.f32 %v4558, %v4686
        %v4719 = vadd.f32 %v4559, %v4687
        %v4720 = vadd.f32 %v4560, %v4688
        %v4721 = vadd.f32 %v4561, %v4689
        %v4722 = vadd.f32 %v4562, %v4690
        %v4723 = vadd.f32 %v4563, %v4691
        %v4724 = vadd.f32 %v4564, %v4692
        %v4725 = vadd.f32 %v4565, %v4693
        %v4726 = vadd.f32 %v4566, %v4694
        %v4727 = vadd.f32 %v4567, %v4695
        %v4728 = vadd.f32 %v4568, %v4696
        %v4729 = vadd.f32 %v4569, %v4697
        %v4730 = vadd.f32 %v4570, %v4698
        %v4731 = vadd.f32 %v4571, %v4699
        %v4732 = vadd.f32 %v4572, %v4700
        %v4733 = vadd.f32 %v4573, %v4701
        %v4734 = vadd.f32 %v4574, %v4702
        %v4735 = vadd.f32 %v4575, %v4703
        %v4736 = vadd.f32 %v4576, %v4704
        %v4737 = vadd.f32 %v4577, %v4705
        %v4738 = vadd.f32 %v4578, %v4706
        %v4739 = vadd.f32 %v4579, %v4707
        %v4740 = vadd.f32 %v4580, %v4708
        %v4741 = vadd.f32 %v4581, %v4709
        %v4742 = vadd.f32 %v4582, %v4710
        %v4743 = vadd.f32 %v4583, %v4711
        %v4744 = vadd.f32 %v4584, %v4712
        %v4745 = vadd.f32 %v4035, %v4713
        %v4746 = vadd.f32 %v4036, %v4714
        %v4747 = vadd.f32 %v4037, %v4715
        %v4748 = vadd.f32 %v4038, %v4716
        %v4749 = vadd.f32 %v4039, %v4717
        %v4750 = vadd.f32 %v4040, %v4718
        %v4751 = vadd.f32 %v4041, %v4719
        %v4752 = vadd.f32 %v4042, %v4720
        %v4753 = vadd.f32 %v4043, %v4721
        %v4754 = vadd.f32 %v4044, %v4722
        %v4755 = vadd.f32 %v4045, %v4723
        %v4756 = vadd.f32 %v4046, %v4724
        %v4757 = vadd.f32 %v4047, %v4725
        %v4758 = vadd.f32 %v4048, %v4726
        %v4759 = vadd.f32 %v4049, %v4727
        %v4760 = vadd.f32 %v4050, %v4728
        %v4761 = vadd.f32 %v4051, %v4729
        %v4762 = vadd.f32 %v4052, %v4730
        %v4763 = vadd.f32 %v4053, %v4731
        %v4764 = vadd.f32 %v4054, %v4732
        %v4765 = vadd.f32 %v4055, %v4733
        %v4766 = vadd.f32 %v4056, %v4734
        %v4767 = vadd.f32 %v4057, %v4735
        %v4768 = vadd.f32 %v4058, %v4736
        %v4769 = vadd.f32 %v4059, %v4737
        %v4770 = vadd.f32 %v4060, %v4738
        %v4771 = vadd.f32 %v4061, %v4739
        %v4772 = vadd.f32 %v4062, %v4740
        %v4773 = vadd.f32 %v4063, %v4741
        %v4774 = vadd.f32 %v4064, %v4742
        %v4775 = vadd.f32 %v4065, %v4743
        %v4776 = vadd.f32 %v4066, %v4744
        %v4777 = vrot.slane %v3259, 1
        %v4778 = vrot.slane %v3260, 1
        %v4779 = vrot.slane %v3261, 1
        %v4780 = vrot.slane %v3262, 1
        %v4781 = vrot.slane %v3263, 1
        %v4782 = vrot.slane %v3264, 1
        %v4783 = vrot.slane %v3265, 1
        %v4784 = vrot.slane %v3266, 1
        %v4785 = vrot.slane %v3267, 1
        %v4786 = vrot.slane %v3268, 1
        %v4787 = vrot.slane %v3269, 1
        %v4788 = vrot.slane %v3270, 1
        %v4789 = vrot.slane %v3271, 1
        %v4790 = vrot.slane %v3272, 1
        %v4791 = vrot.slane %v3273, 1
        %v4792 = vrot.slane %v3274, 1
        %v4793 = vrot.slane %v3275, 1
        %v4794 = vrot.slane %v3276, 1
        %v4795 = vrot.slane %v3277, 1
        %v4796 = vrot.slane %v3278, 1
        %v4797 = vrot.slane %v3279, 1
        %v4798 = vrot.slane %v3280, 1
        %v4799 = vrot.slane %v3281, 1
        %v4800 = vrot.slane %v3282, 1
        %v4801 = vrot.slane %v3283, 1
        %v4802 = vrot.slane %v3284, 1
        %v4803 = vrot.slane %v3285, 1
        %v4804 = vrot.slane %v3286, 1
        %v4805 = vrot.slane %v3287, 1
        %v4806 = vrot.slane %v3288, 1
        %v4807 = vrot.slane %v3289, 1
        %v4808 = vrot.slane %v3290, 1
        %v4809 = vsel %vm2068, %v4807, %v4808
        %v4810 = vsel %vm2068, %v4806, %v4807
        %v4811 = vsel %vm2068, %v4805, %v4806
        %v4812 = vsel %vm2068, %v4804, %v4805
        %v4813 = vsel %vm2068, %v4803, %v4804
        %v4814 = vsel %vm2068, %v4802, %v4803
        %v4815 = vsel %vm2068, %v4801, %v4802
        %v4816 = vsel %vm2068, %v4800, %v4801
        %v4817 = vsel %vm2068, %v4799, %v4800
        %v4818 = vsel %vm2068, %v4798, %v4799
        %v4819 = vsel %vm2068, %v4797, %v4798
        %v4820 = vsel %vm2068, %v4796, %v4797
        %v4821 = vsel %vm2068, %v4795, %v4796
        %v4822 = vsel %vm2068, %v4794, %v4795
        %v4823 = vsel %vm2068, %v4793, %v4794
        %v4824 = vsel %vm2068, %v4792, %v4793
        %v4825 = vsel %vm2068, %v4791, %v4792
        %v4826 = vsel %vm2068, %v4790, %v4791
        %v4827 = vsel %vm2068, %v4789, %v4790
        %v4828 = vsel %vm2068, %v4788, %v4789
        %v4829 = vsel %vm2068, %v4787, %v4788
        %v4830 = vsel %vm2068, %v4786, %v4787
        %v4831 = vsel %vm2068, %v4785, %v4786
        %v4832 = vsel %vm2068, %v4784, %v4785
        %v4833 = vsel %vm2068, %v4783, %v4784
        %v4834 = vsel %vm2068, %v4782, %v4783
        %v4835 = vsel %vm2068, %v4781, %v4782
        %v4836 = vsel %vm2068, %v4780, %v4781
        %v4837 = vsel %vm2068, %v4779, %v4780
        %v4838 = vsel %vm2068, %v4778, %v4779
        %v4839 = vsel %vm2068, %v4777, %v4778
        %v4840 = vsel %vm2068, %v4808, %v4777
        %v4841 = vmul.f32 %v4839, %v357
        %v4842 = vmul.f32 %v4838, %v358
        %v4843 = vmul.f32 %v4837, %v359
        %v4844 = vmul.f32 %v4836, %v360
        %v4845 = vmul.f32 %v4835, %v361
        %v4846 = vmul.f32 %v4834, %v362
        %v4847 = vmul.f32 %v4833, %v363
        %v4848 = vmul.f32 %v4832, %v364
        %v4849 = vmul.f32 %v4831, %v365
        %v4850 = vmul.f32 %v4830, %v366
        %v4851 = vmul.f32 %v4829, %v367
        %v4852 = vmul.f32 %v4828, %v368
        %v4853 = vmul.f32 %v4827, %v369
        %v4854 = vmul.f32 %v4826, %v370
        %v4855 = vmul.f32 %v4825, %v371
        %v4856 = vmul.f32 %v4824, %v372
        %v4857 = vmul.f32 %v4823, %v373
        %v4858 = vmul.f32 %v4822, %v374
        %v4859 = vmul.f32 %v4821, %v375
        %v4860 = vmul.f32 %v4820, %v376
        %v4861 = vmul.f32 %v4819, %v377
        %v4862 = vmul.f32 %v4818, %v378
        %v4863 = vmul.f32 %v4817, %v379
        %v4864 = vmul.f32 %v4816, %v380
        %v4865 = vmul.f32 %v4815, %v381
        %v4866 = vmul.f32 %v4814, %v382
        %v4867 = vmul.f32 %v4813, %v383
        %v4868 = vmul.f32 %v4812, %v384
        %v4869 = vmul.f32 %v4811, %v385
        %v4870 = vmul.f32 %v4810, %v386
        %v4871 = vmul.f32 %v4809, %v387
        %v4872 = vmul.f32 %v4840, %v388
        %s4873 = scalar_lea.vmem %s2, 64
        %v4874 = vld [vmem:[%s4873] sm:$0xff]
        %v4875 = vld [vmem:[%s4873 + $0x8] sm:$0xff]
        %v4876 = vld [vmem:[%s4873 + $0x10] sm:$0xff]
        %v4877 = vld [vmem:[%s4873 + $0x18] sm:$0xff]
        %v4879 = vsel %vm3393, %v4841, 0
        %v4882 = vsel %vm3393, %v4842, 0
        %v4885 = vsel %vm3393, %v4843, 0
        %v4888 = vsel %vm3393, %v4844, 0
        %v4891 = vsel %vm3393, %v4845, 0
        %v4894 = vsel %vm3393, %v4846, 0
        %v4897 = vsel %vm3393, %v4847, 0
        %v4900 = vsel %vm3393, %v4848, 0
        %v4903 = vsel %vm3393, %v4849, 0
        %v4906 = vsel %vm3393, %v4850, 0
        %v4909 = vsel %vm3393, %v4851, 0
        %v4912 = vsel %vm3393, %v4852, 0
        %v4915 = vsel %vm3393, %v4853, 0
        %v4918 = vsel %vm3393, %v4854, 0
        %v4921 = vsel %vm3393, %v4855, 0
        %v4924 = vsel %vm3393, %v4856, 0
        %v4927 = vsel %vm3393, %v4857, 0
        %v4930 = vsel %vm3393, %v4858, 0
        %v4933 = vsel %vm3393, %v4859, 0
        %v4936 = vsel %vm3393, %v4860, 0
        %v4939 = vsel %vm3393, %v4861, 0
        %v4942 = vsel %vm3393, %v4862, 0
        %v4945 = vsel %vm3393, %v4863, 0
        %v4948 = vsel %vm3393, %v4864, 0
        %v4951 = vsel %vm3393, %v4865, 0
        %v4954 = vsel %vm3393, %v4866, 0
        %v4957 = vsel %vm3393, %v4867, 0
        %v4960 = vsel %vm3393, %v4868, 0
        %v4963 = vsel %vm3393, %v4869, 0
        %v4966 = vsel %vm3393, %v4870, 0
        %v4969 = vsel %vm3393, %v4871, 0
        %v4972 = vsel %vm3393, %v4872, 0
        %4974 = vmatprep.subr.mxu0 0.0
        %4975 = vmatpush1.msra.mxu0 %v4874
        %4976 = vmatprep.subr.mxu0 0.0
        %4977 = vmatpush1.msra.mxu0 %v4875
        %4978 = vmatprep.subr.mxu0 0.0
        %4979 = vmatpush1.msra.mxu0 %v4876
        %4980 = vmatprep.subr.mxu0 0.0
        %4981 = vmatpush1.msra.mxu0 %v4877
        %4982 = vmatprep.subr.mxu0 0.0
        %4983 = vmatpush1.msra.mxu0 0.0
        %4984 = vmatprep.subr.mxu0 0.0
        %4985 = vmatpush1.msra.mxu0 0.0
        %4986 = vmatprep.subr.mxu0 0.0
        %4987 = vmatpush1.msra.mxu0 0.0
        %4988 = vmatprep.subr.mxu0 0.0
        %4989 = vmatpush1.msra.mxu0 0.0
        %4990 = vmatprep.subr.mxu0 0.0
        %4991 = vmatpush1.msra.mxu0 0.0
        %4992 = vmatprep.subr.mxu0 0.0
        %4993 = vmatpush1.msra.mxu0 0.0
        %4994 = vmatprep.subr.mxu0 0.0
        %4995 = vmatpush1.msra.mxu0 0.0
        %4996 = vmatprep.subr.mxu0 0.0
        %4997 = vmatpush1.msra.mxu0 0.0
        %4998 = vmatprep.subr.mxu0 0.0
        %4999 = vmatpush1.msra.mxu0 0.0
        %5000 = vmatprep.subr.mxu0 0.0
        %5001 = vmatpush1.msra.mxu0 0.0
        %5002 = vmatprep.subr.mxu0 0.0
        %5003 = vmatpush1.msra.mxu0 0.0
        %5004 = vmatprep.subr.mxu0 0.0
        %5005 = vmatpush1.msra.mxu0 0.0
        %5006 = vmatprep.subr.mxu0 0.0
        %5007 = vmatpush1.msra.mxu0 0.0
        %5008 = vmatprep.subr.mxu0 0.0
        %5009 = vmatpush1.msra.mxu0 0.0
        %5010 = vmatprep.subr.mxu0 0.0
        %5011 = vmatpush1.msra.mxu0 0.0
        %5012 = vmatprep.subr.mxu0 0.0
        %5013 = vmatpush1.msra.mxu0 0.0
        %5014 = vmatprep.subr.mxu0 0.0
        %5015 = vmatpush1.msra.mxu0 0.0
        %5016 = vmatprep.subr.mxu0 0.0
        %5017 = vmatpush1.msra.mxu0 0.0
        %5018 = vmatprep.subr.mxu0 0.0
        %5019 = vmatpush1.msra.mxu0 0.0
        %5020 = vmatprep.subr.mxu0 0.0
        %5021 = vmatpush1.msra.mxu0 0.0
        %5022 = vmatprep.subr.mxu0 0.0
        %5023 = vmatpush1.msra.mxu0 0.0
        %5024 = vmatprep.subr.mxu0 0.0
        %5025 = vmatpush1.msra.mxu0 0.0
        %5026 = vmatprep.subr.mxu0 0.0
        %5027 = vmatpush1.msra.mxu0 0.0
        %5028 = vmatprep.subr.mxu0 0.0
        %5029 = vmatpush1.msra.mxu0 0.0
        %5030 = vmatprep.subr.mxu0 0.0
        %5031 = vmatpush1.msra.mxu0 0.0
        %5032 = vmatprep.subr.mxu0 0.0
        %5033 = vmatpush1.msra.mxu0 0.0
        %5034 = vmatprep.subr.mxu0 0.0
        %5035 = vmatpush1.msra.mxu0 0.0
        %5036 = vmatprep.subr.mxu0 0.0
        %5037 = vmatpush1.msra.mxu0 0.0
        %5038 = vmatprep.mubr.f32.mxu0 0.0
        %5039 = vmatmul.mubr.f32.gmra.mrb[0].mxu0 %v4879
        %v5040 = vpop.f32.mrb[0].mxu0
        %v5041 = vadd.f32 0.0, %v5040
        %v5042 = vpop.f32.mrb[0].mxu0
        %5043 = vmatprep.mubr.f32.mxu0 0.0
        %5044 = vmatmul.mubr.f32.gmra.mrb[0].mxu0 %v4882
        %v5045 = vpop.f32.mrb[0].mxu0
        %v5046 = vadd.f32 0.0, %v5045
        %v5047 = vpop.f32.mrb[0].mxu0
        %5048 = vmatprep.mubr.f32.mxu0 0.0
        %5049 = vmatmul.mubr.f32.gmra.mrb[0].mxu0 %v4885
        %v5050 = vpop.f32.mrb[0].mxu0
        %v5051 = vadd.f32 0.0, %v5050
        %v5052 = vpop.f32.mrb[0].mxu0
        %5053 = vmatprep.mubr.f32.mxu0 0.0
        %5054 = vmatmul.mubr.f32.gmra.mrb[0].mxu0 %v4888
        %v5055 = vpop.f32.mrb[0].mxu0
        %v5056 = vadd.f32 0.0, %v5055
        %v5057 = vpop.f32.mrb[0].mxu0
        %5058 = vmatprep.mubr.f32.mxu0 0.0
        %5059 = vmatmul.mubr.f32.gmra.mrb[0].mxu0 %v4891
        %v5060 = vpop.f32.mrb[0].mxu0
        %v5061 = vadd.f32 0.0, %v5060
        %v5062 = vpop.f32.mrb[0].mxu0
        %5063 = vmatprep.mubr.f32.mxu0 0.0
        %5064 = vmatmul.mubr.f32.gmra.mrb[0].mxu0 %v4894
        %v5065 = vpop.f32.mrb[0].mxu0
        %v5066 = vadd.f32 0.0, %v5065
        %v5067 = vpop.f32.mrb[0].mxu0
        %5068 = vmatprep.mubr.f32.mxu0 0.0
        %5069 = vmatmul.mubr.f32.gmra.mrb[0].mxu0 %v4897
        %v5070 = vpop.f32.mrb[0].mxu0
        %v5071 = vadd.f32 0.0, %v5070
        %v5072 = vpop.f32.mrb[0].mxu0
        %5073 = vmatprep.mubr.f32.mxu0 0.0
        %5074 = vmatmul.mubr.f32.gmra.mrb[0].mxu0 %v4900
        %v5075 = vpop.f32.mrb[0].mxu0
        %v5076 = vadd.f32 0.0, %v5075
        %v5077 = vpop.f32.mrb[0].mxu0
        %5078 = vmatprep.mubr.f32.mxu0 0.0
        %5079 = vmatmul.mubr.f32.gmra.mrb[0].mxu0 %v4903
        %v5080 = vpop.f32.mrb[0].mxu0
        %v5081 = vadd.f32 0.0, %v5080
        %v5082 = vpop.f32.mrb[0].mxu0
        %5083 = vmatprep.mubr.f32.mxu0 0.0
        %5084 = vmatmul.mubr.f32.gmra.mrb[0].mxu0 %v4906
        %v5085 = vpop.f32.mrb[0].mxu0
        %v5086 = vadd.f32 0.0, %v5085
        %v5087 = vpop.f32.mrb[0].mxu0
        %5088 = vmatprep.mubr.f32.mxu0 0.0
        %5089 = vmatmul.mubr.f32.gmra.mrb[0].mxu0 %v4909
        %v5090 = vpop.f32.mrb[0].mxu0
        %v5091 = vadd.f32 0.0, %v5090
        %v5092 = vpop.f32.mrb[0].mxu0
        %5093 = vmatprep.mubr.f32.mxu0 0.0
        %5094 = vmatmul.mubr.f32.gmra.mrb[0].mxu0 %v4912
        %v5095 = vpop.f32.mrb[0].mxu0
        %v5096 = vadd.f32 0.0, %v5095
        %v5097 = vpop.f32.mrb[0].mxu0
        %5098 = vmatprep.mubr.f32.mxu0 0.0
        %5099 = vmatmul.mubr.f32.gmra.mrb[0].mxu0 %v4915
        %v5100 = vpop.f32.mrb[0].mxu0
        %v5101 = vadd.f32 0.0, %v5100
        %v5102 = vpop.f32.mrb[0].mxu0
        %5103 = vmatprep.mubr.f32.mxu0 0.0
        %5104 = vmatmul.mubr.f32.gmra.mrb[0].mxu0 %v4918
        %v5105 = vpop.f32.mrb[0].mxu0
        %v5106 = vadd.f32 0.0, %v5105
        %v5107 = vpop.f32.mrb[0].mxu0
        %5108 = vmatprep.mubr.f32.mxu0 0.0
        %5109 = vmatmul.mubr.f32.gmra.mrb[0].mxu0 %v4921
        %v5110 = vpop.f32.mrb[0].mxu0
        %v5111 = vadd.f32 0.0, %v5110
        %v5112 = vpop.f32.mrb[0].mxu0
        %5113 = vmatprep.mubr.f32.mxu0 0.0
        %5114 = vmatmul.mubr.f32.gmra.mrb[0].mxu0 %v4924
        %v5115 = vpop.f32.mrb[0].mxu0
        %v5116 = vadd.f32 0.0, %v5115
        %v5117 = vpop.f32.mrb[0].mxu0
        %5118 = vmatprep.mubr.f32.mxu0 0.0
        %5119 = vmatmul.mubr.f32.gmra.mrb[0].mxu0 %v4927
        %v5120 = vpop.f32.mrb[0].mxu0
        %v5121 = vadd.f32 0.0, %v5120
        %v5122 = vpop.f32.mrb[0].mxu0
        %5123 = vmatprep.mubr.f32.mxu0 0.0
        %5124 = vmatmul.mubr.f32.gmra.mrb[0].mxu0 %v4930
        %v5125 = vpop.f32.mrb[0].mxu0
        %v5126 = vadd.f32 0.0, %v5125
        %v5127 = vpop.f32.mrb[0].mxu0
        %5128 = vmatprep.mubr.f32.mxu0 0.0
        %5129 = vmatmul.mubr.f32.gmra.mrb[0].mxu0 %v4933
        %v5130 = vpop.f32.mrb[0].mxu0
        %v5131 = vadd.f32 0.0, %v5130
        %v5132 = vpop.f32.mrb[0].mxu0
        %5133 = vmatprep.mubr.f32.mxu0 0.0
        %5134 = vmatmul.mubr.f32.gmra.mrb[0].mxu0 %v4936
        %v5135 = vpop.f32.mrb[0].mxu0
        %v5136 = vadd.f32 0.0, %v5135
        %v5137 = vpop.f32.mrb[0].mxu0
        %5138 = vmatprep.mubr.f32.mxu0 0.0
        %5139 = vmatmul.mubr.f32.gmra.mrb[0].mxu0 %v4939
        %v5140 = vpop.f32.mrb[0].mxu0
        %v5141 = vadd.f32 0.0, %v5140
        %v5142 = vpop.f32.mrb[0].mxu0
        %5143 = vmatprep.mubr.f32.mxu0 0.0
        %5144 = vmatmul.mubr.f32.gmra.mrb[0].mxu0 %v4942
        %v5145 = vpop.f32.mrb[0].mxu0
        %v5146 = vadd.f32 0.0, %v5145
        %v5147 = vpop.f32.mrb[0].mxu0
        %5148 = vmatprep.mubr.f32.mxu0 0.0
        %5149 = vmatmul.mubr.f32.gmra.mrb[0].mxu0 %v4945
        %v5150 = vpop.f32.mrb[0].mxu0
        %v5151 = vadd.f32 0.0, %v5150
        %v5152 = vpop.f32.mrb[0].mxu0
        %5153 = vmatprep.mubr.f32.mxu0 0.0
        %5154 = vmatmul.mubr.f32.gmra.mrb[0].mxu0 %v4948
        %v5155 = vpop.f32.mrb[0].mxu0
        %v5156 = vadd.f32 0.0, %v5155
        %v5157 = vpop.f32.mrb[0].mxu0
        %5158 = vmatprep.mubr.f32.mxu0 0.0
        %5159 = vmatmul.mubr.f32.gmra.mrb[0].mxu0 %v4951
        %v5160 = vpop.f32.mrb[0].mxu0
        %v5161 = vadd.f32 0.0, %v5160
        %v5162 = vpop.f32.mrb[0].mxu0
        %5163 = vmatprep.mubr.f32.mxu0 0.0
        %5164 = vmatmul.mubr.f32.gmra.mrb[0].mxu0 %v4954
        %v5165 = vpop.f32.mrb[0].mxu0
        %v5166 = vadd.f32 0.0, %v5165
        %v5167 = vpop.f32.mrb[0].mxu0
        %5168 = vmatprep.mubr.f32.mxu0 0.0
        %5169 = vmatmul.mubr.f32.gmra.mrb[0].mxu0 %v4957
        %v5170 = vpop.f32.mrb[0].mxu0
        %v5171 = vadd.f32 0.0, %v5170
        %v5172 = vpop.f32.mrb[0].mxu0
        %5173 = vmatprep.mubr.f32.mxu0 0.0
        %5174 = vmatmul.mubr.f32.gmra.mrb[0].mxu0 %v4960
        %v5175 = vpop.f32.mrb[0].mxu0
        %v5176 = vadd.f32 0.0, %v5175
        %v5177 = vpop.f32.mrb[0].mxu0
        %5178 = vmatprep.mubr.f32.mxu0 0.0
        %5179 = vmatmul.mubr.f32.gmra.mrb[0].mxu0 %v4963
        %v5180 = vpop.f32.mrb[0].mxu0
        %v5181 = vadd.f32 0.0, %v5180
        %v5182 = vpop.f32.mrb[0].mxu0
        %5183 = vmatprep.mubr.f32.mxu0 0.0
        %5184 = vmatmul.mubr.f32.gmra.mrb[0].mxu0 %v4966
        %v5185 = vpop.f32.mrb[0].mxu0
        %v5186 = vadd.f32 0.0, %v5185
        %v5187 = vpop.f32.mrb[0].mxu0
        %5188 = vmatprep.mubr.f32.mxu0 0.0
        %5189 = vmatmul.mubr.f32.gmra.mrb[0].mxu0 %v4969
        %v5190 = vpop.f32.mrb[0].mxu0
        %v5191 = vadd.f32 0.0, %v5190
        %v5192 = vpop.f32.mrb[0].mxu0
        %5193 = vmatprep.mubr.f32.mxu0 0.0
        %5194 = vmatmul.mubr.f32.gmra.mrb[0].mxu0 %v4972
        %v5195 = vpop.f32.mrb[0].mxu0
        %v5196 = vadd.f32 0.0, %v5195
        %v5197 = vpop.f32.mrb[0].mxu0
        %5198 = vdwg.mxu0
        %v5199 = vmul.f32 %v5191, %v421
        %v5200 = vmul.f32 %v5196, %v422
        %v5201 = vmul.f32 %v5041, %v423
        %v5202 = vmul.f32 %v5046, %v424
        %v5203 = vmul.f32 %v5051, %v425
        %v5204 = vmul.f32 %v5056, %v426
        %v5205 = vmul.f32 %v5061, %v427
        %v5206 = vmul.f32 %v5066, %v428
        %v5207 = vmul.f32 %v5071, %v429
        %v5208 = vmul.f32 %v5076, %v430
        %v5209 = vmul.f32 %v5081, %v431
        %v5210 = vmul.f32 %v5086, %v432
        %v5211 = vmul.f32 %v5091, %v433
        %v5212 = vmul.f32 %v5096, %v434
        %v5213 = vmul.f32 %v5101, %v435
        %v5214 = vmul.f32 %v5106, %v436
        %v5215 = vmul.f32 %v5111, %v437
        %v5216 = vmul.f32 %v5116, %v438
        %v5217 = vmul.f32 %v5121, %v439
        %v5218 = vmul.f32 %v5126, %v440
        %v5219 = vmul.f32 %v5131, %v441
        %v5220 = vmul.f32 %v5136, %v442
        %v5221 = vmul.f32 %v5141, %v443
        %v5222 = vmul.f32 %v5146, %v444
        %v5223 = vmul.f32 %v5151, %v445
        %v5224 = vmul.f32 %v5156, %v446
        %v5225 = vmul.f32 %v5161, %v447
        %v5226 = vmul.f32 %v5166, %v448
        %v5227 = vmul.f32 %v5171, %v449
        %v5228 = vmul.f32 %v5176, %v450
        %v5229 = vmul.f32 %v5181, %v451
        %v5230 = vmul.f32 %v5186, %v452
        %5263 = vrot.lane.b32.xlu0 %v5041, 96
        %v5264 = vpop.permute.xlu0 %5263
        %5265 = vrot.lane.b32.xlu0 %v5046, 96
        %v5266 = vpop.permute.xlu0 %5265
        %5267 = vrot.lane.b32.xlu0 %v5051, 96
        %v5268 = vpop.permute.xlu0 %5267
        %5269 = vrot.lane.b32.xlu0 %v5056, 96
        %v5270 = vpop.permute.xlu0 %5269
        %5271 = vrot.lane.b32.xlu0 %v5061, 96
        %v5272 = vpop.permute.xlu0 %5271
        %5273 = vrot.lane.b32.xlu0 %v5066, 96
        %v5274 = vpop.permute.xlu0 %5273
        %5275 = vrot.lane.b32.xlu0 %v5071, 96
        %v5276 = vpop.permute.xlu0 %5275
        %5277 = vrot.lane.b32.xlu0 %v5076, 96
        %v5278 = vpop.permute.xlu0 %5277
        %5279 = vrot.lane.b32.xlu0 %v5081, 96
        %v5280 = vpop.permute.xlu0 %5279
        %5281 = vrot.lane.b32.xlu0 %v5086, 96
        %v5282 = vpop.permute.xlu0 %5281
        %5283 = vrot.lane.b32.xlu0 %v5091, 96
        %v5284 = vpop.permute.xlu0 %5283
        %5285 = vrot.lane.b32.xlu0 %v5096, 96
        %v5286 = vpop.permute.xlu0 %5285
        %5287 = vrot.lane.b32.xlu0 %v5101, 96
        %v5288 = vpop.permute.xlu0 %5287
        %5289 = vrot.lane.b32.xlu0 %v5106, 96
        %v5290 = vpop.permute.xlu0 %5289
        %5291 = vrot.lane.b32.xlu0 %v5111, 96
        %v5292 = vpop.permute.xlu0 %5291
        %5293 = vrot.lane.b32.xlu0 %v5116, 96
        %v5294 = vpop.permute.xlu0 %5293
        %5295 = vrot.lane.b32.xlu0 %v5121, 96
        %v5296 = vpop.permute.xlu0 %5295
        %5297 = vrot.lane.b32.xlu0 %v5126, 96
        %v5298 = vpop.permute.xlu0 %5297
        %5299 = vrot.lane.b32.xlu0 %v5131, 96
        %v5300 = vpop.permute.xlu0 %5299
        %5301 = vrot.lane.b32.xlu0 %v5136, 96
        %v5302 = vpop.permute.xlu0 %5301
        %5303 = vrot.lane.b32.xlu0 %v5141, 96
        %v5304 = vpop.permute.xlu0 %5303
        %5305 = vrot.lane.b32.xlu0 %v5146, 96
        %v5306 = vpop.permute.xlu0 %5305
        %5307 = vrot.lane.b32.xlu0 %v5151, 96
        %v5308 = vpop.permute.xlu0 %5307
        %5309 = vrot.lane.b32.xlu0 %v5156, 96
        %v5310 = vpop.permute.xlu0 %5309
        %5311 = vrot.lane.b32.xlu0 %v5161, 96
        %v5312 = vpop.permute.xlu0 %5311
        %5313 = vrot.lane.b32.xlu0 %v5166, 96
        %v5314 = vpop.permute.xlu0 %5313
        %5315 = vrot.lane.b32.xlu0 %v5171, 96
        %v5316 = vpop.permute.xlu0 %5315
        %5317 = vrot.lane.b32.xlu0 %v5176, 96
        %v5318 = vpop.permute.xlu0 %5317
        %5319 = vrot.lane.b32.xlu0 %v5181, 96
        %v5320 = vpop.permute.xlu0 %5319
        %5321 = vrot.lane.b32.xlu0 %v5186, 96
        %v5322 = vpop.permute.xlu0 %5321
        %5323 = vrot.lane.b32.xlu0 %v5191, 96
        %v5324 = vpop.permute.xlu0 %5323
        %5325 = vrot.lane.b32.xlu0 %v5196, 96
        %v5326 = vpop.permute.xlu0 %5325
        %v5359 = vadd.f32 %v5199, %v5264
        %v5360 = vadd.f32 %v5200, %v5266
        %v5361 = vadd.f32 %v5201, %v5268
        %v5362 = vadd.f32 %v5202, %v5270
        %v5363 = vadd.f32 %v5203, %v5272
        %v5364 = vadd.f32 %v5204, %v5274
        %v5365 = vadd.f32 %v5205, %v5276
        %v5366 = vadd.f32 %v5206, %v5278
        %v5367 = vadd.f32 %v5207, %v5280
        %v5368 = vadd.f32 %v5208, %v5282
        %v5369 = vadd.f32 %v5209, %v5284
        %v5370 = vadd.f32 %v5210, %v5286
        %v5371 = vadd.f32 %v5211, %v5288
        %v5372 = vadd.f32 %v5212, %v5290
        %v5373 = vadd.f32 %v5213, %v5292
        %v5374 = vadd.f32 %v5214, %v5294
        %v5375 = vadd.f32 %v5215, %v5296
        %v5376 = vadd.f32 %v5216, %v5298
        %v5377 = vadd.f32 %v5217, %v5300
        %v5378 = vadd.f32 %v5218, %v5302
        %v5379 = vadd.f32 %v5219, %v5304
        %v5380 = vadd.f32 %v5220, %v5306
        %v5381 = vadd.f32 %v5221, %v5308
        %v5382 = vadd.f32 %v5222, %v5310
        %v5383 = vadd.f32 %v5223, %v5312
        %v5384 = vadd.f32 %v5224, %v5314
        %v5385 = vadd.f32 %v5225, %v5316
        %v5386 = vadd.f32 %v5226, %v5318
        %v5387 = vadd.f32 %v5227, %v5320
        %v5388 = vadd.f32 %v5228, %v5322
        %v5389 = vadd.f32 %v5229, %v5324
        %v5390 = vadd.f32 %v5230, %v5326
        %5391 = vrot.lane.b32.xlu0 %v5041, 64
        %v5392 = vpop.permute.xlu0 %5391
        %5393 = vrot.lane.b32.xlu0 %v5046, 64
        %v5394 = vpop.permute.xlu0 %5393
        %5395 = vrot.lane.b32.xlu0 %v5051, 64
        %v5396 = vpop.permute.xlu0 %5395
        %5397 = vrot.lane.b32.xlu0 %v5056, 64
        %v5398 = vpop.permute.xlu0 %5397
        %5399 = vrot.lane.b32.xlu0 %v5061, 64
        %v5400 = vpop.permute.xlu0 %5399
        %5401 = vrot.lane.b32.xlu0 %v5066, 64
        %v5402 = vpop.permute.xlu0 %5401
        %5403 = vrot.lane.b32.xlu0 %v5071, 64
        %v5404 = vpop.permute.xlu0 %5403
        %5405 = vrot.lane.b32.xlu0 %v5076, 64
        %v5406 = vpop.permute.xlu0 %5405
        %5407 = vrot.lane.b32.xlu0 %v5081, 64
        %v5408 = vpop.permute.xlu0 %5407
        %5409 = vrot.lane.b32.xlu0 %v5086, 64
        %v5410 = vpop.permute.xlu0 %5409
        %5411 = vrot.lane.b32.xlu0 %v5091, 64
        %v5412 = vpop.permute.xlu0 %5411
        %5413 = vrot.lane.b32.xlu0 %v5096, 64
        %v5414 = vpop.permute.xlu0 %5413
        %5415 = vrot.lane.b32.xlu0 %v5101, 64
        %v5416 = vpop.permute.xlu0 %5415
        %5417 = vrot.lane.b32.xlu0 %v5106, 64
        %v5418 = vpop.permute.xlu0 %5417
        %5419 = vrot.lane.b32.xlu0 %v5111, 64
        %v5420 = vpop.permute.xlu0 %5419
        %5421 = vrot.lane.b32.xlu0 %v5116, 64
        %v5422 = vpop.permute.xlu0 %5421
        %5423 = vrot.lane.b32.xlu0 %v5121, 64
        %v5424 = vpop.permute.xlu0 %5423
        %5425 = vrot.lane.b32.xlu0 %v5126, 64
        %v5426 = vpop.permute.xlu0 %5425
        %5427 = vrot.lane.b32.xlu0 %v5131, 64
        %v5428 = vpop.permute.xlu0 %5427
        %5429 = vrot.lane.b32.xlu0 %v5136, 64
        %v5430 = vpop.permute.xlu0 %5429
        %5431 = vrot.lane.b32.xlu0 %v5141, 64
        %v5432 = vpop.permute.xlu0 %5431
        %5433 = vrot.lane.b32.xlu0 %v5146, 64
        %v5434 = vpop.permute.xlu0 %5433
        %5435 = vrot.lane.b32.xlu0 %v5151, 64
        %v5436 = vpop.permute.xlu0 %5435
        %5437 = vrot.lane.b32.xlu0 %v5156, 64
        %v5438 = vpop.permute.xlu0 %5437
        %5439 = vrot.lane.b32.xlu0 %v5161, 64
        %v5440 = vpop.permute.xlu0 %5439
        %5441 = vrot.lane.b32.xlu0 %v5166, 64
        %v5442 = vpop.permute.xlu0 %5441
        %5443 = vrot.lane.b32.xlu0 %v5171, 64
        %v5444 = vpop.permute.xlu0 %5443
        %5445 = vrot.lane.b32.xlu0 %v5176, 64
        %v5446 = vpop.permute.xlu0 %5445
        %5447 = vrot.lane.b32.xlu0 %v5181, 64
        %v5448 = vpop.permute.xlu0 %5447
        %5449 = vrot.lane.b32.xlu0 %v5186, 64
        %v5450 = vpop.permute.xlu0 %5449
        %5451 = vrot.lane.b32.xlu0 %v5191, 64
        %v5452 = vpop.permute.xlu0 %5451
        %5453 = vrot.lane.b32.xlu0 %v5196, 64
        %v5454 = vpop.permute.xlu0 %5453
        %v5487 = vmul.f32 %v5396, %v485
        %v5488 = vmul.f32 %v5398, %v486
        %v5489 = vmul.f32 %v5400, %v487
        %v5490 = vmul.f32 %v5402, %v488
        %v5491 = vmul.f32 %v5404, %v489
        %v5492 = vmul.f32 %v5406, %v490
        %v5493 = vmul.f32 %v5408, %v491
        %v5494 = vmul.f32 %v5410, %v492
        %v5495 = vmul.f32 %v5412, %v493
        %v5496 = vmul.f32 %v5414, %v494
        %v5497 = vmul.f32 %v5416, %v495
        %v5498 = vmul.f32 %v5418, %v496
        %v5499 = vmul.f32 %v5420, %v497
        %v5500 = vmul.f32 %v5422, %v498
        %v5501 = vmul.f32 %v5424, %v499
        %v5502 = vmul.f32 %v5426, %v500
        %v5503 = vmul.f32 %v5428, %v501
        %v5504 = vmul.f32 %v5430, %v502
        %v5505 = vmul.f32 %v5432, %v503
        %v5506 = vmul.f32 %v5434, %v504
        %v5507 = vmul.f32 %v5436, %v505
        %v5508 = vmul.f32 %v5438, %v506
        %v5509 = vmul.f32 %v5440, %v507
        %v5510 = vmul.f32 %v5442, %v508
        %v5511 = vmul.f32 %v5444, %v509
        %v5512 = vmul.f32 %v5446, %v510
        %v5513 = vmul.f32 %v5448, %v511
        %v5514 = vmul.f32 %v5450, %v512
        %v5515 = vmul.f32 %v5452, %v513
        %v5516 = vmul.f32 %v5454, %v514
        %v5517 = vmul.f32 %v5392, %v515
        %v5518 = vmul.f32 %v5394, %v516
        %v5519 = vadd.f32 %v5359, %v5487
        %v5520 = vadd.f32 %v5360, %v5488
        %v5521 = vadd.f32 %v5361, %v5489
        %v5522 = vadd.f32 %v5362, %v5490
        %v5523 = vadd.f32 %v5363, %v5491
        %v5524 = vadd.f32 %v5364, %v5492
        %v5525 = vadd.f32 %v5365, %v5493
        %v5526 = vadd.f32 %v5366, %v5494
        %v5527 = vadd.f32 %v5367, %v5495
        %v5528 = vadd.f32 %v5368, %v5496
        %v5529 = vadd.f32 %v5369, %v5497
        %v5530 = vadd.f32 %v5370, %v5498
        %v5531 = vadd.f32 %v5371, %v5499
        %v5532 = vadd.f32 %v5372, %v5500
        %v5533 = vadd.f32 %v5373, %v5501
        %v5534 = vadd.f32 %v5374, %v5502
        %v5535 = vadd.f32 %v5375, %v5503
        %v5536 = vadd.f32 %v5376, %v5504
        %v5537 = vadd.f32 %v5377, %v5505
        %v5538 = vadd.f32 %v5378, %v5506
        %v5539 = vadd.f32 %v5379, %v5507
        %v5540 = vadd.f32 %v5380, %v5508
        %v5541 = vadd.f32 %v5381, %v5509
        %v5542 = vadd.f32 %v5382, %v5510
        %v5543 = vadd.f32 %v5383, %v5511
        %v5544 = vadd.f32 %v5384, %v5512
        %v5545 = vadd.f32 %v5385, %v5513
        %v5546 = vadd.f32 %v5386, %v5514
        %v5547 = vadd.f32 %v5387, %v5515
        %v5548 = vadd.f32 %v5388, %v5516
        %v5549 = vadd.f32 %v5389, %v5517
        %v5550 = vadd.f32 %v5390, %v5518
        %v5551 = vadd.f32 %v4745, %v5519
        %v5552 = vadd.f32 %v4746, %v5520
        %v5553 = vadd.f32 %v4747, %v5521
        %v5554 = vadd.f32 %v4748, %v5522
        %v5555 = vadd.f32 %v4749, %v5523
        %v5556 = vadd.f32 %v4750, %v5524
        %v5557 = vadd.f32 %v4751, %v5525
        %v5558 = vadd.f32 %v4752, %v5526
        %v5559 = vadd.f32 %v4753, %v5527
        %v5560 = vadd.f32 %v4754, %v5528
        %v5561 = vadd.f32 %v4755, %v5529
        %v5562 = vadd.f32 %v4756, %v5530
        %v5563 = vadd.f32 %v4757, %v5531
        %v5564 = vadd.f32 %v4758, %v5532
        %v5565 = vadd.f32 %v4759, %v5533
        %v5566 = vadd.f32 %v4760, %v5534
        %v5567 = vadd.f32 %v4761, %v5535
        %v5568 = vadd.f32 %v4762, %v5536
        %v5569 = vadd.f32 %v4763, %v5537
        %v5570 = vadd.f32 %v4764, %v5538
        %v5571 = vadd.f32 %v4765, %v5539
        %v5572 = vadd.f32 %v4766, %v5540
        %v5573 = vadd.f32 %v4767, %v5541
        %v5574 = vadd.f32 %v4768, %v5542
        %v5575 = vadd.f32 %v4769, %v5543
        %v5576 = vadd.f32 %v4770, %v5544
        %v5577 = vadd.f32 %v4771, %v5545
        %v5578 = vadd.f32 %v4772, %v5546
        %v5579 = vadd.f32 %v4773, %v5547
        %v5580 = vadd.f32 %v4774, %v5548
        %v5581 = vadd.f32 %v4775, %v5549
        %v5582 = vadd.f32 %v4776, %v5550
        %v5583 = vmax.f32 %v5551, 0.0
        %v5584 = vmax.f32 %v5552, 0.0
        %v5585 = vmax.f32 %v5553, 0.0
        %v5586 = vmax.f32 %v5554, 0.0
        %v5587 = vmax.f32 %v5555, 0.0
        %v5588 = vmax.f32 %v5556, 0.0
        %v5589 = vmax.f32 %v5557, 0.0
        %v5590 = vmax.f32 %v5558, 0.0
        %v5591 = vmax.f32 %v5559, 0.0
        %v5592 = vmax.f32 %v5560, 0.0
        %v5593 = vmax.f32 %v5561, 0.0
        %v5594 = vmax.f32 %v5562, 0.0
        %v5595 = vmax.f32 %v5563, 0.0
        %v5596 = vmax.f32 %v5564, 0.0
        %v5597 = vmax.f32 %v5565, 0.0
        %v5598 = vmax.f32 %v5566, 0.0
        %v5599 = vmax.f32 %v5567, 0.0
        %v5600 = vmax.f32 %v5568, 0.0
        %v5601 = vmax.f32 %v5569, 0.0
        %v5602 = vmax.f32 %v5570, 0.0
        %v5603 = vmax.f32 %v5571, 0.0
        %v5604 = vmax.f32 %v5572, 0.0
        %v5605 = vmax.f32 %v5573, 0.0
        %v5606 = vmax.f32 %v5574, 0.0
        %v5607 = vmax.f32 %v5575, 0.0
        %v5608 = vmax.f32 %v5576, 0.0
        %v5609 = vmax.f32 %v5577, 0.0
        %v5610 = vmax.f32 %v5578, 0.0
        %v5611 = vmax.f32 %v5579, 0.0
        %v5612 = vmax.f32 %v5580, 0.0
        %v5613 = vmax.f32 %v5581, 0.0
        %v5614 = vmax.f32 %v5582, 0.0
        %v5615 = vlaneseq
        %v5616 = vshrl.u32 %v5615, 7
        %v5617 = vsub.s32 0, %v5616
        %v5618 = vrot.slane %v3292, %v5617
        %v5619 = vmul.f32 %v5583, %v5618
        %v5620 = vmul.f32 %v5584, %v5618
        %v5621 = vmul.f32 %v5585, %v5618
        %v5622 = vmul.f32 %v5586, %v5618
        %v5623 = vmul.f32 %v5587, %v5618
        %v5624 = vmul.f32 %v5588, %v5618
        %v5625 = vmul.f32 %v5589, %v5618
        %v5626 = vmul.f32 %v5590, %v5618
        %v5627 = vmul.f32 %v5591, %v5618
        %v5628 = vmul.f32 %v5592, %v5618
        %v5629 = vmul.f32 %v5593, %v5618
        %v5630 = vmul.f32 %v5594, %v5618
        %v5631 = vmul.f32 %v5595, %v5618
        %v5632 = vmul.f32 %v5596, %v5618
        %v5633 = vmul.f32 %v5597, %v5618
        %v5634 = vmul.f32 %v5598, %v5618
        %v5635 = vmul.f32 %v5599, %v5618
        %v5636 = vmul.f32 %v5600, %v5618
        %v5637 = vmul.f32 %v5601, %v5618
        %v5638 = vmul.f32 %v5602, %v5618
        %v5639 = vmul.f32 %v5603, %v5618
        %v5640 = vmul.f32 %v5604, %v5618
        %v5641 = vmul.f32 %v5605, %v5618
        %v5642 = vmul.f32 %v5606, %v5618
        %v5643 = vmul.f32 %v5607, %v5618
        %v5644 = vmul.f32 %v5608, %v5618
        %v5645 = vmul.f32 %v5609, %v5618
        %v5646 = vmul.f32 %v5610, %v5618
        %v5647 = vmul.f32 %v5611, %v5618
        %v5648 = vmul.f32 %v5612, %v5618
        %v5649 = vmul.f32 %v5613, %v5618
        %v5650 = vmul.f32 %v5614, %v5618
        %v5651 = vlaneseq
        %v5652 = vshrl.u32 %v5651, 7
        %v5653 = vsub.s32 1, %v5652
        %v5654 = vrot.slane %v3292, %v5653
        %v5655 = vadd.f32 %v5619, %v5654
        %v5656 = vadd.f32 %v5620, %v5654
        %v5657 = vadd.f32 %v5621, %v5654
        %v5658 = vadd.f32 %v5622, %v5654
        %v5659 = vadd.f32 %v5623, %v5654
        %v5660 = vadd.f32 %v5624, %v5654
        %v5661 = vadd.f32 %v5625, %v5654
        %v5662 = vadd.f32 %v5626, %v5654
        %v5663 = vadd.f32 %v5627, %v5654
        %v5664 = vadd.f32 %v5628, %v5654
        %v5665 = vadd.f32 %v5629, %v5654
        %v5666 = vadd.f32 %v5630, %v5654
        %v5667 = vadd.f32 %v5631, %v5654
        %v5668 = vadd.f32 %v5632, %v5654
        %v5669 = vadd.f32 %v5633, %v5654
        %v5670 = vadd.f32 %v5634, %v5654
        %v5671 = vadd.f32 %v5635, %v5654
        %v5672 = vadd.f32 %v5636, %v5654
        %v5673 = vadd.f32 %v5637, %v5654
        %v5674 = vadd.f32 %v5638, %v5654
        %v5675 = vadd.f32 %v5639, %v5654
        %v5676 = vadd.f32 %v5640, %v5654
        %v5677 = vadd.f32 %v5641, %v5654
        %v5678 = vadd.f32 %v5642, %v5654
        %v5679 = vadd.f32 %v5643, %v5654
        %v5680 = vadd.f32 %v5644, %v5654
        %v5681 = vadd.f32 %v5645, %v5654
        %v5682 = vadd.f32 %v5646, %v5654
        %v5683 = vadd.f32 %v5647, %v5654
        %v5684 = vadd.f32 %v5648, %v5654
        %v5685 = vadd.f32 %v5649, %v5654
        %v5686 = vadd.f32 %v5650, %v5654
        %v5687 = vlaneseq
        %v5688 = vshrl.u32 %v5687, 7
        %v5689 = vsub.s32 2, %v5688
        %v5690 = vrot.slane %v3292, %v5689
        %5692 = vrot.lane.b32.xlu0 %v5690, 96
        %v5693 = vpop.permute.xlu0 %5692
        %v5695 = vmul.f32 %v4235, %v5693
        %v5696 = vmul.f32 %v4240, %v5693
        %v5697 = vmul.f32 %v4245, %v5693
        %v5698 = vmul.f32 %v4250, %v5693
        %v5699 = vmul.f32 %v4255, %v5693
        %v5700 = vmul.f32 %v4260, %v5693
        %v5701 = vmul.f32 %v4265, %v5693
        %v5702 = vmul.f32 %v4270, %v5693
        %v5703 = vmul.f32 %v4275, %v5693
        %v5704 = vmul.f32 %v4280, %v5693
        %v5705 = vmul.f32 %v4285, %v5693
        %v5706 = vmul.f32 %v4290, %v5693
        %v5707 = vmul.f32 %v4295, %v5693
        %v5708 = vmul.f32 %v4300, %v5693
        %v5709 = vmul.f32 %v4305, %v5693
        %v5710 = vmul.f32 %v4310, %v5693
        %v5711 = vmul.f32 %v4315, %v5693
        %v5712 = vmul.f32 %v4320, %v5693
        %v5713 = vmul.f32 %v4325, %v5693
        %v5714 = vmul.f32 %v4330, %v5693
        %v5715 = vmul.f32 %v4335, %v5693
        %v5716 = vmul.f32 %v4340, %v5693
        %v5717 = vmul.f32 %v4345, %v5693
        %v5718 = vmul.f32 %v4350, %v5693
        %v5719 = vmul.f32 %v4355, %v5693
        %v5720 = vmul.f32 %v4360, %v5693
        %v5721 = vmul.f32 %v4365, %v5693
        %v5722 = vmul.f32 %v4370, %v5693
        %v5723 = vmul.f32 %v4375, %v5693
        %v5724 = vmul.f32 %v4380, %v5693
        %v5725 = vmul.f32 %v4385, %v5693
        %v5726 = vmul.f32 %v4390, %v5693
        %v5727 = vlaneseq
        %v5728 = vshrl.u32 %v5727, 7
        %v5729 = vsub.s32 3, %v5728
        %v5730 = vrot.slane %v3292, %v5729
        %5732 = vrot.lane.b32.xlu0 %v5730, 96
        %v5733 = vpop.permute.xlu0 %5732
        %v5735 = vadd.f32 %v5695, %v5733
        %v5736 = vadd.f32 %v5696, %v5733
        %v5737 = vadd.f32 %v5697, %v5733
        %v5738 = vadd.f32 %v5698, %v5733
        %v5739 = vadd.f32 %v5699, %v5733
        %v5740 = vadd.f32 %v5700, %v5733
        %v5741 = vadd.f32 %v5701, %v5733
        %v5742 = vadd.f32 %v5702, %v5733
        %v5743 = vadd.f32 %v5703, %v5733
        %v5744 = vadd.f32 %v5704, %v5733
        %v5745 = vadd.f32 %v5705, %v5733
        %v5746 = vadd.f32 %v5706, %v5733
        %v5747 = vadd.f32 %v5707, %v5733
        %v5748 = vadd.f32 %v5708, %v5733
        %v5749 = vadd.f32 %v5709, %v5733
        %v5750 = vadd.f32 %v5710, %v5733
        %v5751 = vadd.f32 %v5711, %v5733
        %v5752 = vadd.f32 %v5712, %v5733
        %v5753 = vadd.f32 %v5713, %v5733
        %v5754 = vadd.f32 %v5714, %v5733
        %v5755 = vadd.f32 %v5715, %v5733
        %v5756 = vadd.f32 %v5716, %v5733
        %v5757 = vadd.f32 %v5717, %v5733
        %v5758 = vadd.f32 %v5718, %v5733
        %v5759 = vadd.f32 %v5719, %v5733
        %v5760 = vadd.f32 %v5720, %v5733
        %v5761 = vadd.f32 %v5721, %v5733
        %v5762 = vadd.f32 %v5722, %v5733
        %v5763 = vadd.f32 %v5723, %v5733
        %v5764 = vadd.f32 %v5724, %v5733
        %v5765 = vadd.f32 %v5725, %v5733
        %v5766 = vadd.f32 %v5726, %v5733
        %5799 = vrot.lane.b32.xlu0 %v5735, 32
        %v5800 = vpop.permute.xlu0 %5799
        %5801 = vrot.lane.b32.xlu0 %v5736, 32
        %v5802 = vpop.permute.xlu0 %5801
        %5803 = vrot.lane.b32.xlu0 %v5737, 32
        %v5804 = vpop.permute.xlu0 %5803
        %5805 = vrot.lane.b32.xlu0 %v5738, 32
        %v5806 = vpop.permute.xlu0 %5805
        %5807 = vrot.lane.b32.xlu0 %v5739, 32
        %v5808 = vpop.permute.xlu0 %5807
        %5809 = vrot.lane.b32.xlu0 %v5740, 32
        %v5810 = vpop.permute.xlu0 %5809
        %5811 = vrot.lane.b32.xlu0 %v5741, 32
        %v5812 = vpop.permute.xlu0 %5811
        %5813 = vrot.lane.b32.xlu0 %v5742, 32
        %v5814 = vpop.permute.xlu0 %5813
        %5815 = vrot.lane.b32.xlu0 %v5743, 32
        %v5816 = vpop.permute.xlu0 %5815
        %5817 = vrot.lane.b32.xlu0 %v5744, 32
        %v5818 = vpop.permute.xlu0 %5817
        %5819 = vrot.lane.b32.xlu0 %v5745, 32
        %v5820 = vpop.permute.xlu0 %5819
        %5821 = vrot.lane.b32.xlu0 %v5746, 32
        %v5822 = vpop.permute.xlu0 %5821
        %5823 = vrot.lane.b32.xlu0 %v5747, 32
        %v5824 = vpop.permute.xlu0 %5823
        %5825 = vrot.lane.b32.xlu0 %v5748, 32
        %v5826 = vpop.permute.xlu0 %5825
        %5827 = vrot.lane.b32.xlu0 %v5749, 32
        %v5828 = vpop.permute.xlu0 %5827
        %5829 = vrot.lane.b32.xlu0 %v5750, 32
        %v5830 = vpop.permute.xlu0 %5829
        %5831 = vrot.lane.b32.xlu0 %v5751, 32
        %v5832 = vpop.permute.xlu0 %5831
        %5833 = vrot.lane.b32.xlu0 %v5752, 32
        %v5834 = vpop.permute.xlu0 %5833
        %5835 = vrot.lane.b32.xlu0 %v5753, 32
        %v5836 = vpop.permute.xlu0 %5835
        %5837 = vrot.lane.b32.xlu0 %v5754, 32
        %v5838 = vpop.permute.xlu0 %5837
        %5839 = vrot.lane.b32.xlu0 %v5755, 32
        %v5840 = vpop.permute.xlu0 %5839
        %5841 = vrot.lane.b32.xlu0 %v5756, 32
        %v5842 = vpop.permute.xlu0 %5841
        %5843 = vrot.lane.b32.xlu0 %v5757, 32
        %v5844 = vpop.permute.xlu0 %5843
        %5845 = vrot.lane.b32.xlu0 %v5758, 32
        %v5846 = vpop.permute.xlu0 %5845
        %5847 = vrot.lane.b32.xlu0 %v5759, 32
        %v5848 = vpop.permute.xlu0 %5847
        %5849 = vrot.lane.b32.xlu0 %v5760, 32
        %v5850 = vpop.permute.xlu0 %5849
        %5851 = vrot.lane.b32.xlu0 %v5761, 32
        %v5852 = vpop.permute.xlu0 %5851
        %5853 = vrot.lane.b32.xlu0 %v5762, 32
        %v5854 = vpop.permute.xlu0 %5853
        %5855 = vrot.lane.b32.xlu0 %v5763, 32
        %v5856 = vpop.permute.xlu0 %5855
        %5857 = vrot.lane.b32.xlu0 %v5764, 32
        %v5858 = vpop.permute.xlu0 %5857
        %5859 = vrot.lane.b32.xlu0 %v5765, 32
        %v5860 = vpop.permute.xlu0 %5859
        %5861 = vrot.lane.b32.xlu0 %v5766, 32
        %v5862 = vpop.permute.xlu0 %5861
        %v5895 = vadd.f32 %v5655, %v5800
        %v5896 = vadd.f32 %v5656, %v5802
        %v5897 = vadd.f32 %v5657, %v5804
        %v5898 = vadd.f32 %v5658, %v5806
        %v5899 = vadd.f32 %v5659, %v5808
        %v5900 = vadd.f32 %v5660, %v5810
        %v5901 = vadd.f32 %v5661, %v5812
        %v5902 = vadd.f32 %v5662, %v5814
        %v5903 = vadd.f32 %v5663, %v5816
        %v5904 = vadd.f32 %v5664, %v5818
        %v5905 = vadd.f32 %v5665, %v5820
        %v5906 = vadd.f32 %v5666, %v5822
        %v5907 = vadd.f32 %v5667, %v5824
        %v5908 = vadd.f32 %v5668, %v5826
        %v5909 = vadd.f32 %v5669, %v5828
        %v5910 = vadd.f32 %v5670, %v5830
        %v5911 = vadd.f32 %v5671, %v5832
        %v5912 = vadd.f32 %v5672, %v5834
        %v5913 = vadd.f32 %v5673, %v5836
        %v5914 = vadd.f32 %v5674, %v5838
        %v5915 = vadd.f32 %v5675, %v5840
        %v5916 = vadd.f32 %v5676, %v5842
        %v5917 = vadd.f32 %v5677, %v5844
        %v5918 = vadd.f32 %v5678, %v5846
        %v5919 = vadd.f32 %v5679, %v5848
        %v5920 = vadd.f32 %v5680, %v5850
        %v5921 = vadd.f32 %v5681, %v5852
        %v5922 = vadd.f32 %v5682, %v5854
        %v5923 = vadd.f32 %v5683, %v5856
        %v5924 = vadd.f32 %v5684, %v5858
        %v5925 = vadd.f32 %v5685, %v5860
        %v5926 = vadd.f32 %v5686, %v5862
        %v5927 = vmax.f32 %v5895, 0.0
        %v5928 = vmax.f32 %v5896, 0.0
        %v5929 = vmax.f32 %v5897, 0.0
        %v5930 = vmax.f32 %v5898, 0.0
        %v5931 = vmax.f32 %v5899, 0.0
        %v5932 = vmax.f32 %v5900, 0.0
        %v5933 = vmax.f32 %v5901, 0.0
        %v5934 = vmax.f32 %v5902, 0.0
        %v5935 = vmax.f32 %v5903, 0.0
        %v5936 = vmax.f32 %v5904, 0.0
        %v5937 = vmax.f32 %v5905, 0.0
        %v5938 = vmax.f32 %v5906, 0.0
        %v5939 = vmax.f32 %v5907, 0.0
        %v5940 = vmax.f32 %v5908, 0.0
        %v5941 = vmax.f32 %v5909, 0.0
        %v5942 = vmax.f32 %v5910, 0.0
        %v5943 = vmax.f32 %v5911, 0.0
        %v5944 = vmax.f32 %v5912, 0.0
        %v5945 = vmax.f32 %v5913, 0.0
        %v5946 = vmax.f32 %v5914, 0.0
        %v5947 = vmax.f32 %v5915, 0.0
        %v5948 = vmax.f32 %v5916, 0.0
        %v5949 = vmax.f32 %v5917, 0.0
        %v5950 = vmax.f32 %v5918, 0.0
        %v5951 = vmax.f32 %v5919, 0.0
        %v5952 = vmax.f32 %v5920, 0.0
        %v5953 = vmax.f32 %v5921, 0.0
        %v5954 = vmax.f32 %v5922, 0.0
        %v5955 = vmax.f32 %v5923, 0.0
        %v5956 = vmax.f32 %v5924, 0.0
        %v5957 = vmax.f32 %v5925, 0.0
        %v5958 = vmax.f32 %v5926, 0.0
        %v5959 = vlaneseq
        %v5960 = vshrl.u32 %v5959, 7
        %v5961 = vsub.s32 4, %v5960
        %v5962 = vrot.slane %v3292, %v5961
        %v5963 = vmul.f32 %v5927, %v5962
        %v5964 = vmul.f32 %v5928, %v5962
        %v5965 = vmul.f32 %v5929, %v5962
        %v5966 = vmul.f32 %v5930, %v5962
        %v5967 = vmul.f32 %v5931, %v5962
        %v5968 = vmul.f32 %v5932, %v5962
        %v5969 = vmul.f32 %v5933, %v5962
        %v5970 = vmul.f32 %v5934, %v5962
        %v5971 = vmul.f32 %v5935, %v5962
        %v5972 = vmul.f32 %v5936, %v5962
        %v5973 = vmul.f32 %v5937, %v5962
        %v5974 = vmul.f32 %v5938, %v5962
        %v5975 = vmul.f32 %v5939, %v5962
        %v5976 = vmul.f32 %v5940, %v5962
        %v5977 = vmul.f32 %v5941, %v5962
        %v5978 = vmul.f32 %v5942, %v5962
        %v5979 = vmul.f32 %v5943, %v5962
        %v5980 = vmul.f32 %v5944, %v5962
        %v5981 = vmul.f32 %v5945, %v5962
        %v5982 = vmul.f32 %v5946, %v5962
        %v5983 = vmul.f32 %v5947, %v5962
        %v5984 = vmul.f32 %v5948, %v5962
        %v5985 = vmul.f32 %v5949, %v5962
        %v5986 = vmul.f32 %v5950, %v5962
        %v5987 = vmul.f32 %v5951, %v5962
        %v5988 = vmul.f32 %v5952, %v5962
        %v5989 = vmul.f32 %v5953, %v5962
        %v5990 = vmul.f32 %v5954, %v5962
        %v5991 = vmul.f32 %v5955, %v5962
        %v5992 = vmul.f32 %v5956, %v5962
        %v5993 = vmul.f32 %v5957, %v5962
        %v5994 = vmul.f32 %v5958, %v5962
        %v5995 = vlaneseq
        %v5996 = vshrl.u32 %v5995, 7
        %v5997 = vsub.s32 5, %v5996
        %v5998 = vrot.slane %v3292, %v5997
        %v5999 = vadd.f32 %v5963, %v5998
        %v6000 = vadd.f32 %v5964, %v5998
        %v6001 = vadd.f32 %v5965, %v5998
        %v6002 = vadd.f32 %v5966, %v5998
        %v6003 = vadd.f32 %v5967, %v5998
        %v6004 = vadd.f32 %v5968, %v5998
        %v6005 = vadd.f32 %v5969, %v5998
        %v6006 = vadd.f32 %v5970, %v5998
        %v6007 = vadd.f32 %v5971, %v5998
        %v6008 = vadd.f32 %v5972, %v5998
        %v6009 = vadd.f32 %v5973, %v5998
        %v6010 = vadd.f32 %v5974, %v5998
        %v6011 = vadd.f32 %v5975, %v5998
        %v6012 = vadd.f32 %v5976, %v5998
        %v6013 = vadd.f32 %v5977, %v5998
        %v6014 = vadd.f32 %v5978, %v5998
        %v6015 = vadd.f32 %v5979, %v5998
        %v6016 = vadd.f32 %v5980, %v5998
        %v6017 = vadd.f32 %v5981, %v5998
        %v6018 = vadd.f32 %v5982, %v5998
        %v6019 = vadd.f32 %v5983, %v5998
        %v6020 = vadd.f32 %v5984, %v5998
        %v6021 = vadd.f32 %v5985, %v5998
        %v6022 = vadd.f32 %v5986, %v5998
        %v6023 = vadd.f32 %v5987, %v5998
        %v6024 = vadd.f32 %v5988, %v5998
        %v6025 = vadd.f32 %v5989, %v5998
        %v6026 = vadd.f32 %v5990, %v5998
        %v6027 = vadd.f32 %v5991, %v5998
        %v6028 = vadd.f32 %v5992, %v5998
        %v6029 = vadd.f32 %v5993, %v5998
        %v6030 = vadd.f32 %v5994, %v5998
        %s6031 = scalar_lea.vmem %s3, 16
        %v6032 = vld [vmem:[%s6031] sm:$0x3f]
        %v6033 = vrot.slane %v5999, 7
        %v6034 = vrot.slane %v6000, 7
        %v6035 = vrot.slane %v6001, 7
        %v6036 = vrot.slane %v6002, 7
        %v6037 = vrot.slane %v6003, 7
        %v6038 = vrot.slane %v6004, 7
        %v6039 = vrot.slane %v6005, 7
        %v6040 = vrot.slane %v6006, 7
        %v6041 = vrot.slane %v6007, 7
        %v6042 = vrot.slane %v6008, 7
        %v6043 = vrot.slane %v6009, 7
        %v6044 = vrot.slane %v6010, 7
        %v6045 = vrot.slane %v6011, 7
        %v6046 = vrot.slane %v6012, 7
        %v6047 = vrot.slane %v6013, 7
        %v6048 = vrot.slane %v6014, 7
        %v6049 = vrot.slane %v6015, 7
        %v6050 = vrot.slane %v6016, 7
        %v6051 = vrot.slane %v6017, 7
        %v6052 = vrot.slane %v6018, 7
        %v6053 = vrot.slane %v6019, 7
        %v6054 = vrot.slane %v6020, 7
        %v6055 = vrot.slane %v6021, 7
        %v6056 = vrot.slane %v6022, 7
        %v6057 = vrot.slane %v6023, 7
        %v6058 = vrot.slane %v6024, 7
        %v6059 = vrot.slane %v6025, 7
        %v6060 = vrot.slane %v6026, 7
        %v6061 = vrot.slane %v6027, 7
        %v6062 = vrot.slane %v6028, 7
        %v6063 = vrot.slane %v6029, 7
        %v6064 = vrot.slane %v6030, 7
        %v6065 = vsel %vm582, %v6063, %v6064
        %v6066 = vsel %vm582, %v6062, %v6063
        %v6067 = vsel %vm582, %v6061, %v6062
        %v6068 = vsel %vm582, %v6060, %v6061
        %v6069 = vsel %vm582, %v6059, %v6060
        %v6070 = vsel %vm582, %v6058, %v6059
        %v6071 = vsel %vm582, %v6057, %v6058
        %v6072 = vsel %vm582, %v6056, %v6057
        %v6073 = vsel %vm582, %v6055, %v6056
        %v6074 = vsel %vm582, %v6054, %v6055
        %v6075 = vsel %vm582, %v6053, %v6054
        %v6076 = vsel %vm582, %v6052, %v6053
        %v6077 = vsel %vm582, %v6051, %v6052
        %v6078 = vsel %vm582, %v6050, %v6051
        %v6079 = vsel %vm582, %v6049, %v6050
        %v6080 = vsel %vm582, %v6048, %v6049
        %v6081 = vsel %vm582, %v6047, %v6048
        %v6082 = vsel %vm582, %v6046, %v6047
        %v6083 = vsel %vm582, %v6045, %v6046
        %v6084 = vsel %vm582, %v6044, %v6045
        %v6085 = vsel %vm582, %v6043, %v6044
        %v6086 = vsel %vm582, %v6042, %v6043
        %v6087 = vsel %vm582, %v6041, %v6042
        %v6088 = vsel %vm582, %v6040, %v6041
        %v6089 = vsel %vm582, %v6039, %v6040
        %v6090 = vsel %vm582, %v6038, %v6039
        %v6091 = vsel %vm582, %v6037, %v6038
        %v6092 = vsel %vm582, %v6036, %v6037
        %v6093 = vsel %vm582, %v6035, %v6036
        %v6094 = vsel %vm582, %v6034, %v6035
        %v6095 = vsel %vm582, %v6033, %v6034
        %v6096 = vsel %vm582, %v6064, %v6033
        %v6097 = vmul.f32 %v6096, %v293
        %v6098 = vmul.f32 %v6095, %v294
        %v6099 = vmul.f32 %v6094, %v295
        %v6100 = vmul.f32 %v6093, %v296
        %v6101 = vmul.f32 %v6092, %v297
        %v6102 = vmul.f32 %v6091, %v298
        %v6103 = vmul.f32 %v6090, %v299
        %v6104 = vmul.f32 %v6089, %v300
        %v6105 = vmul.f32 %v6088, %v301
        %v6106 = vmul.f32 %v6087, %v302
        %v6107 = vmul.f32 %v6086, %v303
        %v6108 = vmul.f32 %v6085, %v304
        %v6109 = vmul.f32 %v6084, %v305
        %v6110 = vmul.f32 %v6083, %v306
        %v6111 = vmul.f32 %v6082, %v307
        %v6112 = vmul.f32 %v6081, %v308
        %v6113 = vmul.f32 %v6080, %v309
        %v6114 = vmul.f32 %v6079, %v310
        %v6115 = vmul.f32 %v6078, %v311
        %v6116 = vmul.f32 %v6077, %v312
        %v6117 = vmul.f32 %v6076, %v313
        %v6118 = vmul.f32 %v6075, %v314
        %v6119 = vmul.f32 %v6074, %v315
        %v6120 = vmul.f32 %v6073, %v316
        %v6121 = vmul.f32 %v6072, %v317
        %v6122 = vmul.f32 %v6071, %v318
        %v6123 = vmul.f32 %v6070, %v319
        %v6124 = vmul.f32 %v6069, %v320
        %v6125 = vmul.f32 %v6068, %v321
        %v6126 = vmul.f32 %v6067, %v322
        %v6127 = vmul.f32 %v6066, %v323
        %v6128 = vmul.f32 %v6065, %v324
        %s6129 = scalar_lea.vmem %s2, 96
        %v6130 = vld [vmem:[%s6129] sm:$0xff]
        %v6131 = vld [vmem:[%s6129 + $0x8] sm:$0xff]
        %v6132 = vld [vmem:[%s6129 + $0x10] sm:$0xff]
        %v6133 = vld [vmem:[%s6129 + $0x18] sm:$0xff]
        %v6135 = vsel %vm3393, %v6097, 0
        %v6138 = vsel %vm3393, %v6098, 0
        %v6141 = vsel %vm3393, %v6099, 0
        %v6144 = vsel %vm3393, %v6100, 0
        %v6147 = vsel %vm3393, %v6101, 0
        %v6150 = vsel %vm3393, %v6102, 0
        %v6153 = vsel %vm3393, %v6103, 0
        %v6156 = vsel %vm3393, %v6104, 0
        %v6159 = vsel %vm3393, %v6105, 0
        %v6162 = vsel %vm3393, %v6106, 0
        %v6165 = vsel %vm3393, %v6107, 0
        %v6168 = vsel %vm3393, %v6108, 0
        %v6171 = vsel %vm3393, %v6109, 0
        %v6174 = vsel %vm3393, %v6110, 0
        %v6177 = vsel %vm3393, %v6111, 0
        %v6180 = vsel %vm3393, %v6112, 0
        %v6183 = vsel %vm3393, %v6113, 0
        %v6186 = vsel %vm3393, %v6114, 0
        %v6189 = vsel %vm3393, %v6115, 0
        %v6192 = vsel %vm3393, %v6116, 0
        %v6195 = vsel %vm3393, %v6117, 0
        %v6198 = vsel %vm3393, %v6118, 0
        %v6201 = vsel %vm3393, %v6119, 0
        %v6204 = vsel %vm3393, %v6120, 0
        %v6207 = vsel %vm3393, %v6121, 0
        %v6210 = vsel %vm3393, %v6122, 0
        %v6213 = vsel %vm3393, %v6123, 0
        %v6216 = vsel %vm3393, %v6124, 0
        %v6219 = vsel %vm3393, %v6125, 0
        %v6222 = vsel %vm3393, %v6126, 0
        %v6225 = vsel %vm3393, %v6127, 0
        %v6228 = vsel %vm3393, %v6128, 0
        %6230 = vmatprep.subr.mxu0 0.0
        %6231 = vmatpush1.msra.mxu0 %v6130
        %6232 = vmatprep.subr.mxu0 0.0
        %6233 = vmatpush1.msra.mxu0 %v6131
        %6234 = vmatprep.subr.mxu0 0.0
        %6235 = vmatpush1.msra.mxu0 %v6132
        %6236 = vmatprep.subr.mxu0 0.0
        %6237 = vmatpush1.msra.mxu0 %v6133
        %6238 = vmatprep.subr.mxu0 0.0
        %6239 = vmatpush1.msra.mxu0 0.0
        %6240 = vmatprep.subr.mxu0 0.0
        %6241 = vmatpush1.msra.mxu0 0.0
        %6242 = vmatprep.subr.mxu0 0.0
        %6243 = vmatpush1.msra.mxu0 0.0
        %6244 = vmatprep.subr.mxu0 0.0
        %6245 = vmatpush1.msra.mxu0 0.0
        %6246 = vmatprep.subr.mxu0 0.0
        %6247 = vmatpush1.msra.mxu0 0.0
        %6248 = vmatprep.subr.mxu0 0.0
        %6249 = vmatpush1.msra.mxu0 0.0
        %6250 = vmatprep.subr.mxu0 0.0
        %6251 = vmatpush1.msra.mxu0 0.0
        %6252 = vmatprep.subr.mxu0 0.0
        %6253 = vmatpush1.msra.mxu0 0.0
        %6254 = vmatprep.subr.mxu0 0.0
        %6255 = vmatpush1.msra.mxu0 0.0
        %6256 = vmatprep.subr.mxu0 0.0
        %6257 = vmatpush1.msra.mxu0 0.0
        %6258 = vmatprep.subr.mxu0 0.0
        %6259 = vmatpush1.msra.mxu0 0.0
        %6260 = vmatprep.subr.mxu0 0.0
        %6261 = vmatpush1.msra.mxu0 0.0
        %6262 = vmatprep.subr.mxu0 0.0
        %6263 = vmatpush1.msra.mxu0 0.0
        %6264 = vmatprep.subr.mxu0 0.0
        %6265 = vmatpush1.msra.mxu0 0.0
        %6266 = vmatprep.subr.mxu0 0.0
        %6267 = vmatpush1.msra.mxu0 0.0
        %6268 = vmatprep.subr.mxu0 0.0
        %6269 = vmatpush1.msra.mxu0 0.0
        %6270 = vmatprep.subr.mxu0 0.0
        %6271 = vmatpush1.msra.mxu0 0.0
        %6272 = vmatprep.subr.mxu0 0.0
        %6273 = vmatpush1.msra.mxu0 0.0
        %6274 = vmatprep.subr.mxu0 0.0
        %6275 = vmatpush1.msra.mxu0 0.0
        %6276 = vmatprep.subr.mxu0 0.0
        %6277 = vmatpush1.msra.mxu0 0.0
        %6278 = vmatprep.subr.mxu0 0.0
        %6279 = vmatpush1.msra.mxu0 0.0
        %6280 = vmatprep.subr.mxu0 0.0
        %6281 = vmatpush1.msra.mxu0 0.0
        %6282 = vmatprep.subr.mxu0 0.0
        %6283 = vmatpush1.msra.mxu0 0.0
        %6284 = vmatprep.subr.mxu0 0.0
        %6285 = vmatpush1.msra.mxu0 0.0
        %6286 = vmatprep.subr.mxu0 0.0
        %6287 = vmatpush1.msra.mxu0 0.0
        %6288 = vmatprep.subr.mxu0 0.0
        %6289 = vmatpush1.msra.mxu0 0.0
        %6290 = vmatprep.subr.mxu0 0.0
        %6291 = vmatpush1.msra.mxu0 0.0
        %6292 = vmatprep.subr.mxu0 0.0
        %6293 = vmatpush1.msra.mxu0 0.0
        %6294 = vmatprep.mubr.f32.mxu0 0.0
        %6295 = vmatmul.mubr.f32.gmra.mrb[0].mxu0 %v6135
        %v6296 = vpop.f32.mrb[0].mxu0
        %v6297 = vadd.f32 0.0, %v6296
        %v6298 = vpop.f32.mrb[0].mxu0
        %6299 = vmatprep.mubr.f32.mxu0 0.0
        %6300 = vmatmul.mubr.f32.gmra.mrb[0].mxu0 %v6138
        %v6301 = vpop.f32.mrb[0].mxu0
        %v6302 = vadd.f32 0.0, %v6301
        %v6303 = vpop.f32.mrb[0].mxu0
        %6304 = vmatprep.mubr.f32.mxu0 0.0
        %6305 = vmatmul.mubr.f32.gmra.mrb[0].mxu0 %v6141
        %v6306 = vpop.f32.mrb[0].mxu0
        %v6307 = vadd.f32 0.0, %v6306
        %v6308 = vpop.f32.mrb[0].mxu0
        %6309 = vmatprep.mubr.f32.mxu0 0.0
        %6310 = vmatmul.mubr.f32.gmra.mrb[0].mxu0 %v6144
        %v6311 = vpop.f32.mrb[0].mxu0
        %v6312 = vadd.f32 0.0, %v6311
        %v6313 = vpop.f32.mrb[0].mxu0
        %6314 = vmatprep.mubr.f32.mxu0 0.0
        %6315 = vmatmul.mubr.f32.gmra.mrb[0].mxu0 %v6147
        %v6316 = vpop.f32.mrb[0].mxu0
        %v6317 = vadd.f32 0.0, %v6316
        %v6318 = vpop.f32.mrb[0].mxu0
        %6319 = vmatprep.mubr.f32.mxu0 0.0
        %6320 = vmatmul.mubr.f32.gmra.mrb[0].mxu0 %v6150
        %v6321 = vpop.f32.mrb[0].mxu0
        %v6322 = vadd.f32 0.0, %v6321
        %v6323 = vpop.f32.mrb[0].mxu0
        %6324 = vmatprep.mubr.f32.mxu0 0.0
        %6325 = vmatmul.mubr.f32.gmra.mrb[0].mxu0 %v6153
        %v6326 = vpop.f32.mrb[0].mxu0
        %v6327 = vadd.f32 0.0, %v6326
        %v6328 = vpop.f32.mrb[0].mxu0
        %6329 = vmatprep.mubr.f32.mxu0 0.0
        %6330 = vmatmul.mubr.f32.gmra.mrb[0].mxu0 %v6156
        %v6331 = vpop.f32.mrb[0].mxu0
        %v6332 = vadd.f32 0.0, %v6331
        %v6333 = vpop.f32.mrb[0].mxu0
        %6334 = vmatprep.mubr.f32.mxu0 0.0
        %6335 = vmatmul.mubr.f32.gmra.mrb[0].mxu0 %v6159
        %v6336 = vpop.f32.mrb[0].mxu0
        %v6337 = vadd.f32 0.0, %v6336
        %v6338 = vpop.f32.mrb[0].mxu0
        %6339 = vmatprep.mubr.f32.mxu0 0.0
        %6340 = vmatmul.mubr.f32.gmra.mrb[0].mxu0 %v6162
        %v6341 = vpop.f32.mrb[0].mxu0
        %v6342 = vadd.f32 0.0, %v6341
        %v6343 = vpop.f32.mrb[0].mxu0
        %6344 = vmatprep.mubr.f32.mxu0 0.0
        %6345 = vmatmul.mubr.f32.gmra.mrb[0].mxu0 %v6165
        %v6346 = vpop.f32.mrb[0].mxu0
        %v6347 = vadd.f32 0.0, %v6346
        %v6348 = vpop.f32.mrb[0].mxu0
        %6349 = vmatprep.mubr.f32.mxu0 0.0
        %6350 = vmatmul.mubr.f32.gmra.mrb[0].mxu0 %v6168
        %v6351 = vpop.f32.mrb[0].mxu0
        %v6352 = vadd.f32 0.0, %v6351
        %v6353 = vpop.f32.mrb[0].mxu0
        %6354 = vmatprep.mubr.f32.mxu0 0.0
        %6355 = vmatmul.mubr.f32.gmra.mrb[0].mxu0 %v6171
        %v6356 = vpop.f32.mrb[0].mxu0
        %v6357 = vadd.f32 0.0, %v6356
        %v6358 = vpop.f32.mrb[0].mxu0
        %6359 = vmatprep.mubr.f32.mxu0 0.0
        %6360 = vmatmul.mubr.f32.gmra.mrb[0].mxu0 %v6174
        %v6361 = vpop.f32.mrb[0].mxu0
        %v6362 = vadd.f32 0.0, %v6361
        %v6363 = vpop.f32.mrb[0].mxu0
        %6364 = vmatprep.mubr.f32.mxu0 0.0
        %6365 = vmatmul.mubr.f32.gmra.mrb[0].mxu0 %v6177
        %v6366 = vpop.f32.mrb[0].mxu0
        %v6367 = vadd.f32 0.0, %v6366
        %v6368 = vpop.f32.mrb[0].mxu0
        %6369 = vmatprep.mubr.f32.mxu0 0.0
        %6370 = vmatmul.mubr.f32.gmra.mrb[0].mxu0 %v6180
        %v6371 = vpop.f32.mrb[0].mxu0
        %v6372 = vadd.f32 0.0, %v6371
        %v6373 = vpop.f32.mrb[0].mxu0
        %6374 = vmatprep.mubr.f32.mxu0 0.0
        %6375 = vmatmul.mubr.f32.gmra.mrb[0].mxu0 %v6183
        %v6376 = vpop.f32.mrb[0].mxu0
        %v6377 = vadd.f32 0.0, %v6376
        %v6378 = vpop.f32.mrb[0].mxu0
        %6379 = vmatprep.mubr.f32.mxu0 0.0
        %6380 = vmatmul.mubr.f32.gmra.mrb[0].mxu0 %v6186
        %v6381 = vpop.f32.mrb[0].mxu0
        %v6382 = vadd.f32 0.0, %v6381
        %v6383 = vpop.f32.mrb[0].mxu0
        %6384 = vmatprep.mubr.f32.mxu0 0.0
        %6385 = vmatmul.mubr.f32.gmra.mrb[0].mxu0 %v6189
        %v6386 = vpop.f32.mrb[0].mxu0
        %v6387 = vadd.f32 0.0, %v6386
        %v6388 = vpop.f32.mrb[0].mxu0
        %6389 = vmatprep.mubr.f32.mxu0 0.0
        %6390 = vmatmul.mubr.f32.gmra.mrb[0].mxu0 %v6192
        %v6391 = vpop.f32.mrb[0].mxu0
        %v6392 = vadd.f32 0.0, %v6391
        %v6393 = vpop.f32.mrb[0].mxu0
        %6394 = vmatprep.mubr.f32.mxu0 0.0
        %6395 = vmatmul.mubr.f32.gmra.mrb[0].mxu0 %v6195
        %v6396 = vpop.f32.mrb[0].mxu0
        %v6397 = vadd.f32 0.0, %v6396
        %v6398 = vpop.f32.mrb[0].mxu0
        %6399 = vmatprep.mubr.f32.mxu0 0.0
        %6400 = vmatmul.mubr.f32.gmra.mrb[0].mxu0 %v6198
        %v6401 = vpop.f32.mrb[0].mxu0
        %v6402 = vadd.f32 0.0, %v6401
        %v6403 = vpop.f32.mrb[0].mxu0
        %6404 = vmatprep.mubr.f32.mxu0 0.0
        %6405 = vmatmul.mubr.f32.gmra.mrb[0].mxu0 %v6201
        %v6406 = vpop.f32.mrb[0].mxu0
        %v6407 = vadd.f32 0.0, %v6406
        %v6408 = vpop.f32.mrb[0].mxu0
        %6409 = vmatprep.mubr.f32.mxu0 0.0
        %6410 = vmatmul.mubr.f32.gmra.mrb[0].mxu0 %v6204
        %v6411 = vpop.f32.mrb[0].mxu0
        %v6412 = vadd.f32 0.0, %v6411
        %v6413 = vpop.f32.mrb[0].mxu0
        %6414 = vmatprep.mubr.f32.mxu0 0.0
        %6415 = vmatmul.mubr.f32.gmra.mrb[0].mxu0 %v6207
        %v6416 = vpop.f32.mrb[0].mxu0
        %v6417 = vadd.f32 0.0, %v6416
        %v6418 = vpop.f32.mrb[0].mxu0
        %6419 = vmatprep.mubr.f32.mxu0 0.0
        %6420 = vmatmul.mubr.f32.gmra.mrb[0].mxu0 %v6210
        %v6421 = vpop.f32.mrb[0].mxu0
        %v6422 = vadd.f32 0.0, %v6421
        %v6423 = vpop.f32.mrb[0].mxu0
        %6424 = vmatprep.mubr.f32.mxu0 0.0
        %6425 = vmatmul.mubr.f32.gmra.mrb[0].mxu0 %v6213
        %v6426 = vpop.f32.mrb[0].mxu0
        %v6427 = vadd.f32 0.0, %v6426
        %v6428 = vpop.f32.mrb[0].mxu0
        %6429 = vmatprep.mubr.f32.mxu0 0.0
        %6430 = vmatmul.mubr.f32.gmra.mrb[0].mxu0 %v6216
        %v6431 = vpop.f32.mrb[0].mxu0
        %v6432 = vadd.f32 0.0, %v6431
        %v6433 = vpop.f32.mrb[0].mxu0
        %6434 = vmatprep.mubr.f32.mxu0 0.0
        %6435 = vmatmul.mubr.f32.gmra.mrb[0].mxu0 %v6219
        %v6436 = vpop.f32.mrb[0].mxu0
        %v6437 = vadd.f32 0.0, %v6436
        %v6438 = vpop.f32.mrb[0].mxu0
        %6439 = vmatprep.mubr.f32.mxu0 0.0
        %6440 = vmatmul.mubr.f32.gmra.mrb[0].mxu0 %v6222
        %v6441 = vpop.f32.mrb[0].mxu0
        %v6442 = vadd.f32 0.0, %v6441
        %v6443 = vpop.f32.mrb[0].mxu0
        %6444 = vmatprep.mubr.f32.mxu0 0.0
        %6445 = vmatmul.mubr.f32.gmra.mrb[0].mxu0 %v6225
        %v6446 = vpop.f32.mrb[0].mxu0
        %v6447 = vadd.f32 0.0, %v6446
        %v6448 = vpop.f32.mrb[0].mxu0
        %6449 = vmatprep.mubr.f32.mxu0 0.0
        %6450 = vmatmul.mubr.f32.gmra.mrb[0].mxu0 %v6228
        %v6451 = vpop.f32.mrb[0].mxu0
        %v6452 = vadd.f32 0.0, %v6451
        %v6453 = vpop.f32.mrb[0].mxu0
        %6454 = vdwg.mxu0
        %v6455 = vmul.f32 %v6447, %v421
        %v6456 = vmul.f32 %v6452, %v422
        %v6457 = vmul.f32 %v6297, %v423
        %v6458 = vmul.f32 %v6302, %v424
        %v6459 = vmul.f32 %v6307, %v425
        %v6460 = vmul.f32 %v6312, %v426
        %v6461 = vmul.f32 %v6317, %v427
        %v6462 = vmul.f32 %v6322, %v428
        %v6463 = vmul.f32 %v6327, %v429
        %v6464 = vmul.f32 %v6332, %v430
        %v6465 = vmul.f32 %v6337, %v431
        %v6466 = vmul.f32 %v6342, %v432
        %v6467 = vmul.f32 %v6347, %v433
        %v6468 = vmul.f32 %v6352, %v434
        %v6469 = vmul.f32 %v6357, %v435
        %v6470 = vmul.f32 %v6362, %v436
        %v6471 = vmul.f32 %v6367, %v437
        %v6472 = vmul.f32 %v6372, %v438
        %v6473 = vmul.f32 %v6377, %v439
        %v6474 = vmul.f32 %v6382, %v440
        %v6475 = vmul.f32 %v6387, %v441
        %v6476 = vmul.f32 %v6392, %v442
        %v6477 = vmul.f32 %v6397, %v443
        %v6478 = vmul.f32 %v6402, %v444
        %v6479 = vmul.f32 %v6407, %v445
        %v6480 = vmul.f32 %v6412, %v446
        %v6481 = vmul.f32 %v6417, %v447
        %v6482 = vmul.f32 %v6422, %v448
        %v6483 = vmul.f32 %v6427, %v449
        %v6484 = vmul.f32 %v6432, %v450
        %v6485 = vmul.f32 %v6437, %v451
        %v6486 = vmul.f32 %v6442, %v452
        %6519 = vrot.lane.b32.xlu0 %v6297, 96
        %v6520 = vpop.permute.xlu0 %6519
        %6521 = vrot.lane.b32.xlu0 %v6302, 96
        %v6522 = vpop.permute.xlu0 %6521
        %6523 = vrot.lane.b32.xlu0 %v6307, 96
        %v6524 = vpop.permute.xlu0 %6523
        %6525 = vrot.lane.b32.xlu0 %v6312, 96
        %v6526 = vpop.permute.xlu0 %6525
        %6527 = vrot.lane.b32.xlu0 %v6317, 96
        %v6528 = vpop.permute.xlu0 %6527
        %6529 = vrot.lane.b32.xlu0 %v6322, 96
        %v6530 = vpop.permute.xlu0 %6529
        %6531 = vrot.lane.b32.xlu0 %v6327, 96
        %v6532 = vpop.permute.xlu0 %6531
        %6533 = vrot.lane.b32.xlu0 %v6332, 96
        %v6534 = vpop.permute.xlu0 %6533
        %6535 = vrot.lane.b32.xlu0 %v6337, 96
        %v6536 = vpop.permute.xlu0 %6535
        %6537 = vrot.lane.b32.xlu0 %v6342, 96
        %v6538 = vpop.permute.xlu0 %6537
        %6539 = vrot.lane.b32.xlu0 %v6347, 96
        %v6540 = vpop.permute.xlu0 %6539
        %6541 = vrot.lane.b32.xlu0 %v6352, 96
        %v6542 = vpop.permute.xlu0 %6541
        %6543 = vrot.lane.b32.xlu0 %v6357, 96
        %v6544 = vpop.permute.xlu0 %6543
        %6545 = vrot.lane.b32.xlu0 %v6362, 96
        %v6546 = vpop.permute.xlu0 %6545
        %6547 = vrot.lane.b32.xlu0 %v6367, 96
        %v6548 = vpop.permute.xlu0 %6547
        %6549 = vrot.lane.b32.xlu0 %v6372, 96
        %v6550 = vpop.permute.xlu0 %6549
        %6551 = vrot.lane.b32.xlu0 %v6377, 96
        %v6552 = vpop.permute.xlu0 %6551
        %6553 = vrot.lane.b32.xlu0 %v6382, 96
        %v6554 = vpop.permute.xlu0 %6553
        %6555 = vrot.lane.b32.xlu0 %v6387, 96
        %v6556 = vpop.permute.xlu0 %6555
        %6557 = vrot.lane.b32.xlu0 %v6392, 96
        %v6558 = vpop.permute.xlu0 %6557
        %6559 = vrot.lane.b32.xlu0 %v6397, 96
        %v6560 = vpop.permute.xlu0 %6559
        %6561 = vrot.lane.b32.xlu0 %v6402, 96
        %v6562 = vpop.permute.xlu0 %6561
        %6563 = vrot.lane.b32.xlu0 %v6407, 96
        %v6564 = vpop.permute.xlu0 %6563
        %6565 = vrot.lane.b32.xlu0 %v6412, 96
        %v6566 = vpop.permute.xlu0 %6565
        %6567 = vrot.lane.b32.xlu0 %v6417, 96
        %v6568 = vpop.permute.xlu0 %6567
        %6569 = vrot.lane.b32.xlu0 %v6422, 96
        %v6570 = vpop.permute.xlu0 %6569
        %6571 = vrot.lane.b32.xlu0 %v6427, 96
        %v6572 = vpop.permute.xlu0 %6571
        %6573 = vrot.lane.b32.xlu0 %v6432, 96
        %v6574 = vpop.permute.xlu0 %6573
        %6575 = vrot.lane.b32.xlu0 %v6437, 96
        %v6576 = vpop.permute.xlu0 %6575
        %6577 = vrot.lane.b32.xlu0 %v6442, 96
        %v6578 = vpop.permute.xlu0 %6577
        %6579 = vrot.lane.b32.xlu0 %v6447, 96
        %v6580 = vpop.permute.xlu0 %6579
        %6581 = vrot.lane.b32.xlu0 %v6452, 96
        %v6582 = vpop.permute.xlu0 %6581
        %v6615 = vadd.f32 %v6455, %v6520
        %v6616 = vadd.f32 %v6456, %v6522
        %v6617 = vadd.f32 %v6457, %v6524
        %v6618 = vadd.f32 %v6458, %v6526
        %v6619 = vadd.f32 %v6459, %v6528
        %v6620 = vadd.f32 %v6460, %v6530
        %v6621 = vadd.f32 %v6461, %v6532
        %v6622 = vadd.f32 %v6462, %v6534
        %v6623 = vadd.f32 %v6463, %v6536
        %v6624 = vadd.f32 %v6464, %v6538
        %v6625 = vadd.f32 %v6465, %v6540
        %v6626 = vadd.f32 %v6466, %v6542
        %v6627 = vadd.f32 %v6467, %v6544
        %v6628 = vadd.f32 %v6468, %v6546
        %v6629 = vadd.f32 %v6469, %v6548
        %v6630 = vadd.f32 %v6470, %v6550
        %v6631 = vadd.f32 %v6471, %v6552
        %v6632 = vadd.f32 %v6472, %v6554
        %v6633 = vadd.f32 %v6473, %v6556
        %v6634 = vadd.f32 %v6474, %v6558
        %v6635 = vadd.f32 %v6475, %v6560
        %v6636 = vadd.f32 %v6476, %v6562
        %v6637 = vadd.f32 %v6477, %v6564
        %v6638 = vadd.f32 %v6478, %v6566
        %v6639 = vadd.f32 %v6479, %v6568
        %v6640 = vadd.f32 %v6480, %v6570
        %v6641 = vadd.f32 %v6481, %v6572
        %v6642 = vadd.f32 %v6482, %v6574
        %v6643 = vadd.f32 %v6483, %v6576
        %v6644 = vadd.f32 %v6484, %v6578
        %v6645 = vadd.f32 %v6485, %v6580
        %v6646 = vadd.f32 %v6486, %v6582
        %6647 = vrot.lane.b32.xlu0 %v6297, 64
        %v6648 = vpop.permute.xlu0 %6647
        %6649 = vrot.lane.b32.xlu0 %v6302, 64
        %v6650 = vpop.permute.xlu0 %6649
        %6651 = vrot.lane.b32.xlu0 %v6307, 64
        %v6652 = vpop.permute.xlu0 %6651
        %6653 = vrot.lane.b32.xlu0 %v6312, 64
        %v6654 = vpop.permute.xlu0 %6653
        %6655 = vrot.lane.b32.xlu0 %v6317, 64
        %v6656 = vpop.permute.xlu0 %6655
        %6657 = vrot.lane.b32.xlu0 %v6322, 64
        %v6658 = vpop.permute.xlu0 %6657
        %6659 = vrot.lane.b32.xlu0 %v6327, 64
        %v6660 = vpop.permute.xlu0 %6659
        %6661 = vrot.lane.b32.xlu0 %v6332, 64
        %v6662 = vpop.permute.xlu0 %6661
        %6663 = vrot.lane.b32.xlu0 %v6337, 64
        %v6664 = vpop.permute.xlu0 %6663
        %6665 = vrot.lane.b32.xlu0 %v6342, 64
        %v6666 = vpop.permute.xlu0 %6665
        %6667 = vrot.lane.b32.xlu0 %v6347, 64
        %v6668 = vpop.permute.xlu0 %6667
        %6669 = vrot.lane.b32.xlu0 %v6352, 64
        %v6670 = vpop.permute.xlu0 %6669
        %6671 = vrot.lane.b32.xlu0 %v6357, 64
        %v6672 = vpop.permute.xlu0 %6671
        %6673 = vrot.lane.b32.xlu0 %v6362, 64
        %v6674 = vpop.permute.xlu0 %6673
        %6675 = vrot.lane.b32.xlu0 %v6367, 64
        %v6676 = vpop.permute.xlu0 %6675
        %6677 = vrot.lane.b32.xlu0 %v6372, 64
        %v6678 = vpop.permute.xlu0 %6677
        %6679 = vrot.lane.b32.xlu0 %v6377, 64
        %v6680 = vpop.permute.xlu0 %6679
        %6681 = vrot.lane.b32.xlu0 %v6382, 64
        %v6682 = vpop.permute.xlu0 %6681
        %6683 = vrot.lane.b32.xlu0 %v6387, 64
        %v6684 = vpop.permute.xlu0 %6683
        %6685 = vrot.lane.b32.xlu0 %v6392, 64
        %v6686 = vpop.permute.xlu0 %6685
        %6687 = vrot.lane.b32.xlu0 %v6397, 64
        %v6688 = vpop.permute.xlu0 %6687
        %6689 = vrot.lane.b32.xlu0 %v6402, 64
        %v6690 = vpop.permute.xlu0 %6689
        %6691 = vrot.lane.b32.xlu0 %v6407, 64
        %v6692 = vpop.permute.xlu0 %6691
        %6693 = vrot.lane.b32.xlu0 %v6412, 64
        %v6694 = vpop.permute.xlu0 %6693
        %6695 = vrot.lane.b32.xlu0 %v6417, 64
        %v6696 = vpop.permute.xlu0 %6695
        %6697 = vrot.lane.b32.xlu0 %v6422, 64
        %v6698 = vpop.permute.xlu0 %6697
        %6699 = vrot.lane.b32.xlu0 %v6427, 64
        %v6700 = vpop.permute.xlu0 %6699
        %6701 = vrot.lane.b32.xlu0 %v6432, 64
        %v6702 = vpop.permute.xlu0 %6701
        %6703 = vrot.lane.b32.xlu0 %v6437, 64
        %v6704 = vpop.permute.xlu0 %6703
        %6705 = vrot.lane.b32.xlu0 %v6442, 64
        %v6706 = vpop.permute.xlu0 %6705
        %6707 = vrot.lane.b32.xlu0 %v6447, 64
        %v6708 = vpop.permute.xlu0 %6707
        %6709 = vrot.lane.b32.xlu0 %v6452, 64
        %v6710 = vpop.permute.xlu0 %6709
        %v6743 = vmul.f32 %v6652, %v485
        %v6744 = vmul.f32 %v6654, %v486
        %v6745 = vmul.f32 %v6656, %v487
        %v6746 = vmul.f32 %v6658, %v488
        %v6747 = vmul.f32 %v6660, %v489
        %v6748 = vmul.f32 %v6662, %v490
        %v6749 = vmul.f32 %v6664, %v491
        %v6750 = vmul.f32 %v6666, %v492
        %v6751 = vmul.f32 %v6668, %v493
        %v6752 = vmul.f32 %v6670, %v494
        %v6753 = vmul.f32 %v6672, %v495
        %v6754 = vmul.f32 %v6674, %v496
        %v6755 = vmul.f32 %v6676, %v497
        %v6756 = vmul.f32 %v6678, %v498
        %v6757 = vmul.f32 %v6680, %v499
        %v6758 = vmul.f32 %v6682, %v500
        %v6759 = vmul.f32 %v6684, %v501
        %v6760 = vmul.f32 %v6686, %v502
        %v6761 = vmul.f32 %v6688, %v503
        %v6762 = vmul.f32 %v6690, %v504
        %v6763 = vmul.f32 %v6692, %v505
        %v6764 = vmul.f32 %v6694, %v506
        %v6765 = vmul.f32 %v6696, %v507
        %v6766 = vmul.f32 %v6698, %v508
        %v6767 = vmul.f32 %v6700, %v509
        %v6768 = vmul.f32 %v6702, %v510
        %v6769 = vmul.f32 %v6704, %v511
        %v6770 = vmul.f32 %v6706, %v512
        %v6771 = vmul.f32 %v6708, %v513
        %v6772 = vmul.f32 %v6710, %v514
        %v6773 = vmul.f32 %v6648, %v515
        %v6774 = vmul.f32 %v6650, %v516
        %v6775 = vadd.f32 %v6615, %v6743
        %v6776 = vadd.f32 %v6616, %v6744
        %v6777 = vadd.f32 %v6617, %v6745
        %v6778 = vadd.f32 %v6618, %v6746
        %v6779 = vadd.f32 %v6619, %v6747
        %v6780 = vadd.f32 %v6620, %v6748
        %v6781 = vadd.f32 %v6621, %v6749
        %v6782 = vadd.f32 %v6622, %v6750
        %v6783 = vadd.f32 %v6623, %v6751
        %v6784 = vadd.f32 %v6624, %v6752
        %v6785 = vadd.f32 %v6625, %v6753
        %v6786 = vadd.f32 %v6626, %v6754
        %v6787 = vadd.f32 %v6627, %v6755
        %v6788 = vadd.f32 %v6628, %v6756
        %v6789 = vadd.f32 %v6629, %v6757
        %v6790 = vadd.f32 %v6630, %v6758
        %v6791 = vadd.f32 %v6631, %v6759
        %v6792 = vadd.f32 %v6632, %v6760
        %v6793 = vadd.f32 %v6633, %v6761
        %v6794 = vadd.f32 %v6634, %v6762
        %v6795 = vadd.f32 %v6635, %v6763
        %v6796 = vadd.f32 %v6636, %v6764
        %v6797 = vadd.f32 %v6637, %v6765
        %v6798 = vadd.f32 %v6638, %v6766
        %v6799 = vadd.f32 %v6639, %v6767
        %v6800 = vadd.f32 %v6640, %v6768
        %v6801 = vadd.f32 %v6641, %v6769
        %v6802 = vadd.f32 %v6642, %v6770
        %v6803 = vadd.f32 %v6643, %v6771
        %v6804 = vadd.f32 %v6644, %v6772
        %v6805 = vadd.f32 %v6645, %v6773
        %v6806 = vadd.f32 %v6646, %v6774
        %s6807 = scalar_lea.vmem %s2, 128
        %v6808 = vld [vmem:[%s6807] sm:$0xff]
        %v6809 = vld [vmem:[%s6807 + $0x8] sm:$0xff]
        %v6810 = vld [vmem:[%s6807 + $0x10] sm:$0xff]
        %v6811 = vld [vmem:[%s6807 + $0x18] sm:$0xff]
        %v6813 = vsel %vm3393, %v5999, 0
        %v6816 = vsel %vm3393, %v6000, 0
        %v6819 = vsel %vm3393, %v6001, 0
        %v6822 = vsel %vm3393, %v6002, 0
        %v6825 = vsel %vm3393, %v6003, 0
        %v6828 = vsel %vm3393, %v6004, 0
        %v6831 = vsel %vm3393, %v6005, 0
        %v6834 = vsel %vm3393, %v6006, 0
        %v6837 = vsel %vm3393, %v6007, 0
        %v6840 = vsel %vm3393, %v6008, 0
        %v6843 = vsel %vm3393, %v6009, 0
        %v6846 = vsel %vm3393, %v6010, 0
        %v6849 = vsel %vm3393, %v6011, 0
        %v6852 = vsel %vm3393, %v6012, 0
        %v6855 = vsel %vm3393, %v6013, 0
        %v6858 = vsel %vm3393, %v6014, 0
        %v6861 = vsel %vm3393, %v6015, 0
        %v6864 = vsel %vm3393, %v6016, 0
        %v6867 = vsel %vm3393, %v6017, 0
        %v6870 = vsel %vm3393, %v6018, 0
        %v6873 = vsel %vm3393, %v6019, 0
        %v6876 = vsel %vm3393, %v6020, 0
        %v6879 = vsel %vm3393, %v6021, 0
        %v6882 = vsel %vm3393, %v6022, 0
        %v6885 = vsel %vm3393, %v6023, 0
        %v6888 = vsel %vm3393, %v6024, 0
        %v6891 = vsel %vm3393, %v6025, 0
        %v6894 = vsel %vm3393, %v6026, 0
        %v6897 = vsel %vm3393, %v6027, 0
        %v6900 = vsel %vm3393, %v6028, 0
        %v6903 = vsel %vm3393, %v6029, 0
        %v6906 = vsel %vm3393, %v6030, 0
        %6908 = vmatprep.subr.mxu0 0.0
        %6909 = vmatpush1.msra.mxu0 %v6808
        %6910 = vmatprep.subr.mxu0 0.0
        %6911 = vmatpush1.msra.mxu0 %v6809
        %6912 = vmatprep.subr.mxu0 0.0
        %6913 = vmatpush1.msra.mxu0 %v6810
        %6914 = vmatprep.subr.mxu0 0.0
        %6915 = vmatpush1.msra.mxu0 %v6811
        %6916 = vmatprep.subr.mxu0 0.0
        %6917 = vmatpush1.msra.mxu0 0.0
        %6918 = vmatprep.subr.mxu0 0.0
        %6919 = vmatpush1.msra.mxu0 0.0
        %6920 = vmatprep.subr.mxu0 0.0
        %6921 = vmatpush1.msra.mxu0 0.0
        %6922 = vmatprep.subr.mxu0 0.0
        %6923 = vmatpush1.msra.mxu0 0.0
        %6924 = vmatprep.subr.mxu0 0.0
        %6925 = vmatpush1.msra.mxu0 0.0
        %6926 = vmatprep.subr.mxu0 0.0
        %6927 = vmatpush1.msra.mxu0 0.0
        %6928 = vmatprep.subr.mxu0 0.0
        %6929 = vmatpush1.msra.mxu0 0.0
        %6930 = vmatprep.subr.mxu0 0.0
        %6931 = vmatpush1.msra.mxu0 0.0
        %6932 = vmatprep.subr.mxu0 0.0
        %6933 = vmatpush1.msra.mxu0 0.0
        %6934 = vmatprep.subr.mxu0 0.0
        %6935 = vmatpush1.msra.mxu0 0.0
        %6936 = vmatprep.subr.mxu0 0.0
        %6937 = vmatpush1.msra.mxu0 0.0
        %6938 = vmatprep.subr.mxu0 0.0
        %6939 = vmatpush1.msra.mxu0 0.0
        %6940 = vmatprep.subr.mxu0 0.0
        %6941 = vmatpush1.msra.mxu0 0.0
        %6942 = vmatprep.subr.mxu0 0.0
        %6943 = vmatpush1.msra.mxu0 0.0
        %6944 = vmatprep.subr.mxu0 0.0
        %6945 = vmatpush1.msra.mxu0 0.0
        %6946 = vmatprep.subr.mxu0 0.0
        %6947 = vmatpush1.msra.mxu0 0.0
        %6948 = vmatprep.subr.mxu0 0.0
        %6949 = vmatpush1.msra.mxu0 0.0
        %6950 = vmatprep.subr.mxu0 0.0
        %6951 = vmatpush1.msra.mxu0 0.0
        %6952 = vmatprep.subr.mxu0 0.0
        %6953 = vmatpush1.msra.mxu0 0.0
        %6954 = vmatprep.subr.mxu0 0.0
        %6955 = vmatpush1.msra.mxu0 0.0
        %6956 = vmatprep.subr.mxu0 0.0
        %6957 = vmatpush1.msra.mxu0 0.0
        %6958 = vmatprep.subr.mxu0 0.0
        %6959 = vmatpush1.msra.mxu0 0.0
        %6960 = vmatprep.subr.mxu0 0.0
        %6961 = vmatpush1.msra.mxu0 0.0
        %6962 = vmatprep.subr.mxu0 0.0
        %6963 = vmatpush1.msra.mxu0 0.0
        %6964 = vmatprep.subr.mxu0 0.0
        %6965 = vmatpush1.msra.mxu0 0.0
        %6966 = vmatprep.subr.mxu0 0.0
        %6967 = vmatpush1.msra.mxu0 0.0
        %6968 = vmatprep.subr.mxu0 0.0
        %6969 = vmatpush1.msra.mxu0 0.0
        %6970 = vmatprep.subr.mxu0 0.0
        %6971 = vmatpush1.msra.mxu0 0.0
        %6972 = vmatprep.mubr.f32.mxu0 0.0
        %6973 = vmatmul.mubr.f32.gmra.mrb[0].mxu0 %v6813
        %v6974 = vpop.f32.mrb[0].mxu0
        %v6975 = vadd.f32 0.0, %v6974
        %v6976 = vpop.f32.mrb[0].mxu0
        %6977 = vmatprep.mubr.f32.mxu0 0.0
        %6978 = vmatmul.mubr.f32.gmra.mrb[0].mxu0 %v6816
        %v6979 = vpop.f32.mrb[0].mxu0
        %v6980 = vadd.f32 0.0, %v6979
        %v6981 = vpop.f32.mrb[0].mxu0
        %6982 = vmatprep.mubr.f32.mxu0 0.0
        %6983 = vmatmul.mubr.f32.gmra.mrb[0].mxu0 %v6819
        %v6984 = vpop.f32.mrb[0].mxu0
        %v6985 = vadd.f32 0.0, %v6984
        %v6986 = vpop.f32.mrb[0].mxu0
        %6987 = vmatprep.mubr.f32.mxu0 0.0
        %6988 = vmatmul.mubr.f32.gmra.mrb[0].mxu0 %v6822
        %v6989 = vpop.f32.mrb[0].mxu0
        %v6990 = vadd.f32 0.0, %v6989
        %v6991 = vpop.f32.mrb[0].mxu0
        %6992 = vmatprep.mubr.f32.mxu0 0.0
        %6993 = vmatmul.mubr.f32.gmra.mrb[0].mxu0 %v6825
        %v6994 = vpop.f32.mrb[0].mxu0
        %v6995 = vadd.f32 0.0, %v6994
        %v6996 = vpop.f32.mrb[0].mxu0
        %6997 = vmatprep.mubr.f32.mxu0 0.0
        %6998 = vmatmul.mubr.f32.gmra.mrb[0].mxu0 %v6828
        %v6999 = vpop.f32.mrb[0].mxu0
        %v7000 = vadd.f32 0.0, %v6999
        %v7001 = vpop.f32.mrb[0].mxu0
        %7002 = vmatprep.mubr.f32.mxu0 0.0
        %7003 = vmatmul.mubr.f32.gmra.mrb[0].mxu0 %v6831
        %v7004 = vpop.f32.mrb[0].mxu0
        %v7005 = vadd.f32 0.0, %v7004
        %v7006 = vpop.f32.mrb[0].mxu0
        %7007 = vmatprep.mubr.f32.mxu0 0.0
        %7008 = vmatmul.mubr.f32.gmra.mrb[0].mxu0 %v6834
        %v7009 = vpop.f32.mrb[0].mxu0
        %v7010 = vadd.f32 0.0, %v7009
        %v7011 = vpop.f32.mrb[0].mxu0
        %7012 = vmatprep.mubr.f32.mxu0 0.0
        %7013 = vmatmul.mubr.f32.gmra.mrb[0].mxu0 %v6837
        %v7014 = vpop.f32.mrb[0].mxu0
        %v7015 = vadd.f32 0.0, %v7014
        %v7016 = vpop.f32.mrb[0].mxu0
        %7017 = vmatprep.mubr.f32.mxu0 0.0
        %7018 = vmatmul.mubr.f32.gmra.mrb[0].mxu0 %v6840
        %v7019 = vpop.f32.mrb[0].mxu0
        %v7020 = vadd.f32 0.0, %v7019
        %v7021 = vpop.f32.mrb[0].mxu0
        %7022 = vmatprep.mubr.f32.mxu0 0.0
        %7023 = vmatmul.mubr.f32.gmra.mrb[0].mxu0 %v6843
        %v7024 = vpop.f32.mrb[0].mxu0
        %v7025 = vadd.f32 0.0, %v7024
        %v7026 = vpop.f32.mrb[0].mxu0
        %7027 = vmatprep.mubr.f32.mxu0 0.0
        %7028 = vmatmul.mubr.f32.gmra.mrb[0].mxu0 %v6846
        %v7029 = vpop.f32.mrb[0].mxu0
        %v7030 = vadd.f32 0.0, %v7029
        %v7031 = vpop.f32.mrb[0].mxu0
        %7032 = vmatprep.mubr.f32.mxu0 0.0
        %7033 = vmatmul.mubr.f32.gmra.mrb[0].mxu0 %v6849
        %v7034 = vpop.f32.mrb[0].mxu0
        %v7035 = vadd.f32 0.0, %v7034
        %v7036 = vpop.f32.mrb[0].mxu0
        %7037 = vmatprep.mubr.f32.mxu0 0.0
        %7038 = vmatmul.mubr.f32.gmra.mrb[0].mxu0 %v6852
        %v7039 = vpop.f32.mrb[0].mxu0
        %v7040 = vadd.f32 0.0, %v7039
        %v7041 = vpop.f32.mrb[0].mxu0
        %7042 = vmatprep.mubr.f32.mxu0 0.0
        %7043 = vmatmul.mubr.f32.gmra.mrb[0].mxu0 %v6855
        %v7044 = vpop.f32.mrb[0].mxu0
        %v7045 = vadd.f32 0.0, %v7044
        %v7046 = vpop.f32.mrb[0].mxu0
        %7047 = vmatprep.mubr.f32.mxu0 0.0
        %7048 = vmatmul.mubr.f32.gmra.mrb[0].mxu0 %v6858
        %v7049 = vpop.f32.mrb[0].mxu0
        %v7050 = vadd.f32 0.0, %v7049
        %v7051 = vpop.f32.mrb[0].mxu0
        %7052 = vmatprep.mubr.f32.mxu0 0.0
        %7053 = vmatmul.mubr.f32.gmra.mrb[0].mxu0 %v6861
        %v7054 = vpop.f32.mrb[0].mxu0
        %v7055 = vadd.f32 0.0, %v7054
        %v7056 = vpop.f32.mrb[0].mxu0
        %7057 = vmatprep.mubr.f32.mxu0 0.0
        %7058 = vmatmul.mubr.f32.gmra.mrb[0].mxu0 %v6864
        %v7059 = vpop.f32.mrb[0].mxu0
        %v7060 = vadd.f32 0.0, %v7059
        %v7061 = vpop.f32.mrb[0].mxu0
        %7062 = vmatprep.mubr.f32.mxu0 0.0
        %7063 = vmatmul.mubr.f32.gmra.mrb[0].mxu0 %v6867
        %v7064 = vpop.f32.mrb[0].mxu0
        %v7065 = vadd.f32 0.0, %v7064
        %v7066 = vpop.f32.mrb[0].mxu0
        %7067 = vmatprep.mubr.f32.mxu0 0.0
        %7068 = vmatmul.mubr.f32.gmra.mrb[0].mxu0 %v6870
        %v7069 = vpop.f32.mrb[0].mxu0
        %v7070 = vadd.f32 0.0, %v7069
        %v7071 = vpop.f32.mrb[0].mxu0
        %7072 = vmatprep.mubr.f32.mxu0 0.0
        %7073 = vmatmul.mubr.f32.gmra.mrb[0].mxu0 %v6873
        %v7074 = vpop.f32.mrb[0].mxu0
        %v7075 = vadd.f32 0.0, %v7074
        %v7076 = vpop.f32.mrb[0].mxu0
        %7077 = vmatprep.mubr.f32.mxu0 0.0
        %7078 = vmatmul.mubr.f32.gmra.mrb[0].mxu0 %v6876
        %v7079 = vpop.f32.mrb[0].mxu0
        %v7080 = vadd.f32 0.0, %v7079
        %v7081 = vpop.f32.mrb[0].mxu0
        %7082 = vmatprep.mubr.f32.mxu0 0.0
        %7083 = vmatmul.mubr.f32.gmra.mrb[0].mxu0 %v6879
        %v7084 = vpop.f32.mrb[0].mxu0
        %v7085 = vadd.f32 0.0, %v7084
        %v7086 = vpop.f32.mrb[0].mxu0
        %7087 = vmatprep.mubr.f32.mxu0 0.0
        %7088 = vmatmul.mubr.f32.gmra.mrb[0].mxu0 %v6882
        %v7089 = vpop.f32.mrb[0].mxu0
        %v7090 = vadd.f32 0.0, %v7089
        %v7091 = vpop.f32.mrb[0].mxu0
        %7092 = vmatprep.mubr.f32.mxu0 0.0
        %7093 = vmatmul.mubr.f32.gmra.mrb[0].mxu0 %v6885
        %v7094 = vpop.f32.mrb[0].mxu0
        %v7095 = vadd.f32 0.0, %v7094
        %v7096 = vpop.f32.mrb[0].mxu0
        %7097 = vmatprep.mubr.f32.mxu0 0.0
        %7098 = vmatmul.mubr.f32.gmra.mrb[0].mxu0 %v6888
        %v7099 = vpop.f32.mrb[0].mxu0
        %v7100 = vadd.f32 0.0, %v7099
        %v7101 = vpop.f32.mrb[0].mxu0
        %7102 = vmatprep.mubr.f32.mxu0 0.0
        %7103 = vmatmul.mubr.f32.gmra.mrb[0].mxu0 %v6891
        %v7104 = vpop.f32.mrb[0].mxu0
        %v7105 = vadd.f32 0.0, %v7104
        %v7106 = vpop.f32.mrb[0].mxu0
        %7107 = vmatprep.mubr.f32.mxu0 0.0
        %7108 = vmatmul.mubr.f32.gmra.mrb[0].mxu0 %v6894
        %v7109 = vpop.f32.mrb[0].mxu0
        %v7110 = vadd.f32 0.0, %v7109
        %v7111 = vpop.f32.mrb[0].mxu0
        %7112 = vmatprep.mubr.f32.mxu0 0.0
        %7113 = vmatmul.mubr.f32.gmra.mrb[0].mxu0 %v6897
        %v7114 = vpop.f32.mrb[0].mxu0
        %v7115 = vadd.f32 0.0, %v7114
        %v7116 = vpop.f32.mrb[0].mxu0
        %7117 = vmatprep.mubr.f32.mxu0 0.0
        %7118 = vmatmul.mubr.f32.gmra.mrb[0].mxu0 %v6900
        %v7119 = vpop.f32.mrb[0].mxu0
        %v7120 = vadd.f32 0.0, %v7119
        %v7121 = vpop.f32.mrb[0].mxu0
        %7122 = vmatprep.mubr.f32.mxu0 0.0
        %7123 = vmatmul.mubr.f32.gmra.mrb[0].mxu0 %v6903
        %v7124 = vpop.f32.mrb[0].mxu0
        %v7125 = vadd.f32 0.0, %v7124
        %v7126 = vpop.f32.mrb[0].mxu0
        %7127 = vmatprep.mubr.f32.mxu0 0.0
        %7128 = vmatmul.mubr.f32.gmra.mrb[0].mxu0 %v6906
        %v7129 = vpop.f32.mrb[0].mxu0
        %v7130 = vadd.f32 0.0, %v7129
        %v7131 = vpop.f32.mrb[0].mxu0
        %7132 = vdwg.mxu0
        %v7133 = vmul.f32 %v7125, %v421
        %v7134 = vmul.f32 %v7130, %v422
        %v7135 = vmul.f32 %v6975, %v423
        %v7136 = vmul.f32 %v6980, %v424
        %v7137 = vmul.f32 %v6985, %v425
        %v7138 = vmul.f32 %v6990, %v426
        %v7139 = vmul.f32 %v6995, %v427
        %v7140 = vmul.f32 %v7000, %v428
        %v7141 = vmul.f32 %v7005, %v429
        %v7142 = vmul.f32 %v7010, %v430
        %v7143 = vmul.f32 %v7015, %v431
        %v7144 = vmul.f32 %v7020, %v432
        %v7145 = vmul.f32 %v7025, %v433
        %v7146 = vmul.f32 %v7030, %v434
        %v7147 = vmul.f32 %v7035, %v435
        %v7148 = vmul.f32 %v7040, %v436
        %v7149 = vmul.f32 %v7045, %v437
        %v7150 = vmul.f32 %v7050, %v438
        %v7151 = vmul.f32 %v7055, %v439
        %v7152 = vmul.f32 %v7060, %v440
        %v7153 = vmul.f32 %v7065, %v441
        %v7154 = vmul.f32 %v7070, %v442
        %v7155 = vmul.f32 %v7075, %v443
        %v7156 = vmul.f32 %v7080, %v444
        %v7157 = vmul.f32 %v7085, %v445
        %v7158 = vmul.f32 %v7090, %v446
        %v7159 = vmul.f32 %v7095, %v447
        %v7160 = vmul.f32 %v7100, %v448
        %v7161 = vmul.f32 %v7105, %v449
        %v7162 = vmul.f32 %v7110, %v450
        %v7163 = vmul.f32 %v7115, %v451
        %v7164 = vmul.f32 %v7120, %v452
        %7197 = vrot.lane.b32.xlu0 %v6975, 96
        %v7198 = vpop.permute.xlu0 %7197
        %7199 = vrot.lane.b32.xlu0 %v6980, 96
        %v7200 = vpop.permute.xlu0 %7199
        %7201 = vrot.lane.b32.xlu0 %v6985, 96
        %v7202 = vpop.permute.xlu0 %7201
        %7203 = vrot.lane.b32.xlu0 %v6990, 96
        %v7204 = vpop.permute.xlu0 %7203
        %7205 = vrot.lane.b32.xlu0 %v6995, 96
        %v7206 = vpop.permute.xlu0 %7205
        %7207 = vrot.lane.b32.xlu0 %v7000, 96
        %v7208 = vpop.permute.xlu0 %7207
        %7209 = vrot.lane.b32.xlu0 %v7005, 96
        %v7210 = vpop.permute.xlu0 %7209
        %7211 = vrot.lane.b32.xlu0 %v7010, 96
        %v7212 = vpop.permute.xlu0 %7211
        %7213 = vrot.lane.b32.xlu0 %v7015, 96
        %v7214 = vpop.permute.xlu0 %7213
        %7215 = vrot.lane.b32.xlu0 %v7020, 96
        %v7216 = vpop.permute.xlu0 %7215
        %7217 = vrot.lane.b32.xlu0 %v7025, 96
        %v7218 = vpop.permute.xlu0 %7217
        %7219 = vrot.lane.b32.xlu0 %v7030, 96
        %v7220 = vpop.permute.xlu0 %7219
        %7221 = vrot.lane.b32.xlu0 %v7035, 96
        %v7222 = vpop.permute.xlu0 %7221
        %7223 = vrot.lane.b32.xlu0 %v7040, 96
        %v7224 = vpop.permute.xlu0 %7223
        %7225 = vrot.lane.b32.xlu0 %v7045, 96
        %v7226 = vpop.permute.xlu0 %7225
        %7227 = vrot.lane.b32.xlu0 %v7050, 96
        %v7228 = vpop.permute.xlu0 %7227
        %7229 = vrot.lane.b32.xlu0 %v7055, 96
        %v7230 = vpop.permute.xlu0 %7229
        %7231 = vrot.lane.b32.xlu0 %v7060, 96
        %v7232 = vpop.permute.xlu0 %7231
        %7233 = vrot.lane.b32.xlu0 %v7065, 96
        %v7234 = vpop.permute.xlu0 %7233
        %7235 = vrot.lane.b32.xlu0 %v7070, 96
        %v7236 = vpop.permute.xlu0 %7235
        %7237 = vrot.lane.b32.xlu0 %v7075, 96
        %v7238 = vpop.permute.xlu0 %7237
        %7239 = vrot.lane.b32.xlu0 %v7080, 96
        %v7240 = vpop.permute.xlu0 %7239
        %7241 = vrot.lane.b32.xlu0 %v7085, 96
        %v7242 = vpop.permute.xlu0 %7241
        %7243 = vrot.lane.b32.xlu0 %v7090, 96
        %v7244 = vpop.permute.xlu0 %7243
        %7245 = vrot.lane.b32.xlu0 %v7095, 96
        %v7246 = vpop.permute.xlu0 %7245
        %7247 = vrot.lane.b32.xlu0 %v7100, 96
        %v7248 = vpop.permute.xlu0 %7247
        %7249 = vrot.lane.b32.xlu0 %v7105, 96
        %v7250 = vpop.permute.xlu0 %7249
        %7251 = vrot.lane.b32.xlu0 %v7110, 96
        %v7252 = vpop.permute.xlu0 %7251
        %7253 = vrot.lane.b32.xlu0 %v7115, 96
        %v7254 = vpop.permute.xlu0 %7253
        %7255 = vrot.lane.b32.xlu0 %v7120, 96
        %v7256 = vpop.permute.xlu0 %7255
        %7257 = vrot.lane.b32.xlu0 %v7125, 96
        %v7258 = vpop.permute.xlu0 %7257
        %7259 = vrot.lane.b32.xlu0 %v7130, 96
        %v7260 = vpop.permute.xlu0 %7259
        %v7293 = vadd.f32 %v7133, %v7198
        %v7294 = vadd.f32 %v7134, %v7200
        %v7295 = vadd.f32 %v7135, %v7202
        %v7296 = vadd.f32 %v7136, %v7204
        %v7297 = vadd.f32 %v7137, %v7206
        %v7298 = vadd.f32 %v7138, %v7208
        %v7299 = vadd.f32 %v7139, %v7210
        %v7300 = vadd.f32 %v7140, %v7212
        %v7301 = vadd.f32 %v7141, %v7214
        %v7302 = vadd.f32 %v7142, %v7216
        %v7303 = vadd.f32 %v7143, %v7218
        %v7304 = vadd.f32 %v7144, %v7220
        %v7305 = vadd.f32 %v7145, %v7222
        %v7306 = vadd.f32 %v7146, %v7224
        %v7307 = vadd.f32 %v7147, %v7226
        %v7308 = vadd.f32 %v7148, %v7228
        %v7309 = vadd.f32 %v7149, %v7230
        %v7310 = vadd.f32 %v7150, %v7232
        %v7311 = vadd.f32 %v7151, %v7234
        %v7312 = vadd.f32 %v7152, %v7236
        %v7313 = vadd.f32 %v7153, %v7238
        %v7314 = vadd.f32 %v7154, %v7240
        %v7315 = vadd.f32 %v7155, %v7242
        %v7316 = vadd.f32 %v7156, %v7244
        %v7317 = vadd.f32 %v7157, %v7246
        %v7318 = vadd.f32 %v7158, %v7248
        %v7319 = vadd.f32 %v7159, %v7250
        %v7320 = vadd.f32 %v7160, %v7252
        %v7321 = vadd.f32 %v7161, %v7254
        %v7322 = vadd.f32 %v7162, %v7256
        %v7323 = vadd.f32 %v7163, %v7258
        %v7324 = vadd.f32 %v7164, %v7260
        %7325 = vrot.lane.b32.xlu0 %v6975, 64
        %v7326 = vpop.permute.xlu0 %7325
        %7327 = vrot.lane.b32.xlu0 %v6980, 64
        %v7328 = vpop.permute.xlu0 %7327
        %7329 = vrot.lane.b32.xlu0 %v6985, 64
        %v7330 = vpop.permute.xlu0 %7329
        %7331 = vrot.lane.b32.xlu0 %v6990, 64
        %v7332 = vpop.permute.xlu0 %7331
        %7333 = vrot.lane.b32.xlu0 %v6995, 64
        %v7334 = vpop.permute.xlu0 %7333
        %7335 = vrot.lane.b32.xlu0 %v7000, 64
        %v7336 = vpop.permute.xlu0 %7335
        %7337 = vrot.lane.b32.xlu0 %v7005, 64
        %v7338 = vpop.permute.xlu0 %7337
        %7339 = vrot.lane.b32.xlu0 %v7010, 64
        %v7340 = vpop.permute.xlu0 %7339
        %7341 = vrot.lane.b32.xlu0 %v7015, 64
        %v7342 = vpop.permute.xlu0 %7341
        %7343 = vrot.lane.b32.xlu0 %v7020, 64
        %v7344 = vpop.permute.xlu0 %7343
        %7345 = vrot.lane.b32.xlu0 %v7025, 64
        %v7346 = vpop.permute.xlu0 %7345
        %7347 = vrot.lane.b32.xlu0 %v7030, 64
        %v7348 = vpop.permute.xlu0 %7347
        %7349 = vrot.lane.b32.xlu0 %v7035, 64
        %v7350 = vpop.permute.xlu0 %7349
        %7351 = vrot.lane.b32.xlu0 %v7040, 64
        %v7352 = vpop.permute.xlu0 %7351
        %7353 = vrot.lane.b32.xlu0 %v7045, 64
        %v7354 = vpop.permute.xlu0 %7353
        %7355 = vrot.lane.b32.xlu0 %v7050, 64
        %v7356 = vpop.permute.xlu0 %7355
        %7357 = vrot.lane.b32.xlu0 %v7055, 64
        %v7358 = vpop.permute.xlu0 %7357
        %7359 = vrot.lane.b32.xlu0 %v7060, 64
        %v7360 = vpop.permute.xlu0 %7359
        %7361 = vrot.lane.b32.xlu0 %v7065, 64
        %v7362 = vpop.permute.xlu0 %7361
        %7363 = vrot.lane.b32.xlu0 %v7070, 64
        %v7364 = vpop.permute.xlu0 %7363
        %7365 = vrot.lane.b32.xlu0 %v7075, 64
        %v7366 = vpop.permute.xlu0 %7365
        %7367 = vrot.lane.b32.xlu0 %v7080, 64
        %v7368 = vpop.permute.xlu0 %7367
        %7369 = vrot.lane.b32.xlu0 %v7085, 64
        %v7370 = vpop.permute.xlu0 %7369
        %7371 = vrot.lane.b32.xlu0 %v7090, 64
        %v7372 = vpop.permute.xlu0 %7371
        %7373 = vrot.lane.b32.xlu0 %v7095, 64
        %v7374 = vpop.permute.xlu0 %7373
        %7375 = vrot.lane.b32.xlu0 %v7100, 64
        %v7376 = vpop.permute.xlu0 %7375
        %7377 = vrot.lane.b32.xlu0 %v7105, 64
        %v7378 = vpop.permute.xlu0 %7377
        %7379 = vrot.lane.b32.xlu0 %v7110, 64
        %v7380 = vpop.permute.xlu0 %7379
        %7381 = vrot.lane.b32.xlu0 %v7115, 64
        %v7382 = vpop.permute.xlu0 %7381
        %7383 = vrot.lane.b32.xlu0 %v7120, 64
        %v7384 = vpop.permute.xlu0 %7383
        %7385 = vrot.lane.b32.xlu0 %v7125, 64
        %v7386 = vpop.permute.xlu0 %7385
        %7387 = vrot.lane.b32.xlu0 %v7130, 64
        %v7388 = vpop.permute.xlu0 %7387
        %v7421 = vmul.f32 %v7330, %v485
        %v7422 = vmul.f32 %v7332, %v486
        %v7423 = vmul.f32 %v7334, %v487
        %v7424 = vmul.f32 %v7336, %v488
        %v7425 = vmul.f32 %v7338, %v489
        %v7426 = vmul.f32 %v7340, %v490
        %v7427 = vmul.f32 %v7342, %v491
        %v7428 = vmul.f32 %v7344, %v492
        %v7429 = vmul.f32 %v7346, %v493
        %v7430 = vmul.f32 %v7348, %v494
        %v7431 = vmul.f32 %v7350, %v495
        %v7432 = vmul.f32 %v7352, %v496
        %v7433 = vmul.f32 %v7354, %v497
        %v7434 = vmul.f32 %v7356, %v498
        %v7435 = vmul.f32 %v7358, %v499
        %v7436 = vmul.f32 %v7360, %v500
        %v7437 = vmul.f32 %v7362, %v501
        %v7438 = vmul.f32 %v7364, %v502
        %v7439 = vmul.f32 %v7366, %v503
        %v7440 = vmul.f32 %v7368, %v504
        %v7441 = vmul.f32 %v7370, %v505
        %v7442 = vmul.f32 %v7372, %v506
        %v7443 = vmul.f32 %v7374, %v507
        %v7444 = vmul.f32 %v7376, %v508
        %v7445 = vmul.f32 %v7378, %v509
        %v7446 = vmul.f32 %v7380, %v510
        %v7447 = vmul.f32 %v7382, %v511
        %v7448 = vmul.f32 %v7384, %v512
        %v7449 = vmul.f32 %v7386, %v513
        %v7450 = vmul.f32 %v7388, %v514
        %v7451 = vmul.f32 %v7326, %v515
        %v7452 = vmul.f32 %v7328, %v516
        %v7453 = vadd.f32 %v7293, %v7421
        %v7454 = vadd.f32 %v7294, %v7422
        %v7455 = vadd.f32 %v7295, %v7423
        %v7456 = vadd.f32 %v7296, %v7424
        %v7457 = vadd.f32 %v7297, %v7425
        %v7458 = vadd.f32 %v7298, %v7426
        %v7459 = vadd.f32 %v7299, %v7427
        %v7460 = vadd.f32 %v7300, %v7428
        %v7461 = vadd.f32 %v7301, %v7429
        %v7462 = vadd.f32 %v7302, %v7430
        %v7463 = vadd.f32 %v7303, %v7431
        %v7464 = vadd.f32 %v7304, %v7432
        %v7465 = vadd.f32 %v7305, %v7433
        %v7466 = vadd.f32 %v7306, %v7434
        %v7467 = vadd.f32 %v7307, %v7435
        %v7468 = vadd.f32 %v7308, %v7436
        %v7469 = vadd.f32 %v7309, %v7437
        %v7470 = vadd.f32 %v7310, %v7438
        %v7471 = vadd.f32 %v7311, %v7439
        %v7472 = vadd.f32 %v7312, %v7440
        %v7473 = vadd.f32 %v7313, %v7441
        %v7474 = vadd.f32 %v7314, %v7442
        %v7475 = vadd.f32 %v7315, %v7443
        %v7476 = vadd.f32 %v7316, %v7444
        %v7477 = vadd.f32 %v7317, %v7445
        %v7478 = vadd.f32 %v7318, %v7446
        %v7479 = vadd.f32 %v7319, %v7447
        %v7480 = vadd.f32 %v7320, %v7448
        %v7481 = vadd.f32 %v7321, %v7449
        %v7482 = vadd.f32 %v7322, %v7450
        %v7483 = vadd.f32 %v7323, %v7451
        %v7484 = vadd.f32 %v7324, %v7452
        %v7485 = vadd.f32 %v6775, %v7453
        %v7486 = vadd.f32 %v6776, %v7454
        %v7487 = vadd.f32 %v6777, %v7455
        %v7488 = vadd.f32 %v6778, %v7456
        %v7489 = vadd.f32 %v6779, %v7457
        %v7490 = vadd.f32 %v6780, %v7458
        %v7491 = vadd.f32 %v6781, %v7459
        %v7492 = vadd.f32 %v6782, %v7460
        %v7493 = vadd.f32 %v6783, %v7461
        %v7494 = vadd.f32 %v6784, %v7462
        %v7495 = vadd.f32 %v6785, %v7463
        %v7496 = vadd.f32 %v6786, %v7464
        %v7497 = vadd.f32 %v6787, %v7465
        %v7498 = vadd.f32 %v6788, %v7466
        %v7499 = vadd.f32 %v6789, %v7467
        %v7500 = vadd.f32 %v6790, %v7468
        %v7501 = vadd.f32 %v6791, %v7469
        %v7502 = vadd.f32 %v6792, %v7470
        %v7503 = vadd.f32 %v6793, %v7471
        %v7504 = vadd.f32 %v6794, %v7472
        %v7505 = vadd.f32 %v6795, %v7473
        %v7506 = vadd.f32 %v6796, %v7474
        %v7507 = vadd.f32 %v6797, %v7475
        %v7508 = vadd.f32 %v6798, %v7476
        %v7509 = vadd.f32 %v6799, %v7477
        %v7510 = vadd.f32 %v6800, %v7478
        %v7511 = vadd.f32 %v6801, %v7479
        %v7512 = vadd.f32 %v6802, %v7480
        %v7513 = vadd.f32 %v6803, %v7481
        %v7514 = vadd.f32 %v6804, %v7482
        %v7515 = vadd.f32 %v6805, %v7483
        %v7516 = vadd.f32 %v6806, %v7484
        %v7517 = vrot.slane %v5999, 1
        %v7518 = vrot.slane %v6000, 1
        %v7519 = vrot.slane %v6001, 1
        %v7520 = vrot.slane %v6002, 1
        %v7521 = vrot.slane %v6003, 1
        %v7522 = vrot.slane %v6004, 1
        %v7523 = vrot.slane %v6005, 1
        %v7524 = vrot.slane %v6006, 1
        %v7525 = vrot.slane %v6007, 1
        %v7526 = vrot.slane %v6008, 1
        %v7527 = vrot.slane %v6009, 1
        %v7528 = vrot.slane %v6010, 1
        %v7529 = vrot.slane %v6011, 1
        %v7530 = vrot.slane %v6012, 1
        %v7531 = vrot.slane %v6013, 1
        %v7532 = vrot.slane %v6014, 1
        %v7533 = vrot.slane %v6015, 1
        %v7534 = vrot.slane %v6016, 1
        %v7535 = vrot.slane %v6017, 1
        %v7536 = vrot.slane %v6018, 1
        %v7537 = vrot.slane %v6019, 1
        %v7538 = vrot.slane %v6020, 1
        %v7539 = vrot.slane %v6021, 1
        %v7540 = vrot.slane %v6022, 1
        %v7541 = vrot.slane %v6023, 1
        %v7542 = vrot.slane %v6024, 1
        %v7543 = vrot.slane %v6025, 1
        %v7544 = vrot.slane %v6026, 1
        %v7545 = vrot.slane %v6027, 1
        %v7546 = vrot.slane %v6028, 1
        %v7547 = vrot.slane %v6029, 1
        %v7548 = vrot.slane %v6030, 1
        %v7549 = vsel %vm2068, %v7547, %v7548
        %v7550 = vsel %vm2068, %v7546, %v7547
        %v7551 = vsel %vm2068, %v7545, %v7546
        %v7552 = vsel %vm2068, %v7544, %v7545
        %v7553 = vsel %vm2068, %v7543, %v7544
        %v7554 = vsel %vm2068, %v7542, %v7543
        %v7555 = vsel %vm2068, %v7541, %v7542
        %v7556 = vsel %vm2068, %v7540, %v7541
        %v7557 = vsel %vm2068, %v7539, %v7540
        %v7558 = vsel %vm2068, %v7538, %v7539
        %v7559 = vsel %vm2068, %v7537, %v7538
        %v7560 = vsel %vm2068, %v7536, %v7537
        %v7561 = vsel %vm2068, %v7535, %v7536
        %v7562 = vsel %vm2068, %v7534, %v7535
        %v7563 = vsel %vm2068, %v7533, %v7534
        %v7564 = vsel %vm2068, %v7532, %v7533
        %v7565 = vsel %vm2068, %v7531, %v7532
        %v7566 = vsel %vm2068, %v7530, %v7531
        %v7567 = vsel %vm2068, %v7529, %v7530
        %v7568 = vsel %vm2068, %v7528, %v7529
        %v7569 = vsel %vm2068, %v7527, %v7528
        %v7570 = vsel %vm2068, %v7526, %v7527
        %v7571 = vsel %vm2068, %v7525, %v7526
        %v7572 = vsel %vm2068, %v7524, %v7525
        %v7573 = vsel %vm2068, %v7523, %v7524
        %v7574 = vsel %vm2068, %v7522, %v7523
        %v7575 = vsel %vm2068, %v7521, %v7522
        %v7576 = vsel %vm2068, %v7520, %v7521
        %v7577 = vsel %vm2068, %v7519, %v7520
        %v7578 = vsel %vm2068, %v7518, %v7519
        %v7579 = vsel %vm2068, %v7517, %v7518
        %v7580 = vsel %vm2068, %v7548, %v7517
        %v7581 = vmul.f32 %v7579, %v357
        %v7582 = vmul.f32 %v7578, %v358
        %v7583 = vmul.f32 %v7577, %v359
        %v7584 = vmul.f32 %v7576, %v360
        %v7585 = vmul.f32 %v7575, %v361
        %v7586 = vmul.f32 %v7574, %v362
        %v7587 = vmul.f32 %v7573, %v363
        %v7588 = vmul.f32 %v7572, %v364
        %v7589 = vmul.f32 %v7571, %v365
        %v7590 = vmul.f32 %v7570, %v366
        %v7591 = vmul.f32 %v7569, %v367
        %v7592 = vmul.f32 %v7568, %v368
        %v7593 = vmul.f32 %v7567, %v369
        %v7594 = vmul.f32 %v7566, %v370
        %v7595 = vmul.f32 %v7565, %v371
        %v7596 = vmul.f32 %v7564, %v372
        %v7597 = vmul.f32 %v7563, %v373
        %v7598 = vmul.f32 %v7562, %v374
        %v7599 = vmul.f32 %v7561, %v375
        %v7600 = vmul.f32 %v7560, %v376
        %v7601 = vmul.f32 %v7559, %v377
        %v7602 = vmul.f32 %v7558, %v378
        %v7603 = vmul.f32 %v7557, %v379
        %v7604 = vmul.f32 %v7556, %v380
        %v7605 = vmul.f32 %v7555, %v381
        %v7606 = vmul.f32 %v7554, %v382
        %v7607 = vmul.f32 %v7553, %v383
        %v7608 = vmul.f32 %v7552, %v384
        %v7609 = vmul.f32 %v7551, %v385
        %v7610 = vmul.f32 %v7550, %v386
        %v7611 = vmul.f32 %v7549, %v387
        %v7612 = vmul.f32 %v7580, %v388
        %s7613 = scalar_lea.vmem %s2, 160
        %v7614 = vld [vmem:[%s7613] sm:$0xff]
        %v7615 = vld [vmem:[%s7613 + $0x8] sm:$0xff]
        %v7616 = vld [vmem:[%s7613 + $0x10] sm:$0xff]
        %v7617 = vld [vmem:[%s7613 + $0x18] sm:$0xff]
        %v7619 = vsel %vm3393, %v7581, 0
        %v7622 = vsel %vm3393, %v7582, 0
        %v7625 = vsel %vm3393, %v7583, 0
        %v7628 = vsel %vm3393, %v7584, 0
        %v7631 = vsel %vm3393, %v7585, 0
        %v7634 = vsel %vm3393, %v7586, 0
        %v7637 = vsel %vm3393, %v7587, 0
        %v7640 = vsel %vm3393, %v7588, 0
        %v7643 = vsel %vm3393, %v7589, 0
        %v7646 = vsel %vm3393, %v7590, 0
        %v7649 = vsel %vm3393, %v7591, 0
        %v7652 = vsel %vm3393, %v7592, 0
        %v7655 = vsel %vm3393, %v7593, 0
        %v7658 = vsel %vm3393, %v7594, 0
        %v7661 = vsel %vm3393, %v7595, 0
        %v7664 = vsel %vm3393, %v7596, 0
        %v7667 = vsel %vm3393, %v7597, 0
        %v7670 = vsel %vm3393, %v7598, 0
        %v7673 = vsel %vm3393, %v7599, 0
        %v7676 = vsel %vm3393, %v7600, 0
        %v7679 = vsel %vm3393, %v7601, 0
        %v7682 = vsel %vm3393, %v7602, 0
        %v7685 = vsel %vm3393, %v7603, 0
        %v7688 = vsel %vm3393, %v7604, 0
        %v7691 = vsel %vm3393, %v7605, 0
        %v7694 = vsel %vm3393, %v7606, 0
        %v7697 = vsel %vm3393, %v7607, 0
        %v7700 = vsel %vm3393, %v7608, 0
        %v7703 = vsel %vm3393, %v7609, 0
        %v7706 = vsel %vm3393, %v7610, 0
        %v7709 = vsel %vm3393, %v7611, 0
        %v7712 = vsel %vm3393, %v7612, 0
        %7714 = vmatprep.subr.mxu0 0.0
        %7715 = vmatpush1.msra.mxu0 %v7614
        %7716 = vmatprep.subr.mxu0 0.0
        %7717 = vmatpush1.msra.mxu0 %v7615
        %7718 = vmatprep.subr.mxu0 0.0
        %7719 = vmatpush1.msra.mxu0 %v7616
        %7720 = vmatprep.subr.mxu0 0.0
        %7721 = vmatpush1.msra.mxu0 %v7617
        %7722 = vmatprep.subr.mxu0 0.0
        %7723 = vmatpush1.msra.mxu0 0.0
        %7724 = vmatprep.subr.mxu0 0.0
        %7725 = vmatpush1.msra.mxu0 0.0
        %7726 = vmatprep.subr.mxu0 0.0
        %7727 = vmatpush1.msra.mxu0 0.0
        %7728 = vmatprep.subr.mxu0 0.0
        %7729 = vmatpush1.msra.mxu0 0.0
        %7730 = vmatprep.subr.mxu0 0.0
        %7731 = vmatpush1.msra.mxu0 0.0
        %7732 = vmatprep.subr.mxu0 0.0
        %7733 = vmatpush1.msra.mxu0 0.0
        %7734 = vmatprep.subr.mxu0 0.0
        %7735 = vmatpush1.msra.mxu0 0.0
        %7736 = vmatprep.subr.mxu0 0.0
        %7737 = vmatpush1.msra.mxu0 0.0
        %7738 = vmatprep.subr.mxu0 0.0
        %7739 = vmatpush1.msra.mxu0 0.0
        %7740 = vmatprep.subr.mxu0 0.0
        %7741 = vmatpush1.msra.mxu0 0.0
        %7742 = vmatprep.subr.mxu0 0.0
        %7743 = vmatpush1.msra.mxu0 0.0
        %7744 = vmatprep.subr.mxu0 0.0
        %7745 = vmatpush1.msra.mxu0 0.0
        %7746 = vmatprep.subr.mxu0 0.0
        %7747 = vmatpush1.msra.mxu0 0.0
        %7748 = vmatprep.subr.mxu0 0.0
        %7749 = vmatpush1.msra.mxu0 0.0
        %7750 = vmatprep.subr.mxu0 0.0
        %7751 = vmatpush1.msra.mxu0 0.0
        %7752 = vmatprep.subr.mxu0 0.0
        %7753 = vmatpush1.msra.mxu0 0.0
        %7754 = vmatprep.subr.mxu0 0.0
        %7755 = vmatpush1.msra.mxu0 0.0
        %7756 = vmatprep.subr.mxu0 0.0
        %7757 = vmatpush1.msra.mxu0 0.0
        %7758 = vmatprep.subr.mxu0 0.0
        %7759 = vmatpush1.msra.mxu0 0.0
        %7760 = vmatprep.subr.mxu0 0.0
        %7761 = vmatpush1.msra.mxu0 0.0
        %7762 = vmatprep.subr.mxu0 0.0
        %7763 = vmatpush1.msra.mxu0 0.0
        %7764 = vmatprep.subr.mxu0 0.0
        %7765 = vmatpush1.msra.mxu0 0.0
        %7766 = vmatprep.subr.mxu0 0.0
        %7767 = vmatpush1.msra.mxu0 0.0
        %7768 = vmatprep.subr.mxu0 0.0
        %7769 = vmatpush1.msra.mxu0 0.0
        %7770 = vmatprep.subr.mxu0 0.0
        %7771 = vmatpush1.msra.mxu0 0.0
        %7772 = vmatprep.subr.mxu0 0.0
        %7773 = vmatpush1.msra.mxu0 0.0
        %7774 = vmatprep.subr.mxu0 0.0
        %7775 = vmatpush1.msra.mxu0 0.0
        %7776 = vmatprep.subr.mxu0 0.0
        %7777 = vmatpush1.msra.mxu0 0.0
        %7778 = vmatprep.mubr.f32.mxu0 0.0
        %7779 = vmatmul.mubr.f32.gmra.mrb[0].mxu0 %v7619
        %v7780 = vpop.f32.mrb[0].mxu0
        %v7781 = vadd.f32 0.0, %v7780
        %v7782 = vpop.f32.mrb[0].mxu0
        %7783 = vmatprep.mubr.f32.mxu0 0.0
        %7784 = vmatmul.mubr.f32.gmra.mrb[0].mxu0 %v7622
        %v7785 = vpop.f32.mrb[0].mxu0
        %v7786 = vadd.f32 0.0, %v7785
        %v7787 = vpop.f32.mrb[0].mxu0
        %7788 = vmatprep.mubr.f32.mxu0 0.0
        %7789 = vmatmul.mubr.f32.gmra.mrb[0].mxu0 %v7625
        %v7790 = vpop.f32.mrb[0].mxu0
        %v7791 = vadd.f32 0.0, %v7790
        %v7792 = vpop.f32.mrb[0].mxu0
        %7793 = vmatprep.mubr.f32.mxu0 0.0
        %7794 = vmatmul.mubr.f32.gmra.mrb[0].mxu0 %v7628
        %v7795 = vpop.f32.mrb[0].mxu0
        %v7796 = vadd.f32 0.0, %v7795
        %v7797 = vpop.f32.mrb[0].mxu0
        %7798 = vmatprep.mubr.f32.mxu0 0.0
        %7799 = vmatmul.mubr.f32.gmra.mrb[0].mxu0 %v7631
        %v7800 = vpop.f32.mrb[0].mxu0
        %v7801 = vadd.f32 0.0, %v7800
        %v7802 = vpop.f32.mrb[0].mxu0
        %7803 = vmatprep.mubr.f32.mxu0 0.0
        %7804 = vmatmul.mubr.f32.gmra.mrb[0].mxu0 %v7634
        %v7805 = vpop.f32.mrb[0].mxu0
        %v7806 = vadd.f32 0.0, %v7805
        %v7807 = vpop.f32.mrb[0].mxu0
        %7808 = vmatprep.mubr.f32.mxu0 0.0
        %7809 = vmatmul.mubr.f32.gmra.mrb[0].mxu0 %v7637
        %v7810 = vpop.f32.mrb[0].mxu0
        %v7811 = vadd.f32 0.0, %v7810
        %v7812 = vpop.f32.mrb[0].mxu0
        %7813 = vmatprep.mubr.f32.mxu0 0.0
        %7814 = vmatmul.mubr.f32.gmra.mrb[0].mxu0 %v7640
        %v7815 = vpop.f32.mrb[0].mxu0
        %v7816 = vadd.f32 0.0, %v7815
        %v7817 = vpop.f32.mrb[0].mxu0
        %7818 = vmatprep.mubr.f32.mxu0 0.0
        %7819 = vmatmul.mubr.f32.gmra.mrb[0].mxu0 %v7643
        %v7820 = vpop.f32.mrb[0].mxu0
        %v7821 = vadd.f32 0.0, %v7820
        %v7822 = vpop.f32.mrb[0].mxu0
        %7823 = vmatprep.mubr.f32.mxu0 0.0
        %7824 = vmatmul.mubr.f32.gmra.mrb[0].mxu0 %v7646
        %v7825 = vpop.f32.mrb[0].mxu0
        %v7826 = vadd.f32 0.0, %v7825
        %v7827 = vpop.f32.mrb[0].mxu0
        %7828 = vmatprep.mubr.f32.mxu0 0.0
        %7829 = vmatmul.mubr.f32.gmra.mrb[0].mxu0 %v7649
        %v7830 = vpop.f32.mrb[0].mxu0
        %v7831 = vadd.f32 0.0, %v7830
        %v7832 = vpop.f32.mrb[0].mxu0
        %7833 = vmatprep.mubr.f32.mxu0 0.0
        %7834 = vmatmul.mubr.f32.gmra.mrb[0].mxu0 %v7652
        %v7835 = vpop.f32.mrb[0].mxu0
        %v7836 = vadd.f32 0.0, %v7835
        %v7837 = vpop.f32.mrb[0].mxu0
        %7838 = vmatprep.mubr.f32.mxu0 0.0
        %7839 = vmatmul.mubr.f32.gmra.mrb[0].mxu0 %v7655
        %v7840 = vpop.f32.mrb[0].mxu0
        %v7841 = vadd.f32 0.0, %v7840
        %v7842 = vpop.f32.mrb[0].mxu0
        %7843 = vmatprep.mubr.f32.mxu0 0.0
        %7844 = vmatmul.mubr.f32.gmra.mrb[0].mxu0 %v7658
        %v7845 = vpop.f32.mrb[0].mxu0
        %v7846 = vadd.f32 0.0, %v7845
        %v7847 = vpop.f32.mrb[0].mxu0
        %7848 = vmatprep.mubr.f32.mxu0 0.0
        %7849 = vmatmul.mubr.f32.gmra.mrb[0].mxu0 %v7661
        %v7850 = vpop.f32.mrb[0].mxu0
        %v7851 = vadd.f32 0.0, %v7850
        %v7852 = vpop.f32.mrb[0].mxu0
        %7853 = vmatprep.mubr.f32.mxu0 0.0
        %7854 = vmatmul.mubr.f32.gmra.mrb[0].mxu0 %v7664
        %v7855 = vpop.f32.mrb[0].mxu0
        %v7856 = vadd.f32 0.0, %v7855
        %v7857 = vpop.f32.mrb[0].mxu0
        %7858 = vmatprep.mubr.f32.mxu0 0.0
        %7859 = vmatmul.mubr.f32.gmra.mrb[0].mxu0 %v7667
        %v7860 = vpop.f32.mrb[0].mxu0
        %v7861 = vadd.f32 0.0, %v7860
        %v7862 = vpop.f32.mrb[0].mxu0
        %7863 = vmatprep.mubr.f32.mxu0 0.0
        %7864 = vmatmul.mubr.f32.gmra.mrb[0].mxu0 %v7670
        %v7865 = vpop.f32.mrb[0].mxu0
        %v7866 = vadd.f32 0.0, %v7865
        %v7867 = vpop.f32.mrb[0].mxu0
        %7868 = vmatprep.mubr.f32.mxu0 0.0
        %7869 = vmatmul.mubr.f32.gmra.mrb[0].mxu0 %v7673
        %v7870 = vpop.f32.mrb[0].mxu0
        %v7871 = vadd.f32 0.0, %v7870
        %v7872 = vpop.f32.mrb[0].mxu0
        %7873 = vmatprep.mubr.f32.mxu0 0.0
        %7874 = vmatmul.mubr.f32.gmra.mrb[0].mxu0 %v7676
        %v7875 = vpop.f32.mrb[0].mxu0
        %v7876 = vadd.f32 0.0, %v7875
        %v7877 = vpop.f32.mrb[0].mxu0
        %7878 = vmatprep.mubr.f32.mxu0 0.0
        %7879 = vmatmul.mubr.f32.gmra.mrb[0].mxu0 %v7679
        %v7880 = vpop.f32.mrb[0].mxu0
        %v7881 = vadd.f32 0.0, %v7880
        %v7882 = vpop.f32.mrb[0].mxu0
        %7883 = vmatprep.mubr.f32.mxu0 0.0
        %7884 = vmatmul.mubr.f32.gmra.mrb[0].mxu0 %v7682
        %v7885 = vpop.f32.mrb[0].mxu0
        %v7886 = vadd.f32 0.0, %v7885
        %v7887 = vpop.f32.mrb[0].mxu0
        %7888 = vmatprep.mubr.f32.mxu0 0.0
        %7889 = vmatmul.mubr.f32.gmra.mrb[0].mxu0 %v7685
        %v7890 = vpop.f32.mrb[0].mxu0
        %v7891 = vadd.f32 0.0, %v7890
        %v7892 = vpop.f32.mrb[0].mxu0
        %7893 = vmatprep.mubr.f32.mxu0 0.0
        %7894 = vmatmul.mubr.f32.gmra.mrb[0].mxu0 %v7688
        %v7895 = vpop.f32.mrb[0].mxu0
        %v7896 = vadd.f32 0.0, %v7895
        %v7897 = vpop.f32.mrb[0].mxu0
        %7898 = vmatprep.mubr.f32.mxu0 0.0
        %7899 = vmatmul.mubr.f32.gmra.mrb[0].mxu0 %v7691
        %v7900 = vpop.f32.mrb[0].mxu0
        %v7901 = vadd.f32 0.0, %v7900
        %v7902 = vpop.f32.mrb[0].mxu0
        %7903 = vmatprep.mubr.f32.mxu0 0.0
        %7904 = vmatmul.mubr.f32.gmra.mrb[0].mxu0 %v7694
        %v7905 = vpop.f32.mrb[0].mxu0
        %v7906 = vadd.f32 0.0, %v7905
        %v7907 = vpop.f32.mrb[0].mxu0
        %7908 = vmatprep.mubr.f32.mxu0 0.0
        %7909 = vmatmul.mubr.f32.gmra.mrb[0].mxu0 %v7697
        %v7910 = vpop.f32.mrb[0].mxu0
        %v7911 = vadd.f32 0.0, %v7910
        %v7912 = vpop.f32.mrb[0].mxu0
        %7913 = vmatprep.mubr.f32.mxu0 0.0
        %7914 = vmatmul.mubr.f32.gmra.mrb[0].mxu0 %v7700
        %v7915 = vpop.f32.mrb[0].mxu0
        %v7916 = vadd.f32 0.0, %v7915
        %v7917 = vpop.f32.mrb[0].mxu0
        %7918 = vmatprep.mubr.f32.mxu0 0.0
        %7919 = vmatmul.mubr.f32.gmra.mrb[0].mxu0 %v7703
        %v7920 = vpop.f32.mrb[0].mxu0
        %v7921 = vadd.f32 0.0, %v7920
        %v7922 = vpop.f32.mrb[0].mxu0
        %7923 = vmatprep.mubr.f32.mxu0 0.0
        %7924 = vmatmul.mubr.f32.gmra.mrb[0].mxu0 %v7706
        %v7925 = vpop.f32.mrb[0].mxu0
        %v7926 = vadd.f32 0.0, %v7925
        %v7927 = vpop.f32.mrb[0].mxu0
        %7928 = vmatprep.mubr.f32.mxu0 0.0
        %7929 = vmatmul.mubr.f32.gmra.mrb[0].mxu0 %v7709
        %v7930 = vpop.f32.mrb[0].mxu0
        %v7931 = vadd.f32 0.0, %v7930
        %v7932 = vpop.f32.mrb[0].mxu0
        %7933 = vmatprep.mubr.f32.mxu0 0.0
        %7934 = vmatmul.mubr.f32.gmra.mrb[0].mxu0 %v7712
        %v7935 = vpop.f32.mrb[0].mxu0
        %v7936 = vadd.f32 0.0, %v7935
        %v7937 = vpop.f32.mrb[0].mxu0
        %7938 = vdwg.mxu0
        %v7939 = vmul.f32 %v7931, %v421
        %v7940 = vmul.f32 %v7936, %v422
        %v7941 = vmul.f32 %v7781, %v423
        %v7942 = vmul.f32 %v7786, %v424
        %v7943 = vmul.f32 %v7791, %v425
        %v7944 = vmul.f32 %v7796, %v426
        %v7945 = vmul.f32 %v7801, %v427
        %v7946 = vmul.f32 %v7806, %v428
        %v7947 = vmul.f32 %v7811, %v429
        %v7948 = vmul.f32 %v7816, %v430
        %v7949 = vmul.f32 %v7821, %v431
        %v7950 = vmul.f32 %v7826, %v432
        %v7951 = vmul.f32 %v7831, %v433
        %v7952 = vmul.f32 %v7836, %v434
        %v7953 = vmul.f32 %v7841, %v435
        %v7954 = vmul.f32 %v7846, %v436
        %v7955 = vmul.f32 %v7851, %v437
        %v7956 = vmul.f32 %v7856, %v438
        %v7957 = vmul.f32 %v7861, %v439
        %v7958 = vmul.f32 %v7866, %v440
        %v7959 = vmul.f32 %v7871, %v441
        %v7960 = vmul.f32 %v7876, %v442
        %v7961 = vmul.f32 %v7881, %v443
        %v7962 = vmul.f32 %v7886, %v444
        %v7963 = vmul.f32 %v7891, %v445
        %v7964 = vmul.f32 %v7896, %v446
        %v7965 = vmul.f32 %v7901, %v447
        %v7966 = vmul.f32 %v7906, %v448
        %v7967 = vmul.f32 %v7911, %v449
        %v7968 = vmul.f32 %v7916, %v450
        %v7969 = vmul.f32 %v7921, %v451
        %v7970 = vmul.f32 %v7926, %v452
        %8003 = vrot.lane.b32.xlu0 %v7781, 96
        %v8004 = vpop.permute.xlu0 %8003
        %8005 = vrot.lane.b32.xlu0 %v7786, 96
        %v8006 = vpop.permute.xlu0 %8005
        %8007 = vrot.lane.b32.xlu0 %v7791, 96
        %v8008 = vpop.permute.xlu0 %8007
        %8009 = vrot.lane.b32.xlu0 %v7796, 96
        %v8010 = vpop.permute.xlu0 %8009
        %8011 = vrot.lane.b32.xlu0 %v7801, 96
        %v8012 = vpop.permute.xlu0 %8011
        %8013 = vrot.lane.b32.xlu0 %v7806, 96
        %v8014 = vpop.permute.xlu0 %8013
        %8015 = vrot.lane.b32.xlu0 %v7811, 96
        %v8016 = vpop.permute.xlu0 %8015
        %8017 = vrot.lane.b32.xlu0 %v7816, 96
        %v8018 = vpop.permute.xlu0 %8017
        %8019 = vrot.lane.b32.xlu0 %v7821, 96
        %v8020 = vpop.permute.xlu0 %8019
        %8021 = vrot.lane.b32.xlu0 %v7826, 96
        %v8022 = vpop.permute.xlu0 %8021
        %8023 = vrot.lane.b32.xlu0 %v7831, 96
        %v8024 = vpop.permute.xlu0 %8023
        %8025 = vrot.lane.b32.xlu0 %v7836, 96
        %v8026 = vpop.permute.xlu0 %8025
        %8027 = vrot.lane.b32.xlu0 %v7841, 96
        %v8028 = vpop.permute.xlu0 %8027
        %8029 = vrot.lane.b32.xlu0 %v7846, 96
        %v8030 = vpop.permute.xlu0 %8029
        %8031 = vrot.lane.b32.xlu0 %v7851, 96
        %v8032 = vpop.permute.xlu0 %8031
        %8033 = vrot.lane.b32.xlu0 %v7856, 96
        %v8034 = vpop.permute.xlu0 %8033
        %8035 = vrot.lane.b32.xlu0 %v7861, 96
        %v8036 = vpop.permute.xlu0 %8035
        %8037 = vrot.lane.b32.xlu0 %v7866, 96
        %v8038 = vpop.permute.xlu0 %8037
        %8039 = vrot.lane.b32.xlu0 %v7871, 96
        %v8040 = vpop.permute.xlu0 %8039
        %8041 = vrot.lane.b32.xlu0 %v7876, 96
        %v8042 = vpop.permute.xlu0 %8041
        %8043 = vrot.lane.b32.xlu0 %v7881, 96
        %v8044 = vpop.permute.xlu0 %8043
        %8045 = vrot.lane.b32.xlu0 %v7886, 96
        %v8046 = vpop.permute.xlu0 %8045
        %8047 = vrot.lane.b32.xlu0 %v7891, 96
        %v8048 = vpop.permute.xlu0 %8047
        %8049 = vrot.lane.b32.xlu0 %v7896, 96
        %v8050 = vpop.permute.xlu0 %8049
        %8051 = vrot.lane.b32.xlu0 %v7901, 96
        %v8052 = vpop.permute.xlu0 %8051
        %8053 = vrot.lane.b32.xlu0 %v7906, 96
        %v8054 = vpop.permute.xlu0 %8053
        %8055 = vrot.lane.b32.xlu0 %v7911, 96
        %v8056 = vpop.permute.xlu0 %8055
        %8057 = vrot.lane.b32.xlu0 %v7916, 96
        %v8058 = vpop.permute.xlu0 %8057
        %8059 = vrot.lane.b32.xlu0 %v7921, 96
        %v8060 = vpop.permute.xlu0 %8059
        %8061 = vrot.lane.b32.xlu0 %v7926, 96
        %v8062 = vpop.permute.xlu0 %8061
        %8063 = vrot.lane.b32.xlu0 %v7931, 96
        %v8064 = vpop.permute.xlu0 %8063
        %8065 = vrot.lane.b32.xlu0 %v7936, 96
        %v8066 = vpop.permute.xlu0 %8065
        %v8099 = vadd.f32 %v7939, %v8004
        %v8100 = vadd.f32 %v7940, %v8006
        %v8101 = vadd.f32 %v7941, %v8008
        %v8102 = vadd.f32 %v7942, %v8010
        %v8103 = vadd.f32 %v7943, %v8012
        %v8104 = vadd.f32 %v7944, %v8014
        %v8105 = vadd.f32 %v7945, %v8016
        %v8106 = vadd.f32 %v7946, %v8018
        %v8107 = vadd.f32 %v7947, %v8020
        %v8108 = vadd.f32 %v7948, %v8022
        %v8109 = vadd.f32 %v7949, %v8024
        %v8110 = vadd.f32 %v7950, %v8026
        %v8111 = vadd.f32 %v7951, %v8028
        %v8112 = vadd.f32 %v7952, %v8030
        %v8113 = vadd.f32 %v7953, %v8032
        %v8114 = vadd.f32 %v7954, %v8034
        %v8115 = vadd.f32 %v7955, %v8036
        %v8116 = vadd.f32 %v7956, %v8038
        %v8117 = vadd.f32 %v7957, %v8040
        %v8118 = vadd.f32 %v7958, %v8042
        %v8119 = vadd.f32 %v7959, %v8044
        %v8120 = vadd.f32 %v7960, %v8046
        %v8121 = vadd.f32 %v7961, %v8048
        %v8122 = vadd.f32 %v7962, %v8050
        %v8123 = vadd.f32 %v7963, %v8052
        %v8124 = vadd.f32 %v7964, %v8054
        %v8125 = vadd.f32 %v7965, %v8056
        %v8126 = vadd.f32 %v7966, %v8058
        %v8127 = vadd.f32 %v7967, %v8060
        %v8128 = vadd.f32 %v7968, %v8062
        %v8129 = vadd.f32 %v7969, %v8064
        %v8130 = vadd.f32 %v7970, %v8066
        %8131 = vrot.lane.b32.xlu0 %v7781, 64
        %v8132 = vpop.permute.xlu0 %8131
        %8133 = vrot.lane.b32.xlu0 %v7786, 64
        %v8134 = vpop.permute.xlu0 %8133
        %8135 = vrot.lane.b32.xlu0 %v7791, 64
        %v8136 = vpop.permute.xlu0 %8135
        %8137 = vrot.lane.b32.xlu0 %v7796, 64
        %v8138 = vpop.permute.xlu0 %8137
        %8139 = vrot.lane.b32.xlu0 %v7801, 64
        %v8140 = vpop.permute.xlu0 %8139
        %8141 = vrot.lane.b32.xlu0 %v7806, 64
        %v8142 = vpop.permute.xlu0 %8141
        %8143 = vrot.lane.b32.xlu0 %v7811, 64
        %v8144 = vpop.permute.xlu0 %8143
        %8145 = vrot.lane.b32.xlu0 %v7816, 64
        %v8146 = vpop.permute.xlu0 %8145
        %8147 = vrot.lane.b32.xlu0 %v7821, 64
        %v8148 = vpop.permute.xlu0 %8147
        %8149 = vrot.lane.b32.xlu0 %v7826, 64
        %v8150 = vpop.permute.xlu0 %8149
        %8151 = vrot.lane.b32.xlu0 %v7831, 64
        %v8152 = vpop.permute.xlu0 %8151
        %8153 = vrot.lane.b32.xlu0 %v7836, 64
        %v8154 = vpop.permute.xlu0 %8153
        %8155 = vrot.lane.b32.xlu0 %v7841, 64
        %v8156 = vpop.permute.xlu0 %8155
        %8157 = vrot.lane.b32.xlu0 %v7846, 64
        %v8158 = vpop.permute.xlu0 %8157
        %8159 = vrot.lane.b32.xlu0 %v7851, 64
        %v8160 = vpop.permute.xlu0 %8159
        %8161 = vrot.lane.b32.xlu0 %v7856, 64
        %v8162 = vpop.permute.xlu0 %8161
        %8163 = vrot.lane.b32.xlu0 %v7861, 64
        %v8164 = vpop.permute.xlu0 %8163
        %8165 = vrot.lane.b32.xlu0 %v7866, 64
        %v8166 = vpop.permute.xlu0 %8165
        %8167 = vrot.lane.b32.xlu0 %v7871, 64
        %v8168 = vpop.permute.xlu0 %8167
        %8169 = vrot.lane.b32.xlu0 %v7876, 64
        %v8170 = vpop.permute.xlu0 %8169
        %8171 = vrot.lane.b32.xlu0 %v7881, 64
        %v8172 = vpop.permute.xlu0 %8171
        %8173 = vrot.lane.b32.xlu0 %v7886, 64
        %v8174 = vpop.permute.xlu0 %8173
        %8175 = vrot.lane.b32.xlu0 %v7891, 64
        %v8176 = vpop.permute.xlu0 %8175
        %8177 = vrot.lane.b32.xlu0 %v7896, 64
        %v8178 = vpop.permute.xlu0 %8177
        %8179 = vrot.lane.b32.xlu0 %v7901, 64
        %v8180 = vpop.permute.xlu0 %8179
        %8181 = vrot.lane.b32.xlu0 %v7906, 64
        %v8182 = vpop.permute.xlu0 %8181
        %8183 = vrot.lane.b32.xlu0 %v7911, 64
        %v8184 = vpop.permute.xlu0 %8183
        %8185 = vrot.lane.b32.xlu0 %v7916, 64
        %v8186 = vpop.permute.xlu0 %8185
        %8187 = vrot.lane.b32.xlu0 %v7921, 64
        %v8188 = vpop.permute.xlu0 %8187
        %8189 = vrot.lane.b32.xlu0 %v7926, 64
        %v8190 = vpop.permute.xlu0 %8189
        %8191 = vrot.lane.b32.xlu0 %v7931, 64
        %v8192 = vpop.permute.xlu0 %8191
        %8193 = vrot.lane.b32.xlu0 %v7936, 64
        %v8194 = vpop.permute.xlu0 %8193
        %v8227 = vmul.f32 %v8136, %v485
        %v8228 = vmul.f32 %v8138, %v486
        %v8229 = vmul.f32 %v8140, %v487
        %v8230 = vmul.f32 %v8142, %v488
        %v8231 = vmul.f32 %v8144, %v489
        %v8232 = vmul.f32 %v8146, %v490
        %v8233 = vmul.f32 %v8148, %v491
        %v8234 = vmul.f32 %v8150, %v492
        %v8235 = vmul.f32 %v8152, %v493
        %v8236 = vmul.f32 %v8154, %v494
        %v8237 = vmul.f32 %v8156, %v495
        %v8238 = vmul.f32 %v8158, %v496
        %v8239 = vmul.f32 %v8160, %v497
        %v8240 = vmul.f32 %v8162, %v498
        %v8241 = vmul.f32 %v8164, %v499
        %v8242 = vmul.f32 %v8166, %v500
        %v8243 = vmul.f32 %v8168, %v501
        %v8244 = vmul.f32 %v8170, %v502
        %v8245 = vmul.f32 %v8172, %v503
        %v8246 = vmul.f32 %v8174, %v504
        %v8247 = vmul.f32 %v8176, %v505
        %v8248 = vmul.f32 %v8178, %v506
        %v8249 = vmul.f32 %v8180, %v507
        %v8250 = vmul.f32 %v8182, %v508
        %v8251 = vmul.f32 %v8184, %v509
        %v8252 = vmul.f32 %v8186, %v510
        %v8253 = vmul.f32 %v8188, %v511
        %v8254 = vmul.f32 %v8190, %v512
        %v8255 = vmul.f32 %v8192, %v513
        %v8256 = vmul.f32 %v8194, %v514
        %v8257 = vmul.f32 %v8132, %v515
        %v8258 = vmul.f32 %v8134, %v516
        %v8259 = vadd.f32 %v8099, %v8227
        %v8260 = vadd.f32 %v8100, %v8228
        %v8261 = vadd.f32 %v8101, %v8229
        %v8262 = vadd.f32 %v8102, %v8230
        %v8263 = vadd.f32 %v8103, %v8231
        %v8264 = vadd.f32 %v8104, %v8232
        %v8265 = vadd.f32 %v8105, %v8233
        %v8266 = vadd.f32 %v8106, %v8234
        %v8267 = vadd.f32 %v8107, %v8235
        %v8268 = vadd.f32 %v8108, %v8236
        %v8269 = vadd.f32 %v8109, %v8237
        %v8270 = vadd.f32 %v8110, %v8238
        %v8271 = vadd.f32 %v8111, %v8239
        %v8272 = vadd.f32 %v8112, %v8240
        %v8273 = vadd.f32 %v8113, %v8241
        %v8274 = vadd.f32 %v8114, %v8242
        %v8275 = vadd.f32 %v8115, %v8243
        %v8276 = vadd.f32 %v8116, %v8244
        %v8277 = vadd.f32 %v8117, %v8245
        %v8278 = vadd.f32 %v8118, %v8246
        %v8279 = vadd.f32 %v8119, %v8247
        %v8280 = vadd.f32 %v8120, %v8248
        %v8281 = vadd.f32 %v8121, %v8249
        %v8282 = vadd.f32 %v8122, %v8250
        %v8283 = vadd.f32 %v8123, %v8251
        %v8284 = vadd.f32 %v8124, %v8252
        %v8285 = vadd.f32 %v8125, %v8253
        %v8286 = vadd.f32 %v8126, %v8254
        %v8287 = vadd.f32 %v8127, %v8255
        %v8288 = vadd.f32 %v8128, %v8256
        %v8289 = vadd.f32 %v8129, %v8257
        %v8290 = vadd.f32 %v8130, %v8258
        %v8291 = vadd.f32 %v7485, %v8259
        %v8292 = vadd.f32 %v7486, %v8260
        %v8293 = vadd.f32 %v7487, %v8261
        %v8294 = vadd.f32 %v7488, %v8262
        %v8295 = vadd.f32 %v7489, %v8263
        %v8296 = vadd.f32 %v7490, %v8264
        %v8297 = vadd.f32 %v7491, %v8265
        %v8298 = vadd.f32 %v7492, %v8266
        %v8299 = vadd.f32 %v7493, %v8267
        %v8300 = vadd.f32 %v7494, %v8268
        %v8301 = vadd.f32 %v7495, %v8269
        %v8302 = vadd.f32 %v7496, %v8270
        %v8303 = vadd.f32 %v7497, %v8271
        %v8304 = vadd.f32 %v7498, %v8272
        %v8305 = vadd.f32 %v7499, %v8273
        %v8306 = vadd.f32 %v7500, %v8274
        %v8307 = vadd.f32 %v7501, %v8275
        %v8308 = vadd.f32 %v7502, %v8276
        %v8309 = vadd.f32 %v7503, %v8277
        %v8310 = vadd.f32 %v7504, %v8278
        %v8311 = vadd.f32 %v7505, %v8279
        %v8312 = vadd.f32 %v7506, %v8280
        %v8313 = vadd.f32 %v7507, %v8281
        %v8314 = vadd.f32 %v7508, %v8282
        %v8315 = vadd.f32 %v7509, %v8283
        %v8316 = vadd.f32 %v7510, %v8284
        %v8317 = vadd.f32 %v7511, %v8285
        %v8318 = vadd.f32 %v7512, %v8286
        %v8319 = vadd.f32 %v7513, %v8287
        %v8320 = vadd.f32 %v7514, %v8288
        %v8321 = vadd.f32 %v7515, %v8289
        %v8322 = vadd.f32 %v7516, %v8290
        %v8323 = vmax.f32 %v8291, 0.0
        %v8324 = vmax.f32 %v8292, 0.0
        %v8325 = vmax.f32 %v8293, 0.0
        %v8326 = vmax.f32 %v8294, 0.0
        %v8327 = vmax.f32 %v8295, 0.0
        %v8328 = vmax.f32 %v8296, 0.0
        %v8329 = vmax.f32 %v8297, 0.0
        %v8330 = vmax.f32 %v8298, 0.0
        %v8331 = vmax.f32 %v8299, 0.0
        %v8332 = vmax.f32 %v8300, 0.0
        %v8333 = vmax.f32 %v8301, 0.0
        %v8334 = vmax.f32 %v8302, 0.0
        %v8335 = vmax.f32 %v8303, 0.0
        %v8336 = vmax.f32 %v8304, 0.0
        %v8337 = vmax.f32 %v8305, 0.0
        %v8338 = vmax.f32 %v8306, 0.0
        %v8339 = vmax.f32 %v8307, 0.0
        %v8340 = vmax.f32 %v8308, 0.0
        %v8341 = vmax.f32 %v8309, 0.0
        %v8342 = vmax.f32 %v8310, 0.0
        %v8343 = vmax.f32 %v8311, 0.0
        %v8344 = vmax.f32 %v8312, 0.0
        %v8345 = vmax.f32 %v8313, 0.0
        %v8346 = vmax.f32 %v8314, 0.0
        %v8347 = vmax.f32 %v8315, 0.0
        %v8348 = vmax.f32 %v8316, 0.0
        %v8349 = vmax.f32 %v8317, 0.0
        %v8350 = vmax.f32 %v8318, 0.0
        %v8351 = vmax.f32 %v8319, 0.0
        %v8352 = vmax.f32 %v8320, 0.0
        %v8353 = vmax.f32 %v8321, 0.0
        %v8354 = vmax.f32 %v8322, 0.0
        %v8355 = vlaneseq
        %v8356 = vshrl.u32 %v8355, 7
        %v8357 = vsub.s32 0, %v8356
        %v8358 = vrot.slane %v6032, %v8357
        %v8359 = vmul.f32 %v8323, %v8358
        %v8360 = vmul.f32 %v8324, %v8358
        %v8361 = vmul.f32 %v8325, %v8358
        %v8362 = vmul.f32 %v8326, %v8358
        %v8363 = vmul.f32 %v8327, %v8358
        %v8364 = vmul.f32 %v8328, %v8358
        %v8365 = vmul.f32 %v8329, %v8358
        %v8366 = vmul.f32 %v8330, %v8358
        %v8367 = vmul.f32 %v8331, %v8358
        %v8368 = vmul.f32 %v8332, %v8358
        %v8369 = vmul.f32 %v8333, %v8358
        %v8370 = vmul.f32 %v8334, %v8358
        %v8371 = vmul.f32 %v8335, %v8358
        %v8372 = vmul.f32 %v8336, %v8358
        %v8373 = vmul.f32 %v8337, %v8358
        %v8374 = vmul.f32 %v8338, %v8358
        %v8375 = vmul.f32 %v8339, %v8358
        %v8376 = vmul.f32 %v8340, %v8358
        %v8377 = vmul.f32 %v8341, %v8358
        %v8378 = vmul.f32 %v8342, %v8358
        %v8379 = vmul.f32 %v8343, %v8358
        %v8380 = vmul.f32 %v8344, %v8358
        %v8381 = vmul.f32 %v8345, %v8358
        %v8382 = vmul.f32 %v8346, %v8358
        %v8383 = vmul.f32 %v8347, %v8358
        %v8384 = vmul.f32 %v8348, %v8358
        %v8385 = vmul.f32 %v8349, %v8358
        %v8386 = vmul.f32 %v8350, %v8358
        %v8387 = vmul.f32 %v8351, %v8358
        %v8388 = vmul.f32 %v8352, %v8358
        %v8389 = vmul.f32 %v8353, %v8358
        %v8390 = vmul.f32 %v8354, %v8358
        %v8391 = vlaneseq
        %v8392 = vshrl.u32 %v8391, 7
        %v8393 = vsub.s32 1, %v8392
        %v8394 = vrot.slane %v6032, %v8393
        %v8395 = vadd.f32 %v8359, %v8394
        %v8396 = vadd.f32 %v8360, %v8394
        %v8397 = vadd.f32 %v8361, %v8394
        %v8398 = vadd.f32 %v8362, %v8394
        %v8399 = vadd.f32 %v8363, %v8394
        %v8400 = vadd.f32 %v8364, %v8394
        %v8401 = vadd.f32 %v8365, %v8394
        %v8402 = vadd.f32 %v8366, %v8394
        %v8403 = vadd.f32 %v8367, %v8394
        %v8404 = vadd.f32 %v8368, %v8394
        %v8405 = vadd.f32 %v8369, %v8394
        %v8406 = vadd.f32 %v8370, %v8394
        %v8407 = vadd.f32 %v8371, %v8394
        %v8408 = vadd.f32 %v8372, %v8394
        %v8409 = vadd.f32 %v8373, %v8394
        %v8410 = vadd.f32 %v8374, %v8394
        %v8411 = vadd.f32 %v8375, %v8394
        %v8412 = vadd.f32 %v8376, %v8394
        %v8413 = vadd.f32 %v8377, %v8394
        %v8414 = vadd.f32 %v8378, %v8394
        %v8415 = vadd.f32 %v8379, %v8394
        %v8416 = vadd.f32 %v8380, %v8394
        %v8417 = vadd.f32 %v8381, %v8394
        %v8418 = vadd.f32 %v8382, %v8394
        %v8419 = vadd.f32 %v8383, %v8394
        %v8420 = vadd.f32 %v8384, %v8394
        %v8421 = vadd.f32 %v8385, %v8394
        %v8422 = vadd.f32 %v8386, %v8394
        %v8423 = vadd.f32 %v8387, %v8394
        %v8424 = vadd.f32 %v8388, %v8394
        %v8425 = vadd.f32 %v8389, %v8394
        %v8426 = vadd.f32 %v8390, %v8394
        %v8427 = vlaneseq
        %v8428 = vshrl.u32 %v8427, 7
        %v8429 = vsub.s32 2, %v8428
        %v8430 = vrot.slane %v6032, %v8429
        %8432 = vrot.lane.b32.xlu0 %v8430, 96
        %v8433 = vpop.permute.xlu0 %8432
        %v8435 = vmul.f32 %v6975, %v8433
        %v8436 = vmul.f32 %v6980, %v8433
        %v8437 = vmul.f32 %v6985, %v8433
        %v8438 = vmul.f32 %v6990, %v8433
        %v8439 = vmul.f32 %v6995, %v8433
        %v8440 = vmul.f32 %v7000, %v8433
        %v8441 = vmul.f32 %v7005, %v8433
        %v8442 = vmul.f32 %v7010, %v8433
        %v8443 = vmul.f32 %v7015, %v8433
        %v8444 = vmul.f32 %v7020, %v8433
        %v8445 = vmul.f32 %v7025, %v8433
        %v8446 = vmul.f32 %v7030, %v8433
        %v8447 = vmul.f32 %v7035, %v8433
        %v8448 = vmul.f32 %v7040, %v8433
        %v8449 = vmul.f32 %v7045, %v8433
        %v8450 = vmul.f32 %v7050, %v8433
        %v8451 = vmul.f32 %v7055, %v8433
        %v8452 = vmul.f32 %v7060, %v8433
        %v8453 = vmul.f32 %v7065, %v8433
        %v8454 = vmul.f32 %v7070, %v8433
        %v8455 = vmul.f32 %v7075, %v8433
        %v8456 = vmul.f32 %v7080, %v8433
        %v8457 = vmul.f32 %v7085, %v8433
        %v8458 = vmul.f32 %v7090, %v8433
        %v8459 = vmul.f32 %v7095, %v8433
        %v8460 = vmul.f32 %v7100, %v8433
        %v8461 = vmul.f32 %v7105, %v8433
        %v8462 = vmul.f32 %v7110, %v8433
        %v8463 = vmul.f32 %v7115, %v8433
        %v8464 = vmul.f32 %v7120, %v8433
        %v8465 = vmul.f32 %v7125, %v8433
        %v8466 = vmul.f32 %v7130, %v8433
        %v8467 = vlaneseq
        %v8468 = vshrl.u32 %v8467, 7
        %v8469 = vsub.s32 3, %v8468
        %v8470 = vrot.slane %v6032, %v8469
        %8472 = vrot.lane.b32.xlu0 %v8470, 96
        %v8473 = vpop.permute.xlu0 %8472
        %v8475 = vadd.f32 %v8435, %v8473
        %v8476 = vadd.f32 %v8436, %v8473
        %v8477 = vadd.f32 %v8437, %v8473
        %v8478 = vadd.f32 %v8438, %v8473
        %v8479 = vadd.f32 %v8439, %v8473
        %v8480 = vadd.f32 %v8440, %v8473
        %v8481 = vadd.f32 %v8441, %v8473
        %v8482 = vadd.f32 %v8442, %v8473
        %v8483 = vadd.f32 %v8443, %v8473
        %v8484 = vadd.f32 %v8444, %v8473
        %v8485 = vadd.f32 %v8445, %v8473
        %v8486 = vadd.f32 %v8446, %v8473
        %v8487 = vadd.f32 %v8447, %v8473
        %v8488 = vadd.f32 %v8448, %v8473
        %v8489 = vadd.f32 %v8449, %v8473
        %v8490 = vadd.f32 %v8450, %v8473
        %v8491 = vadd.f32 %v8451, %v8473
        %v8492 = vadd.f32 %v8452, %v8473
        %v8493 = vadd.f32 %v8453, %v8473
        %v8494 = vadd.f32 %v8454, %v8473
        %v8495 = vadd.f32 %v8455, %v8473
        %v8496 = vadd.f32 %v8456, %v8473
        %v8497 = vadd.f32 %v8457, %v8473
        %v8498 = vadd.f32 %v8458, %v8473
        %v8499 = vadd.f32 %v8459, %v8473
        %v8500 = vadd.f32 %v8460, %v8473
        %v8501 = vadd.f32 %v8461, %v8473
        %v8502 = vadd.f32 %v8462, %v8473
        %v8503 = vadd.f32 %v8463, %v8473
        %v8504 = vadd.f32 %v8464, %v8473
        %v8505 = vadd.f32 %v8465, %v8473
        %v8506 = vadd.f32 %v8466, %v8473
        %8539 = vrot.lane.b32.xlu0 %v8475, 32
        %v8540 = vpop.permute.xlu0 %8539
        %8541 = vrot.lane.b32.xlu0 %v8476, 32
        %v8542 = vpop.permute.xlu0 %8541
        %8543 = vrot.lane.b32.xlu0 %v8477, 32
        %v8544 = vpop.permute.xlu0 %8543
        %8545 = vrot.lane.b32.xlu0 %v8478, 32
        %v8546 = vpop.permute.xlu0 %8545
        %8547 = vrot.lane.b32.xlu0 %v8479, 32
        %v8548 = vpop.permute.xlu0 %8547
        %8549 = vrot.lane.b32.xlu0 %v8480, 32
        %v8550 = vpop.permute.xlu0 %8549
        %8551 = vrot.lane.b32.xlu0 %v8481, 32
        %v8552 = vpop.permute.xlu0 %8551
        %8553 = vrot.lane.b32.xlu0 %v8482, 32
        %v8554 = vpop.permute.xlu0 %8553
        %8555 = vrot.lane.b32.xlu0 %v8483, 32
        %v8556 = vpop.permute.xlu0 %8555
        %8557 = vrot.lane.b32.xlu0 %v8484, 32
        %v8558 = vpop.permute.xlu0 %8557
        %8559 = vrot.lane.b32.xlu0 %v8485, 32
        %v8560 = vpop.permute.xlu0 %8559
        %8561 = vrot.lane.b32.xlu0 %v8486, 32
        %v8562 = vpop.permute.xlu0 %8561
        %8563 = vrot.lane.b32.xlu0 %v8487, 32
        %v8564 = vpop.permute.xlu0 %8563
        %8565 = vrot.lane.b32.xlu0 %v8488, 32
        %v8566 = vpop.permute.xlu0 %8565
        %8567 = vrot.lane.b32.xlu0 %v8489, 32
        %v8568 = vpop.permute.xlu0 %8567
        %8569 = vrot.lane.b32.xlu0 %v8490, 32
        %v8570 = vpop.permute.xlu0 %8569
        %8571 = vrot.lane.b32.xlu0 %v8491, 32
        %v8572 = vpop.permute.xlu0 %8571
        %8573 = vrot.lane.b32.xlu0 %v8492, 32
        %v8574 = vpop.permute.xlu0 %8573
        %8575 = vrot.lane.b32.xlu0 %v8493, 32
        %v8576 = vpop.permute.xlu0 %8575
        %8577 = vrot.lane.b32.xlu0 %v8494, 32
        %v8578 = vpop.permute.xlu0 %8577
        %8579 = vrot.lane.b32.xlu0 %v8495, 32
        %v8580 = vpop.permute.xlu0 %8579
        %8581 = vrot.lane.b32.xlu0 %v8496, 32
        %v8582 = vpop.permute.xlu0 %8581
        %8583 = vrot.lane.b32.xlu0 %v8497, 32
        %v8584 = vpop.permute.xlu0 %8583
        %8585 = vrot.lane.b32.xlu0 %v8498, 32
        %v8586 = vpop.permute.xlu0 %8585
        %8587 = vrot.lane.b32.xlu0 %v8499, 32
        %v8588 = vpop.permute.xlu0 %8587
        %8589 = vrot.lane.b32.xlu0 %v8500, 32
        %v8590 = vpop.permute.xlu0 %8589
        %8591 = vrot.lane.b32.xlu0 %v8501, 32
        %v8592 = vpop.permute.xlu0 %8591
        %8593 = vrot.lane.b32.xlu0 %v8502, 32
        %v8594 = vpop.permute.xlu0 %8593
        %8595 = vrot.lane.b32.xlu0 %v8503, 32
        %v8596 = vpop.permute.xlu0 %8595
        %8597 = vrot.lane.b32.xlu0 %v8504, 32
        %v8598 = vpop.permute.xlu0 %8597
        %8599 = vrot.lane.b32.xlu0 %v8505, 32
        %v8600 = vpop.permute.xlu0 %8599
        %8601 = vrot.lane.b32.xlu0 %v8506, 32
        %v8602 = vpop.permute.xlu0 %8601
        %v8635 = vadd.f32 %v8395, %v8540
        %v8636 = vadd.f32 %v8396, %v8542
        %v8637 = vadd.f32 %v8397, %v8544
        %v8638 = vadd.f32 %v8398, %v8546
        %v8639 = vadd.f32 %v8399, %v8548
        %v8640 = vadd.f32 %v8400, %v8550
        %v8641 = vadd.f32 %v8401, %v8552
        %v8642 = vadd.f32 %v8402, %v8554
        %v8643 = vadd.f32 %v8403, %v8556
        %v8644 = vadd.f32 %v8404, %v8558
        %v8645 = vadd.f32 %v8405, %v8560
        %v8646 = vadd.f32 %v8406, %v8562
        %v8647 = vadd.f32 %v8407, %v8564
        %v8648 = vadd.f32 %v8408, %v8566
        %v8649 = vadd.f32 %v8409, %v8568
        %v8650 = vadd.f32 %v8410, %v8570
        %v8651 = vadd.f32 %v8411, %v8572
        %v8652 = vadd.f32 %v8412, %v8574
        %v8653 = vadd.f32 %v8413, %v8576
        %v8654 = vadd.f32 %v8414, %v8578
        %v8655 = vadd.f32 %v8415, %v8580
        %v8656 = vadd.f32 %v8416, %v8582
        %v8657 = vadd.f32 %v8417, %v8584
        %v8658 = vadd.f32 %v8418, %v8586
        %v8659 = vadd.f32 %v8419, %v8588
        %v8660 = vadd.f32 %v8420, %v8590
        %v8661 = vadd.f32 %v8421, %v8592
        %v8662 = vadd.f32 %v8422, %v8594
        %v8663 = vadd.f32 %v8423, %v8596
        %v8664 = vadd.f32 %v8424, %v8598
        %v8665 = vadd.f32 %v8425, %v8600
        %v8666 = vadd.f32 %v8426, %v8602
        %v8667 = vmax.f32 %v8635, 0.0
        %v8668 = vmax.f32 %v8636, 0.0
        %v8669 = vmax.f32 %v8637, 0.0
        %v8670 = vmax.f32 %v8638, 0.0
        %v8671 = vmax.f32 %v8639, 0.0
        %v8672 = vmax.f32 %v8640, 0.0
        %v8673 = vmax.f32 %v8641, 0.0
        %v8674 = vmax.f32 %v8642, 0.0
        %v8675 = vmax.f32 %v8643, 0.0
        %v8676 = vmax.f32 %v8644, 0.0
        %v8677 = vmax.f32 %v8645, 0.0
        %v8678 = vmax.f32 %v8646, 0.0
        %v8679 = vmax.f32 %v8647, 0.0
        %v8680 = vmax.f32 %v8648, 0.0
        %v8681 = vmax.f32 %v8649, 0.0
        %v8682 = vmax.f32 %v8650, 0.0
        %v8683 = vmax.f32 %v8651, 0.0
        %v8684 = vmax.f32 %v8652, 0.0
        %v8685 = vmax.f32 %v8653, 0.0
        %v8686 = vmax.f32 %v8654, 0.0
        %v8687 = vmax.f32 %v8655, 0.0
        %v8688 = vmax.f32 %v8656, 0.0
        %v8689 = vmax.f32 %v8657, 0.0
        %v8690 = vmax.f32 %v8658, 0.0
        %v8691 = vmax.f32 %v8659, 0.0
        %v8692 = vmax.f32 %v8660, 0.0
        %v8693 = vmax.f32 %v8661, 0.0
        %v8694 = vmax.f32 %v8662, 0.0
        %v8695 = vmax.f32 %v8663, 0.0
        %v8696 = vmax.f32 %v8664, 0.0
        %v8697 = vmax.f32 %v8665, 0.0
        %v8698 = vmax.f32 %v8666, 0.0
        %v8699 = vlaneseq
        %v8700 = vshrl.u32 %v8699, 7
        %v8701 = vsub.s32 4, %v8700
        %v8702 = vrot.slane %v6032, %v8701
        %v8703 = vmul.f32 %v8667, %v8702
        %v8704 = vmul.f32 %v8668, %v8702
        %v8705 = vmul.f32 %v8669, %v8702
        %v8706 = vmul.f32 %v8670, %v8702
        %v8707 = vmul.f32 %v8671, %v8702
        %v8708 = vmul.f32 %v8672, %v8702
        %v8709 = vmul.f32 %v8673, %v8702
        %v8710 = vmul.f32 %v8674, %v8702
        %v8711 = vmul.f32 %v8675, %v8702
        %v8712 = vmul.f32 %v8676, %v8702
        %v8713 = vmul.f32 %v8677, %v8702
        %v8714 = vmul.f32 %v8678, %v8702
        %v8715 = vmul.f32 %v8679, %v8702
        %v8716 = vmul.f32 %v8680, %v8702
        %v8717 = vmul.f32 %v8681, %v8702
        %v8718 = vmul.f32 %v8682, %v8702
        %v8719 = vmul.f32 %v8683, %v8702
        %v8720 = vmul.f32 %v8684, %v8702
        %v8721 = vmul.f32 %v8685, %v8702
        %v8722 = vmul.f32 %v8686, %v8702
        %v8723 = vmul.f32 %v8687, %v8702
        %v8724 = vmul.f32 %v8688, %v8702
        %v8725 = vmul.f32 %v8689, %v8702
        %v8726 = vmul.f32 %v8690, %v8702
        %v8727 = vmul.f32 %v8691, %v8702
        %v8728 = vmul.f32 %v8692, %v8702
        %v8729 = vmul.f32 %v8693, %v8702
        %v8730 = vmul.f32 %v8694, %v8702
        %v8731 = vmul.f32 %v8695, %v8702
        %v8732 = vmul.f32 %v8696, %v8702
        %v8733 = vmul.f32 %v8697, %v8702
        %v8734 = vmul.f32 %v8698, %v8702
        %v8735 = vlaneseq
        %v8736 = vshrl.u32 %v8735, 7
        %v8737 = vsub.s32 5, %v8736
        %v8738 = vrot.slane %v6032, %v8737
        %v8739 = vadd.f32 %v8703, %v8738
        %v8740 = vadd.f32 %v8704, %v8738
        %v8741 = vadd.f32 %v8705, %v8738
        %v8742 = vadd.f32 %v8706, %v8738
        %v8743 = vadd.f32 %v8707, %v8738
        %v8744 = vadd.f32 %v8708, %v8738
        %v8745 = vadd.f32 %v8709, %v8738
        %v8746 = vadd.f32 %v8710, %v8738
        %v8747 = vadd.f32 %v8711, %v8738
        %v8748 = vadd.f32 %v8712, %v8738
        %v8749 = vadd.f32 %v8713, %v8738
        %v8750 = vadd.f32 %v8714, %v8738
        %v8751 = vadd.f32 %v8715, %v8738
        %v8752 = vadd.f32 %v8716, %v8738
        %v8753 = vadd.f32 %v8717, %v8738
        %v8754 = vadd.f32 %v8718, %v8738
        %v8755 = vadd.f32 %v8719, %v8738
        %v8756 = vadd.f32 %v8720, %v8738
        %v8757 = vadd.f32 %v8721, %v8738
        %v8758 = vadd.f32 %v8722, %v8738
        %v8759 = vadd.f32 %v8723, %v8738
        %v8760 = vadd.f32 %v8724, %v8738
        %v8761 = vadd.f32 %v8725, %v8738
        %v8762 = vadd.f32 %v8726, %v8738
        %v8763 = vadd.f32 %v8727, %v8738
        %v8764 = vadd.f32 %v8728, %v8738
        %v8765 = vadd.f32 %v8729, %v8738
        %v8766 = vadd.f32 %v8730, %v8738
        %v8767 = vadd.f32 %v8731, %v8738
        %v8768 = vadd.f32 %v8732, %v8738
        %v8769 = vadd.f32 %v8733, %v8738
        %v8770 = vadd.f32 %v8734, %v8738
        %s8771 = scalar_lea.vmem %s3, 24
        %v8772 = vld [vmem:[%s8771] sm:$0x3f]
        %v8773 = vrot.slane %v8739, 7
        %v8774 = vrot.slane %v8740, 7
        %v8775 = vrot.slane %v8741, 7
        %v8776 = vrot.slane %v8742, 7
        %v8777 = vrot.slane %v8743, 7
        %v8778 = vrot.slane %v8744, 7
        %v8779 = vrot.slane %v8745, 7
        %v8780 = vrot.slane %v8746, 7
        %v8781 = vrot.slane %v8747, 7
        %v8782 = vrot.slane %v8748, 7
        %v8783 = vrot.slane %v8749, 7
        %v8784 = vrot.slane %v8750, 7
        %v8785 = vrot.slane %v8751, 7
        %v8786 = vrot.slane %v8752, 7
        %v8787 = vrot.slane %v8753, 7
        %v8788 = vrot.slane %v8754, 7
        %v8789 = vrot.slane %v8755, 7
        %v8790 = vrot.slane %v8756, 7
        %v8791 = vrot.slane %v8757, 7
        %v8792 = vrot.slane %v8758, 7
        %v8793 = vrot.slane %v8759, 7
        %v8794 = vrot.slane %v8760, 7
        %v8795 = vrot.slane %v8761, 7
        %v8796 = vrot.slane %v8762, 7
        %v8797 = vrot.slane %v8763, 7
        %v8798 = vrot.slane %v8764, 7
        %v8799 = vrot.slane %v8765, 7
        %v8800 = vrot.slane %v8766, 7
        %v8801 = vrot.slane %v8767, 7
        %v8802 = vrot.slane %v8768, 7
        %v8803 = vrot.slane %v8769, 7
        %v8804 = vrot.slane %v8770, 7
        %v8805 = vsel %vm582, %v8803, %v8804
        %v8806 = vsel %vm582, %v8802, %v8803
        %v8807 = vsel %vm582, %v8801, %v8802
        %v8808 = vsel %vm582, %v8800, %v8801
        %v8809 = vsel %vm582, %v8799, %v8800
        %v8810 = vsel %vm582, %v8798, %v8799
        %v8811 = vsel %vm582, %v8797, %v8798
        %v8812 = vsel %vm582, %v8796, %v8797
        %v8813 = vsel %vm582, %v8795, %v8796
        %v8814 = vsel %vm582, %v8794, %v8795
        %v8815 = vsel %vm582, %v8793, %v8794
        %v8816 = vsel %vm582, %v8792, %v8793
        %v8817 = vsel %vm582, %v8791, %v8792
        %v8818 = vsel %vm582, %v8790, %v8791
        %v8819 = vsel %vm582, %v8789, %v8790
        %v8820 = vsel %vm582, %v8788, %v8789
        %v8821 = vsel %vm582, %v8787, %v8788
        %v8822 = vsel %vm582, %v8786, %v8787
        %v8823 = vsel %vm582, %v8785, %v8786
        %v8824 = vsel %vm582, %v8784, %v8785
        %v8825 = vsel %vm582, %v8783, %v8784
        %v8826 = vsel %vm582, %v8782, %v8783
        %v8827 = vsel %vm582, %v8781, %v8782
        %v8828 = vsel %vm582, %v8780, %v8781
        %v8829 = vsel %vm582, %v8779, %v8780
        %v8830 = vsel %vm582, %v8778, %v8779
        %v8831 = vsel %vm582, %v8777, %v8778
        %v8832 = vsel %vm582, %v8776, %v8777
        %v8833 = vsel %vm582, %v8775, %v8776
        %v8834 = vsel %vm582, %v8774, %v8775
        %v8835 = vsel %vm582, %v8773, %v8774
        %v8836 = vsel %vm582, %v8804, %v8773
        %v8837 = vmul.f32 %v8836, %v293
        %v8838 = vmul.f32 %v8835, %v294
        %v8839 = vmul.f32 %v8834, %v295
        %v8840 = vmul.f32 %v8833, %v296
        %v8841 = vmul.f32 %v8832, %v297
        %v8842 = vmul.f32 %v8831, %v298
        %v8843 = vmul.f32 %v8830, %v299
        %v8844 = vmul.f32 %v8829, %v300
        %v8845 = vmul.f32 %v8828, %v301
        %v8846 = vmul.f32 %v8827, %v302
        %v8847 = vmul.f32 %v8826, %v303
        %v8848 = vmul.f32 %v8825, %v304
        %v8849 = vmul.f32 %v8824, %v305
        %v8850 = vmul.f32 %v8823, %v306
        %v8851 = vmul.f32 %v8822, %v307
        %v8852 = vmul.f32 %v8821, %v308
        %v8853 = vmul.f32 %v8820, %v309
        %v8854 = vmul.f32 %v8819, %v310
        %v8855 = vmul.f32 %v8818, %v311
        %v8856 = vmul.f32 %v8817, %v312
        %v8857 = vmul.f32 %v8816, %v313
        %v8858 = vmul.f32 %v8815, %v314
        %v8859 = vmul.f32 %v8814, %v315
        %v8860 = vmul.f32 %v8813, %v316
        %v8861 = vmul.f32 %v8812, %v317
        %v8862 = vmul.f32 %v8811, %v318
        %v8863 = vmul.f32 %v8810, %v319
        %v8864 = vmul.f32 %v8809, %v320
        %v8865 = vmul.f32 %v8808, %v321
        %v8866 = vmul.f32 %v8807, %v322
        %v8867 = vmul.f32 %v8806, %v323
        %v8868 = vmul.f32 %v8805, %v324
        %s8869 = scalar_lea.vmem %s2, 192
        %v8870 = vld [vmem:[%s8869] sm:$0xff]
        %v8871 = vld [vmem:[%s8869 + $0x8] sm:$0xff]
        %v8872 = vld [vmem:[%s8869 + $0x10] sm:$0xff]
        %v8873 = vld [vmem:[%s8869 + $0x18] sm:$0xff]
        %v8875 = vsel %vm3393, %v8837, 0
        %v8878 = vsel %vm3393, %v8838, 0
        %v8881 = vsel %vm3393, %v8839, 0
        %v8884 = vsel %vm3393, %v8840, 0
        %v8887 = vsel %vm3393, %v8841, 0
        %v8890 = vsel %vm3393, %v8842, 0
        %v8893 = vsel %vm3393, %v8843, 0
        %v8896 = vsel %vm3393, %v8844, 0
        %v8899 = vsel %vm3393, %v8845, 0
        %v8902 = vsel %vm3393, %v8846, 0
        %v8905 = vsel %vm3393, %v8847, 0
        %v8908 = vsel %vm3393, %v8848, 0
        %v8911 = vsel %vm3393, %v8849, 0
        %v8914 = vsel %vm3393, %v8850, 0
        %v8917 = vsel %vm3393, %v8851, 0
        %v8920 = vsel %vm3393, %v8852, 0
        %v8923 = vsel %vm3393, %v8853, 0
        %v8926 = vsel %vm3393, %v8854, 0
        %v8929 = vsel %vm3393, %v8855, 0
        %v8932 = vsel %vm3393, %v8856, 0
        %v8935 = vsel %vm3393, %v8857, 0
        %v8938 = vsel %vm3393, %v8858, 0
        %v8941 = vsel %vm3393, %v8859, 0
        %v8944 = vsel %vm3393, %v8860, 0
        %v8947 = vsel %vm3393, %v8861, 0
        %v8950 = vsel %vm3393, %v8862, 0
        %v8953 = vsel %vm3393, %v8863, 0
        %v8956 = vsel %vm3393, %v8864, 0
        %v8959 = vsel %vm3393, %v8865, 0
        %v8962 = vsel %vm3393, %v8866, 0
        %v8965 = vsel %vm3393, %v8867, 0
        %v8968 = vsel %vm3393, %v8868, 0
        %8970 = vmatprep.subr.mxu0 0.0
        %8971 = vmatpush1.msra.mxu0 %v8870
        %8972 = vmatprep.subr.mxu0 0.0
        %8973 = vmatpush1.msra.mxu0 %v8871
        %8974 = vmatprep.subr.mxu0 0.0
        %8975 = vmatpush1.msra.mxu0 %v8872
        %8976 = vmatprep.subr.mxu0 0.0
        %8977 = vmatpush1.msra.mxu0 %v8873
        %8978 = vmatprep.subr.mxu0 0.0
        %8979 = vmatpush1.msra.mxu0 0.0
        %8980 = vmatprep.subr.mxu0 0.0
        %8981 = vmatpush1.msra.mxu0 0.0
        %8982 = vmatprep.subr.mxu0 0.0
        %8983 = vmatpush1.msra.mxu0 0.0
        %8984 = vmatprep.subr.mxu0 0.0
        %8985 = vmatpush1.msra.mxu0 0.0
        %8986 = vmatprep.subr.mxu0 0.0
        %8987 = vmatpush1.msra.mxu0 0.0
        %8988 = vmatprep.subr.mxu0 0.0
        %8989 = vmatpush1.msra.mxu0 0.0
        %8990 = vmatprep.subr.mxu0 0.0
        %8991 = vmatpush1.msra.mxu0 0.0
        %8992 = vmatprep.subr.mxu0 0.0
        %8993 = vmatpush1.msra.mxu0 0.0
        %8994 = vmatprep.subr.mxu0 0.0
        %8995 = vmatpush1.msra.mxu0 0.0
        %8996 = vmatprep.subr.mxu0 0.0
        %8997 = vmatpush1.msra.mxu0 0.0
        %8998 = vmatprep.subr.mxu0 0.0
        %8999 = vmatpush1.msra.mxu0 0.0
        %9000 = vmatprep.subr.mxu0 0.0
        %9001 = vmatpush1.msra.mxu0 0.0
        %9002 = vmatprep.subr.mxu0 0.0
        %9003 = vmatpush1.msra.mxu0 0.0
        %9004 = vmatprep.subr.mxu0 0.0
        %9005 = vmatpush1.msra.mxu0 0.0
        %9006 = vmatprep.subr.mxu0 0.0
        %9007 = vmatpush1.msra.mxu0 0.0
        %9008 = vmatprep.subr.mxu0 0.0
        %9009 = vmatpush1.msra.mxu0 0.0
        %9010 = vmatprep.subr.mxu0 0.0
        %9011 = vmatpush1.msra.mxu0 0.0
        %9012 = vmatprep.subr.mxu0 0.0
        %9013 = vmatpush1.msra.mxu0 0.0
        %9014 = vmatprep.subr.mxu0 0.0
        %9015 = vmatpush1.msra.mxu0 0.0
        %9016 = vmatprep.subr.mxu0 0.0
        %9017 = vmatpush1.msra.mxu0 0.0
        %9018 = vmatprep.subr.mxu0 0.0
        %9019 = vmatpush1.msra.mxu0 0.0
        %9020 = vmatprep.subr.mxu0 0.0
        %9021 = vmatpush1.msra.mxu0 0.0
        %9022 = vmatprep.subr.mxu0 0.0
        %9023 = vmatpush1.msra.mxu0 0.0
        %9024 = vmatprep.subr.mxu0 0.0
        %9025 = vmatpush1.msra.mxu0 0.0
        %9026 = vmatprep.subr.mxu0 0.0
        %9027 = vmatpush1.msra.mxu0 0.0
        %9028 = vmatprep.subr.mxu0 0.0
        %9029 = vmatpush1.msra.mxu0 0.0
        %9030 = vmatprep.subr.mxu0 0.0
        %9031 = vmatpush1.msra.mxu0 0.0
        %9032 = vmatprep.subr.mxu0 0.0
        %9033 = vmatpush1.msra.mxu0 0.0
        %9034 = vmatprep.mubr.f32.mxu0 0.0
        %9035 = vmatmul.mubr.f32.gmra.mrb[0].mxu0 %v8875
        %v9036 = vpop.f32.mrb[0].mxu0
        %v9037 = vadd.f32 0.0, %v9036
        %v9038 = vpop.f32.mrb[0].mxu0
        %9039 = vmatprep.mubr.f32.mxu0 0.0
        %9040 = vmatmul.mubr.f32.gmra.mrb[0].mxu0 %v8878
        %v9041 = vpop.f32.mrb[0].mxu0
        %v9042 = vadd.f32 0.0, %v9041
        %v9043 = vpop.f32.mrb[0].mxu0
        %9044 = vmatprep.mubr.f32.mxu0 0.0
        %9045 = vmatmul.mubr.f32.gmra.mrb[0].mxu0 %v8881
        %v9046 = vpop.f32.mrb[0].mxu0
        %v9047 = vadd.f32 0.0, %v9046
        %v9048 = vpop.f32.mrb[0].mxu0
        %9049 = vmatprep.mubr.f32.mxu0 0.0
        %9050 = vmatmul.mubr.f32.gmra.mrb[0].mxu0 %v8884
        %v9051 = vpop.f32.mrb[0].mxu0
        %v9052 = vadd.f32 0.0, %v9051
        %v9053 = vpop.f32.mrb[0].mxu0
        %9054 = vmatprep.mubr.f32.mxu0 0.0
        %9055 = vmatmul.mubr.f32.gmra.mrb[0].mxu0 %v8887
        %v9056 = vpop.f32.mrb[0].mxu0
        %v9057 = vadd.f32 0.0, %v9056
        %v9058 = vpop.f32.mrb[0].mxu0
        %9059 = vmatprep.mubr.f32.mxu0 0.0
        %9060 = vmatmul.mubr.f32.gmra.mrb[0].mxu0 %v8890
        %v9061 = vpop.f32.mrb[0].mxu0
        %v9062 = vadd.f32 0.0, %v9061
        %v9063 = vpop.f32.mrb[0].mxu0
        %9064 = vmatprep.mubr.f32.mxu0 0.0
        %9065 = vmatmul.mubr.f32.gmra.mrb[0].mxu0 %v8893
        %v9066 = vpop.f32.mrb[0].mxu0
        %v9067 = vadd.f32 0.0, %v9066
        %v9068 = vpop.f32.mrb[0].mxu0
        %9069 = vmatprep.mubr.f32.mxu0 0.0
        %9070 = vmatmul.mubr.f32.gmra.mrb[0].mxu0 %v8896
        %v9071 = vpop.f32.mrb[0].mxu0
        %v9072 = vadd.f32 0.0, %v9071
        %v9073 = vpop.f32.mrb[0].mxu0
        %9074 = vmatprep.mubr.f32.mxu0 0.0
        %9075 = vmatmul.mubr.f32.gmra.mrb[0].mxu0 %v8899
        %v9076 = vpop.f32.mrb[0].mxu0
        %v9077 = vadd.f32 0.0, %v9076
        %v9078 = vpop.f32.mrb[0].mxu0
        %9079 = vmatprep.mubr.f32.mxu0 0.0
        %9080 = vmatmul.mubr.f32.gmra.mrb[0].mxu0 %v8902
        %v9081 = vpop.f32.mrb[0].mxu0
        %v9082 = vadd.f32 0.0, %v9081
        %v9083 = vpop.f32.mrb[0].mxu0
        %9084 = vmatprep.mubr.f32.mxu0 0.0
        %9085 = vmatmul.mubr.f32.gmra.mrb[0].mxu0 %v8905
        %v9086 = vpop.f32.mrb[0].mxu0
        %v9087 = vadd.f32 0.0, %v9086
        %v9088 = vpop.f32.mrb[0].mxu0
        %9089 = vmatprep.mubr.f32.mxu0 0.0
        %9090 = vmatmul.mubr.f32.gmra.mrb[0].mxu0 %v8908
        %v9091 = vpop.f32.mrb[0].mxu0
        %v9092 = vadd.f32 0.0, %v9091
        %v9093 = vpop.f32.mrb[0].mxu0
        %9094 = vmatprep.mubr.f32.mxu0 0.0
        %9095 = vmatmul.mubr.f32.gmra.mrb[0].mxu0 %v8911
        %v9096 = vpop.f32.mrb[0].mxu0
        %v9097 = vadd.f32 0.0, %v9096
        %v9098 = vpop.f32.mrb[0].mxu0
        %9099 = vmatprep.mubr.f32.mxu0 0.0
        %9100 = vmatmul.mubr.f32.gmra.mrb[0].mxu0 %v8914
        %v9101 = vpop.f32.mrb[0].mxu0
        %v9102 = vadd.f32 0.0, %v9101
        %v9103 = vpop.f32.mrb[0].mxu0
        %9104 = vmatprep.mubr.f32.mxu0 0.0
        %9105 = vmatmul.mubr.f32.gmra.mrb[0].mxu0 %v8917
        %v9106 = vpop.f32.mrb[0].mxu0
        %v9107 = vadd.f32 0.0, %v9106
        %v9108 = vpop.f32.mrb[0].mxu0
        %9109 = vmatprep.mubr.f32.mxu0 0.0
        %9110 = vmatmul.mubr.f32.gmra.mrb[0].mxu0 %v8920
        %v9111 = vpop.f32.mrb[0].mxu0
        %v9112 = vadd.f32 0.0, %v9111
        %v9113 = vpop.f32.mrb[0].mxu0
        %9114 = vmatprep.mubr.f32.mxu0 0.0
        %9115 = vmatmul.mubr.f32.gmra.mrb[0].mxu0 %v8923
        %v9116 = vpop.f32.mrb[0].mxu0
        %v9117 = vadd.f32 0.0, %v9116
        %v9118 = vpop.f32.mrb[0].mxu0
        %9119 = vmatprep.mubr.f32.mxu0 0.0
        %9120 = vmatmul.mubr.f32.gmra.mrb[0].mxu0 %v8926
        %v9121 = vpop.f32.mrb[0].mxu0
        %v9122 = vadd.f32 0.0, %v9121
        %v9123 = vpop.f32.mrb[0].mxu0
        %9124 = vmatprep.mubr.f32.mxu0 0.0
        %9125 = vmatmul.mubr.f32.gmra.mrb[0].mxu0 %v8929
        %v9126 = vpop.f32.mrb[0].mxu0
        %v9127 = vadd.f32 0.0, %v9126
        %v9128 = vpop.f32.mrb[0].mxu0
        %9129 = vmatprep.mubr.f32.mxu0 0.0
        %9130 = vmatmul.mubr.f32.gmra.mrb[0].mxu0 %v8932
        %v9131 = vpop.f32.mrb[0].mxu0
        %v9132 = vadd.f32 0.0, %v9131
        %v9133 = vpop.f32.mrb[0].mxu0
        %9134 = vmatprep.mubr.f32.mxu0 0.0
        %9135 = vmatmul.mubr.f32.gmra.mrb[0].mxu0 %v8935
        %v9136 = vpop.f32.mrb[0].mxu0
        %v9137 = vadd.f32 0.0, %v9136
        %v9138 = vpop.f32.mrb[0].mxu0
        %9139 = vmatprep.mubr.f32.mxu0 0.0
        %9140 = vmatmul.mubr.f32.gmra.mrb[0].mxu0 %v8938
        %v9141 = vpop.f32.mrb[0].mxu0
        %v9142 = vadd.f32 0.0, %v9141
        %v9143 = vpop.f32.mrb[0].mxu0
        %9144 = vmatprep.mubr.f32.mxu0 0.0
        %9145 = vmatmul.mubr.f32.gmra.mrb[0].mxu0 %v8941
        %v9146 = vpop.f32.mrb[0].mxu0
        %v9147 = vadd.f32 0.0, %v9146
        %v9148 = vpop.f32.mrb[0].mxu0
        %9149 = vmatprep.mubr.f32.mxu0 0.0
        %9150 = vmatmul.mubr.f32.gmra.mrb[0].mxu0 %v8944
        %v9151 = vpop.f32.mrb[0].mxu0
        %v9152 = vadd.f32 0.0, %v9151
        %v9153 = vpop.f32.mrb[0].mxu0
        %9154 = vmatprep.mubr.f32.mxu0 0.0
        %9155 = vmatmul.mubr.f32.gmra.mrb[0].mxu0 %v8947
        %v9156 = vpop.f32.mrb[0].mxu0
        %v9157 = vadd.f32 0.0, %v9156
        %v9158 = vpop.f32.mrb[0].mxu0
        %9159 = vmatprep.mubr.f32.mxu0 0.0
        %9160 = vmatmul.mubr.f32.gmra.mrb[0].mxu0 %v8950
        %v9161 = vpop.f32.mrb[0].mxu0
        %v9162 = vadd.f32 0.0, %v9161
        %v9163 = vpop.f32.mrb[0].mxu0
        %9164 = vmatprep.mubr.f32.mxu0 0.0
        %9165 = vmatmul.mubr.f32.gmra.mrb[0].mxu0 %v8953
        %v9166 = vpop.f32.mrb[0].mxu0
        %v9167 = vadd.f32 0.0, %v9166
        %v9168 = vpop.f32.mrb[0].mxu0
        %9169 = vmatprep.mubr.f32.mxu0 0.0
        %9170 = vmatmul.mubr.f32.gmra.mrb[0].mxu0 %v8956
        %v9171 = vpop.f32.mrb[0].mxu0
        %v9172 = vadd.f32 0.0, %v9171
        %v9173 = vpop.f32.mrb[0].mxu0
        %9174 = vmatprep.mubr.f32.mxu0 0.0
        %9175 = vmatmul.mubr.f32.gmra.mrb[0].mxu0 %v8959
        %v9176 = vpop.f32.mrb[0].mxu0
        %v9177 = vadd.f32 0.0, %v9176
        %v9178 = vpop.f32.mrb[0].mxu0
        %9179 = vmatprep.mubr.f32.mxu0 0.0
        %9180 = vmatmul.mubr.f32.gmra.mrb[0].mxu0 %v8962
        %v9181 = vpop.f32.mrb[0].mxu0
        %v9182 = vadd.f32 0.0, %v9181
        %v9183 = vpop.f32.mrb[0].mxu0
        %9184 = vmatprep.mubr.f32.mxu0 0.0
        %9185 = vmatmul.mubr.f32.gmra.mrb[0].mxu0 %v8965
        %v9186 = vpop.f32.mrb[0].mxu0
        %v9187 = vadd.f32 0.0, %v9186
        %v9188 = vpop.f32.mrb[0].mxu0
        %9189 = vmatprep.mubr.f32.mxu0 0.0
        %9190 = vmatmul.mubr.f32.gmra.mrb[0].mxu0 %v8968
        %v9191 = vpop.f32.mrb[0].mxu0
        %v9192 = vadd.f32 0.0, %v9191
        %v9193 = vpop.f32.mrb[0].mxu0
        %9194 = vdwg.mxu0
        %v9195 = vmul.f32 %v9187, %v421
        %v9196 = vmul.f32 %v9192, %v422
        %v9197 = vmul.f32 %v9037, %v423
        %v9198 = vmul.f32 %v9042, %v424
        %v9199 = vmul.f32 %v9047, %v425
        %v9200 = vmul.f32 %v9052, %v426
        %v9201 = vmul.f32 %v9057, %v427
        %v9202 = vmul.f32 %v9062, %v428
        %v9203 = vmul.f32 %v9067, %v429
        %v9204 = vmul.f32 %v9072, %v430
        %v9205 = vmul.f32 %v9077, %v431
        %v9206 = vmul.f32 %v9082, %v432
        %v9207 = vmul.f32 %v9087, %v433
        %v9208 = vmul.f32 %v9092, %v434
        %v9209 = vmul.f32 %v9097, %v435
        %v9210 = vmul.f32 %v9102, %v436
        %v9211 = vmul.f32 %v9107, %v437
        %v9212 = vmul.f32 %v9112, %v438
        %v9213 = vmul.f32 %v9117, %v439
        %v9214 = vmul.f32 %v9122, %v440
        %v9215 = vmul.f32 %v9127, %v441
        %v9216 = vmul.f32 %v9132, %v442
        %v9217 = vmul.f32 %v9137, %v443
        %v9218 = vmul.f32 %v9142, %v444
        %v9219 = vmul.f32 %v9147, %v445
        %v9220 = vmul.f32 %v9152, %v446
        %v9221 = vmul.f32 %v9157, %v447
        %v9222 = vmul.f32 %v9162, %v448
        %v9223 = vmul.f32 %v9167, %v449
        %v9224 = vmul.f32 %v9172, %v450
        %v9225 = vmul.f32 %v9177, %v451
        %v9226 = vmul.f32 %v9182, %v452
        %9259 = vrot.lane.b32.xlu0 %v9037, 96
        %v9260 = vpop.permute.xlu0 %9259
        %9261 = vrot.lane.b32.xlu0 %v9042, 96
        %v9262 = vpop.permute.xlu0 %9261
        %9263 = vrot.lane.b32.xlu0 %v9047, 96
        %v9264 = vpop.permute.xlu0 %9263
        %9265 = vrot.lane.b32.xlu0 %v9052, 96
        %v9266 = vpop.permute.xlu0 %9265
        %9267 = vrot.lane.b32.xlu0 %v9057, 96
        %v9268 = vpop.permute.xlu0 %9267
        %9269 = vrot.lane.b32.xlu0 %v9062, 96
        %v9270 = vpop.permute.xlu0 %9269
        %9271 = vrot.lane.b32.xlu0 %v9067, 96
        %v9272 = vpop.permute.xlu0 %9271
        %9273 = vrot.lane.b32.xlu0 %v9072, 96
        %v9274 = vpop.permute.xlu0 %9273
        %9275 = vrot.lane.b32.xlu0 %v9077, 96
        %v9276 = vpop.permute.xlu0 %9275
        %9277 = vrot.lane.b32.xlu0 %v9082, 96
        %v9278 = vpop.permute.xlu0 %9277
        %9279 = vrot.lane.b32.xlu0 %v9087, 96
        %v9280 = vpop.permute.xlu0 %9279
        %9281 = vrot.lane.b32.xlu0 %v9092, 96
        %v9282 = vpop.permute.xlu0 %9281
        %9283 = vrot.lane.b32.xlu0 %v9097, 96
        %v9284 = vpop.permute.xlu0 %9283
        %9285 = vrot.lane.b32.xlu0 %v9102, 96
        %v9286 = vpop.permute.xlu0 %9285
        %9287 = vrot.lane.b32.xlu0 %v9107, 96
        %v9288 = vpop.permute.xlu0 %9287
        %9289 = vrot.lane.b32.xlu0 %v9112, 96
        %v9290 = vpop.permute.xlu0 %9289
        %9291 = vrot.lane.b32.xlu0 %v9117, 96
        %v9292 = vpop.permute.xlu0 %9291
        %9293 = vrot.lane.b32.xlu0 %v9122, 96
        %v9294 = vpop.permute.xlu0 %9293
        %9295 = vrot.lane.b32.xlu0 %v9127, 96
        %v9296 = vpop.permute.xlu0 %9295
        %9297 = vrot.lane.b32.xlu0 %v9132, 96
        %v9298 = vpop.permute.xlu0 %9297
        %9299 = vrot.lane.b32.xlu0 %v9137, 96
        %v9300 = vpop.permute.xlu0 %9299
        %9301 = vrot.lane.b32.xlu0 %v9142, 96
        %v9302 = vpop.permute.xlu0 %9301
        %9303 = vrot.lane.b32.xlu0 %v9147, 96
        %v9304 = vpop.permute.xlu0 %9303
        %9305 = vrot.lane.b32.xlu0 %v9152, 96
        %v9306 = vpop.permute.xlu0 %9305
        %9307 = vrot.lane.b32.xlu0 %v9157, 96
        %v9308 = vpop.permute.xlu0 %9307
        %9309 = vrot.lane.b32.xlu0 %v9162, 96
        %v9310 = vpop.permute.xlu0 %9309
        %9311 = vrot.lane.b32.xlu0 %v9167, 96
        %v9312 = vpop.permute.xlu0 %9311
        %9313 = vrot.lane.b32.xlu0 %v9172, 96
        %v9314 = vpop.permute.xlu0 %9313
        %9315 = vrot.lane.b32.xlu0 %v9177, 96
        %v9316 = vpop.permute.xlu0 %9315
        %9317 = vrot.lane.b32.xlu0 %v9182, 96
        %v9318 = vpop.permute.xlu0 %9317
        %9319 = vrot.lane.b32.xlu0 %v9187, 96
        %v9320 = vpop.permute.xlu0 %9319
        %9321 = vrot.lane.b32.xlu0 %v9192, 96
        %v9322 = vpop.permute.xlu0 %9321
        %v9355 = vadd.f32 %v9195, %v9260
        %v9356 = vadd.f32 %v9196, %v9262
        %v9357 = vadd.f32 %v9197, %v9264
        %v9358 = vadd.f32 %v9198, %v9266
        %v9359 = vadd.f32 %v9199, %v9268
        %v9360 = vadd.f32 %v9200, %v9270
        %v9361 = vadd.f32 %v9201, %v9272
        %v9362 = vadd.f32 %v9202, %v9274
        %v9363 = vadd.f32 %v9203, %v9276
        %v9364 = vadd.f32 %v9204, %v9278
        %v9365 = vadd.f32 %v9205, %v9280
        %v9366 = vadd.f32 %v9206, %v9282
        %v9367 = vadd.f32 %v9207, %v9284
        %v9368 = vadd.f32 %v9208, %v9286
        %v9369 = vadd.f32 %v9209, %v9288
        %v9370 = vadd.f32 %v9210, %v9290
        %v9371 = vadd.f32 %v9211, %v9292
        %v9372 = vadd.f32 %v9212, %v9294
        %v9373 = vadd.f32 %v9213, %v9296
        %v9374 = vadd.f32 %v9214, %v9298
        %v9375 = vadd.f32 %v9215, %v9300
        %v9376 = vadd.f32 %v9216, %v9302
        %v9377 = vadd.f32 %v9217, %v9304
        %v9378 = vadd.f32 %v9218, %v9306
        %v9379 = vadd.f32 %v9219, %v9308
        %v9380 = vadd.f32 %v9220, %v9310
        %v9381 = vadd.f32 %v9221, %v9312
        %v9382 = vadd.f32 %v9222, %v9314
        %v9383 = vadd.f32 %v9223, %v9316
        %v9384 = vadd.f32 %v9224, %v9318
        %v9385 = vadd.f32 %v9225, %v9320
        %v9386 = vadd.f32 %v9226, %v9322
        %9387 = vrot.lane.b32.xlu0 %v9037, 64
        %v9388 = vpop.permute.xlu0 %9387
        %9389 = vrot.lane.b32.xlu0 %v9042, 64
        %v9390 = vpop.permute.xlu0 %9389
        %9391 = vrot.lane.b32.xlu0 %v9047, 64
        %v9392 = vpop.permute.xlu0 %9391
        %9393 = vrot.lane.b32.xlu0 %v9052, 64
        %v9394 = vpop.permute.xlu0 %9393
        %9395 = vrot.lane.b32.xlu0 %v9057, 64
        %v9396 = vpop.permute.xlu0 %9395
        %9397 = vrot.lane.b32.xlu0 %v9062, 64
        %v9398 = vpop.permute.xlu0 %9397
        %9399 = vrot.lane.b32.xlu0 %v9067, 64
        %v9400 = vpop.permute.xlu0 %9399
        %9401 = vrot.lane.b32.xlu0 %v9072, 64
        %v9402 = vpop.permute.xlu0 %9401
        %9403 = vrot.lane.b32.xlu0 %v9077, 64
        %v9404 = vpop.permute.xlu0 %9403
        %9405 = vrot.lane.b32.xlu0 %v9082, 64
        %v9406 = vpop.permute.xlu0 %9405
        %9407 = vrot.lane.b32.xlu0 %v9087, 64
        %v9408 = vpop.permute.xlu0 %9407
        %9409 = vrot.lane.b32.xlu0 %v9092, 64
        %v9410 = vpop.permute.xlu0 %9409
        %9411 = vrot.lane.b32.xlu0 %v9097, 64
        %v9412 = vpop.permute.xlu0 %9411
        %9413 = vrot.lane.b32.xlu0 %v9102, 64
        %v9414 = vpop.permute.xlu0 %9413
        %9415 = vrot.lane.b32.xlu0 %v9107, 64
        %v9416 = vpop.permute.xlu0 %9415
        %9417 = vrot.lane.b32.xlu0 %v9112, 64
        %v9418 = vpop.permute.xlu0 %9417
        %9419 = vrot.lane.b32.xlu0 %v9117, 64
        %v9420 = vpop.permute.xlu0 %9419
        %9421 = vrot.lane.b32.xlu0 %v9122, 64
        %v9422 = vpop.permute.xlu0 %9421
        %9423 = vrot.lane.b32.xlu0 %v9127, 64
        %v9424 = vpop.permute.xlu0 %9423
        %9425 = vrot.lane.b32.xlu0 %v9132, 64
        %v9426 = vpop.permute.xlu0 %9425
        %9427 = vrot.lane.b32.xlu0 %v9137, 64
        %v9428 = vpop.permute.xlu0 %9427
        %9429 = vrot.lane.b32.xlu0 %v9142, 64
        %v9430 = vpop.permute.xlu0 %9429
        %9431 = vrot.lane.b32.xlu0 %v9147, 64
        %v9432 = vpop.permute.xlu0 %9431
        %9433 = vrot.lane.b32.xlu0 %v9152, 64
        %v9434 = vpop.permute.xlu0 %9433
        %9435 = vrot.lane.b32.xlu0 %v9157, 64
        %v9436 = vpop.permute.xlu0 %9435
        %9437 = vrot.lane.b32.xlu0 %v9162, 64
        %v9438 = vpop.permute.xlu0 %9437
        %9439 = vrot.lane.b32.xlu0 %v9167, 64
        %v9440 = vpop.permute.xlu0 %9439
        %9441 = vrot.lane.b32.xlu0 %v9172, 64
        %v9442 = vpop.permute.xlu0 %9441
        %9443 = vrot.lane.b32.xlu0 %v9177, 64
        %v9444 = vpop.permute.xlu0 %9443
        %9445 = vrot.lane.b32.xlu0 %v9182, 64
        %v9446 = vpop.permute.xlu0 %9445
        %9447 = vrot.lane.b32.xlu0 %v9187, 64
        %v9448 = vpop.permute.xlu0 %9447
        %9449 = vrot.lane.b32.xlu0 %v9192, 64
        %v9450 = vpop.permute.xlu0 %9449
        %v9483 = vmul.f32 %v9392, %v485
        %v9484 = vmul.f32 %v9394, %v486
        %v9485 = vmul.f32 %v9396, %v487
        %v9486 = vmul.f32 %v9398, %v488
        %v9487 = vmul.f32 %v9400, %v489
        %v9488 = vmul.f32 %v9402, %v490
        %v9489 = vmul.f32 %v9404, %v491
        %v9490 = vmul.f32 %v9406, %v492
        %v9491 = vmul.f32 %v9408, %v493
        %v9492 = vmul.f32 %v9410, %v494
        %v9493 = vmul.f32 %v9412, %v495
        %v9494 = vmul.f32 %v9414, %v496
        %v9495 = vmul.f32 %v9416, %v497
        %v9496 = vmul.f32 %v9418, %v498
        %v9497 = vmul.f32 %v9420, %v499
        %v9498 = vmul.f32 %v9422, %v500
        %v9499 = vmul.f32 %v9424, %v501
        %v9500 = vmul.f32 %v9426, %v502
        %v9501 = vmul.f32 %v9428, %v503
        %v9502 = vmul.f32 %v9430, %v504
        %v9503 = vmul.f32 %v9432, %v505
        %v9504 = vmul.f32 %v9434, %v506
        %v9505 = vmul.f32 %v9436, %v507
        %v9506 = vmul.f32 %v9438, %v508
        %v9507 = vmul.f32 %v9440, %v509
        %v9508 = vmul.f32 %v9442, %v510
        %v9509 = vmul.f32 %v9444, %v511
        %v9510 = vmul.f32 %v9446, %v512
        %v9511 = vmul.f32 %v9448, %v513
        %v9512 = vmul.f32 %v9450, %v514
        %v9513 = vmul.f32 %v9388, %v515
        %v9514 = vmul.f32 %v9390, %v516
        %v9515 = vadd.f32 %v9355, %v9483
        %v9516 = vadd.f32 %v9356, %v9484
        %v9517 = vadd.f32 %v9357, %v9485
        %v9518 = vadd.f32 %v9358, %v9486
        %v9519 = vadd.f32 %v9359, %v9487
        %v9520 = vadd.f32 %v9360, %v9488
        %v9521 = vadd.f32 %v9361, %v9489
        %v9522 = vadd.f32 %v9362, %v9490
        %v9523 = vadd.f32 %v9363, %v9491
        %v9524 = vadd.f32 %v9364, %v9492
        %v9525 = vadd.f32 %v9365, %v9493
        %v9526 = vadd.f32 %v9366, %v9494
        %v9527 = vadd.f32 %v9367, %v9495
        %v9528 = vadd.f32 %v9368, %v9496
        %v9529 = vadd.f32 %v9369, %v9497
        %v9530 = vadd.f32 %v9370, %v9498
        %v9531 = vadd.f32 %v9371, %v9499
        %v9532 = vadd.f32 %v9372, %v9500
        %v9533 = vadd.f32 %v9373, %v9501
        %v9534 = vadd.f32 %v9374, %v9502
        %v9535 = vadd.f32 %v9375, %v9503
        %v9536 = vadd.f32 %v9376, %v9504
        %v9537 = vadd.f32 %v9377, %v9505
        %v9538 = vadd.f32 %v9378, %v9506
        %v9539 = vadd.f32 %v9379, %v9507
        %v9540 = vadd.f32 %v9380, %v9508
        %v9541 = vadd.f32 %v9381, %v9509
        %v9542 = vadd.f32 %v9382, %v9510
        %v9543 = vadd.f32 %v9383, %v9511
        %v9544 = vadd.f32 %v9384, %v9512
        %v9545 = vadd.f32 %v9385, %v9513
        %v9546 = vadd.f32 %v9386, %v9514
        %s9547 = scalar_lea.vmem %s2, 224
        %v9548 = vld [vmem:[%s9547] sm:$0xff]
        %v9549 = vld [vmem:[%s9547 + $0x8] sm:$0xff]
        %v9550 = vld [vmem:[%s9547 + $0x10] sm:$0xff]
        %v9551 = vld [vmem:[%s9547 + $0x18] sm:$0xff]
        %v9553 = vsel %vm3393, %v8739, 0
        %v9556 = vsel %vm3393, %v8740, 0
        %v9559 = vsel %vm3393, %v8741, 0
        %v9562 = vsel %vm3393, %v8742, 0
        %v9565 = vsel %vm3393, %v8743, 0
        %v9568 = vsel %vm3393, %v8744, 0
        %v9571 = vsel %vm3393, %v8745, 0
        %v9574 = vsel %vm3393, %v8746, 0
        %v9577 = vsel %vm3393, %v8747, 0
        %v9580 = vsel %vm3393, %v8748, 0
        %v9583 = vsel %vm3393, %v8749, 0
        %v9586 = vsel %vm3393, %v8750, 0
        %v9589 = vsel %vm3393, %v8751, 0
        %v9592 = vsel %vm3393, %v8752, 0
        %v9595 = vsel %vm3393, %v8753, 0
        %v9598 = vsel %vm3393, %v8754, 0
        %v9601 = vsel %vm3393, %v8755, 0
        %v9604 = vsel %vm3393, %v8756, 0
        %v9607 = vsel %vm3393, %v8757, 0
        %v9610 = vsel %vm3393, %v8758, 0
        %v9613 = vsel %vm3393, %v8759, 0
        %v9616 = vsel %vm3393, %v8760, 0
        %v9619 = vsel %vm3393, %v8761, 0
        %v9622 = vsel %vm3393, %v8762, 0
        %v9625 = vsel %vm3393, %v8763, 0
        %v9628 = vsel %vm3393, %v8764, 0
        %v9631 = vsel %vm3393, %v8765, 0
        %v9634 = vsel %vm3393, %v8766, 0
        %v9637 = vsel %vm3393, %v8767, 0
        %v9640 = vsel %vm3393, %v8768, 0
        %v9643 = vsel %vm3393, %v8769, 0
        %v9646 = vsel %vm3393, %v8770, 0
        %9648 = vmatprep.subr.mxu0 0.0
        %9649 = vmatpush1.msra.mxu0 %v9548
        %9650 = vmatprep.subr.mxu0 0.0
        %9651 = vmatpush1.msra.mxu0 %v9549
        %9652 = vmatprep.subr.mxu0 0.0
        %9653 = vmatpush1.msra.mxu0 %v9550
        %9654 = vmatprep.subr.mxu0 0.0
        %9655 = vmatpush1.msra.mxu0 %v9551
        %9656 = vmatprep.subr.mxu0 0.0
        %9657 = vmatpush1.msra.mxu0 0.0
        %9658 = vmatprep.subr.mxu0 0.0
        %9659 = vmatpush1.msra.mxu0 0.0
        %9660 = vmatprep.subr.mxu0 0.0
        %9661 = vmatpush1.msra.mxu0 0.0
        %9662 = vmatprep.subr.mxu0 0.0
        %9663 = vmatpush1.msra.mxu0 0.0
        %9664 = vmatprep.subr.mxu0 0.0
        %9665 = vmatpush1.msra.mxu0 0.0
        %9666 = vmatprep.subr.mxu0 0.0
        %9667 = vmatpush1.msra.mxu0 0.0
        %9668 = vmatprep.subr.mxu0 0.0
        %9669 = vmatpush1.msra.mxu0 0.0
        %9670 = vmatprep.subr.mxu0 0.0
        %9671 = vmatpush1.msra.mxu0 0.0
        %9672 = vmatprep.subr.mxu0 0.0
        %9673 = vmatpush1.msra.mxu0 0.0
        %9674 = vmatprep.subr.mxu0 0.0
        %9675 = vmatpush1.msra.mxu0 0.0
        %9676 = vmatprep.subr.mxu0 0.0
        %9677 = vmatpush1.msra.mxu0 0.0
        %9678 = vmatprep.subr.mxu0 0.0
        %9679 = vmatpush1.msra.mxu0 0.0
        %9680 = vmatprep.subr.mxu0 0.0
        %9681 = vmatpush1.msra.mxu0 0.0
        %9682 = vmatprep.subr.mxu0 0.0
        %9683 = vmatpush1.msra.mxu0 0.0
        %9684 = vmatprep.subr.mxu0 0.0
        %9685 = vmatpush1.msra.mxu0 0.0
        %9686 = vmatprep.subr.mxu0 0.0
        %9687 = vmatpush1.msra.mxu0 0.0
        %9688 = vmatprep.subr.mxu0 0.0
        %9689 = vmatpush1.msra.mxu0 0.0
        %9690 = vmatprep.subr.mxu0 0.0
        %9691 = vmatpush1.msra.mxu0 0.0
        %9692 = vmatprep.subr.mxu0 0.0
        %9693 = vmatpush1.msra.mxu0 0.0
        %9694 = vmatprep.subr.mxu0 0.0
        %9695 = vmatpush1.msra.mxu0 0.0
        %9696 = vmatprep.subr.mxu0 0.0
        %9697 = vmatpush1.msra.mxu0 0.0
        %9698 = vmatprep.subr.mxu0 0.0
        %9699 = vmatpush1.msra.mxu0 0.0
        %9700 = vmatprep.subr.mxu0 0.0
        %9701 = vmatpush1.msra.mxu0 0.0
        %9702 = vmatprep.subr.mxu0 0.0
        %9703 = vmatpush1.msra.mxu0 0.0
        %9704 = vmatprep.subr.mxu0 0.0
        %9705 = vmatpush1.msra.mxu0 0.0
        %9706 = vmatprep.subr.mxu0 0.0
        %9707 = vmatpush1.msra.mxu0 0.0
        %9708 = vmatprep.subr.mxu0 0.0
        %9709 = vmatpush1.msra.mxu0 0.0
        %9710 = vmatprep.subr.mxu0 0.0
        %9711 = vmatpush1.msra.mxu0 0.0
        %9712 = vmatprep.mubr.f32.mxu0 0.0
        %9713 = vmatmul.mubr.f32.gmra.mrb[0].mxu0 %v9553
        %v9714 = vpop.f32.mrb[0].mxu0
        %v9715 = vadd.f32 0.0, %v9714
        %v9716 = vpop.f32.mrb[0].mxu0
        %9717 = vmatprep.mubr.f32.mxu0 0.0
        %9718 = vmatmul.mubr.f32.gmra.mrb[0].mxu0 %v9556
        %v9719 = vpop.f32.mrb[0].mxu0
        %v9720 = vadd.f32 0.0, %v9719
        %v9721 = vpop.f32.mrb[0].mxu0
        %9722 = vmatprep.mubr.f32.mxu0 0.0
        %9723 = vmatmul.mubr.f32.gmra.mrb[0].mxu0 %v9559
        %v9724 = vpop.f32.mrb[0].mxu0
        %v9725 = vadd.f32 0.0, %v9724
        %v9726 = vpop.f32.mrb[0].mxu0
        %9727 = vmatprep.mubr.f32.mxu0 0.0
        %9728 = vmatmul.mubr.f32.gmra.mrb[0].mxu0 %v9562
        %v9729 = vpop.f32.mrb[0].mxu0
        %v9730 = vadd.f32 0.0, %v9729
        %v9731 = vpop.f32.mrb[0].mxu0
        %9732 = vmatprep.mubr.f32.mxu0 0.0
        %9733 = vmatmul.mubr.f32.gmra.mrb[0].mxu0 %v9565
        %v9734 = vpop.f32.mrb[0].mxu0
        %v9735 = vadd.f32 0.0, %v9734
        %v9736 = vpop.f32.mrb[0].mxu0
        %9737 = vmatprep.mubr.f32.mxu0 0.0
        %9738 = vmatmul.mubr.f32.gmra.mrb[0].mxu0 %v9568
        %v9739 = vpop.f32.mrb[0].mxu0
        %v9740 = vadd.f32 0.0, %v9739
        %v9741 = vpop.f32.mrb[0].mxu0
        %9742 = vmatprep.mubr.f32.mxu0 0.0
        %9743 = vmatmul.mubr.f32.gmra.mrb[0].mxu0 %v9571
        %v9744 = vpop.f32.mrb[0].mxu0
        %v9745 = vadd.f32 0.0, %v9744
        %v9746 = vpop.f32.mrb[0].mxu0
        %9747 = vmatprep.mubr.f32.mxu0 0.0
        %9748 = vmatmul.mubr.f32.gmra.mrb[0].mxu0 %v9574
        %v9749 = vpop.f32.mrb[0].mxu0
        %v9750 = vadd.f32 0.0, %v9749
        %v9751 = vpop.f32.mrb[0].mxu0
        %9752 = vmatprep.mubr.f32.mxu0 0.0
        %9753 = vmatmul.mubr.f32.gmra.mrb[0].mxu0 %v9577
        %v9754 = vpop.f32.mrb[0].mxu0
        %v9755 = vadd.f32 0.0, %v9754
        %v9756 = vpop.f32.mrb[0].mxu0
        %9757 = vmatprep.mubr.f32.mxu0 0.0
        %9758 = vmatmul.mubr.f32.gmra.mrb[0].mxu0 %v9580
        %v9759 = vpop.f32.mrb[0].mxu0
        %v9760 = vadd.f32 0.0, %v9759
        %v9761 = vpop.f32.mrb[0].mxu0
        %9762 = vmatprep.mubr.f32.mxu0 0.0
        %9763 = vmatmul.mubr.f32.gmra.mrb[0].mxu0 %v9583
        %v9764 = vpop.f32.mrb[0].mxu0
        %v9765 = vadd.f32 0.0, %v9764
        %v9766 = vpop.f32.mrb[0].mxu0
        %9767 = vmatprep.mubr.f32.mxu0 0.0
        %9768 = vmatmul.mubr.f32.gmra.mrb[0].mxu0 %v9586
        %v9769 = vpop.f32.mrb[0].mxu0
        %v9770 = vadd.f32 0.0, %v9769
        %v9771 = vpop.f32.mrb[0].mxu0
        %9772 = vmatprep.mubr.f32.mxu0 0.0
        %9773 = vmatmul.mubr.f32.gmra.mrb[0].mxu0 %v9589
        %v9774 = vpop.f32.mrb[0].mxu0
        %v9775 = vadd.f32 0.0, %v9774
        %v9776 = vpop.f32.mrb[0].mxu0
        %9777 = vmatprep.mubr.f32.mxu0 0.0
        %9778 = vmatmul.mubr.f32.gmra.mrb[0].mxu0 %v9592
        %v9779 = vpop.f32.mrb[0].mxu0
        %v9780 = vadd.f32 0.0, %v9779
        %v9781 = vpop.f32.mrb[0].mxu0
        %9782 = vmatprep.mubr.f32.mxu0 0.0
        %9783 = vmatmul.mubr.f32.gmra.mrb[0].mxu0 %v9595
        %v9784 = vpop.f32.mrb[0].mxu0
        %v9785 = vadd.f32 0.0, %v9784
        %v9786 = vpop.f32.mrb[0].mxu0
        %9787 = vmatprep.mubr.f32.mxu0 0.0
        %9788 = vmatmul.mubr.f32.gmra.mrb[0].mxu0 %v9598
        %v9789 = vpop.f32.mrb[0].mxu0
        %v9790 = vadd.f32 0.0, %v9789
        %v9791 = vpop.f32.mrb[0].mxu0
        %9792 = vmatprep.mubr.f32.mxu0 0.0
        %9793 = vmatmul.mubr.f32.gmra.mrb[0].mxu0 %v9601
        %v9794 = vpop.f32.mrb[0].mxu0
        %v9795 = vadd.f32 0.0, %v9794
        %v9796 = vpop.f32.mrb[0].mxu0
        %9797 = vmatprep.mubr.f32.mxu0 0.0
        %9798 = vmatmul.mubr.f32.gmra.mrb[0].mxu0 %v9604
        %v9799 = vpop.f32.mrb[0].mxu0
        %v9800 = vadd.f32 0.0, %v9799
        %v9801 = vpop.f32.mrb[0].mxu0
        %9802 = vmatprep.mubr.f32.mxu0 0.0
        %9803 = vmatmul.mubr.f32.gmra.mrb[0].mxu0 %v9607
        %v9804 = vpop.f32.mrb[0].mxu0
        %v9805 = vadd.f32 0.0, %v9804
        %v9806 = vpop.f32.mrb[0].mxu0
        %9807 = vmatprep.mubr.f32.mxu0 0.0
        %9808 = vmatmul.mubr.f32.gmra.mrb[0].mxu0 %v9610
        %v9809 = vpop.f32.mrb[0].mxu0
        %v9810 = vadd.f32 0.0, %v9809
        %v9811 = vpop.f32.mrb[0].mxu0
        %9812 = vmatprep.mubr.f32.mxu0 0.0
        %9813 = vmatmul.mubr.f32.gmra.mrb[0].mxu0 %v9613
        %v9814 = vpop.f32.mrb[0].mxu0
        %v9815 = vadd.f32 0.0, %v9814
        %v9816 = vpop.f32.mrb[0].mxu0
        %9817 = vmatprep.mubr.f32.mxu0 0.0
        %9818 = vmatmul.mubr.f32.gmra.mrb[0].mxu0 %v9616
        %v9819 = vpop.f32.mrb[0].mxu0
        %v9820 = vadd.f32 0.0, %v9819
        %v9821 = vpop.f32.mrb[0].mxu0
        %9822 = vmatprep.mubr.f32.mxu0 0.0
        %9823 = vmatmul.mubr.f32.gmra.mrb[0].mxu0 %v9619
        %v9824 = vpop.f32.mrb[0].mxu0
        %v9825 = vadd.f32 0.0, %v9824
        %v9826 = vpop.f32.mrb[0].mxu0
        %9827 = vmatprep.mubr.f32.mxu0 0.0
        %9828 = vmatmul.mubr.f32.gmra.mrb[0].mxu0 %v9622
        %v9829 = vpop.f32.mrb[0].mxu0
        %v9830 = vadd.f32 0.0, %v9829
        %v9831 = vpop.f32.mrb[0].mxu0
        %9832 = vmatprep.mubr.f32.mxu0 0.0
        %9833 = vmatmul.mubr.f32.gmra.mrb[0].mxu0 %v9625
        %v9834 = vpop.f32.mrb[0].mxu0
        %v9835 = vadd.f32 0.0, %v9834
        %v9836 = vpop.f32.mrb[0].mxu0
        %9837 = vmatprep.mubr.f32.mxu0 0.0
        %9838 = vmatmul.mubr.f32.gmra.mrb[0].mxu0 %v9628
        %v9839 = vpop.f32.mrb[0].mxu0
        %v9840 = vadd.f32 0.0, %v9839
        %v9841 = vpop.f32.mrb[0].mxu0
        %9842 = vmatprep.mubr.f32.mxu0 0.0
        %9843 = vmatmul.mubr.f32.gmra.mrb[0].mxu0 %v9631
        %v9844 = vpop.f32.mrb[0].mxu0
        %v9845 = vadd.f32 0.0, %v9844
        %v9846 = vpop.f32.mrb[0].mxu0
        %9847 = vmatprep.mubr.f32.mxu0 0.0
        %9848 = vmatmul.mubr.f32.gmra.mrb[0].mxu0 %v9634
        %v9849 = vpop.f32.mrb[0].mxu0
        %v9850 = vadd.f32 0.0, %v9849
        %v9851 = vpop.f32.mrb[0].mxu0
        %9852 = vmatprep.mubr.f32.mxu0 0.0
        %9853 = vmatmul.mubr.f32.gmra.mrb[0].mxu0 %v9637
        %v9854 = vpop.f32.mrb[0].mxu0
        %v9855 = vadd.f32 0.0, %v9854
        %v9856 = vpop.f32.mrb[0].mxu0
        %9857 = vmatprep.mubr.f32.mxu0 0.0
        %9858 = vmatmul.mubr.f32.gmra.mrb[0].mxu0 %v9640
        %v9859 = vpop.f32.mrb[0].mxu0
        %v9860 = vadd.f32 0.0, %v9859
        %v9861 = vpop.f32.mrb[0].mxu0
        %9862 = vmatprep.mubr.f32.mxu0 0.0
        %9863 = vmatmul.mubr.f32.gmra.mrb[0].mxu0 %v9643
        %v9864 = vpop.f32.mrb[0].mxu0
        %v9865 = vadd.f32 0.0, %v9864
        %v9866 = vpop.f32.mrb[0].mxu0
        %9867 = vmatprep.mubr.f32.mxu0 0.0
        %9868 = vmatmul.mubr.f32.gmra.mrb[0].mxu0 %v9646
        %v9869 = vpop.f32.mrb[0].mxu0
        %v9870 = vadd.f32 0.0, %v9869
        %v9871 = vpop.f32.mrb[0].mxu0
        %9872 = vdwg.mxu0
        %v9873 = vmul.f32 %v9865, %v421
        %v9874 = vmul.f32 %v9870, %v422
        %v9875 = vmul.f32 %v9715, %v423
        %v9876 = vmul.f32 %v9720, %v424
        %v9877 = vmul.f32 %v9725, %v425
        %v9878 = vmul.f32 %v9730, %v426
        %v9879 = vmul.f32 %v9735, %v427
        %v9880 = vmul.f32 %v9740, %v428
        %v9881 = vmul.f32 %v9745, %v429
        %v9882 = vmul.f32 %v9750, %v430
        %v9883 = vmul.f32 %v9755, %v431
        %v9884 = vmul.f32 %v9760, %v432
        %v9885 = vmul.f32 %v9765, %v433
        %v9886 = vmul.f32 %v9770, %v434
        %v9887 = vmul.f32 %v9775, %v435
        %v9888 = vmul.f32 %v9780, %v436
        %v9889 = vmul.f32 %v9785, %v437
        %v9890 = vmul.f32 %v9790, %v438
        %v9891 = vmul.f32 %v9795, %v439
        %v9892 = vmul.f32 %v9800, %v440
        %v9893 = vmul.f32 %v9805, %v441
        %v9894 = vmul.f32 %v9810, %v442
        %v9895 = vmul.f32 %v9815, %v443
        %v9896 = vmul.f32 %v9820, %v444
        %v9897 = vmul.f32 %v9825, %v445
        %v9898 = vmul.f32 %v9830, %v446
        %v9899 = vmul.f32 %v9835, %v447
        %v9900 = vmul.f32 %v9840, %v448
        %v9901 = vmul.f32 %v9845, %v449
        %v9902 = vmul.f32 %v9850, %v450
        %v9903 = vmul.f32 %v9855, %v451
        %v9904 = vmul.f32 %v9860, %v452
        %9937 = vrot.lane.b32.xlu0 %v9715, 96
        %v9938 = vpop.permute.xlu0 %9937
        %9939 = vrot.lane.b32.xlu0 %v9720, 96
        %v9940 = vpop.permute.xlu0 %9939
        %9941 = vrot.lane.b32.xlu0 %v9725, 96
        %v9942 = vpop.permute.xlu0 %9941
        %9943 = vrot.lane.b32.xlu0 %v9730, 96
        %v9944 = vpop.permute.xlu0 %9943
        %9945 = vrot.lane.b32.xlu0 %v9735, 96
        %v9946 = vpop.permute.xlu0 %9945
        %9947 = vrot.lane.b32.xlu0 %v9740, 96
        %v9948 = vpop.permute.xlu0 %9947
        %9949 = vrot.lane.b32.xlu0 %v9745, 96
        %v9950 = vpop.permute.xlu0 %9949
        %9951 = vrot.lane.b32.xlu0 %v9750, 96
        %v9952 = vpop.permute.xlu0 %9951
        %9953 = vrot.lane.b32.xlu0 %v9755, 96
        %v9954 = vpop.permute.xlu0 %9953
        %9955 = vrot.lane.b32.xlu0 %v9760, 96
        %v9956 = vpop.permute.xlu0 %9955
        %9957 = vrot.lane.b32.xlu0 %v9765, 96
        %v9958 = vpop.permute.xlu0 %9957
        %9959 = vrot.lane.b32.xlu0 %v9770, 96
        %v9960 = vpop.permute.xlu0 %9959
        %9961 = vrot.lane.b32.xlu0 %v9775, 96
        %v9962 = vpop.permute.xlu0 %9961
        %9963 = vrot.lane.b32.xlu0 %v9780, 96
        %v9964 = vpop.permute.xlu0 %9963
        %9965 = vrot.lane.b32.xlu0 %v9785, 96
        %v9966 = vpop.permute.xlu0 %9965
        %9967 = vrot.lane.b32.xlu0 %v9790, 96
        %v9968 = vpop.permute.xlu0 %9967
        %9969 = vrot.lane.b32.xlu0 %v9795, 96
        %v9970 = vpop.permute.xlu0 %9969
        %9971 = vrot.lane.b32.xlu0 %v9800, 96
        %v9972 = vpop.permute.xlu0 %9971
        %9973 = vrot.lane.b32.xlu0 %v9805, 96
        %v9974 = vpop.permute.xlu0 %9973
        %9975 = vrot.lane.b32.xlu0 %v9810, 96
        %v9976 = vpop.permute.xlu0 %9975
        %9977 = vrot.lane.b32.xlu0 %v9815, 96
        %v9978 = vpop.permute.xlu0 %9977
        %9979 = vrot.lane.b32.xlu0 %v9820, 96
        %v9980 = vpop.permute.xlu0 %9979
        %9981 = vrot.lane.b32.xlu0 %v9825, 96
        %v9982 = vpop.permute.xlu0 %9981
        %9983 = vrot.lane.b32.xlu0 %v9830, 96
        %v9984 = vpop.permute.xlu0 %9983
        %9985 = vrot.lane.b32.xlu0 %v9835, 96
        %v9986 = vpop.permute.xlu0 %9985
        %9987 = vrot.lane.b32.xlu0 %v9840, 96
        %v9988 = vpop.permute.xlu0 %9987
        %9989 = vrot.lane.b32.xlu0 %v9845, 96
        %v9990 = vpop.permute.xlu0 %9989
        %9991 = vrot.lane.b32.xlu0 %v9850, 96
        %v9992 = vpop.permute.xlu0 %9991
        %9993 = vrot.lane.b32.xlu0 %v9855, 96
        %v9994 = vpop.permute.xlu0 %9993
        %9995 = vrot.lane.b32.xlu0 %v9860, 96
        %v9996 = vpop.permute.xlu0 %9995
        %9997 = vrot.lane.b32.xlu0 %v9865, 96
        %v9998 = vpop.permute.xlu0 %9997
        %9999 = vrot.lane.b32.xlu0 %v9870, 96
        %v10000 = vpop.permute.xlu0 %9999
        %v10033 = vadd.f32 %v9873, %v9938
        %v10034 = vadd.f32 %v9874, %v9940
        %v10035 = vadd.f32 %v9875, %v9942
        %v10036 = vadd.f32 %v9876, %v9944
        %v10037 = vadd.f32 %v9877, %v9946
        %v10038 = vadd.f32 %v9878, %v9948
        %v10039 = vadd.f32 %v9879, %v9950
        %v10040 = vadd.f32 %v9880, %v9952
        %v10041 = vadd.f32 %v9881, %v9954
        %v10042 = vadd.f32 %v9882, %v9956
        %v10043 = vadd.f32 %v9883, %v9958
        %v10044 = vadd.f32 %v9884, %v9960
        %v10045 = vadd.f32 %v9885, %v9962
        %v10046 = vadd.f32 %v9886, %v9964
        %v10047 = vadd.f32 %v9887, %v9966
        %v10048 = vadd.f32 %v9888, %v9968
        %v10049 = vadd.f32 %v9889, %v9970
        %v10050 = vadd.f32 %v9890, %v9972
        %v10051 = vadd.f32 %v9891, %v9974
        %v10052 = vadd.f32 %v9892, %v9976
        %v10053 = vadd.f32 %v9893, %v9978
        %v10054 = vadd.f32 %v9894, %v9980
        %v10055 = vadd.f32 %v9895, %v9982
        %v10056 = vadd.f32 %v9896, %v9984
        %v10057 = vadd.f32 %v9897, %v9986
        %v10058 = vadd.f32 %v9898, %v9988
        %v10059 = vadd.f32 %v9899, %v9990
        %v10060 = vadd.f32 %v9900, %v9992
        %v10061 = vadd.f32 %v9901, %v9994
        %v10062 = vadd.f32 %v9902, %v9996
        %v10063 = vadd.f32 %v9903, %v9998
        %v10064 = vadd.f32 %v9904, %v10000
        %10065 = vrot.lane.b32.xlu0 %v9715, 64
        %v10066 = vpop.permute.xlu0 %10065
        %10067 = vrot.lane.b32.xlu0 %v9720, 64
        %v10068 = vpop.permute.xlu0 %10067
        %10069 = vrot.lane.b32.xlu0 %v9725, 64
        %v10070 = vpop.permute.xlu0 %10069
        %10071 = vrot.lane.b32.xlu0 %v9730, 64
        %v10072 = vpop.permute.xlu0 %10071
        %10073 = vrot.lane.b32.xlu0 %v9735, 64
        %v10074 = vpop.permute.xlu0 %10073
        %10075 = vrot.lane.b32.xlu0 %v9740, 64
        %v10076 = vpop.permute.xlu0 %10075
        %10077 = vrot.lane.b32.xlu0 %v9745, 64
        %v10078 = vpop.permute.xlu0 %10077
        %10079 = vrot.lane.b32.xlu0 %v9750, 64
        %v10080 = vpop.permute.xlu0 %10079
        %10081 = vrot.lane.b32.xlu0 %v9755, 64
        %v10082 = vpop.permute.xlu0 %10081
        %10083 = vrot.lane.b32.xlu0 %v9760, 64
        %v10084 = vpop.permute.xlu0 %10083
        %10085 = vrot.lane.b32.xlu0 %v9765, 64
        %v10086 = vpop.permute.xlu0 %10085
        %10087 = vrot.lane.b32.xlu0 %v9770, 64
        %v10088 = vpop.permute.xlu0 %10087
        %10089 = vrot.lane.b32.xlu0 %v9775, 64
        %v10090 = vpop.permute.xlu0 %10089
        %10091 = vrot.lane.b32.xlu0 %v9780, 64
        %v10092 = vpop.permute.xlu0 %10091
        %10093 = vrot.lane.b32.xlu0 %v9785, 64
        %v10094 = vpop.permute.xlu0 %10093
        %10095 = vrot.lane.b32.xlu0 %v9790, 64
        %v10096 = vpop.permute.xlu0 %10095
        %10097 = vrot.lane.b32.xlu0 %v9795, 64
        %v10098 = vpop.permute.xlu0 %10097
        %10099 = vrot.lane.b32.xlu0 %v9800, 64
        %v10100 = vpop.permute.xlu0 %10099
        %10101 = vrot.lane.b32.xlu0 %v9805, 64
        %v10102 = vpop.permute.xlu0 %10101
        %10103 = vrot.lane.b32.xlu0 %v9810, 64
        %v10104 = vpop.permute.xlu0 %10103
        %10105 = vrot.lane.b32.xlu0 %v9815, 64
        %v10106 = vpop.permute.xlu0 %10105
        %10107 = vrot.lane.b32.xlu0 %v9820, 64
        %v10108 = vpop.permute.xlu0 %10107
        %10109 = vrot.lane.b32.xlu0 %v9825, 64
        %v10110 = vpop.permute.xlu0 %10109
        %10111 = vrot.lane.b32.xlu0 %v9830, 64
        %v10112 = vpop.permute.xlu0 %10111
        %10113 = vrot.lane.b32.xlu0 %v9835, 64
        %v10114 = vpop.permute.xlu0 %10113
        %10115 = vrot.lane.b32.xlu0 %v9840, 64
        %v10116 = vpop.permute.xlu0 %10115
        %10117 = vrot.lane.b32.xlu0 %v9845, 64
        %v10118 = vpop.permute.xlu0 %10117
        %10119 = vrot.lane.b32.xlu0 %v9850, 64
        %v10120 = vpop.permute.xlu0 %10119
        %10121 = vrot.lane.b32.xlu0 %v9855, 64
        %v10122 = vpop.permute.xlu0 %10121
        %10123 = vrot.lane.b32.xlu0 %v9860, 64
        %v10124 = vpop.permute.xlu0 %10123
        %10125 = vrot.lane.b32.xlu0 %v9865, 64
        %v10126 = vpop.permute.xlu0 %10125
        %10127 = vrot.lane.b32.xlu0 %v9870, 64
        %v10128 = vpop.permute.xlu0 %10127
        %v10161 = vmul.f32 %v10070, %v485
        %v10162 = vmul.f32 %v10072, %v486
        %v10163 = vmul.f32 %v10074, %v487
        %v10164 = vmul.f32 %v10076, %v488
        %v10165 = vmul.f32 %v10078, %v489
        %v10166 = vmul.f32 %v10080, %v490
        %v10167 = vmul.f32 %v10082, %v491
        %v10168 = vmul.f32 %v10084, %v492
        %v10169 = vmul.f32 %v10086, %v493
        %v10170 = vmul.f32 %v10088, %v494
        %v10171 = vmul.f32 %v10090, %v495
        %v10172 = vmul.f32 %v10092, %v496
        %v10173 = vmul.f32 %v10094, %v497
        %v10174 = vmul.f32 %v10096, %v498
        %v10175 = vmul.f32 %v10098, %v499
        %v10176 = vmul.f32 %v10100, %v500
        %v10177 = vmul.f32 %v10102, %v501
        %v10178 = vmul.f32 %v10104, %v502
        %v10179 = vmul.f32 %v10106, %v503
        %v10180 = vmul.f32 %v10108, %v504
        %v10181 = vmul.f32 %v10110, %v505
        %v10182 = vmul.f32 %v10112, %v506
        %v10183 = vmul.f32 %v10114, %v507
        %v10184 = vmul.f32 %v10116, %v508
        %v10185 = vmul.f32 %v10118, %v509
        %v10186 = vmul.f32 %v10120, %v510
        %v10187 = vmul.f32 %v10122, %v511
        %v10188 = vmul.f32 %v10124, %v512
        %v10189 = vmul.f32 %v10126, %v513
        %v10190 = vmul.f32 %v10128, %v514
        %v10191 = vmul.f32 %v10066, %v515
        %v10192 = vmul.f32 %v10068, %v516
        %v10193 = vadd.f32 %v10033, %v10161
        %v10194 = vadd.f32 %v10034, %v10162
        %v10195 = vadd.f32 %v10035, %v10163
        %v10196 = vadd.f32 %v10036, %v10164
        %v10197 = vadd.f32 %v10037, %v10165
        %v10198 = vadd.f32 %v10038, %v10166
        %v10199 = vadd.f32 %v10039, %v10167
        %v10200 = vadd.f32 %v10040, %v10168
        %v10201 = vadd.f32 %v10041, %v10169
        %v10202 = vadd.f32 %v10042, %v10170
        %v10203 = vadd.f32 %v10043, %v10171
        %v10204 = vadd.f32 %v10044, %v10172
        %v10205 = vadd.f32 %v10045, %v10173
        %v10206 = vadd.f32 %v10046, %v10174
        %v10207 = vadd.f32 %v10047, %v10175
        %v10208 = vadd.f32 %v10048, %v10176
        %v10209 = vadd.f32 %v10049, %v10177
        %v10210 = vadd.f32 %v10050, %v10178
        %v10211 = vadd.f32 %v10051, %v10179
        %v10212 = vadd.f32 %v10052, %v10180
        %v10213 = vadd.f32 %v10053, %v10181
        %v10214 = vadd.f32 %v10054, %v10182
        %v10215 = vadd.f32 %v10055, %v10183
        %v10216 = vadd.f32 %v10056, %v10184
        %v10217 = vadd.f32 %v10057, %v10185
        %v10218 = vadd.f32 %v10058, %v10186
        %v10219 = vadd.f32 %v10059, %v10187
        %v10220 = vadd.f32 %v10060, %v10188
        %v10221 = vadd.f32 %v10061, %v10189
        %v10222 = vadd.f32 %v10062, %v10190
        %v10223 = vadd.f32 %v10063, %v10191
        %v10224 = vadd.f32 %v10064, %v10192
        %v10225 = vadd.f32 %v9515, %v10193
        %v10226 = vadd.f32 %v9516, %v10194
        %v10227 = vadd.f32 %v9517, %v10195
        %v10228 = vadd.f32 %v9518, %v10196
        %v10229 = vadd.f32 %v9519, %v10197
        %v10230 = vadd.f32 %v9520, %v10198
        %v10231 = vadd.f32 %v9521, %v10199
        %v10232 = vadd.f32 %v9522, %v10200
        %v10233 = vadd.f32 %v9523, %v10201
        %v10234 = vadd.f32 %v9524, %v10202
        %v10235 = vadd.f32 %v9525, %v10203
        %v10236 = vadd.f32 %v9526, %v10204
        %v10237 = vadd.f32 %v9527, %v10205
        %v10238 = vadd.f32 %v9528, %v10206
        %v10239 = vadd.f32 %v9529, %v10207
        %v10240 = vadd.f32 %v9530, %v10208
        %v10241 = vadd.f32 %v9531, %v10209
        %v10242 = vadd.f32 %v9532, %v10210
        %v10243 = vadd.f32 %v9533, %v10211
        %v10244 = vadd.f32 %v9534, %v10212
        %v10245 = vadd.f32 %v9535, %v10213
        %v10246 = vadd.f32 %v9536, %v10214
        %v10247 = vadd.f32 %v9537, %v10215
        %v10248 = vadd.f32 %v9538, %v10216
        %v10249 = vadd.f32 %v9539, %v10217
        %v10250 = vadd.f32 %v9540, %v10218
        %v10251 = vadd.f32 %v9541, %v10219
        %v10252 = vadd.f32 %v9542, %v10220
        %v10253 = vadd.f32 %v9543, %v10221
        %v10254 = vadd.f32 %v9544, %v10222
        %v10255 = vadd.f32 %v9545, %v10223
        %v10256 = vadd.f32 %v9546, %v10224
        %v10257 = vrot.slane %v8739, 1
        %v10258 = vrot.slane %v8740, 1
        %v10259 = vrot.slane %v8741, 1
        %v10260 = vrot.slane %v8742, 1
        %v10261 = vrot.slane %v8743, 1
        %v10262 = vrot.slane %v8744, 1
        %v10263 = vrot.slane %v8745, 1
        %v10264 = vrot.slane %v8746, 1
        %v10265 = vrot.slane %v8747, 1
        %v10266 = vrot.slane %v8748, 1
        %v10267 = vrot.slane %v8749, 1
        %v10268 = vrot.slane %v8750, 1
        %v10269 = vrot.slane %v8751, 1
        %v10270 = vrot.slane %v8752, 1
        %v10271 = vrot.slane %v8753, 1
        %v10272 = vrot.slane %v8754, 1
        %v10273 = vrot.slane %v8755, 1
        %v10274 = vrot.slane %v8756, 1
        %v10275 = vrot.slane %v8757, 1
        %v10276 = vrot.slane %v8758, 1
        %v10277 = vrot.slane %v8759, 1
        %v10278 = vrot.slane %v8760, 1
        %v10279 = vrot.slane %v8761, 1
        %v10280 = vrot.slane %v8762, 1
        %v10281 = vrot.slane %v8763, 1
        %v10282 = vrot.slane %v8764, 1
        %v10283 = vrot.slane %v8765, 1
        %v10284 = vrot.slane %v8766, 1
        %v10285 = vrot.slane %v8767, 1
        %v10286 = vrot.slane %v8768, 1
        %v10287 = vrot.slane %v8769, 1
        %v10288 = vrot.slane %v8770, 1
        %v10289 = vsel %vm2068, %v10287, %v10288
        %v10290 = vsel %vm2068, %v10286, %v10287
        %v10291 = vsel %vm2068, %v10285, %v10286
        %v10292 = vsel %vm2068, %v10284, %v10285
        %v10293 = vsel %vm2068, %v10283, %v10284
        %v10294 = vsel %vm2068, %v10282, %v10283
        %v10295 = vsel %vm2068, %v10281, %v10282
        %v10296 = vsel %vm2068, %v10280, %v10281
        %v10297 = vsel %vm2068, %v10279, %v10280
        %v10298 = vsel %vm2068, %v10278, %v10279
        %v10299 = vsel %vm2068, %v10277, %v10278
        %v10300 = vsel %vm2068, %v10276, %v10277
        %v10301 = vsel %vm2068, %v10275, %v10276
        %v10302 = vsel %vm2068, %v10274, %v10275
        %v10303 = vsel %vm2068, %v10273, %v10274
        %v10304 = vsel %vm2068, %v10272, %v10273
        %v10305 = vsel %vm2068, %v10271, %v10272
        %v10306 = vsel %vm2068, %v10270, %v10271
        %v10307 = vsel %vm2068, %v10269, %v10270
        %v10308 = vsel %vm2068, %v10268, %v10269
        %v10309 = vsel %vm2068, %v10267, %v10268
        %v10310 = vsel %vm2068, %v10266, %v10267
        %v10311 = vsel %vm2068, %v10265, %v10266
        %v10312 = vsel %vm2068, %v10264, %v10265
        %v10313 = vsel %vm2068, %v10263, %v10264
        %v10314 = vsel %vm2068, %v10262, %v10263
        %v10315 = vsel %vm2068, %v10261, %v10262
        %v10316 = vsel %vm2068, %v10260, %v10261
        %v10317 = vsel %vm2068, %v10259, %v10260
        %v10318 = vsel %vm2068, %v10258, %v10259
        %v10319 = vsel %vm2068, %v10257, %v10258
        %v10320 = vsel %vm2068, %v10288, %v10257
        %v10321 = vmul.f32 %v10319, %v357
        %v10322 = vmul.f32 %v10318, %v358
        %v10323 = vmul.f32 %v10317, %v359
        %v10324 = vmul.f32 %v10316, %v360
        %v10325 = vmul.f32 %v10315, %v361
        %v10326 = vmul.f32 %v10314, %v362
        %v10327 = vmul.f32 %v10313, %v363
        %v10328 = vmul.f32 %v10312, %v364
        %v10329 = vmul.f32 %v10311, %v365
        %v10330 = vmul.f32 %v10310, %v366
        %v10331 = vmul.f32 %v10309, %v367
        %v10332 = vmul.f32 %v10308, %v368
        %v10333 = vmul.f32 %v10307, %v369
        %v10334 = vmul.f32 %v10306, %v370
        %v10335 = vmul.f32 %v10305, %v371
        %v10336 = vmul.f32 %v10304, %v372
        %v10337 = vmul.f32 %v10303, %v373
        %v10338 = vmul.f32 %v10302, %v374
        %v10339 = vmul.f32 %v10301, %v375
        %v10340 = vmul.f32 %v10300, %v376
        %v10341 = vmul.f32 %v10299, %v377
        %v10342 = vmul.f32 %v10298, %v378
        %v10343 = vmul.f32 %v10297, %v379
        %v10344 = vmul.f32 %v10296, %v380
        %v10345 = vmul.f32 %v10295, %v381
        %v10346 = vmul.f32 %v10294, %v382
        %v10347 = vmul.f32 %v10293, %v383
        %v10348 = vmul.f32 %v10292, %v384
        %v10349 = vmul.f32 %v10291, %v385
        %v10350 = vmul.f32 %v10290, %v386
        %v10351 = vmul.f32 %v10289, %v387
        %v10352 = vmul.f32 %v10320, %v388
        %s10353 = scalar_lea.vmem %s2, 256
        %v10354 = vld [vmem:[%s10353] sm:$0xff]
        %v10355 = vld [vmem:[%s10353 + $0x8] sm:$0xff]
        %v10356 = vld [vmem:[%s10353 + $0x10] sm:$0xff]
        %v10357 = vld [vmem:[%s10353 + $0x18] sm:$0xff]
        %v10359 = vsel %vm3393, %v10321, 0
        %v10362 = vsel %vm3393, %v10322, 0
        %v10365 = vsel %vm3393, %v10323, 0
        %v10368 = vsel %vm3393, %v10324, 0
        %v10371 = vsel %vm3393, %v10325, 0
        %v10374 = vsel %vm3393, %v10326, 0
        %v10377 = vsel %vm3393, %v10327, 0
        %v10380 = vsel %vm3393, %v10328, 0
        %v10383 = vsel %vm3393, %v10329, 0
        %v10386 = vsel %vm3393, %v10330, 0
        %v10389 = vsel %vm3393, %v10331, 0
        %v10392 = vsel %vm3393, %v10332, 0
        %v10395 = vsel %vm3393, %v10333, 0
        %v10398 = vsel %vm3393, %v10334, 0
        %v10401 = vsel %vm3393, %v10335, 0
        %v10404 = vsel %vm3393, %v10336, 0
        %v10407 = vsel %vm3393, %v10337, 0
        %v10410 = vsel %vm3393, %v10338, 0
        %v10413 = vsel %vm3393, %v10339, 0
        %v10416 = vsel %vm3393, %v10340, 0
        %v10419 = vsel %vm3393, %v10341, 0
        %v10422 = vsel %vm3393, %v10342, 0
        %v10425 = vsel %vm3393, %v10343, 0
        %v10428 = vsel %vm3393, %v10344, 0
        %v10431 = vsel %vm3393, %v10345, 0
        %v10434 = vsel %vm3393, %v10346, 0
        %v10437 = vsel %vm3393, %v10347, 0
        %v10440 = vsel %vm3393, %v10348, 0
        %v10443 = vsel %vm3393, %v10349, 0
        %v10446 = vsel %vm3393, %v10350, 0
        %v10449 = vsel %vm3393, %v10351, 0
        %v10452 = vsel %vm3393, %v10352, 0
        %10454 = vmatprep.subr.mxu0 0.0
        %10455 = vmatpush1.msra.mxu0 %v10354
        %10456 = vmatprep.subr.mxu0 0.0
        %10457 = vmatpush1.msra.mxu0 %v10355
        %10458 = vmatprep.subr.mxu0 0.0
        %10459 = vmatpush1.msra.mxu0 %v10356
        %10460 = vmatprep.subr.mxu0 0.0
        %10461 = vmatpush1.msra.mxu0 %v10357
        %10462 = vmatprep.subr.mxu0 0.0
        %10463 = vmatpush1.msra.mxu0 0.0
        %10464 = vmatprep.subr.mxu0 0.0
        %10465 = vmatpush1.msra.mxu0 0.0
        %10466 = vmatprep.subr.mxu0 0.0
        %10467 = vmatpush1.msra.mxu0 0.0
        %10468 = vmatprep.subr.mxu0 0.0
        %10469 = vmatpush1.msra.mxu0 0.0
        %10470 = vmatprep.subr.mxu0 0.0
        %10471 = vmatpush1.msra.mxu0 0.0
        %10472 = vmatprep.subr.mxu0 0.0
        %10473 = vmatpush1.msra.mxu0 0.0
        %10474 = vmatprep.subr.mxu0 0.0
        %10475 = vmatpush1.msra.mxu0 0.0
        %10476 = vmatprep.subr.mxu0 0.0
        %10477 = vmatpush1.msra.mxu0 0.0
        %10478 = vmatprep.subr.mxu0 0.0
        %10479 = vmatpush1.msra.mxu0 0.0
        %10480 = vmatprep.subr.mxu0 0.0
        %10481 = vmatpush1.msra.mxu0 0.0
        %10482 = vmatprep.subr.mxu0 0.0
        %10483 = vmatpush1.msra.mxu0 0.0
        %10484 = vmatprep.subr.mxu0 0.0
        %10485 = vmatpush1.msra.mxu0 0.0
        %10486 = vmatprep.subr.mxu0 0.0
        %10487 = vmatpush1.msra.mxu0 0.0
        %10488 = vmatprep.subr.mxu0 0.0
        %10489 = vmatpush1.msra.mxu0 0.0
        %10490 = vmatprep.subr.mxu0 0.0
        %10491 = vmatpush1.msra.mxu0 0.0
        %10492 = vmatprep.subr.mxu0 0.0
        %10493 = vmatpush1.msra.mxu0 0.0
        %10494 = vmatprep.subr.mxu0 0.0
        %10495 = vmatpush1.msra.mxu0 0.0
        %10496 = vmatprep.subr.mxu0 0.0
        %10497 = vmatpush1.msra.mxu0 0.0
        %10498 = vmatprep.subr.mxu0 0.0
        %10499 = vmatpush1.msra.mxu0 0.0
        %10500 = vmatprep.subr.mxu0 0.0
        %10501 = vmatpush1.msra.mxu0 0.0
        %10502 = vmatprep.subr.mxu0 0.0
        %10503 = vmatpush1.msra.mxu0 0.0
        %10504 = vmatprep.subr.mxu0 0.0
        %10505 = vmatpush1.msra.mxu0 0.0
        %10506 = vmatprep.subr.mxu0 0.0
        %10507 = vmatpush1.msra.mxu0 0.0
        %10508 = vmatprep.subr.mxu0 0.0
        %10509 = vmatpush1.msra.mxu0 0.0
        %10510 = vmatprep.subr.mxu0 0.0
        %10511 = vmatpush1.msra.mxu0 0.0
        %10512 = vmatprep.subr.mxu0 0.0
        %10513 = vmatpush1.msra.mxu0 0.0
        %10514 = vmatprep.subr.mxu0 0.0
        %10515 = vmatpush1.msra.mxu0 0.0
        %10516 = vmatprep.subr.mxu0 0.0
        %10517 = vmatpush1.msra.mxu0 0.0
        %10518 = vmatprep.mubr.f32.mxu0 0.0
        %10519 = vmatmul.mubr.f32.gmra.mrb[0].mxu0 %v10359
        %v10520 = vpop.f32.mrb[0].mxu0
        %v10521 = vadd.f32 0.0, %v10520
        %v10522 = vpop.f32.mrb[0].mxu0
        %10523 = vmatprep.mubr.f32.mxu0 0.0
        %10524 = vmatmul.mubr.f32.gmra.mrb[0].mxu0 %v10362
        %v10525 = vpop.f32.mrb[0].mxu0
        %v10526 = vadd.f32 0.0, %v10525
        %v10527 = vpop.f32.mrb[0].mxu0
        %10528 = vmatprep.mubr.f32.mxu0 0.0
        %10529 = vmatmul.mubr.f32.gmra.mrb[0].mxu0 %v10365
        %v10530 = vpop.f32.mrb[0].mxu0
        %v10531 = vadd.f32 0.0, %v10530
        %v10532 = vpop.f32.mrb[0].mxu0
        %10533 = vmatprep.mubr.f32.mxu0 0.0
        %10534 = vmatmul.mubr.f32.gmra.mrb[0].mxu0 %v10368
        %v10535 = vpop.f32.mrb[0].mxu0
        %v10536 = vadd.f32 0.0, %v10535
        %v10537 = vpop.f32.mrb[0].mxu0
        %10538 = vmatprep.mubr.f32.mxu0 0.0
        %10539 = vmatmul.mubr.f32.gmra.mrb[0].mxu0 %v10371
        %v10540 = vpop.f32.mrb[0].mxu0
        %v10541 = vadd.f32 0.0, %v10540
        %v10542 = vpop.f32.mrb[0].mxu0
        %10543 = vmatprep.mubr.f32.mxu0 0.0
        %10544 = vmatmul.mubr.f32.gmra.mrb[0].mxu0 %v10374
        %v10545 = vpop.f32.mrb[0].mxu0
        %v10546 = vadd.f32 0.0, %v10545
        %v10547 = vpop.f32.mrb[0].mxu0
        %10548 = vmatprep.mubr.f32.mxu0 0.0
        %10549 = vmatmul.mubr.f32.gmra.mrb[0].mxu0 %v10377
        %v10550 = vpop.f32.mrb[0].mxu0
        %v10551 = vadd.f32 0.0, %v10550
        %v10552 = vpop.f32.mrb[0].mxu0
        %10553 = vmatprep.mubr.f32.mxu0 0.0
        %10554 = vmatmul.mubr.f32.gmra.mrb[0].mxu0 %v10380
        %v10555 = vpop.f32.mrb[0].mxu0
        %v10556 = vadd.f32 0.0, %v10555
        %v10557 = vpop.f32.mrb[0].mxu0
        %10558 = vmatprep.mubr.f32.mxu0 0.0
        %10559 = vmatmul.mubr.f32.gmra.mrb[0].mxu0 %v10383
        %v10560 = vpop.f32.mrb[0].mxu0
        %v10561 = vadd.f32 0.0, %v10560
        %v10562 = vpop.f32.mrb[0].mxu0
        %10563 = vmatprep.mubr.f32.mxu0 0.0
        %10564 = vmatmul.mubr.f32.gmra.mrb[0].mxu0 %v10386
        %v10565 = vpop.f32.mrb[0].mxu0
        %v10566 = vadd.f32 0.0, %v10565
        %v10567 = vpop.f32.mrb[0].mxu0
        %10568 = vmatprep.mubr.f32.mxu0 0.0
        %10569 = vmatmul.mubr.f32.gmra.mrb[0].mxu0 %v10389
        %v10570 = vpop.f32.mrb[0].mxu0
        %v10571 = vadd.f32 0.0, %v10570
        %v10572 = vpop.f32.mrb[0].mxu0
        %10573 = vmatprep.mubr.f32.mxu0 0.0
        %10574 = vmatmul.mubr.f32.gmra.mrb[0].mxu0 %v10392
        %v10575 = vpop.f32.mrb[0].mxu0
        %v10576 = vadd.f32 0.0, %v10575
        %v10577 = vpop.f32.mrb[0].mxu0
        %10578 = vmatprep.mubr.f32.mxu0 0.0
        %10579 = vmatmul.mubr.f32.gmra.mrb[0].mxu0 %v10395
        %v10580 = vpop.f32.mrb[0].mxu0
        %v10581 = vadd.f32 0.0, %v10580
        %v10582 = vpop.f32.mrb[0].mxu0
        %10583 = vmatprep.mubr.f32.mxu0 0.0
        %10584 = vmatmul.mubr.f32.gmra.mrb[0].mxu0 %v10398
        %v10585 = vpop.f32.mrb[0].mxu0
        %v10586 = vadd.f32 0.0, %v10585
        %v10587 = vpop.f32.mrb[0].mxu0
        %10588 = vmatprep.mubr.f32.mxu0 0.0
        %10589 = vmatmul.mubr.f32.gmra.mrb[0].mxu0 %v10401
        %v10590 = vpop.f32.mrb[0].mxu0
        %v10591 = vadd.f32 0.0, %v10590
        %v10592 = vpop.f32.mrb[0].mxu0
        %10593 = vmatprep.mubr.f32.mxu0 0.0
        %10594 = vmatmul.mubr.f32.gmra.mrb[0].mxu0 %v10404
        %v10595 = vpop.f32.mrb[0].mxu0
        %v10596 = vadd.f32 0.0, %v10595
        %v10597 = vpop.f32.mrb[0].mxu0
        %10598 = vmatprep.mubr.f32.mxu0 0.0
        %10599 = vmatmul.mubr.f32.gmra.mrb[0].mxu0 %v10407
        %v10600 = vpop.f32.mrb[0].mxu0
        %v10601 = vadd.f32 0.0, %v10600
        %v10602 = vpop.f32.mrb[0].mxu0
        %10603 = vmatprep.mubr.f32.mxu0 0.0
        %10604 = vmatmul.mubr.f32.gmra.mrb[0].mxu0 %v10410
        %v10605 = vpop.f32.mrb[0].mxu0
        %v10606 = vadd.f32 0.0, %v10605
        %v10607 = vpop.f32.mrb[0].mxu0
        %10608 = vmatprep.mubr.f32.mxu0 0.0
        %10609 = vmatmul.mubr.f32.gmra.mrb[0].mxu0 %v10413
        %v10610 = vpop.f32.mrb[0].mxu0
        %v10611 = vadd.f32 0.0, %v10610
        %v10612 = vpop.f32.mrb[0].mxu0
        %10613 = vmatprep.mubr.f32.mxu0 0.0
        %10614 = vmatmul.mubr.f32.gmra.mrb[0].mxu0 %v10416
        %v10615 = vpop.f32.mrb[0].mxu0
        %v10616 = vadd.f32 0.0, %v10615
        %v10617 = vpop.f32.mrb[0].mxu0
        %10618 = vmatprep.mubr.f32.mxu0 0.0
        %10619 = vmatmul.mubr.f32.gmra.mrb[0].mxu0 %v10419
        %v10620 = vpop.f32.mrb[0].mxu0
        %v10621 = vadd.f32 0.0, %v10620
        %v10622 = vpop.f32.mrb[0].mxu0
        %10623 = vmatprep.mubr.f32.mxu0 0.0
        %10624 = vmatmul.mubr.f32.gmra.mrb[0].mxu0 %v10422
        %v10625 = vpop.f32.mrb[0].mxu0
        %v10626 = vadd.f32 0.0, %v10625
        %v10627 = vpop.f32.mrb[0].mxu0
        %10628 = vmatprep.mubr.f32.mxu0 0.0
        %10629 = vmatmul.mubr.f32.gmra.mrb[0].mxu0 %v10425
        %v10630 = vpop.f32.mrb[0].mxu0
        %v10631 = vadd.f32 0.0, %v10630
        %v10632 = vpop.f32.mrb[0].mxu0
        %10633 = vmatprep.mubr.f32.mxu0 0.0
        %10634 = vmatmul.mubr.f32.gmra.mrb[0].mxu0 %v10428
        %v10635 = vpop.f32.mrb[0].mxu0
        %v10636 = vadd.f32 0.0, %v10635
        %v10637 = vpop.f32.mrb[0].mxu0
        %10638 = vmatprep.mubr.f32.mxu0 0.0
        %10639 = vmatmul.mubr.f32.gmra.mrb[0].mxu0 %v10431
        %v10640 = vpop.f32.mrb[0].mxu0
        %v10641 = vadd.f32 0.0, %v10640
        %v10642 = vpop.f32.mrb[0].mxu0
        %10643 = vmatprep.mubr.f32.mxu0 0.0
        %10644 = vmatmul.mubr.f32.gmra.mrb[0].mxu0 %v10434
        %v10645 = vpop.f32.mrb[0].mxu0
        %v10646 = vadd.f32 0.0, %v10645
        %v10647 = vpop.f32.mrb[0].mxu0
        %10648 = vmatprep.mubr.f32.mxu0 0.0
        %10649 = vmatmul.mubr.f32.gmra.mrb[0].mxu0 %v10437
        %v10650 = vpop.f32.mrb[0].mxu0
        %v10651 = vadd.f32 0.0, %v10650
        %v10652 = vpop.f32.mrb[0].mxu0
        %10653 = vmatprep.mubr.f32.mxu0 0.0
        %10654 = vmatmul.mubr.f32.gmra.mrb[0].mxu0 %v10440
        %v10655 = vpop.f32.mrb[0].mxu0
        %v10656 = vadd.f32 0.0, %v10655
        %v10657 = vpop.f32.mrb[0].mxu0
        %10658 = vmatprep.mubr.f32.mxu0 0.0
        %10659 = vmatmul.mubr.f32.gmra.mrb[0].mxu0 %v10443
        %v10660 = vpop.f32.mrb[0].mxu0
        %v10661 = vadd.f32 0.0, %v10660
        %v10662 = vpop.f32.mrb[0].mxu0
        %10663 = vmatprep.mubr.f32.mxu0 0.0
        %10664 = vmatmul.mubr.f32.gmra.mrb[0].mxu0 %v10446
        %v10665 = vpop.f32.mrb[0].mxu0
        %v10666 = vadd.f32 0.0, %v10665
        %v10667 = vpop.f32.mrb[0].mxu0
        %10668 = vmatprep.mubr.f32.mxu0 0.0
        %10669 = vmatmul.mubr.f32.gmra.mrb[0].mxu0 %v10449
        %v10670 = vpop.f32.mrb[0].mxu0
        %v10671 = vadd.f32 0.0, %v10670
        %v10672 = vpop.f32.mrb[0].mxu0
        %10673 = vmatprep.mubr.f32.mxu0 0.0
        %10674 = vmatmul.mubr.f32.gmra.mrb[0].mxu0 %v10452
        %v10675 = vpop.f32.mrb[0].mxu0
        %v10676 = vadd.f32 0.0, %v10675
        %v10677 = vpop.f32.mrb[0].mxu0
        %10678 = vdwg.mxu0
        %v10679 = vmul.f32 %v10671, %v421
        %v10680 = vmul.f32 %v10676, %v422
        %v10681 = vmul.f32 %v10521, %v423
        %v10682 = vmul.f32 %v10526, %v424
        %v10683 = vmul.f32 %v10531, %v425
        %v10684 = vmul.f32 %v10536, %v426
        %v10685 = vmul.f32 %v10541, %v427
        %v10686 = vmul.f32 %v10546, %v428
        %v10687 = vmul.f32 %v10551, %v429
        %v10688 = vmul.f32 %v10556, %v430
        %v10689 = vmul.f32 %v10561, %v431
        %v10690 = vmul.f32 %v10566, %v432
        %v10691 = vmul.f32 %v10571, %v433
        %v10692 = vmul.f32 %v10576, %v434
        %v10693 = vmul.f32 %v10581, %v435
        %v10694 = vmul.f32 %v10586, %v436
        %v10695 = vmul.f32 %v10591, %v437
        %v10696 = vmul.f32 %v10596, %v438
        %v10697 = vmul.f32 %v10601, %v439
        %v10698 = vmul.f32 %v10606, %v440
        %v10699 = vmul.f32 %v10611, %v441
        %v10700 = vmul.f32 %v10616, %v442
        %v10701 = vmul.f32 %v10621, %v443
        %v10702 = vmul.f32 %v10626, %v444
        %v10703 = vmul.f32 %v10631, %v445
        %v10704 = vmul.f32 %v10636, %v446
        %v10705 = vmul.f32 %v10641, %v447
        %v10706 = vmul.f32 %v10646, %v448
        %v10707 = vmul.f32 %v10651, %v449
        %v10708 = vmul.f32 %v10656, %v450
        %v10709 = vmul.f32 %v10661, %v451
        %v10710 = vmul.f32 %v10666, %v452
        %10743 = vrot.lane.b32.xlu0 %v10521, 96
        %v10744 = vpop.permute.xlu0 %10743
        %10745 = vrot.lane.b32.xlu0 %v10526, 96
        %v10746 = vpop.permute.xlu0 %10745
        %10747 = vrot.lane.b32.xlu0 %v10531, 96
        %v10748 = vpop.permute.xlu0 %10747
        %10749 = vrot.lane.b32.xlu0 %v10536, 96
        %v10750 = vpop.permute.xlu0 %10749
        %10751 = vrot.lane.b32.xlu0 %v10541, 96
        %v10752 = vpop.permute.xlu0 %10751
        %10753 = vrot.lane.b32.xlu0 %v10546, 96
        %v10754 = vpop.permute.xlu0 %10753
        %10755 = vrot.lane.b32.xlu0 %v10551, 96
        %v10756 = vpop.permute.xlu0 %10755
        %10757 = vrot.lane.b32.xlu0 %v10556, 96
        %v10758 = vpop.permute.xlu0 %10757
        %10759 = vrot.lane.b32.xlu0 %v10561, 96
        %v10760 = vpop.permute.xlu0 %10759
        %10761 = vrot.lane.b32.xlu0 %v10566, 96
        %v10762 = vpop.permute.xlu0 %10761
        %10763 = vrot.lane.b32.xlu0 %v10571, 96
        %v10764 = vpop.permute.xlu0 %10763
        %10765 = vrot.lane.b32.xlu0 %v10576, 96
        %v10766 = vpop.permute.xlu0 %10765
        %10767 = vrot.lane.b32.xlu0 %v10581, 96
        %v10768 = vpop.permute.xlu0 %10767
        %10769 = vrot.lane.b32.xlu0 %v10586, 96
        %v10770 = vpop.permute.xlu0 %10769
        %10771 = vrot.lane.b32.xlu0 %v10591, 96
        %v10772 = vpop.permute.xlu0 %10771
        %10773 = vrot.lane.b32.xlu0 %v10596, 96
        %v10774 = vpop.permute.xlu0 %10773
        %10775 = vrot.lane.b32.xlu0 %v10601, 96
        %v10776 = vpop.permute.xlu0 %10775
        %10777 = vrot.lane.b32.xlu0 %v10606, 96
        %v10778 = vpop.permute.xlu0 %10777
        %10779 = vrot.lane.b32.xlu0 %v10611, 96
        %v10780 = vpop.permute.xlu0 %10779
        %10781 = vrot.lane.b32.xlu0 %v10616, 96
        %v10782 = vpop.permute.xlu0 %10781
        %10783 = vrot.lane.b32.xlu0 %v10621, 96
        %v10784 = vpop.permute.xlu0 %10783
        %10785 = vrot.lane.b32.xlu0 %v10626, 96
        %v10786 = vpop.permute.xlu0 %10785
        %10787 = vrot.lane.b32.xlu0 %v10631, 96
        %v10788 = vpop.permute.xlu0 %10787
        %10789 = vrot.lane.b32.xlu0 %v10636, 96
        %v10790 = vpop.permute.xlu0 %10789
        %10791 = vrot.lane.b32.xlu0 %v10641, 96
        %v10792 = vpop.permute.xlu0 %10791
        %10793 = vrot.lane.b32.xlu0 %v10646, 96
        %v10794 = vpop.permute.xlu0 %10793
        %10795 = vrot.lane.b32.xlu0 %v10651, 96
        %v10796 = vpop.permute.xlu0 %10795
        %10797 = vrot.lane.b32.xlu0 %v10656, 96
        %v10798 = vpop.permute.xlu0 %10797
        %10799 = vrot.lane.b32.xlu0 %v10661, 96
        %v10800 = vpop.permute.xlu0 %10799
        %10801 = vrot.lane.b32.xlu0 %v10666, 96
        %v10802 = vpop.permute.xlu0 %10801
        %10803 = vrot.lane.b32.xlu0 %v10671, 96
        %v10804 = vpop.permute.xlu0 %10803
        %10805 = vrot.lane.b32.xlu0 %v10676, 96
        %v10806 = vpop.permute.xlu0 %10805
        %v10839 = vadd.f32 %v10679, %v10744
        %v10840 = vadd.f32 %v10680, %v10746
        %v10841 = vadd.f32 %v10681, %v10748
        %v10842 = vadd.f32 %v10682, %v10750
        %v10843 = vadd.f32 %v10683, %v10752
        %v10844 = vadd.f32 %v10684, %v10754
        %v10845 = vadd.f32 %v10685, %v10756
        %v10846 = vadd.f32 %v10686, %v10758
        %v10847 = vadd.f32 %v10687, %v10760
        %v10848 = vadd.f32 %v10688, %v10762
        %v10849 = vadd.f32 %v10689, %v10764
        %v10850 = vadd.f32 %v10690, %v10766
        %v10851 = vadd.f32 %v10691, %v10768
        %v10852 = vadd.f32 %v10692, %v10770
        %v10853 = vadd.f32 %v10693, %v10772
        %v10854 = vadd.f32 %v10694, %v10774
        %v10855 = vadd.f32 %v10695, %v10776
        %v10856 = vadd.f32 %v10696, %v10778
        %v10857 = vadd.f32 %v10697, %v10780
        %v10858 = vadd.f32 %v10698, %v10782
        %v10859 = vadd.f32 %v10699, %v10784
        %v10860 = vadd.f32 %v10700, %v10786
        %v10861 = vadd.f32 %v10701, %v10788
        %v10862 = vadd.f32 %v10702, %v10790
        %v10863 = vadd.f32 %v10703, %v10792
        %v10864 = vadd.f32 %v10704, %v10794
        %v10865 = vadd.f32 %v10705, %v10796
        %v10866 = vadd.f32 %v10706, %v10798
        %v10867 = vadd.f32 %v10707, %v10800
        %v10868 = vadd.f32 %v10708, %v10802
        %v10869 = vadd.f32 %v10709, %v10804
        %v10870 = vadd.f32 %v10710, %v10806
        %10871 = vrot.lane.b32.xlu0 %v10521, 64
        %v10872 = vpop.permute.xlu0 %10871
        %10873 = vrot.lane.b32.xlu0 %v10526, 64
        %v10874 = vpop.permute.xlu0 %10873
        %10875 = vrot.lane.b32.xlu0 %v10531, 64
        %v10876 = vpop.permute.xlu0 %10875
        %10877 = vrot.lane.b32.xlu0 %v10536, 64
        %v10878 = vpop.permute.xlu0 %10877
        %10879 = vrot.lane.b32.xlu0 %v10541, 64
        %v10880 = vpop.permute.xlu0 %10879
        %10881 = vrot.lane.b32.xlu0 %v10546, 64
        %v10882 = vpop.permute.xlu0 %10881
        %10883 = vrot.lane.b32.xlu0 %v10551, 64
        %v10884 = vpop.permute.xlu0 %10883
        %10885 = vrot.lane.b32.xlu0 %v10556, 64
        %v10886 = vpop.permute.xlu0 %10885
        %10887 = vrot.lane.b32.xlu0 %v10561, 64
        %v10888 = vpop.permute.xlu0 %10887
        %10889 = vrot.lane.b32.xlu0 %v10566, 64
        %v10890 = vpop.permute.xlu0 %10889
        %10891 = vrot.lane.b32.xlu0 %v10571, 64
        %v10892 = vpop.permute.xlu0 %10891
        %10893 = vrot.lane.b32.xlu0 %v10576, 64
        %v10894 = vpop.permute.xlu0 %10893
        %10895 = vrot.lane.b32.xlu0 %v10581, 64
        %v10896 = vpop.permute.xlu0 %10895
        %10897 = vrot.lane.b32.xlu0 %v10586, 64
        %v10898 = vpop.permute.xlu0 %10897
        %10899 = vrot.lane.b32.xlu0 %v10591, 64
        %v10900 = vpop.permute.xlu0 %10899
        %10901 = vrot.lane.b32.xlu0 %v10596, 64
        %v10902 = vpop.permute.xlu0 %10901
        %10903 = vrot.lane.b32.xlu0 %v10601, 64
        %v10904 = vpop.permute.xlu0 %10903
        %10905 = vrot.lane.b32.xlu0 %v10606, 64
        %v10906 = vpop.permute.xlu0 %10905
        %10907 = vrot.lane.b32.xlu0 %v10611, 64
        %v10908 = vpop.permute.xlu0 %10907
        %10909 = vrot.lane.b32.xlu0 %v10616, 64
        %v10910 = vpop.permute.xlu0 %10909
        %10911 = vrot.lane.b32.xlu0 %v10621, 64
        %v10912 = vpop.permute.xlu0 %10911
        %10913 = vrot.lane.b32.xlu0 %v10626, 64
        %v10914 = vpop.permute.xlu0 %10913
        %10915 = vrot.lane.b32.xlu0 %v10631, 64
        %v10916 = vpop.permute.xlu0 %10915
        %10917 = vrot.lane.b32.xlu0 %v10636, 64
        %v10918 = vpop.permute.xlu0 %10917
        %10919 = vrot.lane.b32.xlu0 %v10641, 64
        %v10920 = vpop.permute.xlu0 %10919
        %10921 = vrot.lane.b32.xlu0 %v10646, 64
        %v10922 = vpop.permute.xlu0 %10921
        %10923 = vrot.lane.b32.xlu0 %v10651, 64
        %v10924 = vpop.permute.xlu0 %10923
        %10925 = vrot.lane.b32.xlu0 %v10656, 64
        %v10926 = vpop.permute.xlu0 %10925
        %10927 = vrot.lane.b32.xlu0 %v10661, 64
        %v10928 = vpop.permute.xlu0 %10927
        %10929 = vrot.lane.b32.xlu0 %v10666, 64
        %v10930 = vpop.permute.xlu0 %10929
        %10931 = vrot.lane.b32.xlu0 %v10671, 64
        %v10932 = vpop.permute.xlu0 %10931
        %10933 = vrot.lane.b32.xlu0 %v10676, 64
        %v10934 = vpop.permute.xlu0 %10933
        %v10967 = vmul.f32 %v10876, %v485
        %v10968 = vmul.f32 %v10878, %v486
        %v10969 = vmul.f32 %v10880, %v487
        %v10970 = vmul.f32 %v10882, %v488
        %v10971 = vmul.f32 %v10884, %v489
        %v10972 = vmul.f32 %v10886, %v490
        %v10973 = vmul.f32 %v10888, %v491
        %v10974 = vmul.f32 %v10890, %v492
        %v10975 = vmul.f32 %v10892, %v493
        %v10976 = vmul.f32 %v10894, %v494
        %v10977 = vmul.f32 %v10896, %v495
        %v10978 = vmul.f32 %v10898, %v496
        %v10979 = vmul.f32 %v10900, %v497
        %v10980 = vmul.f32 %v10902, %v498
        %v10981 = vmul.f32 %v10904, %v499
        %v10982 = vmul.f32 %v10906, %v500
        %v10983 = vmul.f32 %v10908, %v501
        %v10984 = vmul.f32 %v10910, %v502
        %v10985 = vmul.f32 %v10912, %v503
        %v10986 = vmul.f32 %v10914, %v504
        %v10987 = vmul.f32 %v10916, %v505
        %v10988 = vmul.f32 %v10918, %v506
        %v10989 = vmul.f32 %v10920, %v507
        %v10990 = vmul.f32 %v10922, %v508
        %v10991 = vmul.f32 %v10924, %v509
        %v10992 = vmul.f32 %v10926, %v510
        %v10993 = vmul.f32 %v10928, %v511
        %v10994 = vmul.f32 %v10930, %v512
        %v10995 = vmul.f32 %v10932, %v513
        %v10996 = vmul.f32 %v10934, %v514
        %v10997 = vmul.f32 %v10872, %v515
        %v10998 = vmul.f32 %v10874, %v516
        %v10999 = vadd.f32 %v10839, %v10967
        %v11000 = vadd.f32 %v10840, %v10968
        %v11001 = vadd.f32 %v10841, %v10969
        %v11002 = vadd.f32 %v10842, %v10970
        %v11003 = vadd.f32 %v10843, %v10971
        %v11004 = vadd.f32 %v10844, %v10972
        %v11005 = vadd.f32 %v10845, %v10973
        %v11006 = vadd.f32 %v10846, %v10974
        %v11007 = vadd.f32 %v10847, %v10975
        %v11008 = vadd.f32 %v10848, %v10976
        %v11009 = vadd.f32 %v10849, %v10977
        %v11010 = vadd.f32 %v10850, %v10978
        %v11011 = vadd.f32 %v10851, %v10979
        %v11012 = vadd.f32 %v10852, %v10980
        %v11013 = vadd.f32 %v10853, %v10981
        %v11014 = vadd.f32 %v10854, %v10982
        %v11015 = vadd.f32 %v10855, %v10983
        %v11016 = vadd.f32 %v10856, %v10984
        %v11017 = vadd.f32 %v10857, %v10985
        %v11018 = vadd.f32 %v10858, %v10986
        %v11019 = vadd.f32 %v10859, %v10987
        %v11020 = vadd.f32 %v10860, %v10988
        %v11021 = vadd.f32 %v10861, %v10989
        %v11022 = vadd.f32 %v10862, %v10990
        %v11023 = vadd.f32 %v10863, %v10991
        %v11024 = vadd.f32 %v10864, %v10992
        %v11025 = vadd.f32 %v10865, %v10993
        %v11026 = vadd.f32 %v10866, %v10994
        %v11027 = vadd.f32 %v10867, %v10995
        %v11028 = vadd.f32 %v10868, %v10996
        %v11029 = vadd.f32 %v10869, %v10997
        %v11030 = vadd.f32 %v10870, %v10998
        %v11031 = vadd.f32 %v10225, %v10999
        %v11032 = vadd.f32 %v10226, %v11000
        %v11033 = vadd.f32 %v10227, %v11001
        %v11034 = vadd.f32 %v10228, %v11002
        %v11035 = vadd.f32 %v10229, %v11003
        %v11036 = vadd.f32 %v10230, %v11004
        %v11037 = vadd.f32 %v10231, %v11005
        %v11038 = vadd.f32 %v10232, %v11006
        %v11039 = vadd.f32 %v10233, %v11007
        %v11040 = vadd.f32 %v10234, %v11008
        %v11041 = vadd.f32 %v10235, %v11009
        %v11042 = vadd.f32 %v10236, %v11010
        %v11043 = vadd.f32 %v10237, %v11011
        %v11044 = vadd.f32 %v10238, %v11012
        %v11045 = vadd.f32 %v10239, %v11013
        %v11046 = vadd.f32 %v10240, %v11014
        %v11047 = vadd.f32 %v10241, %v11015
        %v11048 = vadd.f32 %v10242, %v11016
        %v11049 = vadd.f32 %v10243, %v11017
        %v11050 = vadd.f32 %v10244, %v11018
        %v11051 = vadd.f32 %v10245, %v11019
        %v11052 = vadd.f32 %v10246, %v11020
        %v11053 = vadd.f32 %v10247, %v11021
        %v11054 = vadd.f32 %v10248, %v11022
        %v11055 = vadd.f32 %v10249, %v11023
        %v11056 = vadd.f32 %v10250, %v11024
        %v11057 = vadd.f32 %v10251, %v11025
        %v11058 = vadd.f32 %v10252, %v11026
        %v11059 = vadd.f32 %v10253, %v11027
        %v11060 = vadd.f32 %v10254, %v11028
        %v11061 = vadd.f32 %v10255, %v11029
        %v11062 = vadd.f32 %v10256, %v11030
        %v11063 = vmax.f32 %v11031, 0.0
        %v11064 = vmax.f32 %v11032, 0.0
        %v11065 = vmax.f32 %v11033, 0.0
        %v11066 = vmax.f32 %v11034, 0.0
        %v11067 = vmax.f32 %v11035, 0.0
        %v11068 = vmax.f32 %v11036, 0.0
        %v11069 = vmax.f32 %v11037, 0.0
        %v11070 = vmax.f32 %v11038, 0.0
        %v11071 = vmax.f32 %v11039, 0.0
        %v11072 = vmax.f32 %v11040, 0.0
        %v11073 = vmax.f32 %v11041, 0.0
        %v11074 = vmax.f32 %v11042, 0.0
        %v11075 = vmax.f32 %v11043, 0.0
        %v11076 = vmax.f32 %v11044, 0.0
        %v11077 = vmax.f32 %v11045, 0.0
        %v11078 = vmax.f32 %v11046, 0.0
        %v11079 = vmax.f32 %v11047, 0.0
        %v11080 = vmax.f32 %v11048, 0.0
        %v11081 = vmax.f32 %v11049, 0.0
        %v11082 = vmax.f32 %v11050, 0.0
        %v11083 = vmax.f32 %v11051, 0.0
        %v11084 = vmax.f32 %v11052, 0.0
        %v11085 = vmax.f32 %v11053, 0.0
        %v11086 = vmax.f32 %v11054, 0.0
        %v11087 = vmax.f32 %v11055, 0.0
        %v11088 = vmax.f32 %v11056, 0.0
        %v11089 = vmax.f32 %v11057, 0.0
        %v11090 = vmax.f32 %v11058, 0.0
        %v11091 = vmax.f32 %v11059, 0.0
        %v11092 = vmax.f32 %v11060, 0.0
        %v11093 = vmax.f32 %v11061, 0.0
        %v11094 = vmax.f32 %v11062, 0.0
        %v11095 = vlaneseq
        %v11096 = vshrl.u32 %v11095, 7
        %v11097 = vsub.s32 0, %v11096
        %v11098 = vrot.slane %v8772, %v11097
        %v11099 = vmul.f32 %v11063, %v11098
        %v11100 = vmul.f32 %v11064, %v11098
        %v11101 = vmul.f32 %v11065, %v11098
        %v11102 = vmul.f32 %v11066, %v11098
        %v11103 = vmul.f32 %v11067, %v11098
        %v11104 = vmul.f32 %v11068, %v11098
        %v11105 = vmul.f32 %v11069, %v11098
        %v11106 = vmul.f32 %v11070, %v11098
        %v11107 = vmul.f32 %v11071, %v11098
        %v11108 = vmul.f32 %v11072, %v11098
        %v11109 = vmul.f32 %v11073, %v11098
        %v11110 = vmul.f32 %v11074, %v11098
        %v11111 = vmul.f32 %v11075, %v11098
        %v11112 = vmul.f32 %v11076, %v11098
        %v11113 = vmul.f32 %v11077, %v11098
        %v11114 = vmul.f32 %v11078, %v11098
        %v11115 = vmul.f32 %v11079, %v11098
        %v11116 = vmul.f32 %v11080, %v11098
        %v11117 = vmul.f32 %v11081, %v11098
        %v11118 = vmul.f32 %v11082, %v11098
        %v11119 = vmul.f32 %v11083, %v11098
        %v11120 = vmul.f32 %v11084, %v11098
        %v11121 = vmul.f32 %v11085, %v11098
        %v11122 = vmul.f32 %v11086, %v11098
        %v11123 = vmul.f32 %v11087, %v11098
        %v11124 = vmul.f32 %v11088, %v11098
        %v11125 = vmul.f32 %v11089, %v11098
        %v11126 = vmul.f32 %v11090, %v11098
        %v11127 = vmul.f32 %v11091, %v11098
        %v11128 = vmul.f32 %v11092, %v11098
        %v11129 = vmul.f32 %v11093, %v11098
        %v11130 = vmul.f32 %v11094, %v11098
        %v11131 = vlaneseq
        %v11132 = vshrl.u32 %v11131, 7
        %v11133 = vsub.s32 1, %v11132
        %v11134 = vrot.slane %v8772, %v11133
        %v11135 = vadd.f32 %v11099, %v11134
        %v11136 = vadd.f32 %v11100, %v11134
        %v11137 = vadd.f32 %v11101, %v11134
        %v11138 = vadd.f32 %v11102, %v11134
        %v11139 = vadd.f32 %v11103, %v11134
        %v11140 = vadd.f32 %v11104, %v11134
        %v11141 = vadd.f32 %v11105, %v11134
        %v11142 = vadd.f32 %v11106, %v11134
        %v11143 = vadd.f32 %v11107, %v11134
        %v11144 = vadd.f32 %v11108, %v11134
        %v11145 = vadd.f32 %v11109, %v11134
        %v11146 = vadd.f32 %v11110, %v11134
        %v11147 = vadd.f32 %v11111, %v11134
        %v11148 = vadd.f32 %v11112, %v11134
        %v11149 = vadd.f32 %v11113, %v11134
        %v11150 = vadd.f32 %v11114, %v11134
        %v11151 = vadd.f32 %v11115, %v11134
        %v11152 = vadd.f32 %v11116, %v11134
        %v11153 = vadd.f32 %v11117, %v11134
        %v11154 = vadd.f32 %v11118, %v11134
        %v11155 = vadd.f32 %v11119, %v11134
        %v11156 = vadd.f32 %v11120, %v11134
        %v11157 = vadd.f32 %v11121, %v11134
        %v11158 = vadd.f32 %v11122, %v11134
        %v11159 = vadd.f32 %v11123, %v11134
        %v11160 = vadd.f32 %v11124, %v11134
        %v11161 = vadd.f32 %v11125, %v11134
        %v11162 = vadd.f32 %v11126, %v11134
        %v11163 = vadd.f32 %v11127, %v11134
        %v11164 = vadd.f32 %v11128, %v11134
        %v11165 = vadd.f32 %v11129, %v11134
        %v11166 = vadd.f32 %v11130, %v11134
        %v11167 = vlaneseq
        %v11168 = vshrl.u32 %v11167, 7
        %v11169 = vsub.s32 2, %v11168
        %v11170 = vrot.slane %v8772, %v11169
        %11172 = vrot.lane.b32.xlu0 %v11170, 96
        %v11173 = vpop.permute.xlu0 %11172
        %v11175 = vmul.f32 %v9715, %v11173
        %v11176 = vmul.f32 %v9720, %v11173
        %v11177 = vmul.f32 %v9725, %v11173
        %v11178 = vmul.f32 %v9730, %v11173
        %v11179 = vmul.f32 %v9735, %v11173
        %v11180 = vmul.f32 %v9740, %v11173
        %v11181 = vmul.f32 %v9745, %v11173
        %v11182 = vmul.f32 %v9750, %v11173
        %v11183 = vmul.f32 %v9755, %v11173
        %v11184 = vmul.f32 %v9760, %v11173
        %v11185 = vmul.f32 %v9765, %v11173
        %v11186 = vmul.f32 %v9770, %v11173
        %v11187 = vmul.f32 %v9775, %v11173
        %v11188 = vmul.f32 %v9780, %v11173
        %v11189 = vmul.f32 %v9785, %v11173
        %v11190 = vmul.f32 %v9790, %v11173
        %v11191 = vmul.f32 %v9795, %v11173
        %v11192 = vmul.f32 %v9800, %v11173
        %v11193 = vmul.f32 %v9805, %v11173
        %v11194 = vmul.f32 %v9810, %v11173
        %v11195 = vmul.f32 %v9815, %v11173
        %v11196 = vmul.f32 %v9820, %v11173
        %v11197 = vmul.f32 %v9825, %v11173
        %v11198 = vmul.f32 %v9830, %v11173
        %v11199 = vmul.f32 %v9835, %v11173
        %v11200 = vmul.f32 %v9840, %v11173
        %v11201 = vmul.f32 %v9845, %v11173
        %v11202 = vmul.f32 %v9850, %v11173
        %v11203 = vmul.f32 %v9855, %v11173
        %v11204 = vmul.f32 %v9860, %v11173
        %v11205 = vmul.f32 %v9865, %v11173
        %v11206 = vmul.f32 %v9870, %v11173
        %v11207 = vlaneseq
        %v11208 = vshrl.u32 %v11207, 7
        %v11209 = vsub.s32 3, %v11208
        %v11210 = vrot.slane %v8772, %v11209
        %11212 = vrot.lane.b32.xlu0 %v11210, 96
        %v11213 = vpop.permute.xlu0 %11212
        %v11215 = vadd.f32 %v11175, %v11213
        %v11216 = vadd.f32 %v11176, %v11213
        %v11217 = vadd.f32 %v11177, %v11213
        %v11218 = vadd.f32 %v11178, %v11213
        %v11219 = vadd.f32 %v11179, %v11213
        %v11220 = vadd.f32 %v11180, %v11213
        %v11221 = vadd.f32 %v11181, %v11213
        %v11222 = vadd.f32 %v11182, %v11213
        %v11223 = vadd.f32 %v11183, %v11213
        %v11224 = vadd.f32 %v11184, %v11213
        %v11225 = vadd.f32 %v11185, %v11213
        %v11226 = vadd.f32 %v11186, %v11213
        %v11227 = vadd.f32 %v11187, %v11213
        %v11228 = vadd.f32 %v11188, %v11213
        %v11229 = vadd.f32 %v11189, %v11213
        %v11230 = vadd.f32 %v11190, %v11213
        %v11231 = vadd.f32 %v11191, %v11213
        %v11232 = vadd.f32 %v11192, %v11213
        %v11233 = vadd.f32 %v11193, %v11213
        %v11234 = vadd.f32 %v11194, %v11213
        %v11235 = vadd.f32 %v11195, %v11213
        %v11236 = vadd.f32 %v11196, %v11213
        %v11237 = vadd.f32 %v11197, %v11213
        %v11238 = vadd.f32 %v11198, %v11213
        %v11239 = vadd.f32 %v11199, %v11213
        %v11240 = vadd.f32 %v11200, %v11213
        %v11241 = vadd.f32 %v11201, %v11213
        %v11242 = vadd.f32 %v11202, %v11213
        %v11243 = vadd.f32 %v11203, %v11213
        %v11244 = vadd.f32 %v11204, %v11213
        %v11245 = vadd.f32 %v11205, %v11213
        %v11246 = vadd.f32 %v11206, %v11213
        %11279 = vrot.lane.b32.xlu0 %v11215, 32
        %v11280 = vpop.permute.xlu0 %11279
        %11281 = vrot.lane.b32.xlu0 %v11216, 32
        %v11282 = vpop.permute.xlu0 %11281
        %11283 = vrot.lane.b32.xlu0 %v11217, 32
        %v11284 = vpop.permute.xlu0 %11283
        %11285 = vrot.lane.b32.xlu0 %v11218, 32
        %v11286 = vpop.permute.xlu0 %11285
        %11287 = vrot.lane.b32.xlu0 %v11219, 32
        %v11288 = vpop.permute.xlu0 %11287
        %11289 = vrot.lane.b32.xlu0 %v11220, 32
        %v11290 = vpop.permute.xlu0 %11289
        %11291 = vrot.lane.b32.xlu0 %v11221, 32
        %v11292 = vpop.permute.xlu0 %11291
        %11293 = vrot.lane.b32.xlu0 %v11222, 32
        %v11294 = vpop.permute.xlu0 %11293
        %11295 = vrot.lane.b32.xlu0 %v11223, 32
        %v11296 = vpop.permute.xlu0 %11295
        %11297 = vrot.lane.b32.xlu0 %v11224, 32
        %v11298 = vpop.permute.xlu0 %11297
        %11299 = vrot.lane.b32.xlu0 %v11225, 32
        %v11300 = vpop.permute.xlu0 %11299
        %11301 = vrot.lane.b32.xlu0 %v11226, 32
        %v11302 = vpop.permute.xlu0 %11301
        %11303 = vrot.lane.b32.xlu0 %v11227, 32
        %v11304 = vpop.permute.xlu0 %11303
        %11305 = vrot.lane.b32.xlu0 %v11228, 32
        %v11306 = vpop.permute.xlu0 %11305
        %11307 = vrot.lane.b32.xlu0 %v11229, 32
        %v11308 = vpop.permute.xlu0 %11307
        %11309 = vrot.lane.b32.xlu0 %v11230, 32
        %v11310 = vpop.permute.xlu0 %11309
        %11311 = vrot.lane.b32.xlu0 %v11231, 32
        %v11312 = vpop.permute.xlu0 %11311
        %11313 = vrot.lane.b32.xlu0 %v11232, 32
        %v11314 = vpop.permute.xlu0 %11313
        %11315 = vrot.lane.b32.xlu0 %v11233, 32
        %v11316 = vpop.permute.xlu0 %11315
        %11317 = vrot.lane.b32.xlu0 %v11234, 32
        %v11318 = vpop.permute.xlu0 %11317
        %11319 = vrot.lane.b32.xlu0 %v11235, 32
        %v11320 = vpop.permute.xlu0 %11319
        %11321 = vrot.lane.b32.xlu0 %v11236, 32
        %v11322 = vpop.permute.xlu0 %11321
        %11323 = vrot.lane.b32.xlu0 %v11237, 32
        %v11324 = vpop.permute.xlu0 %11323
        %11325 = vrot.lane.b32.xlu0 %v11238, 32
        %v11326 = vpop.permute.xlu0 %11325
        %11327 = vrot.lane.b32.xlu0 %v11239, 32
        %v11328 = vpop.permute.xlu0 %11327
        %11329 = vrot.lane.b32.xlu0 %v11240, 32
        %v11330 = vpop.permute.xlu0 %11329
        %11331 = vrot.lane.b32.xlu0 %v11241, 32
        %v11332 = vpop.permute.xlu0 %11331
        %11333 = vrot.lane.b32.xlu0 %v11242, 32
        %v11334 = vpop.permute.xlu0 %11333
        %11335 = vrot.lane.b32.xlu0 %v11243, 32
        %v11336 = vpop.permute.xlu0 %11335
        %11337 = vrot.lane.b32.xlu0 %v11244, 32
        %v11338 = vpop.permute.xlu0 %11337
        %11339 = vrot.lane.b32.xlu0 %v11245, 32
        %v11340 = vpop.permute.xlu0 %11339
        %11341 = vrot.lane.b32.xlu0 %v11246, 32
        %v11342 = vpop.permute.xlu0 %11341
        %v11375 = vadd.f32 %v11135, %v11280
        %v11376 = vadd.f32 %v11136, %v11282
        %v11377 = vadd.f32 %v11137, %v11284
        %v11378 = vadd.f32 %v11138, %v11286
        %v11379 = vadd.f32 %v11139, %v11288
        %v11380 = vadd.f32 %v11140, %v11290
        %v11381 = vadd.f32 %v11141, %v11292
        %v11382 = vadd.f32 %v11142, %v11294
        %v11383 = vadd.f32 %v11143, %v11296
        %v11384 = vadd.f32 %v11144, %v11298
        %v11385 = vadd.f32 %v11145, %v11300
        %v11386 = vadd.f32 %v11146, %v11302
        %v11387 = vadd.f32 %v11147, %v11304
        %v11388 = vadd.f32 %v11148, %v11306
        %v11389 = vadd.f32 %v11149, %v11308
        %v11390 = vadd.f32 %v11150, %v11310
        %v11391 = vadd.f32 %v11151, %v11312
        %v11392 = vadd.f32 %v11152, %v11314
        %v11393 = vadd.f32 %v11153, %v11316
        %v11394 = vadd.f32 %v11154, %v11318
        %v11395 = vadd.f32 %v11155, %v11320
        %v11396 = vadd.f32 %v11156, %v11322
        %v11397 = vadd.f32 %v11157, %v11324
        %v11398 = vadd.f32 %v11158, %v11326
        %v11399 = vadd.f32 %v11159, %v11328
        %v11400 = vadd.f32 %v11160, %v11330
        %v11401 = vadd.f32 %v11161, %v11332
        %v11402 = vadd.f32 %v11162, %v11334
        %v11403 = vadd.f32 %v11163, %v11336
        %v11404 = vadd.f32 %v11164, %v11338
        %v11405 = vadd.f32 %v11165, %v11340
        %v11406 = vadd.f32 %v11166, %v11342
        %v11407 = vmax.f32 %v11375, 0.0
        %v11408 = vmax.f32 %v11376, 0.0
        %v11409 = vmax.f32 %v11377, 0.0
        %v11410 = vmax.f32 %v11378, 0.0
        %v11411 = vmax.f32 %v11379, 0.0
        %v11412 = vmax.f32 %v11380, 0.0
        %v11413 = vmax.f32 %v11381, 0.0
        %v11414 = vmax.f32 %v11382, 0.0
        %v11415 = vmax.f32 %v11383, 0.0
        %v11416 = vmax.f32 %v11384, 0.0
        %v11417 = vmax.f32 %v11385, 0.0
        %v11418 = vmax.f32 %v11386, 0.0
        %v11419 = vmax.f32 %v11387, 0.0
        %v11420 = vmax.f32 %v11388, 0.0
        %v11421 = vmax.f32 %v11389, 0.0
        %v11422 = vmax.f32 %v11390, 0.0
        %v11423 = vmax.f32 %v11391, 0.0
        %v11424 = vmax.f32 %v11392, 0.0
        %v11425 = vmax.f32 %v11393, 0.0
        %v11426 = vmax.f32 %v11394, 0.0
        %v11427 = vmax.f32 %v11395, 0.0
        %v11428 = vmax.f32 %v11396, 0.0
        %v11429 = vmax.f32 %v11397, 0.0
        %v11430 = vmax.f32 %v11398, 0.0
        %v11431 = vmax.f32 %v11399, 0.0
        %v11432 = vmax.f32 %v11400, 0.0
        %v11433 = vmax.f32 %v11401, 0.0
        %v11434 = vmax.f32 %v11402, 0.0
        %v11435 = vmax.f32 %v11403, 0.0
        %v11436 = vmax.f32 %v11404, 0.0
        %v11437 = vmax.f32 %v11405, 0.0
        %v11438 = vmax.f32 %v11406, 0.0
        %v11439 = vlaneseq
        %v11440 = vshrl.u32 %v11439, 7
        %v11441 = vsub.s32 4, %v11440
        %v11442 = vrot.slane %v8772, %v11441
        %v11443 = vmul.f32 %v11407, %v11442
        %v11444 = vmul.f32 %v11408, %v11442
        %v11445 = vmul.f32 %v11409, %v11442
        %v11446 = vmul.f32 %v11410, %v11442
        %v11447 = vmul.f32 %v11411, %v11442
        %v11448 = vmul.f32 %v11412, %v11442
        %v11449 = vmul.f32 %v11413, %v11442
        %v11450 = vmul.f32 %v11414, %v11442
        %v11451 = vmul.f32 %v11415, %v11442
        %v11452 = vmul.f32 %v11416, %v11442
        %v11453 = vmul.f32 %v11417, %v11442
        %v11454 = vmul.f32 %v11418, %v11442
        %v11455 = vmul.f32 %v11419, %v11442
        %v11456 = vmul.f32 %v11420, %v11442
        %v11457 = vmul.f32 %v11421, %v11442
        %v11458 = vmul.f32 %v11422, %v11442
        %v11459 = vmul.f32 %v11423, %v11442
        %v11460 = vmul.f32 %v11424, %v11442
        %v11461 = vmul.f32 %v11425, %v11442
        %v11462 = vmul.f32 %v11426, %v11442
        %v11463 = vmul.f32 %v11427, %v11442
        %v11464 = vmul.f32 %v11428, %v11442
        %v11465 = vmul.f32 %v11429, %v11442
        %v11466 = vmul.f32 %v11430, %v11442
        %v11467 = vmul.f32 %v11431, %v11442
        %v11468 = vmul.f32 %v11432, %v11442
        %v11469 = vmul.f32 %v11433, %v11442
        %v11470 = vmul.f32 %v11434, %v11442
        %v11471 = vmul.f32 %v11435, %v11442
        %v11472 = vmul.f32 %v11436, %v11442
        %v11473 = vmul.f32 %v11437, %v11442
        %v11474 = vmul.f32 %v11438, %v11442
        %v11475 = vlaneseq
        %v11476 = vshrl.u32 %v11475, 7
        %v11477 = vsub.s32 5, %v11476
        %v11478 = vrot.slane %v8772, %v11477
        %v11479 = vadd.f32 %v11443, %v11478
        %v11480 = vadd.f32 %v11444, %v11478
        %v11481 = vadd.f32 %v11445, %v11478
        %v11482 = vadd.f32 %v11446, %v11478
        %v11483 = vadd.f32 %v11447, %v11478
        %v11484 = vadd.f32 %v11448, %v11478
        %v11485 = vadd.f32 %v11449, %v11478
        %v11486 = vadd.f32 %v11450, %v11478
        %v11487 = vadd.f32 %v11451, %v11478
        %v11488 = vadd.f32 %v11452, %v11478
        %v11489 = vadd.f32 %v11453, %v11478
        %v11490 = vadd.f32 %v11454, %v11478
        %v11491 = vadd.f32 %v11455, %v11478
        %v11492 = vadd.f32 %v11456, %v11478
        %v11493 = vadd.f32 %v11457, %v11478
        %v11494 = vadd.f32 %v11458, %v11478
        %v11495 = vadd.f32 %v11459, %v11478
        %v11496 = vadd.f32 %v11460, %v11478
        %v11497 = vadd.f32 %v11461, %v11478
        %v11498 = vadd.f32 %v11462, %v11478
        %v11499 = vadd.f32 %v11463, %v11478
        %v11500 = vadd.f32 %v11464, %v11478
        %v11501 = vadd.f32 %v11465, %v11478
        %v11502 = vadd.f32 %v11466, %v11478
        %v11503 = vadd.f32 %v11467, %v11478
        %v11504 = vadd.f32 %v11468, %v11478
        %v11505 = vadd.f32 %v11469, %v11478
        %v11506 = vadd.f32 %v11470, %v11478
        %v11507 = vadd.f32 %v11471, %v11478
        %v11508 = vadd.f32 %v11472, %v11478
        %v11509 = vadd.f32 %v11473, %v11478
        %v11510 = vadd.f32 %v11474, %v11478
        %11511 = vst.msk [vmem:[%s190] sm:$0xff] %vm3393, %v11479
        %11512 = vst.msk [vmem:[%s190 + $0x8] sm:$0xff] %vm3393, %v11480
        %11513 = vst.msk [vmem:[%s190 + $0x10] sm:$0xff] %vm3393, %v11481
        %11514 = vst.msk [vmem:[%s190 + $0x18] sm:$0xff] %vm3393, %v11482
        %11515 = vst.msk [vmem:[%s190 + $0x20] sm:$0xff] %vm3393, %v11483
        %11516 = vst.msk [vmem:[%s190 + $0x28] sm:$0xff] %vm3393, %v11484
        %11517 = vst.msk [vmem:[%s190 + $0x30] sm:$0xff] %vm3393, %v11485
        %11518 = vst.msk [vmem:[%s190 + $0x38] sm:$0xff] %vm3393, %v11486
        %11519 = vst.msk [vmem:[%s190 + $0x40] sm:$0xff] %vm3393, %v11487
        %11520 = vst.msk [vmem:[%s190 + $0x48] sm:$0xff] %vm3393, %v11488
        %11521 = vst.msk [vmem:[%s190 + $0x50] sm:$0xff] %vm3393, %v11489
        %11522 = vst.msk [vmem:[%s190 + $0x58] sm:$0xff] %vm3393, %v11490
        %11523 = vst.msk [vmem:[%s190 + $0x60] sm:$0xff] %vm3393, %v11491
        %11524 = vst.msk [vmem:[%s190 + $0x68] sm:$0xff] %vm3393, %v11492
        %11525 = vst.msk [vmem:[%s190 + $0x70] sm:$0xff] %vm3393, %v11493
        %11526 = vst.msk [vmem:[%s190 + $0x78] sm:$0xff] %vm3393, %v11494
        %11527 = vst.msk [vmem:[%s190 + $0x80] sm:$0xff] %vm3393, %v11495
        %11528 = vst.msk [vmem:[%s190 + $0x88] sm:$0xff] %vm3393, %v11496
        %11529 = vst.msk [vmem:[%s190 + $0x90] sm:$0xff] %vm3393, %v11497
        %11530 = vst.msk [vmem:[%s190 + $0x98] sm:$0xff] %vm3393, %v11498
        %11531 = vst.msk [vmem:[%s190 + $0xa0] sm:$0xff] %vm3393, %v11499
        %11532 = vst.msk [vmem:[%s190 + $0xa8] sm:$0xff] %vm3393, %v11500
        %11533 = vst.msk [vmem:[%s190 + $0xb0] sm:$0xff] %vm3393, %v11501
        %11534 = vst.msk [vmem:[%s190 + $0xb8] sm:$0xff] %vm3393, %v11502
        %11535 = vst.msk [vmem:[%s190 + $0xc0] sm:$0xff] %vm3393, %v11503
        %11536 = vst.msk [vmem:[%s190 + $0xc8] sm:$0xff] %vm3393, %v11504
        %11537 = vst.msk [vmem:[%s190 + $0xd0] sm:$0xff] %vm3393, %v11505
        %11538 = vst.msk [vmem:[%s190 + $0xd8] sm:$0xff] %vm3393, %v11506
        %11539 = vst.msk [vmem:[%s190 + $0xe0] sm:$0xff] %vm3393, %v11507
        %11540 = vst.msk [vmem:[%s190 + $0xe8] sm:$0xff] %vm3393, %v11508
        %11541 = vst.msk [vmem:[%s190 + $0xf0] sm:$0xff] %vm3393, %v11509
        %11542 = vst.msk [vmem:[%s190 + $0xf8] sm:$0xff] %vm3393, %v11510
        %s11543 = sand.u32 %s115, 1
        %s11544 = scalar_lea.sflag [#allocation3], %s11543
        %s11545 = sand.u32 %s115, 1
        %s11546 = smul.addr %s11545, 256
        %s11547 = scalar_lea.vmem [#allocation2], %s11546
        // Predicated region
        $region37: #{_respath1_impl.1} parent=35 // pred_check
          %p11548 = pneg %p125
        $region38: #{_respath1_impl.1} parent=35 // pred_check_branch
          %11550 = sbr.rel (%p11548) target = $region40
        $region39: #{_respath1_impl.1} parent=35 // pred_region
          %s11552 = ssub.s32 4096, 4096
          %11553 = vsyncadd %s11544, %s11552
          %s11554 = smul.addr %s18, 32
          %s11555 = smul.addr %s11554, 128
          %s11556 = scalar_lea.hbm %s4, %s11555
          %s11557 = sshll.u32 %s11547, 4
          %s11558 = int_to_ptr.vmem [resolvable:$true] %s11557
          %11563 = dma.vmem_to_hbm [thread:$0]  %s11558, 4096, %s11556, %s11544, 128, 128, 8
        $region40: #{_respath1_impl.1} parent=35 // pred_fallthru
          _
      $region36: #{_respath1_impl.1} parent=5 // pred_fallthru
        _
      %p11564 = scmp.le.s32.totalorder 2, %s13
      // Predicated region
      $region41: #{_respath1_impl.1} parent=5 // pred_check
        %p11565 = pneg %p11564
      $region42: #{_respath1_impl.1} parent=5 // pred_check_branch
        %11567 = sbr.rel (%p11565) target = $region44
      $region43: #{_respath1_impl.1} parent=5 // pred_region
        %s11568 = ssub.s32 %s13, 2
        // Predicated region
        $region45: #{_respath1_impl.1} parent=43 // pred_check
          %p11569 = pneg %p131
        $region46: #{_respath1_impl.1} parent=43 // pred_check_branch
          %11571 = sbr.rel (%p11569) target = $region48
        $region47: #{_respath1_impl.1} parent=43 // pred_region
          %s11572 = sand.u32 %s116, 1
          %s11573 = scalar_lea.sflag [#allocation3], %s11572
          %s11574 = sand.u32 %s116, 1
          %s11575 = smul.addr %s11574, 256
          %s11576 = scalar_lea.vmem [#allocation2], %s11575
          %11577 = dma.done %s11573, 4096
        $region48: #{_respath1_impl.1} parent=43 // pred_fallthru
          _
      $region44: #{_respath1_impl.1} parent=5 // pred_fallthru
        _
    $region6: #{_respath1_impl.1} parent=1 // loop_footer
      %s17 = sadd.s32 1, %s13
    $region7: #{_respath1_impl.1} parent=1 // loop_footer_branch
      %12 = sbr.rel target = $region3
    $region8: #{_respath1_impl.1} parent=1 // loop_exit
      _
    %11578 = vsyncpa [#allocation3], 1
    %s11579 = scalar_lea.sflag [#allocation3], 1
    %11580 = vsyncpa %s11579, 1

</llo_original>
